<compile_context>
chip_gen: v7x
topology: tpu7x:2x2x1
jax: 0.10.0
libtpu: 0.0.40
codegen_flags: <defaults>
</compile_context>

<pallas_src>
import functools
import math

import jax
import jax.numpy as jnp
from jax import lax
from jax.experimental import pallas as pl
from jax.experimental.pallas import tpu as pltpu


def _round_up(v, m):
    return (v + m - 1) // m * m


def _apply_act(r, act):
    if act == "relu":
        return jnp.maximum(r, 0.0)
    if act == "sigmoid":
        return 1.0 / (1.0 + jnp.exp(-r))
    return r


# ---------------------------------------------------------------------------
# Pallas kernel 1: GEMM with fused bias + activation epilogue.
#   out = act(x @ w + b);  x:(M,K) bf16, w:(K,N) bf16, b:(1,N) f32.
# Full-K / full-N blocks (single reduction step); only M is tiled.
# ---------------------------------------------------------------------------
def _gemm_bias_act_kernel(x_ref, w_ref, b_ref, o_ref, *, act):
    acc = jnp.dot(x_ref[...], w_ref[...], preferred_element_type=jnp.float32)
    r = _apply_act(acc + b_ref[...], act)
    o_ref[...] = r.astype(o_ref.dtype)


def gemm_bias_act(x, w, b=None, act="none", out_dtype=jnp.bfloat16, tm=256):
    M, K = x.shape
    Kw, N = w.shape
    assert K == Kw, (K, Kw)
    if b is None:
        b = jnp.zeros((N,), jnp.float32)
    brow = b.astype(jnp.float32).reshape(1, N)
    x = x.astype(jnp.bfloat16)
    w = w.astype(jnp.bfloat16)

    # Only the rows axis is padded/tiled; K and N stay full-size blocks
    # (a block dim equal to the full array dim is exempt from (8,128) rules).
    Mp = _round_up(M, 16)
    if Mp <= tm:
        tm = Mp                                   # single row-block
    else:
        Mp = _round_up(M, tm)
    if Mp != M:
        x = jnp.pad(x, ((0, Mp - M), (0, 0)))

    out = pl.pallas_call(
        functools.partial(_gemm_bias_act_kernel, act=act),
        out_shape=jax.ShapeDtypeStruct((Mp, N), out_dtype),
        grid=(Mp // tm,),
        in_specs=[
            pl.BlockSpec((tm, K), lambda i: (i, 0)),
            pl.BlockSpec((K, N), lambda i: (0, 0)),
            pl.BlockSpec((1, N), lambda i: (0, 0)),
        ],
        out_specs=pl.BlockSpec((tm, N), lambda i: (i, 0)),
        compiler_params=pltpu.CompilerParams(
            dimension_semantics=("parallel",)),
    )(x, w, brow)
    return out[:M]


# ---------------------------------------------------------------------------
# Pallas kernel 2: elementwise bias + activation (for the transposed convs,
# whose bias/act cannot live in the GEMM epilogue because each output voxel
# sums contributions from several GEMM rows).
# ---------------------------------------------------------------------------
def _bias_act_kernel(x_ref, b_ref, o_ref, *, act):
    r = _apply_act(x_ref[...] + b_ref[...], act)
    o_ref[...] = r.astype(o_ref.dtype)


def bias_act_rows(x, brow, act, out_dtype, tr=256):
    R, L = x.shape
    Rp = _round_up(R, 16)
    if Rp <= tr:
        tr = Rp
    else:
        Rp = _round_up(R, tr)
    if Rp != R:
        x = jnp.pad(x, ((0, Rp - R), (0, 0)))
    out = pl.pallas_call(
        functools.partial(_bias_act_kernel, act=act),
        out_shape=jax.ShapeDtypeStruct((Rp, L), out_dtype),
        grid=(Rp // tr,),
        in_specs=[
            pl.BlockSpec((tr, L), lambda i: (i, 0)),
            pl.BlockSpec((1, L), lambda i: (0, 0)),
        ],
        out_specs=pl.BlockSpec((tr, L), lambda i: (i, 0)),
        compiler_params=pltpu.CompilerParams(
            dimension_semantics=("parallel",)),
    )(x, brow.astype(jnp.float32))
    return out[:R]


# ---------------------------------------------------------------------------
# Conv3d: im2col (plain-JAX glue, channels-last) + Pallas GEMM w/ fused bias+act.
# TODO(synk): build the (tm, K) patch tiles inside the kernel (index_map /
# manual DMA) instead of materializing the patch matrix; at the encoder's
# sizes (K = 64 / 4096) the materialized patches are only a few MB.
# ---------------------------------------------------------------------------
def conv3d_cl(x, w_mat, b, ksize, stride, padding, act, out_dtype=jnp.bfloat16):
    # x: (N, D, H, W, Cin);  w_mat: (kD*kH*kW*Cin, Cout) taps-major / Cin-minor.
    N, D, H, W, C = x.shape
    kD, kH, kW = ksize
    sD, sH, sW = stride
    pD, pH, pW = padding
    xp = jnp.pad(x, ((0, 0), (pD, pD), (pH, pH), (pW, pW), (0, 0)))
    Dp, Hp, Wp = xp.shape[1:4]
    oD = (Dp - kD) // sD + 1
    oH = (Hp - kH) // sH + 1
    oW = (Wp - kW) // sW + 1
    cols = []
    for kd in range(kD):
        for kh in range(kH):
            for kw in range(kW):
                cols.append(xp[:, kd:kd + (oD - 1) * sD + 1:sD,
                                  kh:kh + (oH - 1) * sH + 1:sH,
                                  kw:kw + (oW - 1) * sW + 1:sW, :])
    patches = jnp.stack(cols, axis=4)                     # (N,oD,oH,oW,taps,C)
    patches = patches.reshape(N * oD * oH * oW, kD * kH * kW * C)
    out = gemm_bias_act(patches, w_mat, b, act=act, out_dtype=out_dtype)
    return out.reshape(N, oD, oH, oW, -1)


# ---------------------------------------------------------------------------
# ConvTranspose3d: dense (input-voxels, Cin) @ (Cin, taps*Cout) Pallas GEMM,
# then a strided scatter-add (col2im) over taps (plain-JAX glue), then the
# Pallas bias+act kernel.  No zero-dilation, no im2col, no wasted FLOPs.
# ---------------------------------------------------------------------------
def conv_transpose3d_cl(x, w_mat, b, ksize, stride, padding, act,
                        out_dtype=jnp.bfloat16):
    # x: (N, D, H, W, Cin);  w_mat: (Cin, kD*kH*kW*Cout) taps-major / Cout-minor.
    N, ID, IH, IW, Cin = x.shape
    kD, kH, kW = ksize
    sD, sH, sW = stride
    pD, pH, pW = padding
    taps = kD * kH * kW
    Cout = w_mat.shape[1] // taps

    y = gemm_bias_act(x.reshape(N * ID * IH * IW, Cin), w_mat, None,
                      act="none", out_dtype=jnp.float32)
    y = y.reshape(N, ID, IH, IW, kD, kH, kW, Cout)

    OfD = (ID - 1) * sD + kD
    OfH = (IH - 1) * sH + kH
    OfW = (IW - 1) * sW + kW
    full = jnp.zeros((N, OfD, OfH, OfW, Cout), jnp.float32)
    for kd in range(kD):
        for kh in range(kH):
            for kw in range(kW):
                full = full.at[:, kd:kd + (ID - 1) * sD + 1:sD,
                                  kh:kh + (IH - 1) * sH + 1:sH,
                                  kw:kw + (IW - 1) * sW + 1:sW, :].add(
                    y[:, :, :, :, kd, kh, kw, :])
    out = full[:, pD:OfD - pD, pH:OfH - pH, pW:OfW - pW, :]
    oD, oH, oW = out.shape[1:4]

    if Cout == 1:
        # Lane-dense layout for the single-channel output layer (W in lanes).
        flat = out.reshape(N * oD * oH, oW)
        brow = jnp.broadcast_to(b.astype(jnp.float32).reshape(1, 1), (1, oW))
        res = bias_act_rows(flat, brow, act, out_dtype)
        return res.reshape(N, oD, oH, oW, 1)
    flat = out.reshape(N * oD * oH * oW, Cout)
    res = bias_act_rows(flat, b.reshape(1, Cout), act, out_dtype)
    return res.reshape(N, oD, oH, oW, Cout)


# ---------------------------------------------------------------------------
# Parameters (PyTorch layout) and one-time packing into GEMM layout.
# ---------------------------------------------------------------------------
LATENT = 32


def init_params(key, latent, enc_spatial):
    """PyTorch-layout parameters for Conv3dAutoencoder(latent)."""
    d4, h4, w4 = enc_spatial
    flat = 32 * d4 * h4 * w4
    ks = jax.random.split(key, 14)

    def w(k, shape, fan_in):
        return jax.random.normal(k, shape, jnp.float32) / math.sqrt(fan_in)

    return {
        "c1_w": w(ks[0], (64, 1, 4, 4, 4), 64),     "c1_b": w(ks[1], (64,), 64),
        "c2_w": w(ks[2], (32, 64, 4, 4, 4), 4096),  "c2_b": w(ks[3], (32,), 4096),
        "fce_w": w(ks[4], (latent, flat), flat),    "fce_b": w(ks[5], (latent,), flat),
        "fcd_w": w(ks[6], (flat, latent), latent),  "fcd_b": w(ks[7], (flat,), latent),
        "d1_w": w(ks[8], (32, 64, 4, 4, 4), 2048),  "d1_b": w(ks[9], (64,), 2048),
        "d2_w": w(ks[10], (64, 32, 3, 3, 3), 1728), "d2_b": w(ks[11], (32,), 1728),
        "d3_w": w(ks[12], (32, 1, 3, 2, 2), 384),   "d3_b": w(ks[13], (1,), 384),
    }


def pack_params(p, enc_spatial):
    """One-time (outside jit) repack of PyTorch-layout weights into the GEMM
    layouts used by the Pallas kernels (bf16 GEMM operands, f32 biases).
    The FC weights are also permuted so the activation flatten/unflatten can
    stay channels-last (no per-forward transpose of huge activations)."""
    d4, h4, w4 = enc_spatial
    latent, flat = p["fce_w"].shape

    def conv_w(w):      # (Cout,Cin,kD,kH,kW) -> (taps*Cin, Cout)
        return w.transpose(2, 3, 4, 1, 0).reshape(-1, w.shape[0]).astype(jnp.bfloat16)

    def convT_w(w):     # (Cin,Cout,kD,kH,kW) -> (Cin, taps*Cout)
        return w.transpose(0, 2, 3, 4, 1).reshape(w.shape[0], -1).astype(jnp.bfloat16)

    fce_w = (p["fce_w"].reshape(latent, 32, d4, h4, w4)
             .transpose(2, 3, 4, 1, 0).reshape(flat, latent).astype(jnp.bfloat16))
    fcd_w = (p["fcd_w"].reshape(32, d4, h4, w4, latent)
             .transpose(4, 1, 2, 3, 0).reshape(latent, flat).astype(jnp.bfloat16))
    fcd_b = (p["fcd_b"].reshape(32, d4, h4, w4)
             .transpose(1, 2, 3, 0).reshape(flat).astype(jnp.float32))

    return {
        "c1_w": conv_w(p["c1_w"]), "c1_b": p["c1_b"],
        "c2_w": conv_w(p["c2_w"]), "c2_b": p["c2_b"],
        "fce_w": fce_w, "fce_b": p["fce_b"],
        "fcd_w": fcd_w, "fcd_b": fcd_b,
        "d1_w": convT_w(p["d1_w"]), "d1_b": p["d1_b"],
        "d2_w": convT_w(p["d2_w"]), "d2_b": p["d2_b"],
        "d3_w": convT_w(p["d3_w"]), "d3_b": p["d3_b"],
    }


# ---------------------------------------------------------------------------
# Forward pass (same layer hyperparameters / semantics as the PyTorch module).
# ---------------------------------------------------------------------------
@jax.jit
def conv3d_autoencoder_forward(x, pp):
    """x: (N, 1, D, H, W) f32 NCDHW.  Returns (N, 1, D, H, W) f32 in [0, 1]."""
    N = x.shape[0]
    h = x.transpose(0, 2, 3, 4, 1).astype(jnp.bfloat16)        # NDHWC

    # ---- encoder ----
    h = conv3d_cl(h, pp["c1_w"], pp["c1_b"], (4, 4, 4), (2, 2, 2), (1, 1, 1), "relu")
    h = conv3d_cl(h, pp["c2_w"], pp["c2_b"], (4, 4, 4), (2, 2, 2), (1, 1, 1), "relu")
    enc_sp = h.shape[1:4]
    z = gemm_bias_act(h.reshape(N, -1), pp["fce_w"], pp["fce_b"], act="none")

    # ---- decoder ----
    hd = gemm_bias_act(z, pp["fcd_w"], pp["fcd_b"], act="none")
    h = hd.reshape(N, *enc_sp, 32)
    h = conv_transpose3d_cl(h, pp["d1_w"], pp["d1_b"], (4, 4, 4), (2, 2, 2), (0, 1, 1), "relu")
    h = conv_transpose3d_cl(h, pp["d2_w"], pp["d2_b"], (3, 3, 3), (1, 2, 2), (0, 1, 1), "relu")
    h = conv_transpose3d_cl(h, pp["d3_w"], pp["d3_b"], (3, 2, 2), (1, 1, 1), (0, 0, 0),
                            "sigmoid", out_dtype=jnp.float32)
    return h.transpose(0, 4, 1, 2, 3)                          # back to NCDHW


# ---------------------------------------------------------------------------
# Pure-JAX / XLA reference (with the same bf16 operand quantization) used to
# validate the Pallas path numerically.
# ---------------------------------------------------------------------------
def reference_forward(x, p):
    q = lambda a: a.astype(jnp.bfloat16).astype(jnp.float32)
    dn = ("NCDHW", "OIDHW", "NCDHW")
    hp = lax.Precision.HIGHEST

    def conv(h, w, b, s, pad):
        o = lax.conv_general_dilated(h, q(w), window_strides=s,
                                     padding=[(v, v) for v in pad],
                                     dimension_numbers=dn, precision=hp)
        return o + b.reshape(1, -1, 1, 1, 1)

    def convT(h, w, b, s, pad):
        k = w.shape[2:]
        w_eq = q(jnp.flip(w, (2, 3, 4)).transpose(1, 0, 2, 3, 4))
        o = lax.conv_general_dilated(h, w_eq, window_strides=(1, 1, 1),
                                     padding=[(k[i] - 1 - pad[i],) * 2 for i in range(3)],
                                     lhs_dilation=s, dimension_numbers=dn, precision=hp)
        return o + b.reshape(1, -1, 1, 1, 1)

    sig = lambda v: 1.0 / (1.0 + jnp.exp(-v))
    N = x.shape[0]
    h = q(x)
    h = q(jax.nn.relu(conv(h, p["c1_w"], p["c1_b"], (2, 2, 2), (1, 1, 1))))
    h = q(jax.nn.relu(conv(h, p["c2_w"], p["c2_b"], (2, 2, 2), (1, 1, 1))))
    enc_sp = h.shape[2:]
    z = q(jnp.dot(h.reshape(N, -1), q(p["fce_w"]).T, precision=hp) + p["fce_b"])
    hd = q(jnp.dot(z, q(p["fcd_w"]).T, precision=hp) + p["fcd_b"])
    h = hd.reshape(N, 32, *enc_sp)
    h = q(jax.nn.relu(convT(h, p["d1_w"], p["d1_b"], (2, 2, 2), (0, 1, 1))))
    h = q(jax.nn.relu(convT(h, p["d2_w"], p["d2_b"], (1, 2, 2), (0, 1, 1))))
    return sig(convT(h, p["d3_w"], p["d3_b"], (1, 1, 1), (0, 0, 0)))


if __name__ == "__main__":
    key = jax.random.PRNGKey(0)
    kx, kp = jax.random.split(key)

    # Small shapes consistent with the module: the conv/deconv stack
    # round-trips for D = 12 and any H, W divisible by 4.  model.py's
    # hard-coded Linear(32*3*28*28, latent) corresponds to (12, 112, 112);
    # (12, 16, 16) keeps validation fast while using the exact same layers.
    N, D, H, W = 2, 12, 16, 16
    latent = LATENT
    enc_spatial = (D // 4, H // 4, W // 4)      # encoder output spatial dims

    x = jax.random.normal(kx, (N, 1, D, H, W), jnp.float32)
    params = init_params(kp, latent, enc_spatial)
    packed = pack_params(params, enc_spatial)

    out = jax.block_until_ready(conv3d_autoencoder_forward(x, packed))

    assert out.shape == (N, 1, D, H, W), out.shape
    assert bool(jnp.all(jnp.isfinite(out)))
    assert bool(jnp.all((out >= 0.0) & (out <= 1.0)))       # sigmoid range

    ref = jax.block_until_ready(jax.jit(reference_forward)(x, params))
    max_diff = float(jnp.max(jnp.abs(out - ref)))
    assert max_diff < 1e-2, max_diff

    print("KERNEL_OK")
</pallas_src>

<mosaic_0001>
module attributes {stable_mosaic.version = 11 : i64} {
  func.func @_gemm_bias_act_kernel(%arg0: i32, %arg1: memref<256x64xbf16, #tpu.memory_space<vmem>>, %arg2: memref<64x64xbf16, #tpu.memory_space<vmem>>, %arg3: memref<1x64xf32, #tpu.memory_space<vmem>>, %arg4: memref<256x64xbf16, #tpu.memory_space<vmem>>) attributes {dimension_semantics = [#tpu.dimension_semantics<parallel>], iteration_bounds = array<i64: 3>, scalar_prefetch = 0 : i64, scratch_operands = 0 : i64, tpu.core_type = #tpu.core_type<tc>, window_params = [{transform_indices = @transform_0, window_bounds = array<i64: 256, 64>}, {pipeline_mode = #tpu.pipeline_mode<synchronous>, transform_indices = @transform_1, window_bounds = array<i64: 64, 64>}, {pipeline_mode = #tpu.pipeline_mode<synchronous>, transform_indices = @transform_2, window_bounds = array<i64: 1, 64>}, {transform_indices = @transform_3, window_bounds = array<i64: 256, 64>}]} {
    %c0 = arith.constant 0 : index
    %c0_0 = arith.constant 0 : index
    %0 = vector.load %arg1[%c0, %c0_0] : memref<256x64xbf16, #tpu.memory_space<vmem>>, vector<256x64xbf16>
    %c0_1 = arith.constant 0 : index
    %c0_2 = arith.constant 0 : index
    %1 = vector.load %arg2[%c0_1, %c0_2] : memref<64x64xbf16, #tpu.memory_space<vmem>>, vector<64x64xbf16>
    %cst = arith.constant dense<0.000000e+00> : vector<256x64xf32>
    %2 = tpu.matmul %0, %1, %cst {dimension_numbers = #tpu.dot_dimension_numbers<[1], [0], [0], [1], [0, 0, 1, 1], [], []>} : vector<256x64xbf16>, vector<64x64xbf16>, vector<256x64xf32> -> vector<256x64xf32>
    %c0_3 = arith.constant 0 : index
    %c0_4 = arith.constant 0 : index
    %3 = vector.load %arg3[%c0_3, %c0_4] : memref<1x64xf32, #tpu.memory_space<vmem>>, vector<1x64xf32>
    %4 = vector.broadcast %3 : vector<1x64xf32> to vector<256x64xf32>
    %5 = arith.addf %2, %4 : vector<256x64xf32>
    %cst_5 = arith.constant 0.000000e+00 : f32
    %6 = vector.broadcast %cst_5 : f32 to vector<256x64xf32>
    %7 = arith.maximumf %5, %6 : vector<256x64xf32>
    %8 = arith.truncf %7 : vector<256x64xf32> to vector<256x64xbf16>
    %c0_6 = arith.constant 0 : index
    %c0_7 = arith.constant 0 : index
    %9 = vector.load %arg4[%c0_6, %c0_7] : memref<256x64xbf16, #tpu.memory_space<vmem>>, vector<256x64xbf16>
    tpu.vector_store %arg4[%c0_6, %c0_7], %8 {strides = array<i32>} : memref<256x64xbf16, #tpu.memory_space<vmem>>, vector<256x64xbf16>,
    return
  }
  func.func @transform_0(%arg0: i32) -> (i32, i32) {
    %c0_i32 = arith.constant 0 : i32
    %c0_i32_0 = arith.constant 0 : i32
    return %arg0, %c0_i32 : i32, i32
  }
  func.func @transform_1(%arg0: i32) -> (i32, i32) {
    %c0_i32 = arith.constant 0 : i32
    %c0_i32_0 = arith.constant 0 : i32
    %c0_i32_1 = arith.constant 0 : i32
    return %c0_i32, %c0_i32_0 : i32, i32
  }
  func.func @transform_2(%arg0: i32) -> (i32, i32) {
    %c0_i32 = arith.constant 0 : i32
    %c0_i32_0 = arith.constant 0 : i32
    %c0_i32_1 = arith.constant 0 : i32
    return %c0_i32, %c0_i32_0 : i32, i32
  }
  func.func @transform_3(%arg0: i32) -> (i32, i32) {
    %c0_i32 = arith.constant 0 : i32
    %c0_i32_0 = arith.constant 0 : i32
    return %arg0, %c0_i32 : i32, i32
  }
}

module attributes {stable_mosaic.version = 11 : i64} {
  func.func @_gemm_bias_act_kernel(%arg0: i32, %arg1: memref<96x4096xbf16, #tpu.memory_space<vmem>>, %arg2: memref<4096x32xbf16, #tpu.memory_space<vmem>>, %arg3: memref<1x32xf32, #tpu.memory_space<vmem>>, %arg4: memref<96x32xbf16, #tpu.memory_space<vmem>>) attributes {dimension_semantics = [#tpu.dimension_semantics<parallel>], iteration_bounds = array<i64: 1>, scalar_prefetch = 0 : i64, scratch_operands = 0 : i64, tpu.core_type = #tpu.core_type<tc>, window_params = [{transform_indices = @transform_0, window_bounds = array<i64: 96, 4096>}, {pipeline_mode = #tpu.pipeline_mode<synchronous>, transform_indices = @transform_1, window_bounds = array<i64: 4096, 32>}, {pipeline_mode = #tpu.pipeline_mode<synchronous>, transform_indices = @transform_2, window_bounds = array<i64: 1, 32>}, {transform_indices = @transform_3, window_bounds = array<i64: 96, 32>}]} {
    %c0 = arith.constant 0 : index
    %c0_0 = arith.constant 0 : index
    %0 = vector.load %arg1[%c0, %c0_0] : memref<96x4096xbf16, #tpu.memory_space<vmem>>, vector<96x4096xbf16>
    %c0_1 = arith.constant 0 : index
    %c0_2 = arith.constant 0 : index
    %1 = vector.load %arg2[%c0_1, %c0_2] : memref<4096x32xbf16, #tpu.memory_space<vmem>>, vector<4096x32xbf16>
    %cst = arith.constant dense<0.000000e+00> : vector<96x32xf32>
    %2 = tpu.matmul %0, %1, %cst {dimension_numbers = #tpu.dot_dimension_numbers<[1], [0], [0], [1], [0, 0, 1, 1], [], []>} : vector<96x4096xbf16>, vector<4096x32xbf16>, vector<96x32xf32> -> vector<96x32xf32>
    %c0_3 = arith.constant 0 : index
    %c0_4 = arith.constant 0 : index
    %3 = vector.load %arg3[%c0_3, %c0_4] : memref<1x32xf32, #tpu.memory_space<vmem>>, vector<1x32xf32>
    %4 = vector.broadcast %3 : vector<1x32xf32> to vector<96x32xf32>
    %5 = arith.addf %2, %4 : vector<96x32xf32>
    %cst_5 = arith.constant 0.000000e+00 : f32
    %6 = vector.broadcast %cst_5 : f32 to vector<96x32xf32>
    %7 = arith.maximumf %5, %6 : vector<96x32xf32>
    %8 = arith.truncf %7 : vector<96x32xf32> to vector<96x32xbf16>
    %c0_6 = arith.constant 0 : index
    %c0_7 = arith.constant 0 : index
    %9 = vector.load %arg4[%c0_6, %c0_7] : memref<96x32xbf16, #tpu.memory_space<vmem>>, vector<96x32xbf16>
    tpu.vector_store %arg4[%c0_6, %c0_7], %8 {strides = array<i32>} : memref<96x32xbf16, #tpu.memory_space<vmem>>, vector<96x32xbf16>,
    return
  }
  func.func @transform_0(%arg0: i32) -> (i32, i32) {
    %c0_i32 = arith.constant 0 : i32
    %c0_i32_0 = arith.constant 0 : i32
    return %arg0, %c0_i32 : i32, i32
  }
  func.func @transform_1(%arg0: i32) -> (i32, i32) {
    %c0_i32 = arith.constant 0 : i32
    %c0_i32_0 = arith.constant 0 : i32
    %c0_i32_1 = arith.constant 0 : i32
    return %c0_i32, %c0_i32_0 : i32, i32
  }
  func.func @transform_2(%arg0: i32) -> (i32, i32) {
    %c0_i32 = arith.constant 0 : i32
    %c0_i32_0 = arith.constant 0 : i32
    %c0_i32_1 = arith.constant 0 : i32
    return %c0_i32, %c0_i32_0 : i32, i32
  }
  func.func @transform_3(%arg0: i32) -> (i32, i32) {
    %c0_i32 = arith.constant 0 : i32
    %c0_i32_0 = arith.constant 0 : i32
    return %arg0, %c0_i32 : i32, i32
  }
}

module attributes {stable_mosaic.version = 11 : i64} {
  func.func @_gemm_bias_act_kernel(%arg0: i32, %arg1: memref<16x1536xbf16, #tpu.memory_space<vmem>>, %arg2: memref<1536x32xbf16, #tpu.memory_space<vmem>>, %arg3: memref<1x32xf32, #tpu.memory_space<vmem>>, %arg4: memref<16x32xbf16, #tpu.memory_space<vmem>>) attributes {dimension_semantics = [#tpu.dimension_semantics<parallel>], iteration_bounds = array<i64: 1>, scalar_prefetch = 0 : i64, scratch_operands = 0 : i64, tpu.core_type = #tpu.core_type<tc>, window_params = [{transform_indices = @transform_0, window_bounds = array<i64: 16, 1536>}, {pipeline_mode = #tpu.pipeline_mode<synchronous>, transform_indices = @transform_1, window_bounds = array<i64: 1536, 32>}, {pipeline_mode = #tpu.pipeline_mode<synchronous>, transform_indices = @transform_2, window_bounds = array<i64: 1, 32>}, {transform_indices = @transform_3, window_bounds = array<i64: 16, 32>}]} {
    %c0 = arith.constant 0 : index
    %c0_0 = arith.constant 0 : index
    %0 = vector.load %arg1[%c0, %c0_0] : memref<16x1536xbf16, #tpu.memory_space<vmem>>, vector<16x1536xbf16>
    %c0_1 = arith.constant 0 : index
    %c0_2 = arith.constant 0 : index
    %1 = vector.load %arg2[%c0_1, %c0_2] : memref<1536x32xbf16, #tpu.memory_space<vmem>>, vector<1536x32xbf16>
    %cst = arith.constant dense<0.000000e+00> : vector<16x32xf32>
    %2 = tpu.matmul %0, %1, %cst {dimension_numbers = #tpu.dot_dimension_numbers<[1], [0], [0], [1], [0, 0, 1, 1], [], []>} : vector<16x1536xbf16>, vector<1536x32xbf16>, vector<16x32xf32> -> vector<16x32xf32>
    %c0_3 = arith.constant 0 : index
    %c0_4 = arith.constant 0 : index
    %3 = vector.load %arg3[%c0_3, %c0_4] : memref<1x32xf32, #tpu.memory_space<vmem>>, vector<1x32xf32>
    %4 = vector.broadcast %3 : vector<1x32xf32> to vector<16x32xf32>
    %5 = arith.addf %2, %4 : vector<16x32xf32>
    %6 = arith.truncf %5 : vector<16x32xf32> to vector<16x32xbf16>
    %c0_5 = arith.constant 0 : index
    %c0_6 = arith.constant 0 : index
    %7 = vector.load %arg4[%c0_5, %c0_6] : memref<16x32xbf16, #tpu.memory_space<vmem>>, vector<16x32xbf16>
    tpu.vector_store %arg4[%c0_5, %c0_6], %6 {strides = array<i32>} : memref<16x32xbf16, #tpu.memory_space<vmem>>, vector<16x32xbf16>,
    return
  }
  func.func @transform_0(%arg0: i32) -> (i32, i32) {
    %c0_i32 = arith.constant 0 : i32
    %c0_i32_0 = arith.constant 0 : i32
    return %arg0, %c0_i32 : i32, i32
  }
  func.func @transform_1(%arg0: i32) -> (i32, i32) {
    %c0_i32 = arith.constant 0 : i32
    %c0_i32_0 = arith.constant 0 : i32
    %c0_i32_1 = arith.constant 0 : i32
    return %c0_i32, %c0_i32_0 : i32, i32
  }
  func.func @transform_2(%arg0: i32) -> (i32, i32) {
    %c0_i32 = arith.constant 0 : i32
    %c0_i32_0 = arith.constant 0 : i32
    %c0_i32_1 = arith.constant 0 : i32
    return %c0_i32, %c0_i32_0 : i32, i32
  }
  func.func @transform_3(%arg0: i32) -> (i32, i32) {
    %c0_i32 = arith.constant 0 : i32
    %c0_i32_0 = arith.constant 0 : i32
    return %arg0, %c0_i32 : i32, i32
  }
}

module attributes {stable_mosaic.version = 11 : i64} {
  func.func @_gemm_bias_act_kernel(%arg0: i32, %arg1: memref<16x32xbf16, #tpu.memory_space<vmem>>, %arg2: memref<32x1536xbf16, #tpu.memory_space<vmem>>, %arg3: memref<1x1536xf32, #tpu.memory_space<vmem>>, %arg4: memref<16x1536xbf16, #tpu.memory_space<vmem>>) attributes {dimension_semantics = [#tpu.dimension_semantics<parallel>], iteration_bounds = array<i64: 1>, scalar_prefetch = 0 : i64, scratch_operands = 0 : i64, tpu.core_type = #tpu.core_type<tc>, window_params = [{transform_indices = @transform_0, window_bounds = array<i64: 16, 32>}, {pipeline_mode = #tpu.pipeline_mode<synchronous>, transform_indices = @transform_1, window_bounds = array<i64: 32, 1536>}, {pipeline_mode = #tpu.pipeline_mode<synchronous>, transform_indices = @transform_2, window_bounds = array<i64: 1, 1536>}, {transform_indices = @transform_3, window_bounds = array<i64: 16, 1536>}]} {
    %c0 = arith.constant 0 : index
    %c0_0 = arith.constant 0 : index
    %0 = vector.load %arg1[%c0, %c0_0] : memref<16x32xbf16, #tpu.memory_space<vmem>>, vector<16x32xbf16>
    %c0_1 = arith.constant 0 : index
    %c0_2 = arith.constant 0 : index
    %1 = vector.load %arg2[%c0_1, %c0_2] : memref<32x1536xbf16, #tpu.memory_space<vmem>>, vector<32x1536xbf16>
    %cst = arith.constant dense<0.000000e+00> : vector<16x1536xf32>
    %2 = tpu.matmul %0, %1, %cst {dimension_numbers = #tpu.dot_dimension_numbers<[1], [0], [0], [1], [0, 0, 1, 1], [], []>} : vector<16x32xbf16>, vector<32x1536xbf16>, vector<16x1536xf32> -> vector<16x1536xf32>
    %c0_3 = arith.constant 0 : index
    %c0_4 = arith.constant 0 : index
    %3 = vector.load %arg3[%c0_3, %c0_4] : memref<1x1536xf32, #tpu.memory_space<vmem>>, vector<1x1536xf32>
    %4 = vector.broadcast %3 : vector<1x1536xf32> to vector<16x1536xf32>
    %5 = arith.addf %2, %4 : vector<16x1536xf32>
    %6 = arith.truncf %5 : vector<16x1536xf32> to vector<16x1536xbf16>
    %c0_5 = arith.constant 0 : index
    %c0_6 = arith.constant 0 : index
    %7 = vector.load %arg4[%c0_5, %c0_6] : memref<16x1536xbf16, #tpu.memory_space<vmem>>, vector<16x1536xbf16>
    tpu.vector_store %arg4[%c0_5, %c0_6], %6 {strides = array<i32>} : memref<16x1536xbf16, #tpu.memory_space<vmem>>, vector<16x1536xbf16>,
    return
  }
  func.func @transform_0(%arg0: i32) -> (i32, i32) {
    %c0_i32 = arith.constant 0 : i32
    %c0_i32_0 = arith.constant 0 : i32
    return %arg0, %c0_i32 : i32, i32
  }
  func.func @transform_1(%arg0: i32) -> (i32, i32) {
    %c0_i32 = arith.constant 0 : i32
    %c0_i32_0 = arith.constant 0 : i32
    %c0_i32_1 = arith.constant 0 : i32
    return %c0_i32, %c0_i32_0 : i32, i32
  }
  func.func @transform_2(%arg0: i32) -> (i32, i32) {
    %c0_i32 = arith.constant 0 : i32
    %c0_i32_0 = arith.constant 0 : i32
    %c0_i32_1 = arith.constant 0 : i32
    return %c0_i32, %c0_i32_0 : i32, i32
  }
  func.func @transform_3(%arg0: i32) -> (i32, i32) {
    %c0_i32 = arith.constant 0 : i32
    %c0_i32_0 = arith.constant 0 : i32
    return %arg0, %c0_i32 : i32, i32
  }
}

module attributes {stable_mosaic.version = 11 : i64} {
  func.func @_gemm_bias_act_kernel(%arg0: i32, %arg1: memref<96x32xbf16, #tpu.memory_space<vmem>>, %arg2: memref<32x4096xbf16, #tpu.memory_space<vmem>>, %arg3: memref<1x4096xf32, #tpu.memory_space<vmem>>, %arg4: memref<96x4096xf32, #tpu.memory_space<vmem>>) attributes {dimension_semantics = [#tpu.dimension_semantics<parallel>], iteration_bounds = array<i64: 1>, scalar_prefetch = 0 : i64, scratch_operands = 0 : i64, tpu.core_type = #tpu.core_type<tc>, window_params = [{transform_indices = @transform_0, window_bounds = array<i64: 96, 32>}, {pipeline_mode = #tpu.pipeline_mode<synchronous>, transform_indices = @transform_1, window_bounds = array<i64: 32, 4096>}, {pipeline_mode = #tpu.pipeline_mode<synchronous>, transform_indices = @transform_2, window_bounds = array<i64: 1, 4096>}, {transform_indices = @transform_3, window_bounds = array<i64: 96, 4096>}]} {
    %c0 = arith.constant 0 : index
    %c0_0 = arith.constant 0 : index
    %0 = vector.load %arg1[%c0, %c0_0] : memref<96x32xbf16, #tpu.memory_space<vmem>>, vector<96x32xbf16>
    %c0_1 = arith.constant 0 : index
    %c0_2 = arith.constant 0 : index
    %1 = vector.load %arg2[%c0_1, %c0_2] : memref<32x4096xbf16, #tpu.memory_space<vmem>>, vector<32x4096xbf16>
    %cst = arith.constant dense<0.000000e+00> : vector<96x4096xf32>
    %2 = tpu.matmul %0, %1, %cst {dimension_numbers = #tpu.dot_dimension_numbers<[1], [0], [0], [1], [0, 0, 1, 1], [], []>} : vector<96x32xbf16>, vector<32x4096xbf16>, vector<96x4096xf32> -> vector<96x4096xf32>
    %c0_3 = arith.constant 0 : index
    %c0_4 = arith.constant 0 : index
    %3 = vector.load %arg3[%c0_3, %c0_4] : memref<1x4096xf32, #tpu.memory_space<vmem>>, vector<1x4096xf32>
    %4 = vector.broadcast %3 : vector<1x4096xf32> to vector<96x4096xf32>
    %5 = arith.addf %2, %4 : vector<96x4096xf32>
    %c0_5 = arith.constant 0 : index
    %c0_6 = arith.constant 0 : index
    %6 = vector.load %arg4[%c0_5, %c0_6] : memref<96x4096xf32, #tpu.memory_space<vmem>>, vector<96x4096xf32>
    tpu.vector_store %arg4[%c0_5, %c0_6], %5 {strides = array<i32>} : memref<96x4096xf32, #tpu.memory_space<vmem>>, vector<96x4096xf32>,
    return
  }
  func.func @transform_0(%arg0: i32) -> (i32, i32) {
    %c0_i32 = arith.constant 0 : i32
    %c0_i32_0 = arith.constant 0 : i32
    return %arg0, %c0_i32 : i32, i32
  }
  func.func @transform_1(%arg0: i32) -> (i32, i32) {
    %c0_i32 = arith.constant 0 : i32
    %c0_i32_0 = arith.constant 0 : i32
    %c0_i32_1 = arith.constant 0 : i32
    return %c0_i32, %c0_i32_0 : i32, i32
  }
  func.func @transform_2(%arg0: i32) -> (i32, i32) {
    %c0_i32 = arith.constant 0 : i32
    %c0_i32_0 = arith.constant 0 : i32
    %c0_i32_1 = arith.constant 0 : i32
    return %c0_i32, %c0_i32_0 : i32, i32
  }
  func.func @transform_3(%arg0: i32) -> (i32, i32) {
    %c0_i32 = arith.constant 0 : i32
    %c0_i32_0 = arith.constant 0 : i32
    return %arg0, %c0_i32 : i32, i32
  }
}

module attributes {stable_mosaic.version = 11 : i64} {
  func.func @_bias_act_kernel(%arg0: i32, %arg1: memref<256x64xf32, #tpu.memory_space<vmem>>, %arg2: memref<1x64xf32, #tpu.memory_space<vmem>>, %arg3: memref<256x64xbf16, #tpu.memory_space<vmem>>) attributes {dimension_semantics = [#tpu.dimension_semantics<parallel>], iteration_bounds = array<i64: 4>, scalar_prefetch = 0 : i64, scratch_operands = 0 : i64, tpu.core_type = #tpu.core_type<tc>, window_params = [{transform_indices = @transform_0, window_bounds = array<i64: 256, 64>}, {pipeline_mode = #tpu.pipeline_mode<synchronous>, transform_indices = @transform_1, window_bounds = array<i64: 1, 64>}, {transform_indices = @transform_2, window_bounds = array<i64: 256, 64>}]} {
    %c0 = arith.constant 0 : index
    %c0_0 = arith.constant 0 : index
    %0 = vector.load %arg1[%c0, %c0_0] : memref<256x64xf32, #tpu.memory_space<vmem>>, vector<256x64xf32>
    %c0_1 = arith.constant 0 : index
    %c0_2 = arith.constant 0 : index
    %1 = vector.load %arg2[%c0_1, %c0_2] : memref<1x64xf32, #tpu.memory_space<vmem>>, vector<1x64xf32>
    %2 = vector.broadcast %1 : vector<1x64xf32> to vector<256x64xf32>
    %3 = arith.addf %0, %2 : vector<256x64xf32>
    %cst = arith.constant 0.000000e+00 : f32
    %4 = vector.broadcast %cst : f32 to vector<256x64xf32>
    %5 = arith.maximumf %3, %4 : vector<256x64xf32>
    %6 = arith.truncf %5 : vector<256x64xf32> to vector<256x64xbf16>
    %c0_3 = arith.constant 0 : index
    %c0_4 = arith.constant 0 : index
    %7 = vector.load %arg3[%c0_3, %c0_4] : memref<256x64xbf16, #tpu.memory_space<vmem>>, vector<256x64xbf16>
    tpu.vector_store %arg3[%c0_3, %c0_4], %6 {strides = array<i32>} : memref<256x64xbf16, #tpu.memory_space<vmem>>, vector<256x64xbf16>,
    return
  }
  func.func @transform_0(%arg0: i32) -> (i32, i32) {
    %c0_i32 = arith.constant 0 : i32
    %c0_i32_0 = arith.constant 0 : i32
    return %arg0, %c0_i32 : i32, i32
  }
  func.func @transform_1(%arg0: i32) -> (i32, i32) {
    %c0_i32 = arith.constant 0 : i32
    %c0_i32_0 = arith.constant 0 : i32
    %c0_i32_1 = arith.constant 0 : i32
    return %c0_i32, %c0_i32_0 : i32, i32
  }
  func.func @transform_2(%arg0: i32) -> (i32, i32) {
    %c0_i32 = arith.constant 0 : i32
    %c0_i32_0 = arith.constant 0 : i32
    return %arg0, %c0_i32 : i32, i32
  }
}

module attributes {stable_mosaic.version = 11 : i64} {
  func.func @_gemm_bias_act_kernel(%arg0: i32, %arg1: memref<256x64xbf16, #tpu.memory_space<vmem>>, %arg2: memref<64x864xbf16, #tpu.memory_space<vmem>>, %arg3: memref<1x864xf32, #tpu.memory_space<vmem>>, %arg4: memref<256x864xf32, #tpu.memory_space<vmem>>) attributes {dimension_semantics = [#tpu.dimension_semantics<parallel>], iteration_bounds = array<i64: 4>, scalar_prefetch = 0 : i64, scratch_operands = 0 : i64, tpu.core_type = #tpu.core_type<tc>, window_params = [{transform_indices = @transform_0, window_bounds = array<i64: 256, 64>}, {pipeline_mode = #tpu.pipeline_mode<synchronous>, transform_indices = @transform_1, window_bounds = array<i64: 64, 864>}, {pipeline_mode = #tpu.pipeline_mode<synchronous>, transform_indices = @transform_2, window_bounds = array<i64: 1, 864>}, {transform_indices = @transform_3, window_bounds = array<i64: 256, 864>}]} {
    %c0 = arith.constant 0 : index
    %c0_0 = arith.constant 0 : index
    %0 = vector.load %arg1[%c0, %c0_0] : memref<256x64xbf16, #tpu.memory_space<vmem>>, vector<256x64xbf16>
    %c0_1 = arith.constant 0 : index
    %c0_2 = arith.constant 0 : index
    %1 = vector.load %arg2[%c0_1, %c0_2] : memref<64x864xbf16, #tpu.memory_space<vmem>>, vector<64x864xbf16>
    %cst = arith.constant dense<0.000000e+00> : vector<256x864xf32>
    %2 = tpu.matmul %0, %1, %cst {dimension_numbers = #tpu.dot_dimension_numbers<[1], [0], [0], [1], [0, 0, 1, 1], [], []>} : vector<256x64xbf16>, vector<64x864xbf16>, vector<256x864xf32> -> vector<256x864xf32>
    %c0_3 = arith.constant 0 : index
    %c0_4 = arith.constant 0 : index
    %3 = vector.load %arg3[%c0_3, %c0_4] : memref<1x864xf32, #tpu.memory_space<vmem>>, vector<1x864xf32>
    %4 = vector.broadcast %3 : vector<1x864xf32> to vector<256x864xf32>
    %5 = arith.addf %2, %4 : vector<256x864xf32>
    %c0_5 = arith.constant 0 : index
    %c0_6 = arith.constant 0 : index
    %6 = vector.load %arg4[%c0_5, %c0_6] : memref<256x864xf32, #tpu.memory_space<vmem>>, vector<256x864xf32>
    tpu.vector_store %arg4[%c0_5, %c0_6], %5 {strides = array<i32>} : memref<256x864xf32, #tpu.memory_space<vmem>>, vector<256x864xf32>,
    return
  }
  func.func @transform_0(%arg0: i32) -> (i32, i32) {
    %c0_i32 = arith.constant 0 : i32
    %c0_i32_0 = arith.constant 0 : i32
    return %arg0, %c0_i32 : i32, i32
  }
  func.func @transform_1(%arg0: i32) -> (i32, i32) {
    %c0_i32 = arith.constant 0 : i32
    %c0_i32_0 = arith.constant 0 : i32
    %c0_i32_1 = arith.constant 0 : i32
    return %c0_i32, %c0_i32_0 : i32, i32
  }
  func.func @transform_2(%arg0: i32) -> (i32, i32) {
    %c0_i32 = arith.constant 0 : i32
    %c0_i32_0 = arith.constant 0 : i32
    %c0_i32_1 = arith.constant 0 : i32
    return %c0_i32, %c0_i32_0 : i32, i32
  }
  func.func @transform_3(%arg0: i32) -> (i32, i32) {
    %c0_i32 = arith.constant 0 : i32
    %c0_i32_0 = arith.constant 0 : i32
    return %arg0, %c0_i32 : i32, i32
  }
}

module attributes {stable_mosaic.version = 11 : i64} {
  func.func @_bias_act_kernel(%arg0: i32, %arg1: memref<256x32xf32, #tpu.memory_space<vmem>>, %arg2: memref<1x32xf32, #tpu.memory_space<vmem>>, %arg3: memref<256x32xbf16, #tpu.memory_space<vmem>>) attributes {dimension_semantics = [#tpu.dimension_semantics<parallel>], iteration_bounds = array<i64: 18>, scalar_prefetch = 0 : i64, scratch_operands = 0 : i64, tpu.core_type = #tpu.core_type<tc>, window_params = [{transform_indices = @transform_0, window_bounds = array<i64: 256, 32>}, {pipeline_mode = #tpu.pipeline_mode<synchronous>, transform_indices = @transform_1, window_bounds = array<i64: 1, 32>}, {transform_indices = @transform_2, window_bounds = array<i64: 256, 32>}]} {
    %c0 = arith.constant 0 : index
    %c0_0 = arith.constant 0 : index
    %0 = vector.load %arg1[%c0, %c0_0] : memref<256x32xf32, #tpu.memory_space<vmem>>, vector<256x32xf32>
    %c0_1 = arith.constant 0 : index
    %c0_2 = arith.constant 0 : index
    %1 = vector.load %arg2[%c0_1, %c0_2] : memref<1x32xf32, #tpu.memory_space<vmem>>, vector<1x32xf32>
    %2 = vector.broadcast %1 : vector<1x32xf32> to vector<256x32xf32>
    %3 = arith.addf %0, %2 : vector<256x32xf32>
    %cst = arith.constant 0.000000e+00 : f32
    %4 = vector.broadcast %cst : f32 to vector<256x32xf32>
    %5 = arith.maximumf %3, %4 : vector<256x32xf32>
    %6 = arith.truncf %5 : vector<256x32xf32> to vector<256x32xbf16>
    %c0_3 = arith.constant 0 : index
    %c0_4 = arith.constant 0 : index
    %7 = vector.load %arg3[%c0_3, %c0_4] : memref<256x32xbf16, #tpu.memory_space<vmem>>, vector<256x32xbf16>
    tpu.vector_store %arg3[%c0_3, %c0_4], %6 {strides = array<i32>} : memref<256x32xbf16, #tpu.memory_space<vmem>>, vector<256x32xbf16>,
    return
  }
  func.func @transform_0(%arg0: i32) -> (i32, i32) {
    %c0_i32 = arith.constant 0 : i32
    %c0_i32_0 = arith.constant 0 : i32
    return %arg0, %c0_i32 : i32, i32
  }
  func.func @transform_1(%arg0: i32) -> (i32, i32) {
    %c0_i32 = arith.constant 0 : i32
    %c0_i32_0 = arith.constant 0 : i32
    %c0_i32_1 = arith.constant 0 : i32
    return %c0_i32, %c0_i32_0 : i32, i32
  }
  func.func @transform_2(%arg0: i32) -> (i32, i32) {
    %c0_i32 = arith.constant 0 : i32
    %c0_i32_0 = arith.constant 0 : i32
    return %arg0, %c0_i32 : i32, i32
  }
}

module attributes {stable_mosaic.version = 11 : i64} {
  func.func @_gemm_bias_act_kernel(%arg0: i32, %arg1: memref<256x32xbf16, #tpu.memory_space<vmem>>, %arg2: memref<32x12xbf16, #tpu.memory_space<vmem>>, %arg3: memref<1x12xf32, #tpu.memory_space<vmem>>, %arg4: memref<256x12xf32, #tpu.memory_space<vmem>>) attributes {dimension_semantics = [#tpu.dimension_semantics<parallel>], iteration_bounds = array<i64: 18>, scalar_prefetch = 0 : i64, scratch_operands = 0 : i64, tpu.core_type = #tpu.core_type<tc>, window_params = [{transform_indices = @transform_0, window_bounds = array<i64: 256, 32>}, {pipeline_mode = #tpu.pipeline_mode<synchronous>, transform_indices = @transform_1, window_bounds = array<i64: 32, 12>}, {pipeline_mode = #tpu.pipeline_mode<synchronous>, transform_indices = @transform_2, window_bounds = array<i64: 1, 12>}, {transform_indices = @transform_3, window_bounds = array<i64: 256, 12>}]} {
    %c0 = arith.constant 0 : index
    %c0_0 = arith.constant 0 : index
    %0 = vector.load %arg1[%c0, %c0_0] : memref<256x32xbf16, #tpu.memory_space<vmem>>, vector<256x32xbf16>
    %c0_1 = arith.constant 0 : index
    %c0_2 = arith.constant 0 : index
    %1 = vector.load %arg2[%c0_1, %c0_2] : memref<32x12xbf16, #tpu.memory_space<vmem>>, vector<32x12xbf16>
    %cst = arith.constant dense<0.000000e+00> : vector<256x12xf32>
    %2 = tpu.matmul %0, %1, %cst {dimension_numbers = #tpu.dot_dimension_numbers<[1], [0], [0], [1], [0, 0, 1, 1], [], []>} : vector<256x32xbf16>, vector<32x12xbf16>, vector<256x12xf32> -> vector<256x12xf32>
    %c0_3 = arith.constant 0 : index
    %c0_4 = arith.constant 0 : index
    %3 = vector.load %arg3[%c0_3, %c0_4] : memref<1x12xf32, #tpu.memory_space<vmem>>, vector<1x12xf32>
    %4 = vector.broadcast %3 : vector<1x12xf32> to vector<256x12xf32>
    %5 = arith.addf %2, %4 : vector<256x12xf32>
    %c0_5 = arith.constant 0 : index
    %c0_6 = arith.constant 0 : index
    %6 = vector.load %arg4[%c0_5, %c0_6] : memref<256x12xf32, #tpu.memory_space<vmem>>, vector<256x12xf32>
    tpu.vector_store %arg4[%c0_5, %c0_6], %5 {strides = array<i32>} : memref<256x12xf32, #tpu.memory_space<vmem>>, vector<256x12xf32>,
    return
  }
  func.func @transform_0(%arg0: i32) -> (i32, i32) {
    %c0_i32 = arith.constant 0 : i32
    %c0_i32_0 = arith.constant 0 : i32
    return %arg0, %c0_i32 : i32, i32
  }
  func.func @transform_1(%arg0: i32) -> (i32, i32) {
    %c0_i32 = arith.constant 0 : i32
    %c0_i32_0 = arith.constant 0 : i32
    %c0_i32_1 = arith.constant 0 : i32
    return %c0_i32, %c0_i32_0 : i32, i32
  }
  func.func @transform_2(%arg0: i32) -> (i32, i32) {
    %c0_i32 = arith.constant 0 : i32
    %c0_i32_0 = arith.constant 0 : i32
    %c0_i32_1 = arith.constant 0 : i32
    return %c0_i32, %c0_i32_0 : i32, i32
  }
  func.func @transform_3(%arg0: i32) -> (i32, i32) {
    %c0_i32 = arith.constant 0 : i32
    %c0_i32_0 = arith.constant 0 : i32
    return %arg0, %c0_i32 : i32, i32
  }
}

module attributes {stable_mosaic.version = 11 : i64} {
  func.func @_bias_act_kernel(%arg0: i32, %arg1: memref<256x16xf32, #tpu.memory_space<vmem>>, %arg2: memref<1x16xf32, #tpu.memory_space<vmem>>, %arg3: memref<256x16xf32, #tpu.memory_space<vmem>>) attributes {dimension_semantics = [#tpu.dimension_semantics<parallel>], iteration_bounds = array<i64: 2>, scalar_prefetch = 0 : i64, scratch_operands = 0 : i64, tpu.core_type = #tpu.core_type<tc>, window_params = [{transform_indices = @transform_0, window_bounds = array<i64: 256, 16>}, {pipeline_mode = #tpu.pipeline_mode<synchronous>, transform_indices = @transform_1, window_bounds = array<i64: 1, 16>}, {transform_indices = @transform_2, window_bounds = array<i64: 256, 16>}]} {
    %c0 = arith.constant 0 : index
    %c0_0 = arith.constant 0 : index
    %0 = vector.load %arg1[%c0, %c0_0] : memref<256x16xf32, #tpu.memory_space<vmem>>, vector<256x16xf32>
    %c0_1 = arith.constant 0 : index
    %c0_2 = arith.constant 0 : index
    %1 = vector.load %arg2[%c0_1, %c0_2] : memref<1x16xf32, #tpu.memory_space<vmem>>, vector<1x16xf32>
    %2 = vector.broadcast %1 : vector<1x16xf32> to vector<256x16xf32>
    %3 = arith.addf %0, %2 : vector<256x16xf32>
    %cst = arith.constant 0.000000e+00 : f32
    %4 = vector.broadcast %cst : f32 to vector<256x16xf32>
    %5 = arith.subf %4, %3 : vector<256x16xf32>
    %6 = math.exp %5 : vector<256x16xf32>
    %cst_3 = arith.constant 1.000000e+00 : f32
    %7 = vector.broadcast %cst_3 : f32 to vector<256x16xf32>
    %8 = arith.addf %7, %6 : vector<256x16xf32>
    %cst_4 = arith.constant 1.000000e+00 : f32
    %9 = vector.broadcast %cst_4 : f32 to vector<256x16xf32>
    %10 = arith.divf %9, %8 : vector<256x16xf32>
    %c0_5 = arith.constant 0 : index
    %c0_6 = arith.constant 0 : index
    %11 = vector.load %arg3[%c0_5, %c0_6] : memref<256x16xf32, #tpu.memory_space<vmem>>, vector<256x16xf32>
    tpu.vector_store %arg3[%c0_5, %c0_6], %10 {strides = array<i32>} : memref<256x16xf32, #tpu.memory_space<vmem>>, vector<256x16xf32>,
    return
  }
  func.func @transform_0(%arg0: i32) -> (i32, i32) {
    %c0_i32 = arith.constant 0 : i32
    %c0_i32_0 = arith.constant 0 : i32
    return %arg0, %c0_i32 : i32, i32
  }
  func.func @transform_1(%arg0: i32) -> (i32, i32) {
    %c0_i32 = arith.constant 0 : i32
    %c0_i32_0 = arith.constant 0 : i32
    %c0_i32_1 = arith.constant 0 : i32
    return %c0_i32, %c0_i32_0 : i32, i32
  }
  func.func @transform_2(%arg0: i32) -> (i32, i32) {
    %c0_i32 = arith.constant 0 : i32
    %c0_i32_0 = arith.constant 0 : i32
    return %arg0, %c0_i32 : i32, i32
  }
}

</mosaic_0001>

<llo_original>
// kernel: conv3d_autoencoder_forward.10
$region0: #{conv3d_autoencoder_forward.10}
  #allocation0 [shape = 'u32[]', space=smem, size = 0x4, offset = 0x4, fixed_abs, tag = 'smem constant byte address 0x4 - core index']
  #allocation1 [shape = 'u32[144,128]{1,0:T(1,128)}', space=vmem, size = 0x12000, scoped, tag = 'internal scratch']
  %s0 = inlined_call_operand.vmem [shape: bf16[768,64], index: 0, kind: input, shape index: {}]
  %s1 = inlined_call_operand.vmem [shape: bf16[64,64], index: 1, kind: input, shape index: {}]
  %s2 = inlined_call_operand.vmem [shape: f32[1,64], index: 2, kind: input, shape index: {}]
  %s3 = inlined_call_operand.vmem [shape: bf16[768,64], index: 3, kind: output, shape index: {}]
  %s4 = sld [smem:[#allocation0]]
  $region45: #{conv3d_autoencoder_forward.10} parent=0
    _
  %s6 = ssub.s32 1, %s4
  %s7 = scalar_select 0, %s6, %s4
  loop: start=0, step=1, limit=5
  $region2: #{conv3d_autoencoder_forward.10} parent=0 // loop_pre_header
    _
  $region3: #{conv3d_autoencoder_forward.10} parent=0 // loop_header
    %s9 = sphi 0, %s13
    %p10 = scmp.ge.s32.totalorder %s9, 5
    %s19 = sphi 0, %s21
    %s22 = sphi 0, %s19
    %s23 = sphi 0, %s22
    %s39 = sphi 0, %s23
    %s43 = sphi 0, %s43
    %s45 = sphi 0, %s43
    %s46 = sphi 0, %s45
    %s60 = sphi 0, %s46
    %s64 = sphi 0, %s64
    %s66 = sphi 0, %s64
    %s67 = sphi 0, %s66
    %s81 = sphi 0, %s67
    %s87 = sphi 0, %s89
    %s90 = sphi 0, %s87
    %s91 = sphi 0, %s90
    %s107 = sphi 0, %s91
  $region4: #{conv3d_autoencoder_forward.10} parent=0 // loop_header_branch
    %12 = sbr.rel (%p10) target = $region8
  $region5: #{conv3d_autoencoder_forward.10} parent=0 // loop_body
    %s14 = ssub.s32 %s9, 1
    %s15 = ssub.s32 %s9, 2
    %s16 = sadd.s32 %s9, 1
    %s17 = ssub.s32 %s9, %s16
    %p18 = scmp.eq.s32.totalorder %s17, 0
    %s20 = sadd.s32 %s19, 1
    %s21 = scalar_select %p18, %s19, %s20
    %p24 = pneg %p18
    %p25 = scmp.eq.s32.totalorder %s9, 2
    %p26 = por %p24, %p25
    %p27 = scmp.ne.s32.totalorder %s19, %s22
    %p28 = scmp.eq.s32.totalorder %s9, 0
    %p29 = por %p27, %p28
    %p30 = scmp.ne.s32.totalorder %s19, %s22
    %p31 = scmp.eq.s32.totalorder %s14, 2
    %p32 = por %p30, %p31
    %p33 = scmp.ne.s32.totalorder %s22, %s23
    %p34 = scmp.eq.s32.totalorder %s14, 0
    %p35 = por %p33, %p34
    %p36 = scmp.ne.s32.totalorder %s22, %s23
    %p37 = scmp.eq.s32.totalorder %s15, 2
    %p38 = por %p36, %p37
    %p40 = scmp.ne.s32.totalorder %s23, %s39
    %p41 = scmp.eq.s32.totalorder %s15, 0
    %p42 = por %p40, %p41
    %s44 = sadd.s32 %s43, 1
    %p47 = scmp.eq.s32.totalorder %s9, 2
    %p48 = scmp.ne.s32.totalorder %s43, %s45
    %p49 = scmp.eq.s32.totalorder %s9, 0
    %p50 = por %p48, %p49
    %p51 = scmp.ne.s32.totalorder %s43, %s45
    %p52 = scmp.eq.s32.totalorder %s14, 2
    %p53 = por %p51, %p52
    %p54 = scmp.ne.s32.totalorder %s45, %s46
    %p55 = scmp.eq.s32.totalorder %s14, 0
    %p56 = por %p54, %p55
    %p57 = scmp.ne.s32.totalorder %s45, %s46
    %p58 = scmp.eq.s32.totalorder %s15, 2
    %p59 = por %p57, %p58
    %p61 = scmp.ne.s32.totalorder %s46, %s60
    %p62 = scmp.eq.s32.totalorder %s15, 0
    %p63 = por %p61, %p62
    %s65 = sadd.s32 %s64, 1
    %p68 = scmp.eq.s32.totalorder %s9, 2
    %p69 = scmp.ne.s32.totalorder %s64, %s66
    %p70 = scmp.eq.s32.totalorder %s9, 0
    %p71 = por %p69, %p70
    %p72 = scmp.ne.s32.totalorder %s64, %s66
    %p73 = scmp.eq.s32.totalorder %s14, 2
    %p74 = por %p72, %p73
    %p75 = scmp.ne.s32.totalorder %s66, %s67
    %p76 = scmp.eq.s32.totalorder %s14, 0
    %p77 = por %p75, %p76
    %p78 = scmp.ne.s32.totalorder %s66, %s67
    %p79 = scmp.eq.s32.totalorder %s15, 2
    %p80 = por %p78, %p79
    %p82 = scmp.ne.s32.totalorder %s67, %s81
    %p83 = scmp.eq.s32.totalorder %s15, 0
    %p84 = por %p82, %p83
    %s85 = ssub.s32 %s9, %s16
    %p86 = scmp.eq.s32.totalorder %s85, 0
    %s88 = sadd.s32 %s87, 1
    %s89 = scalar_select %p86, %s87, %s88
    %p92 = pneg %p86
    %p93 = scmp.eq.s32.totalorder %s9, 2
    %p94 = por %p92, %p93
    %p95 = scmp.ne.s32.totalorder %s87, %s90
    %p96 = scmp.eq.s32.totalorder %s9, 0
    %p97 = por %p95, %p96
    %p98 = scmp.ne.s32.totalorder %s87, %s90
    %p99 = scmp.eq.s32.totalorder %s14, 2
    %p100 = por %p98, %p99
    %p101 = scmp.ne.s32.totalorder %s90, %s91
    %p102 = scmp.eq.s32.totalorder %s14, 0
    %p103 = por %p101, %p102
    %p104 = scmp.ne.s32.totalorder %s90, %s91
    %p105 = scmp.eq.s32.totalorder %s15, 2
    %p106 = por %p104, %p105
    %p108 = scmp.ne.s32.totalorder %s91, %s107
    %p109 = scmp.eq.s32.totalorder %s15, 0
    %p110 = por %p108, %p109
    %p111 = scmp.le.s32.totalorder 1, %s9
    %p112 = scmp.lt.s32.totalorder %s9, 4
    %p113 = pnand %p111, %p112
    %p114 = pneg %p113
    // Predicated region
    $region9: #{conv3d_autoencoder_forward.10} parent=5 // pred_check
      _
    $region10: #{conv3d_autoencoder_forward.10} parent=5 // pred_check_branch
      %116 = sbr.rel (%p113) target = $region12
    $region11: #{conv3d_autoencoder_forward.10} parent=5 // pred_region
      %s117 = ssub.s32 %s9, 1
      // Predicated region
      $region13: #{conv3d_autoencoder_forward.10} parent=11 // pred_check
        %p118 = pneg %p56
      $region14: #{conv3d_autoencoder_forward.10} parent=11 // pred_check_branch
        %120 = sbr.rel (%p118) target = $region16
      $region15: #{conv3d_autoencoder_forward.10} parent=11 // pred_region
        _
      $region16: #{conv3d_autoencoder_forward.10} parent=11 // pred_fallthru
        _
      // Predicated region
      $region17: #{conv3d_autoencoder_forward.10} parent=11 // pred_check
        %p121 = pneg %p77
      $region18: #{conv3d_autoencoder_forward.10} parent=11 // pred_check_branch
        %123 = sbr.rel (%p121) target = $region20
      $region19: #{conv3d_autoencoder_forward.10} parent=11 // pred_region
        _
      $region20: #{conv3d_autoencoder_forward.10} parent=11 // pred_fallthru
        _
    $region12: #{conv3d_autoencoder_forward.10} parent=5 // pred_fallthru
      _
    %p124 = scmp.lt.s32.totalorder %s9, 3
    // Predicated region
    $region21: #{conv3d_autoencoder_forward.10} parent=5 // pred_check
      %p125 = pneg %p124
    $region22: #{conv3d_autoencoder_forward.10} parent=5 // pred_check_branch
      %127 = sbr.rel (%p125) target = $region24
    $region23: #{conv3d_autoencoder_forward.10} parent=5 // pred_region
      // Predicated region
      $region25: #{conv3d_autoencoder_forward.10} parent=23 // pred_check
        %p128 = pneg %p29
      $region26: #{conv3d_autoencoder_forward.10} parent=23 // pred_check_branch
        %130 = sbr.rel (%p128) target = $region28
      $region27: #{conv3d_autoencoder_forward.10} parent=23 // pred_region
        %s131 = smul.u32 32, %s9
        %p132 = scmp.lt.s32.totalorder %s131, 95
        %s133 = scalar_select %p132, %s131, 95
        %s134 = smul.addr %s133, 4
        %s135 = scalar_lea.vmem %s0, %s134
        %s136 = smul.u32 32, %s9
      $region28: #{conv3d_autoencoder_forward.10} parent=23 // pred_fallthru
        _
    $region24: #{conv3d_autoencoder_forward.10} parent=5 // pred_fallthru
      _
    %p137 = scmp.le.s32.totalorder 1, %s9
    %p138 = scmp.lt.s32.totalorder %s9, 4
    %p139 = pnand %p137, %p138
    %p140 = pneg %p139
    // Predicated region
    $region29: #{conv3d_autoencoder_forward.10} parent=5 // pred_check
      _
    $region30: #{conv3d_autoencoder_forward.10} parent=5 // pred_check_branch
      %142 = sbr.rel (%p139) target = $region32
    $region31: #{conv3d_autoencoder_forward.10} parent=5 // pred_region
      %s143 = ssub.s32 %s9, 1
      %s144 = smul.u32 32, %s14
      %p145 = scmp.lt.s32.totalorder %s144, 95
      %s146 = scalar_select %p145, %s144, 95
      %s147 = smul.addr %s146, 4
      %s148 = scalar_lea.vmem %s0, %s147
      %p149 = pneg %p35
      %p150 = pneg %p32
      %p151 = pneg %p56
      %p152 = pneg %p53
      %p153 = pneg %p77
      %p154 = pneg %p74
      %p155 = pneg %p103
      %p156 = pneg %p100
      %s157 = smul.u32 32, %s14
      %p158 = scmp.lt.s32.totalorder %s157, 95
      %s159 = scalar_select %p158, %s157, 95
      %s160 = smul.addr %s159, 4
      %s161 = scalar_lea.vmem %s3, %s160
      %s162 = smul.u32 32, %s14
      %p163 = scmp.lt.s32.totalorder %s162, 95
      %s164 = scalar_select %p163, %s162, 95
      %s165 = smul.addr %s164, 4
      %s166 = scalar_lea.vmem %s0, %s165
      %s167 = smul.u32 32, %s14
      %s168 = smul.u32 32, %s14
      %p169 = scmp.lt.s32.totalorder %s168, 95
      %s170 = scalar_select %p169, %s168, 95
      %s171 = smul.addr %s170, 4
      %s172 = scalar_lea.vmem %s3, %s171
      %s173 = smul.u32 32, %s14
      %v175 = vld [vmem:[%s166] sm:$0xf]
      %v176 = vld [vmem:[%s166 + $0x4] sm:$0xf]
      %v177 = vld [vmem:[%s166 + $0x8] sm:$0xf]
      %v178 = vld [vmem:[%s166 + $0xc] sm:$0xf]
      %v179 = vld [vmem:[%s166 + $0x10] sm:$0xf]
      %v180 = vld [vmem:[%s166 + $0x14] sm:$0xf]
      %v181 = vld [vmem:[%s166 + $0x18] sm:$0xf]
      %v182 = vld [vmem:[%s166 + $0x1c] sm:$0xf]
      %v183 = vld [vmem:[%s166 + $0x20] sm:$0xf]
      %v184 = vld [vmem:[%s166 + $0x24] sm:$0xf]
      %v185 = vld [vmem:[%s166 + $0x28] sm:$0xf]
      %v186 = vld [vmem:[%s166 + $0x2c] sm:$0xf]
      %v187 = vld [vmem:[%s166 + $0x30] sm:$0xf]
      %v188 = vld [vmem:[%s166 + $0x34] sm:$0xf]
      %v189 = vld [vmem:[%s166 + $0x38] sm:$0xf]
      %v190 = vld [vmem:[%s166 + $0x3c] sm:$0xf]
      %v191 = vld [vmem:[%s166 + $0x40] sm:$0xf]
      %v192 = vld [vmem:[%s166 + $0x44] sm:$0xf]
      %v193 = vld [vmem:[%s166 + $0x48] sm:$0xf]
      %v194 = vld [vmem:[%s166 + $0x4c] sm:$0xf]
      %v195 = vld [vmem:[%s166 + $0x50] sm:$0xf]
      %v196 = vld [vmem:[%s166 + $0x54] sm:$0xf]
      %v197 = vld [vmem:[%s166 + $0x58] sm:$0xf]
      %v198 = vld [vmem:[%s166 + $0x5c] sm:$0xf]
      %v199 = vld [vmem:[%s166 + $0x60] sm:$0xf]
      %v200 = vld [vmem:[%s166 + $0x64] sm:$0xf]
      %v201 = vld [vmem:[%s166 + $0x68] sm:$0xf]
      %v202 = vld [vmem:[%s166 + $0x6c] sm:$0xf]
      %v203 = vld [vmem:[%s166 + $0x70] sm:$0xf]
      %v204 = vld [vmem:[%s166 + $0x74] sm:$0xf]
      %v205 = vld [vmem:[%s166 + $0x78] sm:$0xf]
      %v206 = vld [vmem:[%s166 + $0x7c] sm:$0xf]
      %v207 = vld [vmem:[%s1] sm:$0xf]
      %v208 = vld [vmem:[%s1 + $0x4] sm:$0xf]
      %v209 = vld [vmem:[%s1 + $0x8] sm:$0xf]
      %v210 = vld [vmem:[%s1 + $0xc] sm:$0xf]
      %v211 = vld [vmem:[%s1 + $0x10] sm:$0xf]
      %v212 = vld [vmem:[%s1 + $0x14] sm:$0xf]
      %v213 = vld [vmem:[%s1 + $0x18] sm:$0xf]
      %v214 = vld [vmem:[%s1 + $0x1c] sm:$0xf]
      %v215 = vld [vmem:[%s2] sm:$0x1]
      %v217 = vlaneseq
      %v218 = vshrl.u32 %v217, 7
      %v219 = vsub.s32 0, %v218
      %v220 = vrot.slane %v215, %v219
      %v254 = vunpack.c.l.b16 %v175
      %v255 = vunpack.c.l.b16 %v176
      %v256 = vunpack.c.l.b16 %v177
      %v257 = vunpack.c.l.b16 %v178
      %v258 = vunpack.c.l.b16 %v179
      %v259 = vunpack.c.l.b16 %v180
      %v260 = vunpack.c.l.b16 %v181
      %v261 = vunpack.c.l.b16 %v182
      %v262 = vunpack.c.l.b16 %v183
      %v263 = vunpack.c.l.b16 %v184
      %v264 = vunpack.c.l.b16 %v185
      %v265 = vunpack.c.l.b16 %v186
      %v266 = vunpack.c.l.b16 %v187
      %v267 = vunpack.c.l.b16 %v188
      %v268 = vunpack.c.l.b16 %v189
      %v269 = vunpack.c.l.b16 %v190
      %v270 = vunpack.c.l.b16 %v191
      %v271 = vunpack.c.l.b16 %v192
      %v272 = vunpack.c.l.b16 %v193
      %v273 = vunpack.c.l.b16 %v194
      %v274 = vunpack.c.l.b16 %v195
      %v275 = vunpack.c.l.b16 %v196
      %v276 = vunpack.c.l.b16 %v197
      %v277 = vunpack.c.l.b16 %v198
      %v278 = vunpack.c.l.b16 %v199
      %v279 = vunpack.c.l.b16 %v200
      %v280 = vunpack.c.l.b16 %v201
      %v281 = vunpack.c.l.b16 %v202
      %v282 = vunpack.c.l.b16 %v203
      %v283 = vunpack.c.l.b16 %v204
      %v284 = vunpack.c.l.b16 %v205
      %v285 = vunpack.c.l.b16 %v206
      %v286 = vpack.c.b16 %v255, %v254
      %v287 = vpack.c.b16 %v257, %v256
      %v288 = vpack.c.b16 %v259, %v258
      %v289 = vpack.c.b16 %v261, %v260
      %v290 = vpack.c.b16 %v263, %v262
      %v291 = vpack.c.b16 %v265, %v264
      %v292 = vpack.c.b16 %v267, %v266
      %v293 = vpack.c.b16 %v269, %v268
      %v294 = vpack.c.b16 %v271, %v270
      %v295 = vpack.c.b16 %v273, %v272
      %v296 = vpack.c.b16 %v275, %v274
      %v297 = vpack.c.b16 %v277, %v276
      %v298 = vpack.c.b16 %v279, %v278
      %v299 = vpack.c.b16 %v281, %v280
      %v300 = vpack.c.b16 %v283, %v282
      %v301 = vpack.c.b16 %v285, %v284
      %v310 = vunpack.c.l.b16 %v207
      %v311 = vunpack.c.l.b16 %v208
      %v312 = vunpack.c.l.b16 %v209
      %v313 = vunpack.c.l.b16 %v210
      %v314 = vunpack.c.l.b16 %v211
      %v315 = vunpack.c.l.b16 %v212
      %v316 = vunpack.c.l.b16 %v213
      %v317 = vunpack.c.l.b16 %v214
      %v318 = vpack.c.b16 %v311, %v310
      %v319 = vpack.c.b16 %v313, %v312
      %v320 = vpack.c.b16 %v315, %v314
      %v321 = vpack.c.b16 %v317, %v316
      %vm326 = vcmask 523264
      %v328 = vsel %vm326, %v286, 0
      %v331 = vsel %vm326, %v287, 0
      %v334 = vsel %vm326, %v288, 0
      %v337 = vsel %vm326, %v289, 0
      %v340 = vsel %vm326, %v290, 0
      %v343 = vsel %vm326, %v291, 0
      %v346 = vsel %vm326, %v292, 0
      %v349 = vsel %vm326, %v293, 0
      %v352 = vsel %vm326, %v294, 0
      %v355 = vsel %vm326, %v295, 0
      %v358 = vsel %vm326, %v296, 0
      %v361 = vsel %vm326, %v297, 0
      %v364 = vsel %vm326, %v298, 0
      %v367 = vsel %vm326, %v299, 0
      %v370 = vsel %vm326, %v300, 0
      %v373 = vsel %vm326, %v301, 0
      %375 = vmatprep.subr.bf16.mxu0 0
      %376 = vmatpush1.bf16.msra.mxu0 %v318
      %377 = vmatprep.subr.bf16.mxu0 0
      %378 = vmatpush1.bf16.msra.mxu0 %v319
      %379 = vmatprep.subr.bf16.mxu0 0
      %380 = vmatpush1.bf16.msra.mxu0 %v320
      %381 = vmatprep.subr.bf16.mxu0 0
      %382 = vmatpush1.bf16.msra.mxu0 %v321
      %383 = vmatprep.subr.bf16.mxu0 0
      %384 = vmatpush1.bf16.msra.mxu0 0
      %385 = vmatprep.subr.bf16.mxu0 0
      %386 = vmatpush1.bf16.msra.mxu0 0
      %387 = vmatprep.subr.bf16.mxu0 0
      %388 = vmatpush1.bf16.msra.mxu0 0
      %389 = vmatprep.subr.bf16.mxu0 0
      %390 = vmatpush1.bf16.msra.mxu0 0
      %391 = vmatprep.subr.bf16.mxu0 0
      %392 = vmatpush1.bf16.msra.mxu0 0
      %393 = vmatprep.subr.bf16.mxu0 0
      %394 = vmatpush1.bf16.msra.mxu0 0
      %395 = vmatprep.subr.bf16.mxu0 0
      %396 = vmatpush1.bf16.msra.mxu0 0
      %397 = vmatprep.subr.bf16.mxu0 0
      %398 = vmatpush1.bf16.msra.mxu0 0
      %399 = vmatprep.subr.bf16.mxu0 0
      %400 = vmatpush1.bf16.msra.mxu0 0
      %401 = vmatprep.subr.bf16.mxu0 0
      %402 = vmatpush1.bf16.msra.mxu0 0
      %403 = vmatprep.subr.bf16.mxu0 0
      %404 = vmatpush1.bf16.msra.mxu0 0
      %405 = vmatprep.subr.bf16.mxu0 0
      %406 = vmatpush1.bf16.msra.mxu0 0
      %407 = vmatprep.mubr.bf16.mxu0 0
      %408 = vmatmul.mubr.bf16.gmra.mrb[0].mxu0 %v328
      %v409 = vpop.f32.mrb[0].mxu0
      %v410 = vadd.f32 %v220, %v409
      %v411 = vpop.f32.mrb[0].mxu0
      %v412 = vpop.f32.mrb[0].mxu0
      %v413 = vadd.f32 %v220, %v412
      %v414 = vpop.f32.mrb[0].mxu0
      %415 = vmatprep.mubr.bf16.mxu0 0
      %416 = vmatmul.mubr.bf16.gmra.mrb[0].mxu0 %v331
      %v417 = vpop.f32.mrb[0].mxu0
      %v418 = vadd.f32 %v220, %v417
      %v419 = vpop.f32.mrb[0].mxu0
      %v420 = vpop.f32.mrb[0].mxu0
      %v421 = vadd.f32 %v220, %v420
      %v422 = vpop.f32.mrb[0].mxu0
      %423 = vmatprep.mubr.bf16.mxu0 0
      %424 = vmatmul.mubr.bf16.gmra.mrb[0].mxu0 %v334
      %v425 = vpop.f32.mrb[0].mxu0
      %v426 = vadd.f32 %v220, %v425
      %v427 = vpop.f32.mrb[0].mxu0
      %v428 = vpop.f32.mrb[0].mxu0
      %v429 = vadd.f32 %v220, %v428
      %v430 = vpop.f32.mrb[0].mxu0
      %431 = vmatprep.mubr.bf16.mxu0 0
      %432 = vmatmul.mubr.bf16.gmra.mrb[0].mxu0 %v337
      %v433 = vpop.f32.mrb[0].mxu0
      %v434 = vadd.f32 %v220, %v433
      %v435 = vpop.f32.mrb[0].mxu0
      %v436 = vpop.f32.mrb[0].mxu0
      %v437 = vadd.f32 %v220, %v436
      %v438 = vpop.f32.mrb[0].mxu0
      %439 = vmatprep.mubr.bf16.mxu0 0
      %440 = vmatmul.mubr.bf16.gmra.mrb[0].mxu0 %v340
      %v441 = vpop.f32.mrb[0].mxu0
      %v442 = vadd.f32 %v220, %v441
      %v443 = vpop.f32.mrb[0].mxu0
      %v444 = vpop.f32.mrb[0].mxu0
      %v445 = vadd.f32 %v220, %v444
      %v446 = vpop.f32.mrb[0].mxu0
      %447 = vmatprep.mubr.bf16.mxu0 0
      %448 = vmatmul.mubr.bf16.gmra.mrb[0].mxu0 %v343
      %v449 = vpop.f32.mrb[0].mxu0
      %v450 = vadd.f32 %v220, %v449
      %v451 = vpop.f32.mrb[0].mxu0
      %v452 = vpop.f32.mrb[0].mxu0
      %v453 = vadd.f32 %v220, %v452
      %v454 = vpop.f32.mrb[0].mxu0
      %455 = vmatprep.mubr.bf16.mxu0 0
      %456 = vmatmul.mubr.bf16.gmra.mrb[0].mxu0 %v346
      %v457 = vpop.f32.mrb[0].mxu0
      %v458 = vadd.f32 %v220, %v457
      %v459 = vpop.f32.mrb[0].mxu0
      %v460 = vpop.f32.mrb[0].mxu0
      %v461 = vadd.f32 %v220, %v460
      %v462 = vpop.f32.mrb[0].mxu0
      %463 = vmatprep.mubr.bf16.mxu0 0
      %464 = vmatmul.mubr.bf16.gmra.mrb[0].mxu0 %v349
      %v465 = vpop.f32.mrb[0].mxu0
      %v466 = vadd.f32 %v220, %v465
      %v467 = vpop.f32.mrb[0].mxu0
      %v468 = vpop.f32.mrb[0].mxu0
      %v469 = vadd.f32 %v220, %v468
      %v470 = vpop.f32.mrb[0].mxu0
      %471 = vmatprep.mubr.bf16.mxu0 0
      %472 = vmatmul.mubr.bf16.gmra.mrb[0].mxu0 %v352
      %v473 = vpop.f32.mrb[0].mxu0
      %v474 = vadd.f32 %v220, %v473
      %v475 = vpop.f32.mrb[0].mxu0
      %v476 = vpop.f32.mrb[0].mxu0
      %v477 = vadd.f32 %v220, %v476
      %v478 = vpop.f32.mrb[0].mxu0
      %479 = vmatprep.mubr.bf16.mxu0 0
      %480 = vmatmul.mubr.bf16.gmra.mrb[0].mxu0 %v355
      %v481 = vpop.f32.mrb[0].mxu0
      %v482 = vadd.f32 %v220, %v481
      %v483 = vpop.f32.mrb[0].mxu0
      %v484 = vpop.f32.mrb[0].mxu0
      %v485 = vadd.f32 %v220, %v484
      %v486 = vpop.f32.mrb[0].mxu0
      %487 = vmatprep.mubr.bf16.mxu0 0
      %488 = vmatmul.mubr.bf16.gmra.mrb[0].mxu0 %v358
      %v489 = vpop.f32.mrb[0].mxu0
      %v490 = vadd.f32 %v220, %v489
      %v491 = vpop.f32.mrb[0].mxu0
      %v492 = vpop.f32.mrb[0].mxu0
      %v493 = vadd.f32 %v220, %v492
      %v494 = vpop.f32.mrb[0].mxu0
      %495 = vmatprep.mubr.bf16.mxu0 0
      %496 = vmatmul.mubr.bf16.gmra.mrb[0].mxu0 %v361
      %v497 = vpop.f32.mrb[0].mxu0
      %v498 = vadd.f32 %v220, %v497
      %v499 = vpop.f32.mrb[0].mxu0
      %v500 = vpop.f32.mrb[0].mxu0
      %v501 = vadd.f32 %v220, %v500
      %v502 = vpop.f32.mrb[0].mxu0
      %503 = vmatprep.mubr.bf16.mxu0 0
      %504 = vmatmul.mubr.bf16.gmra.mrb[0].mxu0 %v364
      %v505 = vpop.f32.mrb[0].mxu0
      %v506 = vadd.f32 %v220, %v505
      %v507 = vpop.f32.mrb[0].mxu0
      %v508 = vpop.f32.mrb[0].mxu0
      %v509 = vadd.f32 %v220, %v508
      %v510 = vpop.f32.mrb[0].mxu0
      %511 = vmatprep.mubr.bf16.mxu0 0
      %512 = vmatmul.mubr.bf16.gmra.mrb[0].mxu0 %v367
      %v513 = vpop.f32.mrb[0].mxu0
      %v514 = vadd.f32 %v220, %v513
      %v515 = vpop.f32.mrb[0].mxu0
      %v516 = vpop.f32.mrb[0].mxu0
      %v517 = vadd.f32 %v220, %v516
      %v518 = vpop.f32.mrb[0].mxu0
      %519 = vmatprep.mubr.bf16.mxu0 0
      %520 = vmatmul.mubr.bf16.gmra.mrb[0].mxu0 %v370
      %v521 = vpop.f32.mrb[0].mxu0
      %v522 = vadd.f32 %v220, %v521
      %v523 = vpop.f32.mrb[0].mxu0
      %v524 = vpop.f32.mrb[0].mxu0
      %v525 = vadd.f32 %v220, %v524
      %v526 = vpop.f32.mrb[0].mxu0
      %527 = vmatprep.mubr.bf16.mxu0 0
      %528 = vmatmul.mubr.bf16.gmra.mrb[0].mxu0 %v373
      %v529 = vpop.f32.mrb[0].mxu0
      %v530 = vadd.f32 %v220, %v529
      %v531 = vpop.f32.mrb[0].mxu0
      %v532 = vpop.f32.mrb[0].mxu0
      %v533 = vadd.f32 %v220, %v532
      %v534 = vpop.f32.mrb[0].mxu0
      %535 = vdwg.mxu0
      %v536 = vmax.f32 %v410, 0.0
      %v537 = vmax.f32 %v413, 0.0
      %v538 = vmax.f32 %v418, 0.0
      %v539 = vmax.f32 %v421, 0.0
      %v540 = vmax.f32 %v426, 0.0
      %v541 = vmax.f32 %v429, 0.0
      %v542 = vmax.f32 %v434, 0.0
      %v543 = vmax.f32 %v437, 0.0
      %v544 = vmax.f32 %v442, 0.0
      %v545 = vmax.f32 %v445, 0.0
      %v546 = vmax.f32 %v450, 0.0
      %v547 = vmax.f32 %v453, 0.0
      %v548 = vmax.f32 %v458, 0.0
      %v549 = vmax.f32 %v461, 0.0
      %v550 = vmax.f32 %v466, 0.0
      %v551 = vmax.f32 %v469, 0.0
      %v552 = vmax.f32 %v474, 0.0
      %v553 = vmax.f32 %v477, 0.0
      %v554 = vmax.f32 %v482, 0.0
      %v555 = vmax.f32 %v485, 0.0
      %v556 = vmax.f32 %v490, 0.0
      %v557 = vmax.f32 %v493, 0.0
      %v558 = vmax.f32 %v498, 0.0
      %v559 = vmax.f32 %v501, 0.0
      %v560 = vmax.f32 %v506, 0.0
      %v561 = vmax.f32 %v509, 0.0
      %v562 = vmax.f32 %v514, 0.0
      %v563 = vmax.f32 %v517, 0.0
      %v564 = vmax.f32 %v522, 0.0
      %v565 = vmax.f32 %v525, 0.0
      %v566 = vmax.f32 %v530, 0.0
      %v567 = vmax.f32 %v533, 0.0
      %v568 = vpack.c.bf16 %v537, %v536
      %v569 = vpack.c.bf16 %v539, %v538
      %v570 = vpack.c.bf16 %v541, %v540
      %v571 = vpack.c.bf16 %v543, %v542
      %v572 = vpack.c.bf16 %v545, %v544
      %v573 = vpack.c.bf16 %v547, %v546
      %v574 = vpack.c.bf16 %v549, %v548
      %v575 = vpack.c.bf16 %v551, %v550
      %v576 = vpack.c.bf16 %v553, %v552
      %v577 = vpack.c.bf16 %v555, %v554
      %v578 = vpack.c.bf16 %v557, %v556
      %v579 = vpack.c.bf16 %v559, %v558
      %v580 = vpack.c.bf16 %v561, %v560
      %v581 = vpack.c.bf16 %v563, %v562
      %v582 = vpack.c.bf16 %v565, %v564
      %v583 = vpack.c.bf16 %v567, %v566
      %v600 = vunpack.c.l.b16 %v568
      %v601 = vunpack.c.h.b16 %v568
      %v602 = vunpack.c.l.b16 %v569
      %v603 = vunpack.c.h.b16 %v569
      %v604 = vunpack.c.l.b16 %v570
      %v605 = vunpack.c.h.b16 %v570
      %v606 = vunpack.c.l.b16 %v571
      %v607 = vunpack.c.h.b16 %v571
      %v608 = vunpack.c.l.b16 %v572
      %v609 = vunpack.c.h.b16 %v572
      %v610 = vunpack.c.l.b16 %v573
      %v611 = vunpack.c.h.b16 %v573
      %v612 = vunpack.c.l.b16 %v574
      %v613 = vunpack.c.h.b16 %v574
      %v614 = vunpack.c.l.b16 %v575
      %v615 = vunpack.c.h.b16 %v575
      %v616 = vunpack.c.l.b16 %v576
      %v617 = vunpack.c.h.b16 %v576
      %v618 = vunpack.c.l.b16 %v577
      %v619 = vunpack.c.h.b16 %v577
      %v620 = vunpack.c.l.b16 %v578
      %v621 = vunpack.c.h.b16 %v578
      %v622 = vunpack.c.l.b16 %v579
      %v623 = vunpack.c.h.b16 %v579
      %v624 = vunpack.c.l.b16 %v580
      %v625 = vunpack.c.h.b16 %v580
      %v626 = vunpack.c.l.b16 %v581
      %v627 = vunpack.c.h.b16 %v581
      %v628 = vunpack.c.l.b16 %v582
      %v629 = vunpack.c.h.b16 %v582
      %v630 = vunpack.c.l.b16 %v583
      %v631 = vunpack.c.h.b16 %v583
      %v632 = vpack.c.b16 %v600, %v600
      %v633 = vpack.c.b16 %v601, %v601
      %v634 = vpack.c.b16 %v602, %v602
      %v635 = vpack.c.b16 %v603, %v603
      %v636 = vpack.c.b16 %v604, %v604
      %v637 = vpack.c.b16 %v605, %v605
      %v638 = vpack.c.b16 %v606, %v606
      %v639 = vpack.c.b16 %v607, %v607
      %v640 = vpack.c.b16 %v608, %v608
      %v641 = vpack.c.b16 %v609, %v609
      %v642 = vpack.c.b16 %v610, %v610
      %v643 = vpack.c.b16 %v611, %v611
      %v644 = vpack.c.b16 %v612, %v612
      %v645 = vpack.c.b16 %v613, %v613
      %v646 = vpack.c.b16 %v614, %v614
      %v647 = vpack.c.b16 %v615, %v615
      %v648 = vpack.c.b16 %v616, %v616
      %v649 = vpack.c.b16 %v617, %v617
      %v650 = vpack.c.b16 %v618, %v618
      %v651 = vpack.c.b16 %v619, %v619
      %v652 = vpack.c.b16 %v620, %v620
      %v653 = vpack.c.b16 %v621, %v621
      %v654 = vpack.c.b16 %v622, %v622
      %v655 = vpack.c.b16 %v623, %v623
      %v656 = vpack.c.b16 %v624, %v624
      %v657 = vpack.c.b16 %v625, %v625
      %v658 = vpack.c.b16 %v626, %v626
      %v659 = vpack.c.b16 %v627, %v627
      %v660 = vpack.c.b16 %v628, %v628
      %v661 = vpack.c.b16 %v629, %v629
      %v662 = vpack.c.b16 %v630, %v630
      %v663 = vpack.c.b16 %v631, %v631
      %vm696 = vcmask 519168
      %697 = vst.msk [vmem:[%s172] sm:$0xf] %vm696, %v632
      %698 = vst.msk [vmem:[%s172 + $0x4] sm:$0xf] %vm696, %v633
      %699 = vst.msk [vmem:[%s172 + $0x8] sm:$0xf] %vm696, %v634
      %700 = vst.msk [vmem:[%s172 + $0xc] sm:$0xf] %vm696, %v635
      %701 = vst.msk [vmem:[%s172 + $0x10] sm:$0xf] %vm696, %v636
      %702 = vst.msk [vmem:[%s172 + $0x14] sm:$0xf] %vm696, %v637
      %703 = vst.msk [vmem:[%s172 + $0x18] sm:$0xf] %vm696, %v638
      %704 = vst.msk [vmem:[%s172 + $0x1c] sm:$0xf] %vm696, %v639
      %705 = vst.msk [vmem:[%s172 + $0x20] sm:$0xf] %vm696, %v640
      %706 = vst.msk [vmem:[%s172 + $0x24] sm:$0xf] %vm696, %v641
      %707 = vst.msk [vmem:[%s172 + $0x28] sm:$0xf] %vm696, %v642
      %708 = vst.msk [vmem:[%s172 + $0x2c] sm:$0xf] %vm696, %v643
      %709 = vst.msk [vmem:[%s172 + $0x30] sm:$0xf] %vm696, %v644
      %710 = vst.msk [vmem:[%s172 + $0x34] sm:$0xf] %vm696, %v645
      %711 = vst.msk [vmem:[%s172 + $0x38] sm:$0xf] %vm696, %v646
      %712 = vst.msk [vmem:[%s172 + $0x3c] sm:$0xf] %vm696, %v647
      %713 = vst.msk [vmem:[%s172 + $0x40] sm:$0xf] %vm696, %v648
      %714 = vst.msk [vmem:[%s172 + $0x44] sm:$0xf] %vm696, %v649
      %715 = vst.msk [vmem:[%s172 + $0x48] sm:$0xf] %vm696, %v650
      %716 = vst.msk [vmem:[%s172 + $0x4c] sm:$0xf] %vm696, %v651
      %717 = vst.msk [vmem:[%s172 + $0x50] sm:$0xf] %vm696, %v652
      %718 = vst.msk [vmem:[%s172 + $0x54] sm:$0xf] %vm696, %v653
      %719 = vst.msk [vmem:[%s172 + $0x58] sm:$0xf] %vm696, %v654
      %720 = vst.msk [vmem:[%s172 + $0x5c] sm:$0xf] %vm696, %v655
      %721 = vst.msk [vmem:[%s172 + $0x60] sm:$0xf] %vm696, %v656
      %722 = vst.msk [vmem:[%s172 + $0x64] sm:$0xf] %vm696, %v657
      %723 = vst.msk [vmem:[%s172 + $0x68] sm:$0xf] %vm696, %v658
      %724 = vst.msk [vmem:[%s172 + $0x6c] sm:$0xf] %vm696, %v659
      %725 = vst.msk [vmem:[%s172 + $0x70] sm:$0xf] %vm696, %v660
      %726 = vst.msk [vmem:[%s172 + $0x74] sm:$0xf] %vm696, %v661
      %727 = vst.msk [vmem:[%s172 + $0x78] sm:$0xf] %vm696, %v662
      %728 = vst.msk [vmem:[%s172 + $0x7c] sm:$0xf] %vm696, %v663
      %s729 = smul.u32 32, %s14
      %p730 = scmp.lt.s32.totalorder %s729, 95
      %s731 = scalar_select %p730, %s729, 95
      %s732 = smul.addr %s731, 4
      %s733 = scalar_lea.vmem %s3, %s732
      // Predicated region
      $region33: #{conv3d_autoencoder_forward.10} parent=31 // pred_check
        %p734 = pneg %p100
      $region34: #{conv3d_autoencoder_forward.10} parent=31 // pred_check_branch
        %736 = sbr.rel (%p734) target = $region36
      $region35: #{conv3d_autoencoder_forward.10} parent=31 // pred_region
        %s737 = smul.u32 32, %s14
      $region36: #{conv3d_autoencoder_forward.10} parent=31 // pred_fallthru
        _
    $region32: #{conv3d_autoencoder_forward.10} parent=5 // pred_fallthru
      _
    %p738 = scmp.le.s32.totalorder 2, %s9
    // Predicated region
    $region37: #{conv3d_autoencoder_forward.10} parent=5 // pred_check
      %p739 = pneg %p738
    $region38: #{conv3d_autoencoder_forward.10} parent=5 // pred_check_branch
      %741 = sbr.rel (%p739) target = $region40
    $region39: #{conv3d_autoencoder_forward.10} parent=5 // pred_region
      %s742 = ssub.s32 %s9, 2
      // Predicated region
      $region41: #{conv3d_autoencoder_forward.10} parent=39 // pred_check
        %p743 = pneg %p106
      $region42: #{conv3d_autoencoder_forward.10} parent=39 // pred_check_branch
        %745 = sbr.rel (%p743) target = $region44
      $region43: #{conv3d_autoencoder_forward.10} parent=39 // pred_region
        %s746 = smul.u32 32, %s15
        %p747 = scmp.lt.s32.totalorder %s746, 95
        %s748 = scalar_select %p747, %s746, 95
        %s749 = smul.addr %s748, 4
        %s750 = scalar_lea.vmem %s3, %s749
      $region44: #{conv3d_autoencoder_forward.10} parent=39 // pred_fallthru
        _
    $region40: #{conv3d_autoencoder_forward.10} parent=5 // pred_fallthru
      _
  $region6: #{conv3d_autoencoder_forward.10} parent=0 // loop_footer
    %s13 = sadd.s32 1, %s9
  $region7: #{conv3d_autoencoder_forward.10} parent=0 // loop_footer_branch
    %8 = sbr.rel target = $region3
  $region8: #{conv3d_autoencoder_forward.10} parent=0 // loop_exit
    _

// kernel: conv3d_autoencoder_forward.11
$region0: #{conv3d_autoencoder_forward.11}
  #allocation0 [shape = 'u32[]', space=smem, size = 0x4, offset = 0x4, fixed_abs, tag = 'smem constant byte address 0x4 - core index']
  #allocation1 [shape = 'u32[144,128]{1,0:T(1,128)}', space=vmem, size = 0x12000, scoped, tag = 'internal scratch']
  %s0 = inlined_call_operand.vmem [shape: bf16[96,4096], index: 0, kind: input, shape index: {}]
  %s1 = inlined_call_operand.vmem [shape: bf16[4096,32], index: 1, kind: input, shape index: {}]
  %s2 = inlined_call_operand.vmem [shape: f32[1,32], index: 2, kind: input, shape index: {}]
  %s3 = inlined_call_operand.vmem [shape: bf16[96,32], index: 3, kind: output, shape index: {}]
  %s4 = sld [smem:[#allocation0]]
  $region22: #{conv3d_autoencoder_forward.11} parent=0
    _
  %s6 = ssub.s32 1, %s4
  %s7 = scalar_select 0, %s6, %s4
  // Predicated region
  $region2: #{conv3d_autoencoder_forward.11} parent=0 // pred_check
    _
  $region3: #{conv3d_autoencoder_forward.11} parent=0 // pred_check_branch
    %9 = sbr.rel (0) target = $region5
  $region4: #{conv3d_autoencoder_forward.11} parent=0 // pred_region
    _
  $region5: #{conv3d_autoencoder_forward.11} parent=0 // pred_fallthru
    _
  // Predicated region
  $region6: #{conv3d_autoencoder_forward.11} parent=0 // pred_check
    _
  $region7: #{conv3d_autoencoder_forward.11} parent=0 // pred_check_branch
    %11 = sbr.rel (0) target = $region9
  $region8: #{conv3d_autoencoder_forward.11} parent=0 // pred_region
    _
  $region9: #{conv3d_autoencoder_forward.11} parent=0 // pred_fallthru
    _
  // Predicated region
  $region10: #{conv3d_autoencoder_forward.11} parent=0 // pred_check
    _
  $region11: #{conv3d_autoencoder_forward.11} parent=0 // pred_check_branch
    %13 = sbr.rel (0) target = $region13
  $region12: #{conv3d_autoencoder_forward.11} parent=0 // pred_region
    _
  $region13: #{conv3d_autoencoder_forward.11} parent=0 // pred_fallthru
    _
  %v15 = vld [vmem:[%s0] sm:$0xff]
  %v16 = vld [vmem:[%s0 + $0x8] sm:$0xff]
  %v17 = vld [vmem:[%s0 + $0x10] sm:$0xff]
  %v18 = vld [vmem:[%s0 + $0x18] sm:$0xff]
  %v19 = vld [vmem:[%s0 + $0x20] sm:$0xff]
  %v20 = vld [vmem:[%s0 + $0x28] sm:$0xff]
  %v21 = vld [vmem:[%s0 + $0x30] sm:$0xff]
  %v22 = vld [vmem:[%s0 + $0x38] sm:$0xff]
  %v23 = vld [vmem:[%s0 + $0x40] sm:$0xff]
  %v24 = vld [vmem:[%s0 + $0x48] sm:$0xff]
  %v25 = vld [vmem:[%s0 + $0x50] sm:$0xff]
  %v26 = vld [vmem:[%s0 + $0x58] sm:$0xff]
  %v27 = vld [vmem:[%s0 + $0x60] sm:$0xff]
  %v28 = vld [vmem:[%s0 + $0x68] sm:$0xff]
  %v29 = vld [vmem:[%s0 + $0x70] sm:$0xff]
  %v30 = vld [vmem:[%s0 + $0x78] sm:$0xff]
  %v31 = vld [vmem:[%s0 + $0x80] sm:$0xff]
  %v32 = vld [vmem:[%s0 + $0x88] sm:$0xff]
  %v33 = vld [vmem:[%s0 + $0x90] sm:$0xff]
  %v34 = vld [vmem:[%s0 + $0x98] sm:$0xff]
  %v35 = vld [vmem:[%s0 + $0xa0] sm:$0xff]
  %v36 = vld [vmem:[%s0 + $0xa8] sm:$0xff]
  %v37 = vld [vmem:[%s0 + $0xb0] sm:$0xff]
  %v38 = vld [vmem:[%s0 + $0xb8] sm:$0xff]
  %v39 = vld [vmem:[%s0 + $0xc0] sm:$0xff]
  %v40 = vld [vmem:[%s0 + $0xc8] sm:$0xff]
  %v41 = vld [vmem:[%s0 + $0xd0] sm:$0xff]
  %v42 = vld [vmem:[%s0 + $0xd8] sm:$0xff]
  %v43 = vld [vmem:[%s0 + $0xe0] sm:$0xff]
  %v44 = vld [vmem:[%s0 + $0xe8] sm:$0xff]
  %v45 = vld [vmem:[%s0 + $0xf0] sm:$0xff]
  %v46 = vld [vmem:[%s0 + $0xf8] sm:$0xff]
  %v47 = vld [vmem:[%s0 + $0x100] sm:$0xff]
  %v48 = vld [vmem:[%s0 + $0x108] sm:$0xff]
  %v49 = vld [vmem:[%s0 + $0x110] sm:$0xff]
  %v50 = vld [vmem:[%s0 + $0x118] sm:$0xff]
  %v51 = vld [vmem:[%s0 + $0x120] sm:$0xff]
  %v52 = vld [vmem:[%s0 + $0x128] sm:$0xff]
  %v53 = vld [vmem:[%s0 + $0x130] sm:$0xff]
  %v54 = vld [vmem:[%s0 + $0x138] sm:$0xff]
  %v55 = vld [vmem:[%s0 + $0x140] sm:$0xff]
  %v56 = vld [vmem:[%s0 + $0x148] sm:$0xff]
  %v57 = vld [vmem:[%s0 + $0x150] sm:$0xff]
  %v58 = vld [vmem:[%s0 + $0x158] sm:$0xff]
  %v59 = vld [vmem:[%s0 + $0x160] sm:$0xff]
  %v60 = vld [vmem:[%s0 + $0x168] sm:$0xff]
  %v61 = vld [vmem:[%s0 + $0x170] sm:$0xff]
  %v62 = vld [vmem:[%s0 + $0x178] sm:$0xff]
  %v63 = vld [vmem:[%s0 + $0x180] sm:$0xff]
  %v64 = vld [vmem:[%s0 + $0x188] sm:$0xff]
  %v65 = vld [vmem:[%s0 + $0x190] sm:$0xff]
  %v66 = vld [vmem:[%s0 + $0x198] sm:$0xff]
  %v67 = vld [vmem:[%s0 + $0x1a0] sm:$0xff]
  %v68 = vld [vmem:[%s0 + $0x1a8] sm:$0xff]
  %v69 = vld [vmem:[%s0 + $0x1b0] sm:$0xff]
  %v70 = vld [vmem:[%s0 + $0x1b8] sm:$0xff]
  %v71 = vld [vmem:[%s0 + $0x1c0] sm:$0xff]
  %v72 = vld [vmem:[%s0 + $0x1c8] sm:$0xff]
  %v73 = vld [vmem:[%s0 + $0x1d0] sm:$0xff]
  %v74 = vld [vmem:[%s0 + $0x1d8] sm:$0xff]
  %v75 = vld [vmem:[%s0 + $0x1e0] sm:$0xff]
  %v76 = vld [vmem:[%s0 + $0x1e8] sm:$0xff]
  %v77 = vld [vmem:[%s0 + $0x1f0] sm:$0xff]
  %v78 = vld [vmem:[%s0 + $0x1f8] sm:$0xff]
  %v79 = vld [vmem:[%s0 + $0x200] sm:$0xff]
  %v80 = vld [vmem:[%s0 + $0x208] sm:$0xff]
  %v81 = vld [vmem:[%s0 + $0x210] sm:$0xff]
  %v82 = vld [vmem:[%s0 + $0x218] sm:$0xff]
  %v83 = vld [vmem:[%s0 + $0x220] sm:$0xff]
  %v84 = vld [vmem:[%s0 + $0x228] sm:$0xff]
  %v85 = vld [vmem:[%s0 + $0x230] sm:$0xff]
  %v86 = vld [vmem:[%s0 + $0x238] sm:$0xff]
  %v87 = vld [vmem:[%s0 + $0x240] sm:$0xff]
  %v88 = vld [vmem:[%s0 + $0x248] sm:$0xff]
  %v89 = vld [vmem:[%s0 + $0x250] sm:$0xff]
  %v90 = vld [vmem:[%s0 + $0x258] sm:$0xff]
  %v91 = vld [vmem:[%s0 + $0x260] sm:$0xff]
  %v92 = vld [vmem:[%s0 + $0x268] sm:$0xff]
  %v93 = vld [vmem:[%s0 + $0x270] sm:$0xff]
  %v94 = vld [vmem:[%s0 + $0x278] sm:$0xff]
  %v95 = vld [vmem:[%s0 + $0x280] sm:$0xff]
  %v96 = vld [vmem:[%s0 + $0x288] sm:$0xff]
  %v97 = vld [vmem:[%s0 + $0x290] sm:$0xff]
  %v98 = vld [vmem:[%s0 + $0x298] sm:$0xff]
  %v99 = vld [vmem:[%s0 + $0x2a0] sm:$0xff]
  %v100 = vld [vmem:[%s0 + $0x2a8] sm:$0xff]
  %v101 = vld [vmem:[%s0 + $0x2b0] sm:$0xff]
  %v102 = vld [vmem:[%s0 + $0x2b8] sm:$0xff]
  %v103 = vld [vmem:[%s0 + $0x2c0] sm:$0xff]
  %v104 = vld [vmem:[%s0 + $0x2c8] sm:$0xff]
  %v105 = vld [vmem:[%s0 + $0x2d0] sm:$0xff]
  %v106 = vld [vmem:[%s0 + $0x2d8] sm:$0xff]
  %v107 = vld [vmem:[%s0 + $0x2e0] sm:$0xff]
  %v108 = vld [vmem:[%s0 + $0x2e8] sm:$0xff]
  %v109 = vld [vmem:[%s0 + $0x2f0] sm:$0xff]
  %v110 = vld [vmem:[%s0 + $0x2f8] sm:$0xff]
  %v111 = vld [vmem:[%s0 + $0x300] sm:$0xff]
  %v112 = vld [vmem:[%s0 + $0x308] sm:$0xff]
  %v113 = vld [vmem:[%s0 + $0x310] sm:$0xff]
  %v114 = vld [vmem:[%s0 + $0x318] sm:$0xff]
  %v115 = vld [vmem:[%s0 + $0x320] sm:$0xff]
  %v116 = vld [vmem:[%s0 + $0x328] sm:$0xff]
  %v117 = vld [vmem:[%s0 + $0x330] sm:$0xff]
  %v118 = vld [vmem:[%s0 + $0x338] sm:$0xff]
  %v119 = vld [vmem:[%s0 + $0x340] sm:$0xff]
  %v120 = vld [vmem:[%s0 + $0x348] sm:$0xff]
  %v121 = vld [vmem:[%s0 + $0x350] sm:$0xff]
  %v122 = vld [vmem:[%s0 + $0x358] sm:$0xff]
  %v123 = vld [vmem:[%s0 + $0x360] sm:$0xff]
  %v124 = vld [vmem:[%s0 + $0x368] sm:$0xff]
  %v125 = vld [vmem:[%s0 + $0x370] sm:$0xff]
  %v126 = vld [vmem:[%s0 + $0x378] sm:$0xff]
  %v127 = vld [vmem:[%s0 + $0x380] sm:$0xff]
  %v128 = vld [vmem:[%s0 + $0x388] sm:$0xff]
  %v129 = vld [vmem:[%s0 + $0x390] sm:$0xff]
  %v130 = vld [vmem:[%s0 + $0x398] sm:$0xff]
  %v131 = vld [vmem:[%s0 + $0x3a0] sm:$0xff]
  %v132 = vld [vmem:[%s0 + $0x3a8] sm:$0xff]
  %v133 = vld [vmem:[%s0 + $0x3b0] sm:$0xff]
  %v134 = vld [vmem:[%s0 + $0x3b8] sm:$0xff]
  %v135 = vld [vmem:[%s0 + $0x3c0] sm:$0xff]
  %v136 = vld [vmem:[%s0 + $0x3c8] sm:$0xff]
  %v137 = vld [vmem:[%s0 + $0x3d0] sm:$0xff]
  %v138 = vld [vmem:[%s0 + $0x3d8] sm:$0xff]
  %v139 = vld [vmem:[%s0 + $0x3e0] sm:$0xff]
  %v140 = vld [vmem:[%s0 + $0x3e8] sm:$0xff]
  %v141 = vld [vmem:[%s0 + $0x3f0] sm:$0xff]
  %v142 = vld [vmem:[%s0 + $0x3f8] sm:$0xff]
  %v143 = vld [vmem:[%s0 + $0x400] sm:$0xff]
  %v144 = vld [vmem:[%s0 + $0x408] sm:$0xff]
  %v145 = vld [vmem:[%s0 + $0x410] sm:$0xff]
  %v146 = vld [vmem:[%s0 + $0x418] sm:$0xff]
  %v147 = vld [vmem:[%s0 + $0x420] sm:$0xff]
  %v148 = vld [vmem:[%s0 + $0x428] sm:$0xff]
  %v149 = vld [vmem:[%s0 + $0x430] sm:$0xff]
  %v150 = vld [vmem:[%s0 + $0x438] sm:$0xff]
  %v151 = vld [vmem:[%s0 + $0x440] sm:$0xff]
  %v152 = vld [vmem:[%s0 + $0x448] sm:$0xff]
  %v153 = vld [vmem:[%s0 + $0x450] sm:$0xff]
  %v154 = vld [vmem:[%s0 + $0x458] sm:$0xff]
  %v155 = vld [vmem:[%s0 + $0x460] sm:$0xff]
  %v156 = vld [vmem:[%s0 + $0x468] sm:$0xff]
  %v157 = vld [vmem:[%s0 + $0x470] sm:$0xff]
  %v158 = vld [vmem:[%s0 + $0x478] sm:$0xff]
  %v159 = vld [vmem:[%s0 + $0x480] sm:$0xff]
  %v160 = vld [vmem:[%s0 + $0x488] sm:$0xff]
  %v161 = vld [vmem:[%s0 + $0x490] sm:$0xff]
  %v162 = vld [vmem:[%s0 + $0x498] sm:$0xff]
  %v163 = vld [vmem:[%s0 + $0x4a0] sm:$0xff]
  %v164 = vld [vmem:[%s0 + $0x4a8] sm:$0xff]
  %v165 = vld [vmem:[%s0 + $0x4b0] sm:$0xff]
  %v166 = vld [vmem:[%s0 + $0x4b8] sm:$0xff]
  %v167 = vld [vmem:[%s0 + $0x4c0] sm:$0xff]
  %v168 = vld [vmem:[%s0 + $0x4c8] sm:$0xff]
  %v169 = vld [vmem:[%s0 + $0x4d0] sm:$0xff]
  %v170 = vld [vmem:[%s0 + $0x4d8] sm:$0xff]
  %v171 = vld [vmem:[%s0 + $0x4e0] sm:$0xff]
  %v172 = vld [vmem:[%s0 + $0x4e8] sm:$0xff]
  %v173 = vld [vmem:[%s0 + $0x4f0] sm:$0xff]
  %v174 = vld [vmem:[%s0 + $0x4f8] sm:$0xff]
  %v175 = vld [vmem:[%s0 + $0x500] sm:$0xff]
  %v176 = vld [vmem:[%s0 + $0x508] sm:$0xff]
  %v177 = vld [vmem:[%s0 + $0x510] sm:$0xff]
  %v178 = vld [vmem:[%s0 + $0x518] sm:$0xff]
  %v179 = vld [vmem:[%s0 + $0x520] sm:$0xff]
  %v180 = vld [vmem:[%s0 + $0x528] sm:$0xff]
  %v181 = vld [vmem:[%s0 + $0x530] sm:$0xff]
  %v182 = vld [vmem:[%s0 + $0x538] sm:$0xff]
  %v183 = vld [vmem:[%s0 + $0x540] sm:$0xff]
  %v184 = vld [vmem:[%s0 + $0x548] sm:$0xff]
  %v185 = vld [vmem:[%s0 + $0x550] sm:$0xff]
  %v186 = vld [vmem:[%s0 + $0x558] sm:$0xff]
  %v187 = vld [vmem:[%s0 + $0x560] sm:$0xff]
  %v188 = vld [vmem:[%s0 + $0x568] sm:$0xff]
  %v189 = vld [vmem:[%s0 + $0x570] sm:$0xff]
  %v190 = vld [vmem:[%s0 + $0x578] sm:$0xff]
  %v191 = vld [vmem:[%s0 + $0x580] sm:$0xff]
  %v192 = vld [vmem:[%s0 + $0x588] sm:$0xff]
  %v193 = vld [vmem:[%s0 + $0x590] sm:$0xff]
  %v194 = vld [vmem:[%s0 + $0x598] sm:$0xff]
  %v195 = vld [vmem:[%s0 + $0x5a0] sm:$0xff]
  %v196 = vld [vmem:[%s0 + $0x5a8] sm:$0xff]
  %v197 = vld [vmem:[%s0 + $0x5b0] sm:$0xff]
  %v198 = vld [vmem:[%s0 + $0x5b8] sm:$0xff]
  %v199 = vld [vmem:[%s0 + $0x5c0] sm:$0xff]
  %v200 = vld [vmem:[%s0 + $0x5c8] sm:$0xff]
  %v201 = vld [vmem:[%s0 + $0x5d0] sm:$0xff]
  %v202 = vld [vmem:[%s0 + $0x5d8] sm:$0xff]
  %v203 = vld [vmem:[%s0 + $0x5e0] sm:$0xff]
  %v204 = vld [vmem:[%s0 + $0x5e8] sm:$0xff]
  %v205 = vld [vmem:[%s0 + $0x5f0] sm:$0xff]
  %v206 = vld [vmem:[%s0 + $0x5f8] sm:$0xff]
  %v207 = vld [vmem:[%s1] sm:$0xf]
  %v208 = vld [vmem:[%s1 + $0x4] sm:$0xf]
  %v209 = vld [vmem:[%s1 + $0x8] sm:$0xf]
  %v210 = vld [vmem:[%s1 + $0xc] sm:$0xf]
  %v211 = vld [vmem:[%s1 + $0x10] sm:$0xf]
  %v212 = vld [vmem:[%s1 + $0x14] sm:$0xf]
  %v213 = vld [vmem:[%s1 + $0x18] sm:$0xf]
  %v214 = vld [vmem:[%s1 + $0x1c] sm:$0xf]
  %v215 = vld [vmem:[%s1 + $0x20] sm:$0xf]
  %v216 = vld [vmem:[%s1 + $0x24] sm:$0xf]
  %v217 = vld [vmem:[%s1 + $0x28] sm:$0xf]
  %v218 = vld [vmem:[%s1 + $0x2c] sm:$0xf]
  %v219 = vld [vmem:[%s1 + $0x30] sm:$0xf]
  %v220 = vld [vmem:[%s1 + $0x34] sm:$0xf]
  %v221 = vld [vmem:[%s1 + $0x38] sm:$0xf]
  %v222 = vld [vmem:[%s1 + $0x3c] sm:$0xf]
  %v223 = vld [vmem:[%s1 + $0x40] sm:$0xf]
  %v224 = vld [vmem:[%s1 + $0x44] sm:$0xf]
  %v225 = vld [vmem:[%s1 + $0x48] sm:$0xf]
  %v226 = vld [vmem:[%s1 + $0x4c] sm:$0xf]
  %v227 = vld [vmem:[%s1 + $0x50] sm:$0xf]
  %v228 = vld [vmem:[%s1 + $0x54] sm:$0xf]
  %v229 = vld [vmem:[%s1 + $0x58] sm:$0xf]
  %v230 = vld [vmem:[%s1 + $0x5c] sm:$0xf]
  %v231 = vld [vmem:[%s1 + $0x60] sm:$0xf]
  %v232 = vld [vmem:[%s1 + $0x64] sm:$0xf]
  %v233 = vld [vmem:[%s1 + $0x68] sm:$0xf]
  %v234 = vld [vmem:[%s1 + $0x6c] sm:$0xf]
  %v235 = vld [vmem:[%s1 + $0x70] sm:$0xf]
  %v236 = vld [vmem:[%s1 + $0x74] sm:$0xf]
  %v237 = vld [vmem:[%s1 + $0x78] sm:$0xf]
  %v238 = vld [vmem:[%s1 + $0x7c] sm:$0xf]
  %v239 = vld [vmem:[%s1 + $0x80] sm:$0xf]
  %v240 = vld [vmem:[%s1 + $0x84] sm:$0xf]
  %v241 = vld [vmem:[%s1 + $0x88] sm:$0xf]
  %v242 = vld [vmem:[%s1 + $0x8c] sm:$0xf]
  %v243 = vld [vmem:[%s1 + $0x90] sm:$0xf]
  %v244 = vld [vmem:[%s1 + $0x94] sm:$0xf]
  %v245 = vld [vmem:[%s1 + $0x98] sm:$0xf]
  %v246 = vld [vmem:[%s1 + $0x9c] sm:$0xf]
  %v247 = vld [vmem:[%s1 + $0xa0] sm:$0xf]
  %v248 = vld [vmem:[%s1 + $0xa4] sm:$0xf]
  %v249 = vld [vmem:[%s1 + $0xa8] sm:$0xf]
  %v250 = vld [vmem:[%s1 + $0xac] sm:$0xf]
  %v251 = vld [vmem:[%s1 + $0xb0] sm:$0xf]
  %v252 = vld [vmem:[%s1 + $0xb4] sm:$0xf]
  %v253 = vld [vmem:[%s1 + $0xb8] sm:$0xf]
  %v254 = vld [vmem:[%s1 + $0xbc] sm:$0xf]
  %v255 = vld [vmem:[%s1 + $0xc0] sm:$0xf]
  %v256 = vld [vmem:[%s1 + $0xc4] sm:$0xf]
  %v257 = vld [vmem:[%s1 + $0xc8] sm:$0xf]
  %v258 = vld [vmem:[%s1 + $0xcc] sm:$0xf]
  %v259 = vld [vmem:[%s1 + $0xd0] sm:$0xf]
  %v260 = vld [vmem:[%s1 + $0xd4] sm:$0xf]
  %v261 = vld [vmem:[%s1 + $0xd8] sm:$0xf]
  %v262 = vld [vmem:[%s1 + $0xdc] sm:$0xf]
  %v263 = vld [vmem:[%s1 + $0xe0] sm:$0xf]
  %v264 = vld [vmem:[%s1 + $0xe4] sm:$0xf]
  %v265 = vld [vmem:[%s1 + $0xe8] sm:$0xf]
  %v266 = vld [vmem:[%s1 + $0xec] sm:$0xf]
  %v267 = vld [vmem:[%s1 + $0xf0] sm:$0xf]
  %v268 = vld [vmem:[%s1 + $0xf4] sm:$0xf]
  %v269 = vld [vmem:[%s1 + $0xf8] sm:$0xf]
  %v270 = vld [vmem:[%s1 + $0xfc] sm:$0xf]
  %v271 = vld [vmem:[%s1 + $0x100] sm:$0xf]
  %v272 = vld [vmem:[%s1 + $0x104] sm:$0xf]
  %v273 = vld [vmem:[%s1 + $0x108] sm:$0xf]
  %v274 = vld [vmem:[%s1 + $0x10c] sm:$0xf]
  %v275 = vld [vmem:[%s1 + $0x110] sm:$0xf]
  %v276 = vld [vmem:[%s1 + $0x114] sm:$0xf]
  %v277 = vld [vmem:[%s1 + $0x118] sm:$0xf]
  %v278 = vld [vmem:[%s1 + $0x11c] sm:$0xf]
  %v279 = vld [vmem:[%s1 + $0x120] sm:$0xf]
  %v280 = vld [vmem:[%s1 + $0x124] sm:$0xf]
  %v281 = vld [vmem:[%s1 + $0x128] sm:$0xf]
  %v282 = vld [vmem:[%s1 + $0x12c] sm:$0xf]
  %v283 = vld [vmem:[%s1 + $0x130] sm:$0xf]
  %v284 = vld [vmem:[%s1 + $0x134] sm:$0xf]
  %v285 = vld [vmem:[%s1 + $0x138] sm:$0xf]
  %v286 = vld [vmem:[%s1 + $0x13c] sm:$0xf]
  %v287 = vld [vmem:[%s1 + $0x140] sm:$0xf]
  %v288 = vld [vmem:[%s1 + $0x144] sm:$0xf]
  %v289 = vld [vmem:[%s1 + $0x148] sm:$0xf]
  %v290 = vld [vmem:[%s1 + $0x14c] sm:$0xf]
  %v291 = vld [vmem:[%s1 + $0x150] sm:$0xf]
  %v292 = vld [vmem:[%s1 + $0x154] sm:$0xf]
  %v293 = vld [vmem:[%s1 + $0x158] sm:$0xf]
  %v294 = vld [vmem:[%s1 + $0x15c] sm:$0xf]
  %v295 = vld [vmem:[%s1 + $0x160] sm:$0xf]
  %v296 = vld [vmem:[%s1 + $0x164] sm:$0xf]
  %v297 = vld [vmem:[%s1 + $0x168] sm:$0xf]
  %v298 = vld [vmem:[%s1 + $0x16c] sm:$0xf]
  %v299 = vld [vmem:[%s1 + $0x170] sm:$0xf]
  %v300 = vld [vmem:[%s1 + $0x174] sm:$0xf]
  %v301 = vld [vmem:[%s1 + $0x178] sm:$0xf]
  %v302 = vld [vmem:[%s1 + $0x17c] sm:$0xf]
  %v303 = vld [vmem:[%s1 + $0x180] sm:$0xf]
  %v304 = vld [vmem:[%s1 + $0x184] sm:$0xf]
  %v305 = vld [vmem:[%s1 + $0x188] sm:$0xf]
  %v306 = vld [vmem:[%s1 + $0x18c] sm:$0xf]
  %v307 = vld [vmem:[%s1 + $0x190] sm:$0xf]
  %v308 = vld [vmem:[%s1 + $0x194] sm:$0xf]
  %v309 = vld [vmem:[%s1 + $0x198] sm:$0xf]
  %v310 = vld [vmem:[%s1 + $0x19c] sm:$0xf]
  %v311 = vld [vmem:[%s1 + $0x1a0] sm:$0xf]
  %v312 = vld [vmem:[%s1 + $0x1a4] sm:$0xf]
  %v313 = vld [vmem:[%s1 + $0x1a8] sm:$0xf]
  %v314 = vld [vmem:[%s1 + $0x1ac] sm:$0xf]
  %v315 = vld [vmem:[%s1 + $0x1b0] sm:$0xf]
  %v316 = vld [vmem:[%s1 + $0x1b4] sm:$0xf]
  %v317 = vld [vmem:[%s1 + $0x1b8] sm:$0xf]
  %v318 = vld [vmem:[%s1 + $0x1bc] sm:$0xf]
  %v319 = vld [vmem:[%s1 + $0x1c0] sm:$0xf]
  %v320 = vld [vmem:[%s1 + $0x1c4] sm:$0xf]
  %v321 = vld [vmem:[%s1 + $0x1c8] sm:$0xf]
  %v322 = vld [vmem:[%s1 + $0x1cc] sm:$0xf]
  %v323 = vld [vmem:[%s1 + $0x1d0] sm:$0xf]
  %v324 = vld [vmem:[%s1 + $0x1d4] sm:$0xf]
  %v325 = vld [vmem:[%s1 + $0x1d8] sm:$0xf]
  %v326 = vld [vmem:[%s1 + $0x1dc] sm:$0xf]
  %v327 = vld [vmem:[%s1 + $0x1e0] sm:$0xf]
  %v328 = vld [vmem:[%s1 + $0x1e4] sm:$0xf]
  %v329 = vld [vmem:[%s1 + $0x1e8] sm:$0xf]
  %v330 = vld [vmem:[%s1 + $0x1ec] sm:$0xf]
  %v331 = vld [vmem:[%s1 + $0x1f0] sm:$0xf]
  %v332 = vld [vmem:[%s1 + $0x1f4] sm:$0xf]
  %v333 = vld [vmem:[%s1 + $0x1f8] sm:$0xf]
  %v334 = vld [vmem:[%s1 + $0x1fc] sm:$0xf]
  %v335 = vld [vmem:[%s1 + $0x200] sm:$0xf]
  %v336 = vld [vmem:[%s1 + $0x204] sm:$0xf]
  %v337 = vld [vmem:[%s1 + $0x208] sm:$0xf]
  %v338 = vld [vmem:[%s1 + $0x20c] sm:$0xf]
  %v339 = vld [vmem:[%s1 + $0x210] sm:$0xf]
  %v340 = vld [vmem:[%s1 + $0x214] sm:$0xf]
  %v341 = vld [vmem:[%s1 + $0x218] sm:$0xf]
  %v342 = vld [vmem:[%s1 + $0x21c] sm:$0xf]
  %v343 = vld [vmem:[%s1 + $0x220] sm:$0xf]
  %v344 = vld [vmem:[%s1 + $0x224] sm:$0xf]
  %v345 = vld [vmem:[%s1 + $0x228] sm:$0xf]
  %v346 = vld [vmem:[%s1 + $0x22c] sm:$0xf]
  %v347 = vld [vmem:[%s1 + $0x230] sm:$0xf]
  %v348 = vld [vmem:[%s1 + $0x234] sm:$0xf]
  %v349 = vld [vmem:[%s1 + $0x238] sm:$0xf]
  %v350 = vld [vmem:[%s1 + $0x23c] sm:$0xf]
  %v351 = vld [vmem:[%s1 + $0x240] sm:$0xf]
  %v352 = vld [vmem:[%s1 + $0x244] sm:$0xf]
  %v353 = vld [vmem:[%s1 + $0x248] sm:$0xf]
  %v354 = vld [vmem:[%s1 + $0x24c] sm:$0xf]
  %v355 = vld [vmem:[%s1 + $0x250] sm:$0xf]
  %v356 = vld [vmem:[%s1 + $0x254] sm:$0xf]
  %v357 = vld [vmem:[%s1 + $0x258] sm:$0xf]
  %v358 = vld [vmem:[%s1 + $0x25c] sm:$0xf]
  %v359 = vld [vmem:[%s1 + $0x260] sm:$0xf]
  %v360 = vld [vmem:[%s1 + $0x264] sm:$0xf]
  %v361 = vld [vmem:[%s1 + $0x268] sm:$0xf]
  %v362 = vld [vmem:[%s1 + $0x26c] sm:$0xf]
  %v363 = vld [vmem:[%s1 + $0x270] sm:$0xf]
  %v364 = vld [vmem:[%s1 + $0x274] sm:$0xf]
  %v365 = vld [vmem:[%s1 + $0x278] sm:$0xf]
  %v366 = vld [vmem:[%s1 + $0x27c] sm:$0xf]
  %v367 = vld [vmem:[%s1 + $0x280] sm:$0xf]
  %v368 = vld [vmem:[%s1 + $0x284] sm:$0xf]
  %v369 = vld [vmem:[%s1 + $0x288] sm:$0xf]
  %v370 = vld [vmem:[%s1 + $0x28c] sm:$0xf]
  %v371 = vld [vmem:[%s1 + $0x290] sm:$0xf]
  %v372 = vld [vmem:[%s1 + $0x294] sm:$0xf]
  %v373 = vld [vmem:[%s1 + $0x298] sm:$0xf]
  %v374 = vld [vmem:[%s1 + $0x29c] sm:$0xf]
  %v375 = vld [vmem:[%s1 + $0x2a0] sm:$0xf]
  %v376 = vld [vmem:[%s1 + $0x2a4] sm:$0xf]
  %v377 = vld [vmem:[%s1 + $0x2a8] sm:$0xf]
  %v378 = vld [vmem:[%s1 + $0x2ac] sm:$0xf]
  %v379 = vld [vmem:[%s1 + $0x2b0] sm:$0xf]
  %v380 = vld [vmem:[%s1 + $0x2b4] sm:$0xf]
  %v381 = vld [vmem:[%s1 + $0x2b8] sm:$0xf]
  %v382 = vld [vmem:[%s1 + $0x2bc] sm:$0xf]
  %v383 = vld [vmem:[%s1 + $0x2c0] sm:$0xf]
  %v384 = vld [vmem:[%s1 + $0x2c4] sm:$0xf]
  %v385 = vld [vmem:[%s1 + $0x2c8] sm:$0xf]
  %v386 = vld [vmem:[%s1 + $0x2cc] sm:$0xf]
  %v387 = vld [vmem:[%s1 + $0x2d0] sm:$0xf]
  %v388 = vld [vmem:[%s1 + $0x2d4] sm:$0xf]
  %v389 = vld [vmem:[%s1 + $0x2d8] sm:$0xf]
  %v390 = vld [vmem:[%s1 + $0x2dc] sm:$0xf]
  %v391 = vld [vmem:[%s1 + $0x2e0] sm:$0xf]
  %v392 = vld [vmem:[%s1 + $0x2e4] sm:$0xf]
  %v393 = vld [vmem:[%s1 + $0x2e8] sm:$0xf]
  %v394 = vld [vmem:[%s1 + $0x2ec] sm:$0xf]
  %v395 = vld [vmem:[%s1 + $0x2f0] sm:$0xf]
  %v396 = vld [vmem:[%s1 + $0x2f4] sm:$0xf]
  %v397 = vld [vmem:[%s1 + $0x2f8] sm:$0xf]
  %v398 = vld [vmem:[%s1 + $0x2fc] sm:$0xf]
  %v399 = vld [vmem:[%s1 + $0x300] sm:$0xf]
  %v400 = vld [vmem:[%s1 + $0x304] sm:$0xf]
  %v401 = vld [vmem:[%s1 + $0x308] sm:$0xf]
  %v402 = vld [vmem:[%s1 + $0x30c] sm:$0xf]
  %v403 = vld [vmem:[%s1 + $0x310] sm:$0xf]
  %v404 = vld [vmem:[%s1 + $0x314] sm:$0xf]
  %v405 = vld [vmem:[%s1 + $0x318] sm:$0xf]
  %v406 = vld [vmem:[%s1 + $0x31c] sm:$0xf]
  %v407 = vld [vmem:[%s1 + $0x320] sm:$0xf]
  %v408 = vld [vmem:[%s1 + $0x324] sm:$0xf]
  %v409 = vld [vmem:[%s1 + $0x328] sm:$0xf]
  %v410 = vld [vmem:[%s1 + $0x32c] sm:$0xf]
  %v411 = vld [vmem:[%s1 + $0x330] sm:$0xf]
  %v412 = vld [vmem:[%s1 + $0x334] sm:$0xf]
  %v413 = vld [vmem:[%s1 + $0x338] sm:$0xf]
  %v414 = vld [vmem:[%s1 + $0x33c] sm:$0xf]
  %v415 = vld [vmem:[%s1 + $0x340] sm:$0xf]
  %v416 = vld [vmem:[%s1 + $0x344] sm:$0xf]
  %v417 = vld [vmem:[%s1 + $0x348] sm:$0xf]
  %v418 = vld [vmem:[%s1 + $0x34c] sm:$0xf]
  %v419 = vld [vmem:[%s1 + $0x350] sm:$0xf]
  %v420 = vld [vmem:[%s1 + $0x354] sm:$0xf]
  %v421 = vld [vmem:[%s1 + $0x358] sm:$0xf]
  %v422 = vld [vmem:[%s1 + $0x35c] sm:$0xf]
  %v423 = vld [vmem:[%s1 + $0x360] sm:$0xf]
  %v424 = vld [vmem:[%s1 + $0x364] sm:$0xf]
  %v425 = vld [vmem:[%s1 + $0x368] sm:$0xf]
  %v426 = vld [vmem:[%s1 + $0x36c] sm:$0xf]
  %v427 = vld [vmem:[%s1 + $0x370] sm:$0xf]
  %v428 = vld [vmem:[%s1 + $0x374] sm:$0xf]
  %v429 = vld [vmem:[%s1 + $0x378] sm:$0xf]
  %v430 = vld [vmem:[%s1 + $0x37c] sm:$0xf]
  %v431 = vld [vmem:[%s1 + $0x380] sm:$0xf]
  %v432 = vld [vmem:[%s1 + $0x384] sm:$0xf]
  %v433 = vld [vmem:[%s1 + $0x388] sm:$0xf]
  %v434 = vld [vmem:[%s1 + $0x38c] sm:$0xf]
  %v435 = vld [vmem:[%s1 + $0x390] sm:$0xf]
  %v436 = vld [vmem:[%s1 + $0x394] sm:$0xf]
  %v437 = vld [vmem:[%s1 + $0x398] sm:$0xf]
  %v438 = vld [vmem:[%s1 + $0x39c] sm:$0xf]
  %v439 = vld [vmem:[%s1 + $0x3a0] sm:$0xf]
  %v440 = vld [vmem:[%s1 + $0x3a4] sm:$0xf]
  %v441 = vld [vmem:[%s1 + $0x3a8] sm:$0xf]
  %v442 = vld [vmem:[%s1 + $0x3ac] sm:$0xf]
  %v443 = vld [vmem:[%s1 + $0x3b0] sm:$0xf]
  %v444 = vld [vmem:[%s1 + $0x3b4] sm:$0xf]
  %v445 = vld [vmem:[%s1 + $0x3b8] sm:$0xf]
  %v446 = vld [vmem:[%s1 + $0x3bc] sm:$0xf]
  %v447 = vld [vmem:[%s1 + $0x3c0] sm:$0xf]
  %v448 = vld [vmem:[%s1 + $0x3c4] sm:$0xf]
  %v449 = vld [vmem:[%s1 + $0x3c8] sm:$0xf]
  %v450 = vld [vmem:[%s1 + $0x3cc] sm:$0xf]
  %v451 = vld [vmem:[%s1 + $0x3d0] sm:$0xf]
  %v452 = vld [vmem:[%s1 + $0x3d4] sm:$0xf]
  %v453 = vld [vmem:[%s1 + $0x3d8] sm:$0xf]
  %v454 = vld [vmem:[%s1 + $0x3dc] sm:$0xf]
  %v455 = vld [vmem:[%s1 + $0x3e0] sm:$0xf]
  %v456 = vld [vmem:[%s1 + $0x3e4] sm:$0xf]
  %v457 = vld [vmem:[%s1 + $0x3e8] sm:$0xf]
  %v458 = vld [vmem:[%s1 + $0x3ec] sm:$0xf]
  %v459 = vld [vmem:[%s1 + $0x3f0] sm:$0xf]
  %v460 = vld [vmem:[%s1 + $0x3f4] sm:$0xf]
  %v461 = vld [vmem:[%s1 + $0x3f8] sm:$0xf]
  %v462 = vld [vmem:[%s1 + $0x3fc] sm:$0xf]
  %v463 = vld [vmem:[%s1 + $0x400] sm:$0xf]
  %v464 = vld [vmem:[%s1 + $0x404] sm:$0xf]
  %v465 = vld [vmem:[%s1 + $0x408] sm:$0xf]
  %v466 = vld [vmem:[%s1 + $0x40c] sm:$0xf]
  %v467 = vld [vmem:[%s1 + $0x410] sm:$0xf]
  %v468 = vld [vmem:[%s1 + $0x414] sm:$0xf]
  %v469 = vld [vmem:[%s1 + $0x418] sm:$0xf]
  %v470 = vld [vmem:[%s1 + $0x41c] sm:$0xf]
  %v471 = vld [vmem:[%s1 + $0x420] sm:$0xf]
  %v472 = vld [vmem:[%s1 + $0x424] sm:$0xf]
  %v473 = vld [vmem:[%s1 + $0x428] sm:$0xf]
  %v474 = vld [vmem:[%s1 + $0x42c] sm:$0xf]
  %v475 = vld [vmem:[%s1 + $0x430] sm:$0xf]
  %v476 = vld [vmem:[%s1 + $0x434] sm:$0xf]
  %v477 = vld [vmem:[%s1 + $0x438] sm:$0xf]
  %v478 = vld [vmem:[%s1 + $0x43c] sm:$0xf]
  %v479 = vld [vmem:[%s1 + $0x440] sm:$0xf]
  %v480 = vld [vmem:[%s1 + $0x444] sm:$0xf]
  %v481 = vld [vmem:[%s1 + $0x448] sm:$0xf]
  %v482 = vld [vmem:[%s1 + $0x44c] sm:$0xf]
  %v483 = vld [vmem:[%s1 + $0x450] sm:$0xf]
  %v484 = vld [vmem:[%s1 + $0x454] sm:$0xf]
  %v485 = vld [vmem:[%s1 + $0x458] sm:$0xf]
  %v486 = vld [vmem:[%s1 + $0x45c] sm:$0xf]
  %v487 = vld [vmem:[%s1 + $0x460] sm:$0xf]
  %v488 = vld [vmem:[%s1 + $0x464] sm:$0xf]
  %v489 = vld [vmem:[%s1 + $0x468] sm:$0xf]
  %v490 = vld [vmem:[%s1 + $0x46c] sm:$0xf]
  %v491 = vld [vmem:[%s1 + $0x470] sm:$0xf]
  %v492 = vld [vmem:[%s1 + $0x474] sm:$0xf]
  %v493 = vld [vmem:[%s1 + $0x478] sm:$0xf]
  %v494 = vld [vmem:[%s1 + $0x47c] sm:$0xf]
  %v495 = vld [vmem:[%s1 + $0x480] sm:$0xf]
  %v496 = vld [vmem:[%s1 + $0x484] sm:$0xf]
  %v497 = vld [vmem:[%s1 + $0x488] sm:$0xf]
  %v498 = vld [vmem:[%s1 + $0x48c] sm:$0xf]
  %v499 = vld [vmem:[%s1 + $0x490] sm:$0xf]
  %v500 = vld [vmem:[%s1 + $0x494] sm:$0xf]
  %v501 = vld [vmem:[%s1 + $0x498] sm:$0xf]
  %v502 = vld [vmem:[%s1 + $0x49c] sm:$0xf]
  %v503 = vld [vmem:[%s1 + $0x4a0] sm:$0xf]
  %v504 = vld [vmem:[%s1 + $0x4a4] sm:$0xf]
  %v505 = vld [vmem:[%s1 + $0x4a8] sm:$0xf]
  %v506 = vld [vmem:[%s1 + $0x4ac] sm:$0xf]
  %v507 = vld [vmem:[%s1 + $0x4b0] sm:$0xf]
  %v508 = vld [vmem:[%s1 + $0x4b4] sm:$0xf]
  %v509 = vld [vmem:[%s1 + $0x4b8] sm:$0xf]
  %v510 = vld [vmem:[%s1 + $0x4bc] sm:$0xf]
  %v511 = vld [vmem:[%s1 + $0x4c0] sm:$0xf]
  %v512 = vld [vmem:[%s1 + $0x4c4] sm:$0xf]
  %v513 = vld [vmem:[%s1 + $0x4c8] sm:$0xf]
  %v514 = vld [vmem:[%s1 + $0x4cc] sm:$0xf]
  %v515 = vld [vmem:[%s1 + $0x4d0] sm:$0xf]
  %v516 = vld [vmem:[%s1 + $0x4d4] sm:$0xf]
  %v517 = vld [vmem:[%s1 + $0x4d8] sm:$0xf]
  %v518 = vld [vmem:[%s1 + $0x4dc] sm:$0xf]
  %v519 = vld [vmem:[%s1 + $0x4e0] sm:$0xf]
  %v520 = vld [vmem:[%s1 + $0x4e4] sm:$0xf]
  %v521 = vld [vmem:[%s1 + $0x4e8] sm:$0xf]
  %v522 = vld [vmem:[%s1 + $0x4ec] sm:$0xf]
  %v523 = vld [vmem:[%s1 + $0x4f0] sm:$0xf]
  %v524 = vld [vmem:[%s1 + $0x4f4] sm:$0xf]
  %v525 = vld [vmem:[%s1 + $0x4f8] sm:$0xf]
  %v526 = vld [vmem:[%s1 + $0x4fc] sm:$0xf]
  %v527 = vld [vmem:[%s1 + $0x500] sm:$0xf]
  %v528 = vld [vmem:[%s1 + $0x504] sm:$0xf]
  %v529 = vld [vmem:[%s1 + $0x508] sm:$0xf]
  %v530 = vld [vmem:[%s1 + $0x50c] sm:$0xf]
  %v531 = vld [vmem:[%s1 + $0x510] sm:$0xf]
  %v532 = vld [vmem:[%s1 + $0x514] sm:$0xf]
  %v533 = vld [vmem:[%s1 + $0x518] sm:$0xf]
  %v534 = vld [vmem:[%s1 + $0x51c] sm:$0xf]
  %v535 = vld [vmem:[%s1 + $0x520] sm:$0xf]
  %v536 = vld [vmem:[%s1 + $0x524] sm:$0xf]
  %v537 = vld [vmem:[%s1 + $0x528] sm:$0xf]
  %v538 = vld [vmem:[%s1 + $0x52c] sm:$0xf]
  %v539 = vld [vmem:[%s1 + $0x530] sm:$0xf]
  %v540 = vld [vmem:[%s1 + $0x534] sm:$0xf]
  %v541 = vld [vmem:[%s1 + $0x538] sm:$0xf]
  %v542 = vld [vmem:[%s1 + $0x53c] sm:$0xf]
  %v543 = vld [vmem:[%s1 + $0x540] sm:$0xf]
  %v544 = vld [vmem:[%s1 + $0x544] sm:$0xf]
  %v545 = vld [vmem:[%s1 + $0x548] sm:$0xf]
  %v546 = vld [vmem:[%s1 + $0x54c] sm:$0xf]
  %v547 = vld [vmem:[%s1 + $0x550] sm:$0xf]
  %v548 = vld [vmem:[%s1 + $0x554] sm:$0xf]
  %v549 = vld [vmem:[%s1 + $0x558] sm:$0xf]
  %v550 = vld [vmem:[%s1 + $0x55c] sm:$0xf]
  %v551 = vld [vmem:[%s1 + $0x560] sm:$0xf]
  %v552 = vld [vmem:[%s1 + $0x564] sm:$0xf]
  %v553 = vld [vmem:[%s1 + $0x568] sm:$0xf]
  %v554 = vld [vmem:[%s1 + $0x56c] sm:$0xf]
  %v555 = vld [vmem:[%s1 + $0x570] sm:$0xf]
  %v556 = vld [vmem:[%s1 + $0x574] sm:$0xf]
  %v557 = vld [vmem:[%s1 + $0x578] sm:$0xf]
  %v558 = vld [vmem:[%s1 + $0x57c] sm:$0xf]
  %v559 = vld [vmem:[%s1 + $0x580] sm:$0xf]
  %v560 = vld [vmem:[%s1 + $0x584] sm:$0xf]
  %v561 = vld [vmem:[%s1 + $0x588] sm:$0xf]
  %v562 = vld [vmem:[%s1 + $0x58c] sm:$0xf]
  %v563 = vld [vmem:[%s1 + $0x590] sm:$0xf]
  %v564 = vld [vmem:[%s1 + $0x594] sm:$0xf]
  %v565 = vld [vmem:[%s1 + $0x598] sm:$0xf]
  %v566 = vld [vmem:[%s1 + $0x59c] sm:$0xf]
  %v567 = vld [vmem:[%s1 + $0x5a0] sm:$0xf]
  %v568 = vld [vmem:[%s1 + $0x5a4] sm:$0xf]
  %v569 = vld [vmem:[%s1 + $0x5a8] sm:$0xf]
  %v570 = vld [vmem:[%s1 + $0x5ac] sm:$0xf]
  %v571 = vld [vmem:[%s1 + $0x5b0] sm:$0xf]
  %v572 = vld [vmem:[%s1 + $0x5b4] sm:$0xf]
  %v573 = vld [vmem:[%s1 + $0x5b8] sm:$0xf]
  %v574 = vld [vmem:[%s1 + $0x5bc] sm:$0xf]
  %v575 = vld [vmem:[%s1 + $0x5c0] sm:$0xf]
  %v576 = vld [vmem:[%s1 + $0x5c4] sm:$0xf]
  %v577 = vld [vmem:[%s1 + $0x5c8] sm:$0xf]
  %v578 = vld [vmem:[%s1 + $0x5cc] sm:$0xf]
  %v579 = vld [vmem:[%s1 + $0x5d0] sm:$0xf]
  %v580 = vld [vmem:[%s1 + $0x5d4] sm:$0xf]
  %v581 = vld [vmem:[%s1 + $0x5d8] sm:$0xf]
  %v582 = vld [vmem:[%s1 + $0x5dc] sm:$0xf]
  %v583 = vld [vmem:[%s1 + $0x5e0] sm:$0xf]
  %v584 = vld [vmem:[%s1 + $0x5e4] sm:$0xf]
  %v585 = vld [vmem:[%s1 + $0x5e8] sm:$0xf]
  %v586 = vld [vmem:[%s1 + $0x5ec] sm:$0xf]
  %v587 = vld [vmem:[%s1 + $0x5f0] sm:$0xf]
  %v588 = vld [vmem:[%s1 + $0x5f4] sm:$0xf]
  %v589 = vld [vmem:[%s1 + $0x5f8] sm:$0xf]
  %v590 = vld [vmem:[%s1 + $0x5fc] sm:$0xf]
  %v591 = vld [vmem:[%s1 + $0x600] sm:$0xf]
  %v592 = vld [vmem:[%s1 + $0x604] sm:$0xf]
  %v593 = vld [vmem:[%s1 + $0x608] sm:$0xf]
  %v594 = vld [vmem:[%s1 + $0x60c] sm:$0xf]
  %v595 = vld [vmem:[%s1 + $0x610] sm:$0xf]
  %v596 = vld [vmem:[%s1 + $0x614] sm:$0xf]
  %v597 = vld [vmem:[%s1 + $0x618] sm:$0xf]
  %v598 = vld [vmem:[%s1 + $0x61c] sm:$0xf]
  %v599 = vld [vmem:[%s1 + $0x620] sm:$0xf]
  %v600 = vld [vmem:[%s1 + $0x624] sm:$0xf]
  %v601 = vld [vmem:[%s1 + $0x628] sm:$0xf]
  %v602 = vld [vmem:[%s1 + $0x62c] sm:$0xf]
  %v603 = vld [vmem:[%s1 + $0x630] sm:$0xf]
  %v604 = vld [vmem:[%s1 + $0x634] sm:$0xf]
  %v605 = vld [vmem:[%s1 + $0x638] sm:$0xf]
  %v606 = vld [vmem:[%s1 + $0x63c] sm:$0xf]
  %v607 = vld [vmem:[%s1 + $0x640] sm:$0xf]
  %v608 = vld [vmem:[%s1 + $0x644] sm:$0xf]
  %v609 = vld [vmem:[%s1 + $0x648] sm:$0xf]
  %v610 = vld [vmem:[%s1 + $0x64c] sm:$0xf]
  %v611 = vld [vmem:[%s1 + $0x650] sm:$0xf]
  %v612 = vld [vmem:[%s1 + $0x654] sm:$0xf]
  %v613 = vld [vmem:[%s1 + $0x658] sm:$0xf]
  %v614 = vld [vmem:[%s1 + $0x65c] sm:$0xf]
  %v615 = vld [vmem:[%s1 + $0x660] sm:$0xf]
  %v616 = vld [vmem:[%s1 + $0x664] sm:$0xf]
  %v617 = vld [vmem:[%s1 + $0x668] sm:$0xf]
  %v618 = vld [vmem:[%s1 + $0x66c] sm:$0xf]
  %v619 = vld [vmem:[%s1 + $0x670] sm:$0xf]
  %v620 = vld [vmem:[%s1 + $0x674] sm:$0xf]
  %v621 = vld [vmem:[%s1 + $0x678] sm:$0xf]
  %v622 = vld [vmem:[%s1 + $0x67c] sm:$0xf]
  %v623 = vld [vmem:[%s1 + $0x680] sm:$0xf]
  %v624 = vld [vmem:[%s1 + $0x684] sm:$0xf]
  %v625 = vld [vmem:[%s1 + $0x688] sm:$0xf]
  %v626 = vld [vmem:[%s1 + $0x68c] sm:$0xf]
  %v627 = vld [vmem:[%s1 + $0x690] sm:$0xf]
  %v628 = vld [vmem:[%s1 + $0x694] sm:$0xf]
  %v629 = vld [vmem:[%s1 + $0x698] sm:$0xf]
  %v630 = vld [vmem:[%s1 + $0x69c] sm:$0xf]
  %v631 = vld [vmem:[%s1 + $0x6a0] sm:$0xf]
  %v632 = vld [vmem:[%s1 + $0x6a4] sm:$0xf]
  %v633 = vld [vmem:[%s1 + $0x6a8] sm:$0xf]
  %v634 = vld [vmem:[%s1 + $0x6ac] sm:$0xf]
  %v635 = vld [vmem:[%s1 + $0x6b0] sm:$0xf]
  %v636 = vld [vmem:[%s1 + $0x6b4] sm:$0xf]
  %v637 = vld [vmem:[%s1 + $0x6b8] sm:$0xf]
  %v638 = vld [vmem:[%s1 + $0x6bc] sm:$0xf]
  %v639 = vld [vmem:[%s1 + $0x6c0] sm:$0xf]
  %v640 = vld [vmem:[%s1 + $0x6c4] sm:$0xf]
  %v641 = vld [vmem:[%s1 + $0x6c8] sm:$0xf]
  %v642 = vld [vmem:[%s1 + $0x6cc] sm:$0xf]
  %v643 = vld [vmem:[%s1 + $0x6d0] sm:$0xf]
  %v644 = vld [vmem:[%s1 + $0x6d4] sm:$0xf]
  %v645 = vld [vmem:[%s1 + $0x6d8] sm:$0xf]
  %v646 = vld [vmem:[%s1 + $0x6dc] sm:$0xf]
  %v647 = vld [vmem:[%s1 + $0x6e0] sm:$0xf]
  %v648 = vld [vmem:[%s1 + $0x6e4] sm:$0xf]
  %v649 = vld [vmem:[%s1 + $0x6e8] sm:$0xf]
  %v650 = vld [vmem:[%s1 + $0x6ec] sm:$0xf]
  %v651 = vld [vmem:[%s1 + $0x6f0] sm:$0xf]
  %v652 = vld [vmem:[%s1 + $0x6f4] sm:$0xf]
  %v653 = vld [vmem:[%s1 + $0x6f8] sm:$0xf]
  %v654 = vld [vmem:[%s1 + $0x6fc] sm:$0xf]
  %v655 = vld [vmem:[%s1 + $0x700] sm:$0xf]
  %v656 = vld [vmem:[%s1 + $0x704] sm:$0xf]
  %v657 = vld [vmem:[%s1 + $0x708] sm:$0xf]
  %v658 = vld [vmem:[%s1 + $0x70c] sm:$0xf]
  %v659 = vld [vmem:[%s1 + $0x710] sm:$0xf]
  %v660 = vld [vmem:[%s1 + $0x714] sm:$0xf]
  %v661 = vld [vmem:[%s1 + $0x718] sm:$0xf]
  %v662 = vld [vmem:[%s1 + $0x71c] sm:$0xf]
  %v663 = vld [vmem:[%s1 + $0x720] sm:$0xf]
  %v664 = vld [vmem:[%s1 + $0x724] sm:$0xf]
  %v665 = vld [vmem:[%s1 + $0x728] sm:$0xf]
  %v666 = vld [vmem:[%s1 + $0x72c] sm:$0xf]
  %v667 = vld [vmem:[%s1 + $0x730] sm:$0xf]
  %v668 = vld [vmem:[%s1 + $0x734] sm:$0xf]
  %v669 = vld [vmem:[%s1 + $0x738] sm:$0xf]
  %v670 = vld [vmem:[%s1 + $0x73c] sm:$0xf]
  %v671 = vld [vmem:[%s1 + $0x740] sm:$0xf]
  %v672 = vld [vmem:[%s1 + $0x744] sm:$0xf]
  %v673 = vld [vmem:[%s1 + $0x748] sm:$0xf]
  %v674 = vld [vmem:[%s1 + $0x74c] sm:$0xf]
  %v675 = vld [vmem:[%s1 + $0x750] sm:$0xf]
  %v676 = vld [vmem:[%s1 + $0x754] sm:$0xf]
  %v677 = vld [vmem:[%s1 + $0x758] sm:$0xf]
  %v678 = vld [vmem:[%s1 + $0x75c] sm:$0xf]
  %v679 = vld [vmem:[%s1 + $0x760] sm:$0xf]
  %v680 = vld [vmem:[%s1 + $0x764] sm:$0xf]
  %v681 = vld [vmem:[%s1 + $0x768] sm:$0xf]
  %v682 = vld [vmem:[%s1 + $0x76c] sm:$0xf]
  %v683 = vld [vmem:[%s1 + $0x770] sm:$0xf]
  %v684 = vld [vmem:[%s1 + $0x774] sm:$0xf]
  %v685 = vld [vmem:[%s1 + $0x778] sm:$0xf]
  %v686 = vld [vmem:[%s1 + $0x77c] sm:$0xf]
  %v687 = vld [vmem:[%s1 + $0x780] sm:$0xf]
  %v688 = vld [vmem:[%s1 + $0x784] sm:$0xf]
  %v689 = vld [vmem:[%s1 + $0x788] sm:$0xf]
  %v690 = vld [vmem:[%s1 + $0x78c] sm:$0xf]
  %v691 = vld [vmem:[%s1 + $0x790] sm:$0xf]
  %v692 = vld [vmem:[%s1 + $0x794] sm:$0xf]
  %v693 = vld [vmem:[%s1 + $0x798] sm:$0xf]
  %v694 = vld [vmem:[%s1 + $0x79c] sm:$0xf]
  %v695 = vld [vmem:[%s1 + $0x7a0] sm:$0xf]
  %v696 = vld [vmem:[%s1 + $0x7a4] sm:$0xf]
  %v697 = vld [vmem:[%s1 + $0x7a8] sm:$0xf]
  %v698 = vld [vmem:[%s1 + $0x7ac] sm:$0xf]
  %v699 = vld [vmem:[%s1 + $0x7b0] sm:$0xf]
  %v700 = vld [vmem:[%s1 + $0x7b4] sm:$0xf]
  %v701 = vld [vmem:[%s1 + $0x7b8] sm:$0xf]
  %v702 = vld [vmem:[%s1 + $0x7bc] sm:$0xf]
  %v703 = vld [vmem:[%s1 + $0x7c0] sm:$0xf]
  %v704 = vld [vmem:[%s1 + $0x7c4] sm:$0xf]
  %v705 = vld [vmem:[%s1 + $0x7c8] sm:$0xf]
  %v706 = vld [vmem:[%s1 + $0x7cc] sm:$0xf]
  %v707 = vld [vmem:[%s1 + $0x7d0] sm:$0xf]
  %v708 = vld [vmem:[%s1 + $0x7d4] sm:$0xf]
  %v709 = vld [vmem:[%s1 + $0x7d8] sm:$0xf]
  %v710 = vld [vmem:[%s1 + $0x7dc] sm:$0xf]
  %v711 = vld [vmem:[%s1 + $0x7e0] sm:$0xf]
  %v712 = vld [vmem:[%s1 + $0x7e4] sm:$0xf]
  %v713 = vld [vmem:[%s1 + $0x7e8] sm:$0xf]
  %v714 = vld [vmem:[%s1 + $0x7ec] sm:$0xf]
  %v715 = vld [vmem:[%s1 + $0x7f0] sm:$0xf]
  %v716 = vld [vmem:[%s1 + $0x7f4] sm:$0xf]
  %v717 = vld [vmem:[%s1 + $0x7f8] sm:$0xf]
  %v718 = vld [vmem:[%s1 + $0x7fc] sm:$0xf]
  %v719 = vld [vmem:[%s2] sm:$0x1]
  %v721 = vlaneseq
  %v722 = vshrl.u32 %v721, 7
  %v723 = vsub.s32 0, %v722
  %v724 = vrot.slane %v719, %v723
  %v918 = vunpack.c.l.b16 %v15
  %v919 = vunpack.c.h.b16 %v15
  %v920 = vunpack.c.l.b16 %v16
  %v921 = vunpack.c.h.b16 %v16
  %v922 = vunpack.c.l.b16 %v17
  %v923 = vunpack.c.h.b16 %v17
  %v924 = vunpack.c.l.b16 %v18
  %v925 = vunpack.c.h.b16 %v18
  %v926 = vunpack.c.l.b16 %v19
  %v927 = vunpack.c.h.b16 %v19
  %v928 = vunpack.c.l.b16 %v20
  %v929 = vunpack.c.h.b16 %v20
  %v930 = vunpack.c.l.b16 %v21
  %v931 = vunpack.c.h.b16 %v21
  %v932 = vunpack.c.l.b16 %v22
  %v933 = vunpack.c.h.b16 %v22
  %v934 = vunpack.c.l.b16 %v23
  %v935 = vunpack.c.h.b16 %v23
  %v936 = vunpack.c.l.b16 %v24
  %v937 = vunpack.c.h.b16 %v24
  %v938 = vunpack.c.l.b16 %v25
  %v939 = vunpack.c.h.b16 %v25
  %v940 = vunpack.c.l.b16 %v26
  %v941 = vunpack.c.h.b16 %v26
  %v942 = vunpack.c.l.b16 %v27
  %v943 = vunpack.c.h.b16 %v27
  %v944 = vunpack.c.l.b16 %v28
  %v945 = vunpack.c.h.b16 %v28
  %v946 = vunpack.c.l.b16 %v29
  %v947 = vunpack.c.h.b16 %v29
  %v948 = vunpack.c.l.b16 %v30
  %v949 = vunpack.c.h.b16 %v30
  %v950 = vunpack.c.l.b16 %v31
  %v951 = vunpack.c.h.b16 %v31
  %v952 = vunpack.c.l.b16 %v32
  %v953 = vunpack.c.h.b16 %v32
  %v954 = vunpack.c.l.b16 %v33
  %v955 = vunpack.c.h.b16 %v33
  %v956 = vunpack.c.l.b16 %v34
  %v957 = vunpack.c.h.b16 %v34
  %v958 = vunpack.c.l.b16 %v35
  %v959 = vunpack.c.h.b16 %v35
  %v960 = vunpack.c.l.b16 %v36
  %v961 = vunpack.c.h.b16 %v36
  %v962 = vunpack.c.l.b16 %v37
  %v963 = vunpack.c.h.b16 %v37
  %v964 = vunpack.c.l.b16 %v38
  %v965 = vunpack.c.h.b16 %v38
  %v966 = vunpack.c.l.b16 %v39
  %v967 = vunpack.c.h.b16 %v39
  %v968 = vunpack.c.l.b16 %v40
  %v969 = vunpack.c.h.b16 %v40
  %v970 = vunpack.c.l.b16 %v41
  %v971 = vunpack.c.h.b16 %v41
  %v972 = vunpack.c.l.b16 %v42
  %v973 = vunpack.c.h.b16 %v42
  %v974 = vunpack.c.l.b16 %v43
  %v975 = vunpack.c.h.b16 %v43
  %v976 = vunpack.c.l.b16 %v44
  %v977 = vunpack.c.h.b16 %v44
  %v978 = vunpack.c.l.b16 %v45
  %v979 = vunpack.c.h.b16 %v45
  %v980 = vunpack.c.l.b16 %v46
  %v981 = vunpack.c.h.b16 %v46
  %v982 = vunpack.c.l.b16 %v47
  %v983 = vunpack.c.h.b16 %v47
  %v984 = vunpack.c.l.b16 %v48
  %v985 = vunpack.c.h.b16 %v48
  %v986 = vunpack.c.l.b16 %v49
  %v987 = vunpack.c.h.b16 %v49
  %v988 = vunpack.c.l.b16 %v50
  %v989 = vunpack.c.h.b16 %v50
  %v990 = vunpack.c.l.b16 %v51
  %v991 = vunpack.c.h.b16 %v51
  %v992 = vunpack.c.l.b16 %v52
  %v993 = vunpack.c.h.b16 %v52
  %v994 = vunpack.c.l.b16 %v53
  %v995 = vunpack.c.h.b16 %v53
  %v996 = vunpack.c.l.b16 %v54
  %v997 = vunpack.c.h.b16 %v54
  %v998 = vunpack.c.l.b16 %v55
  %v999 = vunpack.c.h.b16 %v55
  %v1000 = vunpack.c.l.b16 %v56
  %v1001 = vunpack.c.h.b16 %v56
  %v1002 = vunpack.c.l.b16 %v57
  %v1003 = vunpack.c.h.b16 %v57
  %v1004 = vunpack.c.l.b16 %v58
  %v1005 = vunpack.c.h.b16 %v58
  %v1006 = vunpack.c.l.b16 %v59
  %v1007 = vunpack.c.h.b16 %v59
  %v1008 = vunpack.c.l.b16 %v60
  %v1009 = vunpack.c.h.b16 %v60
  %v1010 = vunpack.c.l.b16 %v61
  %v1011 = vunpack.c.h.b16 %v61
  %v1012 = vunpack.c.l.b16 %v62
  %v1013 = vunpack.c.h.b16 %v62
  %v1014 = vunpack.c.l.b16 %v63
  %v1015 = vunpack.c.h.b16 %v63
  %v1016 = vunpack.c.l.b16 %v64
  %v1017 = vunpack.c.h.b16 %v64
  %v1018 = vunpack.c.l.b16 %v65
  %v1019 = vunpack.c.h.b16 %v65
  %v1020 = vunpack.c.l.b16 %v66
  %v1021 = vunpack.c.h.b16 %v66
  %v1022 = vunpack.c.l.b16 %v67
  %v1023 = vunpack.c.h.b16 %v67
  %v1024 = vunpack.c.l.b16 %v68
  %v1025 = vunpack.c.h.b16 %v68
  %v1026 = vunpack.c.l.b16 %v69
  %v1027 = vunpack.c.h.b16 %v69
  %v1028 = vunpack.c.l.b16 %v70
  %v1029 = vunpack.c.h.b16 %v70
  %v1030 = vunpack.c.l.b16 %v71
  %v1031 = vunpack.c.h.b16 %v71
  %v1032 = vunpack.c.l.b16 %v72
  %v1033 = vunpack.c.h.b16 %v72
  %v1034 = vunpack.c.l.b16 %v73
  %v1035 = vunpack.c.h.b16 %v73
  %v1036 = vunpack.c.l.b16 %v74
  %v1037 = vunpack.c.h.b16 %v74
  %v1038 = vunpack.c.l.b16 %v75
  %v1039 = vunpack.c.h.b16 %v75
  %v1040 = vunpack.c.l.b16 %v76
  %v1041 = vunpack.c.h.b16 %v76
  %v1042 = vunpack.c.l.b16 %v77
  %v1043 = vunpack.c.h.b16 %v77
  %v1044 = vunpack.c.l.b16 %v78
  %v1045 = vunpack.c.h.b16 %v78
  %v1046 = vunpack.c.l.b16 %v79
  %v1047 = vunpack.c.h.b16 %v79
  %v1048 = vunpack.c.l.b16 %v80
  %v1049 = vunpack.c.h.b16 %v80
  %v1050 = vunpack.c.l.b16 %v81
  %v1051 = vunpack.c.h.b16 %v81
  %v1052 = vunpack.c.l.b16 %v82
  %v1053 = vunpack.c.h.b16 %v82
  %v1054 = vunpack.c.l.b16 %v83
  %v1055 = vunpack.c.h.b16 %v83
  %v1056 = vunpack.c.l.b16 %v84
  %v1057 = vunpack.c.h.b16 %v84
  %v1058 = vunpack.c.l.b16 %v85
  %v1059 = vunpack.c.h.b16 %v85
  %v1060 = vunpack.c.l.b16 %v86
  %v1061 = vunpack.c.h.b16 %v86
  %v1062 = vunpack.c.l.b16 %v87
  %v1063 = vunpack.c.h.b16 %v87
  %v1064 = vunpack.c.l.b16 %v88
  %v1065 = vunpack.c.h.b16 %v88
  %v1066 = vunpack.c.l.b16 %v89
  %v1067 = vunpack.c.h.b16 %v89
  %v1068 = vunpack.c.l.b16 %v90
  %v1069 = vunpack.c.h.b16 %v90
  %v1070 = vunpack.c.l.b16 %v91
  %v1071 = vunpack.c.h.b16 %v91
  %v1072 = vunpack.c.l.b16 %v92
  %v1073 = vunpack.c.h.b16 %v92
  %v1074 = vunpack.c.l.b16 %v93
  %v1075 = vunpack.c.h.b16 %v93
  %v1076 = vunpack.c.l.b16 %v94
  %v1077 = vunpack.c.h.b16 %v94
  %v1078 = vunpack.c.l.b16 %v95
  %v1079 = vunpack.c.h.b16 %v95
  %v1080 = vunpack.c.l.b16 %v96
  %v1081 = vunpack.c.h.b16 %v96
  %v1082 = vunpack.c.l.b16 %v97
  %v1083 = vunpack.c.h.b16 %v97
  %v1084 = vunpack.c.l.b16 %v98
  %v1085 = vunpack.c.h.b16 %v98
  %v1086 = vunpack.c.l.b16 %v99
  %v1087 = vunpack.c.h.b16 %v99
  %v1088 = vunpack.c.l.b16 %v100
  %v1089 = vunpack.c.h.b16 %v100
  %v1090 = vunpack.c.l.b16 %v101
  %v1091 = vunpack.c.h.b16 %v101
  %v1092 = vunpack.c.l.b16 %v102
  %v1093 = vunpack.c.h.b16 %v102
  %v1094 = vunpack.c.l.b16 %v103
  %v1095 = vunpack.c.h.b16 %v103
  %v1096 = vunpack.c.l.b16 %v104
  %v1097 = vunpack.c.h.b16 %v104
  %v1098 = vunpack.c.l.b16 %v105
  %v1099 = vunpack.c.h.b16 %v105
  %v1100 = vunpack.c.l.b16 %v106
  %v1101 = vunpack.c.h.b16 %v106
  %v1102 = vunpack.c.l.b16 %v107
  %v1103 = vunpack.c.h.b16 %v107
  %v1104 = vunpack.c.l.b16 %v108
  %v1105 = vunpack.c.h.b16 %v108
  %v1106 = vunpack.c.l.b16 %v109
  %v1107 = vunpack.c.h.b16 %v109
  %v1108 = vunpack.c.l.b16 %v110
  %v1109 = vunpack.c.h.b16 %v110
  %v1110 = vunpack.c.l.b16 %v111
  %v1111 = vunpack.c.h.b16 %v111
  %v1112 = vunpack.c.l.b16 %v112
  %v1113 = vunpack.c.h.b16 %v112
  %v1114 = vunpack.c.l.b16 %v113
  %v1115 = vunpack.c.h.b16 %v113
  %v1116 = vunpack.c.l.b16 %v114
  %v1117 = vunpack.c.h.b16 %v114
  %v1118 = vunpack.c.l.b16 %v115
  %v1119 = vunpack.c.h.b16 %v115
  %v1120 = vunpack.c.l.b16 %v116
  %v1121 = vunpack.c.h.b16 %v116
  %v1122 = vunpack.c.l.b16 %v117
  %v1123 = vunpack.c.h.b16 %v117
  %v1124 = vunpack.c.l.b16 %v118
  %v1125 = vunpack.c.h.b16 %v118
  %v1126 = vunpack.c.l.b16 %v119
  %v1127 = vunpack.c.h.b16 %v119
  %v1128 = vunpack.c.l.b16 %v120
  %v1129 = vunpack.c.h.b16 %v120
  %v1130 = vunpack.c.l.b16 %v121
  %v1131 = vunpack.c.h.b16 %v121
  %v1132 = vunpack.c.l.b16 %v122
  %v1133 = vunpack.c.h.b16 %v122
  %v1134 = vunpack.c.l.b16 %v123
  %v1135 = vunpack.c.h.b16 %v123
  %v1136 = vunpack.c.l.b16 %v124
  %v1137 = vunpack.c.h.b16 %v124
  %v1138 = vunpack.c.l.b16 %v125
  %v1139 = vunpack.c.h.b16 %v125
  %v1140 = vunpack.c.l.b16 %v126
  %v1141 = vunpack.c.h.b16 %v126
  %v1142 = vunpack.c.l.b16 %v127
  %v1143 = vunpack.c.h.b16 %v127
  %v1144 = vunpack.c.l.b16 %v128
  %v1145 = vunpack.c.h.b16 %v128
  %v1146 = vunpack.c.l.b16 %v129
  %v1147 = vunpack.c.h.b16 %v129
  %v1148 = vunpack.c.l.b16 %v130
  %v1149 = vunpack.c.h.b16 %v130
  %v1150 = vunpack.c.l.b16 %v131
  %v1151 = vunpack.c.h.b16 %v131
  %v1152 = vunpack.c.l.b16 %v132
  %v1153 = vunpack.c.h.b16 %v132
  %v1154 = vunpack.c.l.b16 %v133
  %v1155 = vunpack.c.h.b16 %v133
  %v1156 = vunpack.c.l.b16 %v134
  %v1157 = vunpack.c.h.b16 %v134
  %v1158 = vunpack.c.l.b16 %v135
  %v1159 = vunpack.c.h.b16 %v135
  %v1160 = vunpack.c.l.b16 %v136
  %v1161 = vunpack.c.h.b16 %v136
  %v1162 = vunpack.c.l.b16 %v137
  %v1163 = vunpack.c.h.b16 %v137
  %v1164 = vunpack.c.l.b16 %v138
  %v1165 = vunpack.c.h.b16 %v138
  %v1166 = vunpack.c.l.b16 %v139
  %v1167 = vunpack.c.h.b16 %v139
  %v1168 = vunpack.c.l.b16 %v140
  %v1169 = vunpack.c.h.b16 %v140
  %v1170 = vunpack.c.l.b16 %v141
  %v1171 = vunpack.c.h.b16 %v141
  %v1172 = vunpack.c.l.b16 %v142
  %v1173 = vunpack.c.h.b16 %v142
  %v1174 = vunpack.c.l.b16 %v143
  %v1175 = vunpack.c.h.b16 %v143
  %v1176 = vunpack.c.l.b16 %v144
  %v1177 = vunpack.c.h.b16 %v144
  %v1178 = vunpack.c.l.b16 %v145
  %v1179 = vunpack.c.h.b16 %v145
  %v1180 = vunpack.c.l.b16 %v146
  %v1181 = vunpack.c.h.b16 %v146
  %v1182 = vunpack.c.l.b16 %v147
  %v1183 = vunpack.c.h.b16 %v147
  %v1184 = vunpack.c.l.b16 %v148
  %v1185 = vunpack.c.h.b16 %v148
  %v1186 = vunpack.c.l.b16 %v149
  %v1187 = vunpack.c.h.b16 %v149
  %v1188 = vunpack.c.l.b16 %v150
  %v1189 = vunpack.c.h.b16 %v150
  %v1190 = vunpack.c.l.b16 %v151
  %v1191 = vunpack.c.h.b16 %v151
  %v1192 = vunpack.c.l.b16 %v152
  %v1193 = vunpack.c.h.b16 %v152
  %v1194 = vunpack.c.l.b16 %v153
  %v1195 = vunpack.c.h.b16 %v153
  %v1196 = vunpack.c.l.b16 %v154
  %v1197 = vunpack.c.h.b16 %v154
  %v1198 = vunpack.c.l.b16 %v155
  %v1199 = vunpack.c.h.b16 %v155
  %v1200 = vunpack.c.l.b16 %v156
  %v1201 = vunpack.c.h.b16 %v156
  %v1202 = vunpack.c.l.b16 %v157
  %v1203 = vunpack.c.h.b16 %v157
  %v1204 = vunpack.c.l.b16 %v158
  %v1205 = vunpack.c.h.b16 %v158
  %v1206 = vunpack.c.l.b16 %v159
  %v1207 = vunpack.c.h.b16 %v159
  %v1208 = vunpack.c.l.b16 %v160
  %v1209 = vunpack.c.h.b16 %v160
  %v1210 = vunpack.c.l.b16 %v161
  %v1211 = vunpack.c.h.b16 %v161
  %v1212 = vunpack.c.l.b16 %v162
  %v1213 = vunpack.c.h.b16 %v162
  %v1214 = vunpack.c.l.b16 %v163
  %v1215 = vunpack.c.h.b16 %v163
  %v1216 = vunpack.c.l.b16 %v164
  %v1217 = vunpack.c.h.b16 %v164
  %v1218 = vunpack.c.l.b16 %v165
  %v1219 = vunpack.c.h.b16 %v165
  %v1220 = vunpack.c.l.b16 %v166
  %v1221 = vunpack.c.h.b16 %v166
  %v1222 = vunpack.c.l.b16 %v167
  %v1223 = vunpack.c.h.b16 %v167
  %v1224 = vunpack.c.l.b16 %v168
  %v1225 = vunpack.c.h.b16 %v168
  %v1226 = vunpack.c.l.b16 %v169
  %v1227 = vunpack.c.h.b16 %v169
  %v1228 = vunpack.c.l.b16 %v170
  %v1229 = vunpack.c.h.b16 %v170
  %v1230 = vunpack.c.l.b16 %v171
  %v1231 = vunpack.c.h.b16 %v171
  %v1232 = vunpack.c.l.b16 %v172
  %v1233 = vunpack.c.h.b16 %v172
  %v1234 = vunpack.c.l.b16 %v173
  %v1235 = vunpack.c.h.b16 %v173
  %v1236 = vunpack.c.l.b16 %v174
  %v1237 = vunpack.c.h.b16 %v174
  %v1238 = vunpack.c.l.b16 %v175
  %v1239 = vunpack.c.h.b16 %v175
  %v1240 = vunpack.c.l.b16 %v176
  %v1241 = vunpack.c.h.b16 %v176
  %v1242 = vunpack.c.l.b16 %v177
  %v1243 = vunpack.c.h.b16 %v177
  %v1244 = vunpack.c.l.b16 %v178
  %v1245 = vunpack.c.h.b16 %v178
  %v1246 = vunpack.c.l.b16 %v179
  %v1247 = vunpack.c.h.b16 %v179
  %v1248 = vunpack.c.l.b16 %v180
  %v1249 = vunpack.c.h.b16 %v180
  %v1250 = vunpack.c.l.b16 %v181
  %v1251 = vunpack.c.h.b16 %v181
  %v1252 = vunpack.c.l.b16 %v182
  %v1253 = vunpack.c.h.b16 %v182
  %v1254 = vunpack.c.l.b16 %v183
  %v1255 = vunpack.c.h.b16 %v183
  %v1256 = vunpack.c.l.b16 %v184
  %v1257 = vunpack.c.h.b16 %v184
  %v1258 = vunpack.c.l.b16 %v185
  %v1259 = vunpack.c.h.b16 %v185
  %v1260 = vunpack.c.l.b16 %v186
  %v1261 = vunpack.c.h.b16 %v186
  %v1262 = vunpack.c.l.b16 %v187
  %v1263 = vunpack.c.h.b16 %v187
  %v1264 = vunpack.c.l.b16 %v188
  %v1265 = vunpack.c.h.b16 %v188
  %v1266 = vunpack.c.l.b16 %v189
  %v1267 = vunpack.c.h.b16 %v189
  %v1268 = vunpack.c.l.b16 %v190
  %v1269 = vunpack.c.h.b16 %v190
  %v1270 = vunpack.c.l.b16 %v191
  %v1271 = vunpack.c.h.b16 %v191
  %v1272 = vunpack.c.l.b16 %v192
  %v1273 = vunpack.c.h.b16 %v192
  %v1274 = vunpack.c.l.b16 %v193
  %v1275 = vunpack.c.h.b16 %v193
  %v1276 = vunpack.c.l.b16 %v194
  %v1277 = vunpack.c.h.b16 %v194
  %v1278 = vunpack.c.l.b16 %v195
  %v1279 = vunpack.c.h.b16 %v195
  %v1280 = vunpack.c.l.b16 %v196
  %v1281 = vunpack.c.h.b16 %v196
  %v1282 = vunpack.c.l.b16 %v197
  %v1283 = vunpack.c.h.b16 %v197
  %v1284 = vunpack.c.l.b16 %v198
  %v1285 = vunpack.c.h.b16 %v198
  %v1286 = vunpack.c.l.b16 %v199
  %v1287 = vunpack.c.h.b16 %v199
  %v1288 = vunpack.c.l.b16 %v200
  %v1289 = vunpack.c.h.b16 %v200
  %v1290 = vunpack.c.l.b16 %v201
  %v1291 = vunpack.c.h.b16 %v201
  %v1292 = vunpack.c.l.b16 %v202
  %v1293 = vunpack.c.h.b16 %v202
  %v1294 = vunpack.c.l.b16 %v203
  %v1295 = vunpack.c.h.b16 %v203
  %v1296 = vunpack.c.l.b16 %v204
  %v1297 = vunpack.c.h.b16 %v204
  %v1298 = vunpack.c.l.b16 %v205
  %v1299 = vunpack.c.h.b16 %v205
  %v1300 = vunpack.c.l.b16 %v206
  %v1301 = vunpack.c.h.b16 %v206
  %v1302 = vpack.c.b16 %v950, %v918
  %v1303 = vpack.c.b16 %v951, %v919
  %v1304 = vpack.c.b16 %v952, %v920
  %v1305 = vpack.c.b16 %v953, %v921
  %v1306 = vpack.c.b16 %v954, %v922
  %v1307 = vpack.c.b16 %v955, %v923
  %v1308 = vpack.c.b16 %v956, %v924
  %v1309 = vpack.c.b16 %v957, %v925
  %v1310 = vpack.c.b16 %v958, %v926
  %v1311 = vpack.c.b16 %v959, %v927
  %v1312 = vpack.c.b16 %v960, %v928
  %v1313 = vpack.c.b16 %v961, %v929
  %v1314 = vpack.c.b16 %v962, %v930
  %v1315 = vpack.c.b16 %v963, %v931
  %v1316 = vpack.c.b16 %v964, %v932
  %v1317 = vpack.c.b16 %v965, %v933
  %v1318 = vpack.c.b16 %v966, %v934
  %v1319 = vpack.c.b16 %v967, %v935
  %v1320 = vpack.c.b16 %v968, %v936
  %v1321 = vpack.c.b16 %v969, %v937
  %v1322 = vpack.c.b16 %v970, %v938
  %v1323 = vpack.c.b16 %v971, %v939
  %v1324 = vpack.c.b16 %v972, %v940
  %v1325 = vpack.c.b16 %v973, %v941
  %v1326 = vpack.c.b16 %v974, %v942
  %v1327 = vpack.c.b16 %v975, %v943
  %v1328 = vpack.c.b16 %v976, %v944
  %v1329 = vpack.c.b16 %v977, %v945
  %v1330 = vpack.c.b16 %v978, %v946
  %v1331 = vpack.c.b16 %v979, %v947
  %v1332 = vpack.c.b16 %v980, %v948
  %v1333 = vpack.c.b16 %v981, %v949
  %v1334 = vpack.c.b16 %v1014, %v982
  %v1335 = vpack.c.b16 %v1015, %v983
  %v1336 = vpack.c.b16 %v1016, %v984
  %v1337 = vpack.c.b16 %v1017, %v985
  %v1338 = vpack.c.b16 %v1018, %v986
  %v1339 = vpack.c.b16 %v1019, %v987
  %v1340 = vpack.c.b16 %v1020, %v988
  %v1341 = vpack.c.b16 %v1021, %v989
  %v1342 = vpack.c.b16 %v1022, %v990
  %v1343 = vpack.c.b16 %v1023, %v991
  %v1344 = vpack.c.b16 %v1024, %v992
  %v1345 = vpack.c.b16 %v1025, %v993
  %v1346 = vpack.c.b16 %v1026, %v994
  %v1347 = vpack.c.b16 %v1027, %v995
  %v1348 = vpack.c.b16 %v1028, %v996
  %v1349 = vpack.c.b16 %v1029, %v997
  %v1350 = vpack.c.b16 %v1030, %v998
  %v1351 = vpack.c.b16 %v1031, %v999
  %v1352 = vpack.c.b16 %v1032, %v1000
  %v1353 = vpack.c.b16 %v1033, %v1001
  %v1354 = vpack.c.b16 %v1034, %v1002
  %v1355 = vpack.c.b16 %v1035, %v1003
  %v1356 = vpack.c.b16 %v1036, %v1004
  %v1357 = vpack.c.b16 %v1037, %v1005
  %v1358 = vpack.c.b16 %v1038, %v1006
  %v1359 = vpack.c.b16 %v1039, %v1007
  %v1360 = vpack.c.b16 %v1040, %v1008
  %v1361 = vpack.c.b16 %v1041, %v1009
  %v1362 = vpack.c.b16 %v1042, %v1010
  %v1363 = vpack.c.b16 %v1043, %v1011
  %v1364 = vpack.c.b16 %v1044, %v1012
  %v1365 = vpack.c.b16 %v1045, %v1013
  %v1366 = vpack.c.b16 %v1078, %v1046
  %v1367 = vpack.c.b16 %v1079, %v1047
  %v1368 = vpack.c.b16 %v1080, %v1048
  %v1369 = vpack.c.b16 %v1081, %v1049
  %v1370 = vpack.c.b16 %v1082, %v1050
  %v1371 = vpack.c.b16 %v1083, %v1051
  %v1372 = vpack.c.b16 %v1084, %v1052
  %v1373 = vpack.c.b16 %v1085, %v1053
  %v1374 = vpack.c.b16 %v1086, %v1054
  %v1375 = vpack.c.b16 %v1087, %v1055
  %v1376 = vpack.c.b16 %v1088, %v1056
  %v1377 = vpack.c.b16 %v1089, %v1057
  %v1378 = vpack.c.b16 %v1090, %v1058
  %v1379 = vpack.c.b16 %v1091, %v1059
  %v1380 = vpack.c.b16 %v1092, %v1060
  %v1381 = vpack.c.b16 %v1093, %v1061
  %v1382 = vpack.c.b16 %v1094, %v1062
  %v1383 = vpack.c.b16 %v1095, %v1063
  %v1384 = vpack.c.b16 %v1096, %v1064
  %v1385 = vpack.c.b16 %v1097, %v1065
  %v1386 = vpack.c.b16 %v1098, %v1066
  %v1387 = vpack.c.b16 %v1099, %v1067
  %v1388 = vpack.c.b16 %v1100, %v1068
  %v1389 = vpack.c.b16 %v1101, %v1069
  %v1390 = vpack.c.b16 %v1102, %v1070
  %v1391 = vpack.c.b16 %v1103, %v1071
  %v1392 = vpack.c.b16 %v1104, %v1072
  %v1393 = vpack.c.b16 %v1105, %v1073
  %v1394 = vpack.c.b16 %v1106, %v1074
  %v1395 = vpack.c.b16 %v1107, %v1075
  %v1396 = vpack.c.b16 %v1108, %v1076
  %v1397 = vpack.c.b16 %v1109, %v1077
  %v1398 = vpack.c.b16 %v1142, %v1110
  %v1399 = vpack.c.b16 %v1143, %v1111
  %v1400 = vpack.c.b16 %v1144, %v1112
  %v1401 = vpack.c.b16 %v1145, %v1113
  %v1402 = vpack.c.b16 %v1146, %v1114
  %v1403 = vpack.c.b16 %v1147, %v1115
  %v1404 = vpack.c.b16 %v1148, %v1116
  %v1405 = vpack.c.b16 %v1149, %v1117
  %v1406 = vpack.c.b16 %v1150, %v1118
  %v1407 = vpack.c.b16 %v1151, %v1119
  %v1408 = vpack.c.b16 %v1152, %v1120
  %v1409 = vpack.c.b16 %v1153, %v1121
  %v1410 = vpack.c.b16 %v1154, %v1122
  %v1411 = vpack.c.b16 %v1155, %v1123
  %v1412 = vpack.c.b16 %v1156, %v1124
  %v1413 = vpack.c.b16 %v1157, %v1125
  %v1414 = vpack.c.b16 %v1158, %v1126
  %v1415 = vpack.c.b16 %v1159, %v1127
  %v1416 = vpack.c.b16 %v1160, %v1128
  %v1417 = vpack.c.b16 %v1161, %v1129
  %v1418 = vpack.c.b16 %v1162, %v1130
  %v1419 = vpack.c.b16 %v1163, %v1131
  %v1420 = vpack.c.b16 %v1164, %v1132
  %v1421 = vpack.c.b16 %v1165, %v1133
  %v1422 = vpack.c.b16 %v1166, %v1134
  %v1423 = vpack.c.b16 %v1167, %v1135
  %v1424 = vpack.c.b16 %v1168, %v1136
  %v1425 = vpack.c.b16 %v1169, %v1137
  %v1426 = vpack.c.b16 %v1170, %v1138
  %v1427 = vpack.c.b16 %v1171, %v1139
  %v1428 = vpack.c.b16 %v1172, %v1140
  %v1429 = vpack.c.b16 %v1173, %v1141
  %v1430 = vpack.c.b16 %v1206, %v1174
  %v1431 = vpack.c.b16 %v1207, %v1175
  %v1432 = vpack.c.b16 %v1208, %v1176
  %v1433 = vpack.c.b16 %v1209, %v1177
  %v1434 = vpack.c.b16 %v1210, %v1178
  %v1435 = vpack.c.b16 %v1211, %v1179
  %v1436 = vpack.c.b16 %v1212, %v1180
  %v1437 = vpack.c.b16 %v1213, %v1181
  %v1438 = vpack.c.b16 %v1214, %v1182
  %v1439 = vpack.c.b16 %v1215, %v1183
  %v1440 = vpack.c.b16 %v1216, %v1184
  %v1441 = vpack.c.b16 %v1217, %v1185
  %v1442 = vpack.c.b16 %v1218, %v1186
  %v1443 = vpack.c.b16 %v1219, %v1187
  %v1444 = vpack.c.b16 %v1220, %v1188
  %v1445 = vpack.c.b16 %v1221, %v1189
  %v1446 = vpack.c.b16 %v1222, %v1190
  %v1447 = vpack.c.b16 %v1223, %v1191
  %v1448 = vpack.c.b16 %v1224, %v1192
  %v1449 = vpack.c.b16 %v1225, %v1193
  %v1450 = vpack.c.b16 %v1226, %v1194
  %v1451 = vpack.c.b16 %v1227, %v1195
  %v1452 = vpack.c.b16 %v1228, %v1196
  %v1453 = vpack.c.b16 %v1229, %v1197
  %v1454 = vpack.c.b16 %v1230, %v1198
  %v1455 = vpack.c.b16 %v1231, %v1199
  %v1456 = vpack.c.b16 %v1232, %v1200
  %v1457 = vpack.c.b16 %v1233, %v1201
  %v1458 = vpack.c.b16 %v1234, %v1202
  %v1459 = vpack.c.b16 %v1235, %v1203
  %v1460 = vpack.c.b16 %v1236, %v1204
  %v1461 = vpack.c.b16 %v1237, %v1205
  %v1462 = vpack.c.b16 %v1270, %v1238
  %v1463 = vpack.c.b16 %v1271, %v1239
  %v1464 = vpack.c.b16 %v1272, %v1240
  %v1465 = vpack.c.b16 %v1273, %v1241
  %v1466 = vpack.c.b16 %v1274, %v1242
  %v1467 = vpack.c.b16 %v1275, %v1243
  %v1468 = vpack.c.b16 %v1276, %v1244
  %v1469 = vpack.c.b16 %v1277, %v1245
  %v1470 = vpack.c.b16 %v1278, %v1246
  %v1471 = vpack.c.b16 %v1279, %v1247
  %v1472 = vpack.c.b16 %v1280, %v1248
  %v1473 = vpack.c.b16 %v1281, %v1249
  %v1474 = vpack.c.b16 %v1282, %v1250
  %v1475 = vpack.c.b16 %v1283, %v1251
  %v1476 = vpack.c.b16 %v1284, %v1252
  %v1477 = vpack.c.b16 %v1285, %v1253
  %v1478 = vpack.c.b16 %v1286, %v1254
  %v1479 = vpack.c.b16 %v1287, %v1255
  %v1480 = vpack.c.b16 %v1288, %v1256
  %v1481 = vpack.c.b16 %v1289, %v1257
  %v1482 = vpack.c.b16 %v1290, %v1258
  %v1483 = vpack.c.b16 %v1291, %v1259
  %v1484 = vpack.c.b16 %v1292, %v1260
  %v1485 = vpack.c.b16 %v1293, %v1261
  %v1486 = vpack.c.b16 %v1294, %v1262
  %v1487 = vpack.c.b16 %v1295, %v1263
  %v1488 = vpack.c.b16 %v1296, %v1264
  %v1489 = vpack.c.b16 %v1297, %v1265
  %v1490 = vpack.c.b16 %v1298, %v1266
  %v1491 = vpack.c.b16 %v1299, %v1267
  %v1492 = vpack.c.b16 %v1300, %v1268
  %v1493 = vpack.c.b16 %v1301, %v1269
  %v2198 = vunpack.c.l.b16 %v207
  %v2199 = vunpack.c.l.b16 %v208
  %v2200 = vunpack.c.l.b16 %v209
  %v2201 = vunpack.c.l.b16 %v210
  %v2202 = vunpack.c.l.b16 %v211
  %v2203 = vunpack.c.l.b16 %v212
  %v2204 = vunpack.c.l.b16 %v213
  %v2205 = vunpack.c.l.b16 %v214
  %v2206 = vunpack.c.l.b16 %v215
  %v2207 = vunpack.c.l.b16 %v216
  %v2208 = vunpack.c.l.b16 %v217
  %v2209 = vunpack.c.l.b16 %v218
  %v2210 = vunpack.c.l.b16 %v219
  %v2211 = vunpack.c.l.b16 %v220
  %v2212 = vunpack.c.l.b16 %v221
  %v2213 = vunpack.c.l.b16 %v222
  %v2214 = vunpack.c.l.b16 %v223
  %v2215 = vunpack.c.l.b16 %v224
  %v2216 = vunpack.c.l.b16 %v225
  %v2217 = vunpack.c.l.b16 %v226
  %v2218 = vunpack.c.l.b16 %v227
  %v2219 = vunpack.c.l.b16 %v228
  %v2220 = vunpack.c.l.b16 %v229
  %v2221 = vunpack.c.l.b16 %v230
  %v2222 = vunpack.c.l.b16 %v231
  %v2223 = vunpack.c.l.b16 %v232
  %v2224 = vunpack.c.l.b16 %v233
  %v2225 = vunpack.c.l.b16 %v234
  %v2226 = vunpack.c.l.b16 %v235
  %v2227 = vunpack.c.l.b16 %v236
  %v2228 = vunpack.c.l.b16 %v237
  %v2229 = vunpack.c.l.b16 %v238
  %v2230 = vunpack.c.l.b16 %v239
  %v2231 = vunpack.c.l.b16 %v240
  %v2232 = vunpack.c.l.b16 %v241
  %v2233 = vunpack.c.l.b16 %v242
  %v2234 = vunpack.c.l.b16 %v243
  %v2235 = vunpack.c.l.b16 %v244
  %v2236 = vunpack.c.l.b16 %v245
  %v2237 = vunpack.c.l.b16 %v246
  %v2238 = vunpack.c.l.b16 %v247
  %v2239 = vunpack.c.l.b16 %v248
  %v2240 = vunpack.c.l.b16 %v249
  %v2241 = vunpack.c.l.b16 %v250
  %v2242 = vunpack.c.l.b16 %v251
  %v2243 = vunpack.c.l.b16 %v252
  %v2244 = vunpack.c.l.b16 %v253
  %v2245 = vunpack.c.l.b16 %v254
  %v2246 = vunpack.c.l.b16 %v255
  %v2247 = vunpack.c.l.b16 %v256
  %v2248 = vunpack.c.l.b16 %v257
  %v2249 = vunpack.c.l.b16 %v258
  %v2250 = vunpack.c.l.b16 %v259
  %v2251 = vunpack.c.l.b16 %v260
  %v2252 = vunpack.c.l.b16 %v261
  %v2253 = vunpack.c.l.b16 %v262
  %v2254 = vunpack.c.l.b16 %v263
  %v2255 = vunpack.c.l.b16 %v264
  %v2256 = vunpack.c.l.b16 %v265
  %v2257 = vunpack.c.l.b16 %v266
  %v2258 = vunpack.c.l.b16 %v267
  %v2259 = vunpack.c.l.b16 %v268
  %v2260 = vunpack.c.l.b16 %v269
  %v2261 = vunpack.c.l.b16 %v270
  %v2262 = vunpack.c.l.b16 %v271
  %v2263 = vunpack.c.l.b16 %v272
  %v2264 = vunpack.c.l.b16 %v273
  %v2265 = vunpack.c.l.b16 %v274
  %v2266 = vunpack.c.l.b16 %v275
  %v2267 = vunpack.c.l.b16 %v276
  %v2268 = vunpack.c.l.b16 %v277
  %v2269 = vunpack.c.l.b16 %v278
  %v2270 = vunpack.c.l.b16 %v279
  %v2271 = vunpack.c.l.b16 %v280
  %v2272 = vunpack.c.l.b16 %v281
  %v2273 = vunpack.c.l.b16 %v282
  %v2274 = vunpack.c.l.b16 %v283
  %v2275 = vunpack.c.l.b16 %v284
  %v2276 = vunpack.c.l.b16 %v285
  %v2277 = vunpack.c.l.b16 %v286
  %v2278 = vunpack.c.l.b16 %v287
  %v2279 = vunpack.c.l.b16 %v288
  %v2280 = vunpack.c.l.b16 %v289
  %v2281 = vunpack.c.l.b16 %v290
  %v2282 = vunpack.c.l.b16 %v291
  %v2283 = vunpack.c.l.b16 %v292
  %v2284 = vunpack.c.l.b16 %v293
  %v2285 = vunpack.c.l.b16 %v294
  %v2286 = vunpack.c.l.b16 %v295
  %v2287 = vunpack.c.l.b16 %v296
  %v2288 = vunpack.c.l.b16 %v297
  %v2289 = vunpack.c.l.b16 %v298
  %v2290 = vunpack.c.l.b16 %v299
  %v2291 = vunpack.c.l.b16 %v300
  %v2292 = vunpack.c.l.b16 %v301
  %v2293 = vunpack.c.l.b16 %v302
  %v2294 = vunpack.c.l.b16 %v303
  %v2295 = vunpack.c.l.b16 %v304
  %v2296 = vunpack.c.l.b16 %v305
  %v2297 = vunpack.c.l.b16 %v306
  %v2298 = vunpack.c.l.b16 %v307
  %v2299 = vunpack.c.l.b16 %v308
  %v2300 = vunpack.c.l.b16 %v309
  %v2301 = vunpack.c.l.b16 %v310
  %v2302 = vunpack.c.l.b16 %v311
  %v2303 = vunpack.c.l.b16 %v312
  %v2304 = vunpack.c.l.b16 %v313
  %v2305 = vunpack.c.l.b16 %v314
  %v2306 = vunpack.c.l.b16 %v315
  %v2307 = vunpack.c.l.b16 %v316
  %v2308 = vunpack.c.l.b16 %v317
  %v2309 = vunpack.c.l.b16 %v318
  %v2310 = vunpack.c.l.b16 %v319
  %v2311 = vunpack.c.l.b16 %v320
  %v2312 = vunpack.c.l.b16 %v321
  %v2313 = vunpack.c.l.b16 %v322
  %v2314 = vunpack.c.l.b16 %v323
  %v2315 = vunpack.c.l.b16 %v324
  %v2316 = vunpack.c.l.b16 %v325
  %v2317 = vunpack.c.l.b16 %v326
  %v2318 = vunpack.c.l.b16 %v327
  %v2319 = vunpack.c.l.b16 %v328
  %v2320 = vunpack.c.l.b16 %v329
  %v2321 = vunpack.c.l.b16 %v330
  %v2322 = vunpack.c.l.b16 %v331
  %v2323 = vunpack.c.l.b16 %v332
  %v2324 = vunpack.c.l.b16 %v333
  %v2325 = vunpack.c.l.b16 %v334
  %v2326 = vunpack.c.l.b16 %v335
  %v2327 = vunpack.c.l.b16 %v336
  %v2328 = vunpack.c.l.b16 %v337
  %v2329 = vunpack.c.l.b16 %v338
  %v2330 = vunpack.c.l.b16 %v339
  %v2331 = vunpack.c.l.b16 %v340
  %v2332 = vunpack.c.l.b16 %v341
  %v2333 = vunpack.c.l.b16 %v342
  %v2334 = vunpack.c.l.b16 %v343
  %v2335 = vunpack.c.l.b16 %v344
  %v2336 = vunpack.c.l.b16 %v345
  %v2337 = vunpack.c.l.b16 %v346
  %v2338 = vunpack.c.l.b16 %v347
  %v2339 = vunpack.c.l.b16 %v348
  %v2340 = vunpack.c.l.b16 %v349
  %v2341 = vunpack.c.l.b16 %v350
  %v2342 = vunpack.c.l.b16 %v351
  %v2343 = vunpack.c.l.b16 %v352
  %v2344 = vunpack.c.l.b16 %v353
  %v2345 = vunpack.c.l.b16 %v354
  %v2346 = vunpack.c.l.b16 %v355
  %v2347 = vunpack.c.l.b16 %v356
  %v2348 = vunpack.c.l.b16 %v357
  %v2349 = vunpack.c.l.b16 %v358
  %v2350 = vunpack.c.l.b16 %v359
  %v2351 = vunpack.c.l.b16 %v360
  %v2352 = vunpack.c.l.b16 %v361
  %v2353 = vunpack.c.l.b16 %v362
  %v2354 = vunpack.c.l.b16 %v363
  %v2355 = vunpack.c.l.b16 %v364
  %v2356 = vunpack.c.l.b16 %v365
  %v2357 = vunpack.c.l.b16 %v366
  %v2358 = vunpack.c.l.b16 %v367
  %v2359 = vunpack.c.l.b16 %v368
  %v2360 = vunpack.c.l.b16 %v369
  %v2361 = vunpack.c.l.b16 %v370
  %v2362 = vunpack.c.l.b16 %v371
  %v2363 = vunpack.c.l.b16 %v372
  %v2364 = vunpack.c.l.b16 %v373
  %v2365 = vunpack.c.l.b16 %v374
  %v2366 = vunpack.c.l.b16 %v375
  %v2367 = vunpack.c.l.b16 %v376
  %v2368 = vunpack.c.l.b16 %v377
  %v2369 = vunpack.c.l.b16 %v378
  %v2370 = vunpack.c.l.b16 %v379
  %v2371 = vunpack.c.l.b16 %v380
  %v2372 = vunpack.c.l.b16 %v381
  %v2373 = vunpack.c.l.b16 %v382
  %v2374 = vunpack.c.l.b16 %v383
  %v2375 = vunpack.c.l.b16 %v384
  %v2376 = vunpack.c.l.b16 %v385
  %v2377 = vunpack.c.l.b16 %v386
  %v2378 = vunpack.c.l.b16 %v387
  %v2379 = vunpack.c.l.b16 %v388
  %v2380 = vunpack.c.l.b16 %v389
  %v2381 = vunpack.c.l.b16 %v390
  %v2382 = vunpack.c.l.b16 %v391
  %v2383 = vunpack.c.l.b16 %v392
  %v2384 = vunpack.c.l.b16 %v393
  %v2385 = vunpack.c.l.b16 %v394
  %v2386 = vunpack.c.l.b16 %v395
  %v2387 = vunpack.c.l.b16 %v396
  %v2388 = vunpack.c.l.b16 %v397
  %v2389 = vunpack.c.l.b16 %v398
  %v2390 = vunpack.c.l.b16 %v399
  %v2391 = vunpack.c.l.b16 %v400
  %v2392 = vunpack.c.l.b16 %v401
  %v2393 = vunpack.c.l.b16 %v402
  %v2394 = vunpack.c.l.b16 %v403
  %v2395 = vunpack.c.l.b16 %v404
  %v2396 = vunpack.c.l.b16 %v405
  %v2397 = vunpack.c.l.b16 %v406
  %v2398 = vunpack.c.l.b16 %v407
  %v2399 = vunpack.c.l.b16 %v408
  %v2400 = vunpack.c.l.b16 %v409
  %v2401 = vunpack.c.l.b16 %v410
  %v2402 = vunpack.c.l.b16 %v411
  %v2403 = vunpack.c.l.b16 %v412
  %v2404 = vunpack.c.l.b16 %v413
  %v2405 = vunpack.c.l.b16 %v414
  %v2406 = vunpack.c.l.b16 %v415
  %v2407 = vunpack.c.l.b16 %v416
  %v2408 = vunpack.c.l.b16 %v417
  %v2409 = vunpack.c.l.b16 %v418
  %v2410 = vunpack.c.l.b16 %v419
  %v2411 = vunpack.c.l.b16 %v420
  %v2412 = vunpack.c.l.b16 %v421
  %v2413 = vunpack.c.l.b16 %v422
  %v2414 = vunpack.c.l.b16 %v423
  %v2415 = vunpack.c.l.b16 %v424
  %v2416 = vunpack.c.l.b16 %v425
  %v2417 = vunpack.c.l.b16 %v426
  %v2418 = vunpack.c.l.b16 %v427
  %v2419 = vunpack.c.l.b16 %v428
  %v2420 = vunpack.c.l.b16 %v429
  %v2421 = vunpack.c.l.b16 %v430
  %v2422 = vunpack.c.l.b16 %v431
  %v2423 = vunpack.c.l.b16 %v432
  %v2424 = vunpack.c.l.b16 %v433
  %v2425 = vunpack.c.l.b16 %v434
  %v2426 = vunpack.c.l.b16 %v435
  %v2427 = vunpack.c.l.b16 %v436
  %v2428 = vunpack.c.l.b16 %v437
  %v2429 = vunpack.c.l.b16 %v438
  %v2430 = vunpack.c.l.b16 %v439
  %v2431 = vunpack.c.l.b16 %v440
  %v2432 = vunpack.c.l.b16 %v441
  %v2433 = vunpack.c.l.b16 %v442
  %v2434 = vunpack.c.l.b16 %v443
  %v2435 = vunpack.c.l.b16 %v444
  %v2436 = vunpack.c.l.b16 %v445
  %v2437 = vunpack.c.l.b16 %v446
  %v2438 = vunpack.c.l.b16 %v447
  %v2439 = vunpack.c.l.b16 %v448
  %v2440 = vunpack.c.l.b16 %v449
  %v2441 = vunpack.c.l.b16 %v450
  %v2442 = vunpack.c.l.b16 %v451
  %v2443 = vunpack.c.l.b16 %v452
  %v2444 = vunpack.c.l.b16 %v453
  %v2445 = vunpack.c.l.b16 %v454
  %v2446 = vunpack.c.l.b16 %v455
  %v2447 = vunpack.c.l.b16 %v456
  %v2448 = vunpack.c.l.b16 %v457
  %v2449 = vunpack.c.l.b16 %v458
  %v2450 = vunpack.c.l.b16 %v459
  %v2451 = vunpack.c.l.b16 %v460
  %v2452 = vunpack.c.l.b16 %v461
  %v2453 = vunpack.c.l.b16 %v462
  %v2454 = vunpack.c.l.b16 %v463
  %v2455 = vunpack.c.l.b16 %v464
  %v2456 = vunpack.c.l.b16 %v465
  %v2457 = vunpack.c.l.b16 %v466
  %v2458 = vunpack.c.l.b16 %v467
  %v2459 = vunpack.c.l.b16 %v468
  %v2460 = vunpack.c.l.b16 %v469
  %v2461 = vunpack.c.l.b16 %v470
  %v2462 = vunpack.c.l.b16 %v471
  %v2463 = vunpack.c.l.b16 %v472
  %v2464 = vunpack.c.l.b16 %v473
  %v2465 = vunpack.c.l.b16 %v474
  %v2466 = vunpack.c.l.b16 %v475
  %v2467 = vunpack.c.l.b16 %v476
  %v2468 = vunpack.c.l.b16 %v477
  %v2469 = vunpack.c.l.b16 %v478
  %v2470 = vunpack.c.l.b16 %v479
  %v2471 = vunpack.c.l.b16 %v480
  %v2472 = vunpack.c.l.b16 %v481
  %v2473 = vunpack.c.l.b16 %v482
  %v2474 = vunpack.c.l.b16 %v483
  %v2475 = vunpack.c.l.b16 %v484
  %v2476 = vunpack.c.l.b16 %v485
  %v2477 = vunpack.c.l.b16 %v486
  %v2478 = vunpack.c.l.b16 %v487
  %v2479 = vunpack.c.l.b16 %v488
  %v2480 = vunpack.c.l.b16 %v489
  %v2481 = vunpack.c.l.b16 %v490
  %v2482 = vunpack.c.l.b16 %v491
  %v2483 = vunpack.c.l.b16 %v492
  %v2484 = vunpack.c.l.b16 %v493
  %v2485 = vunpack.c.l.b16 %v494
  %v2486 = vunpack.c.l.b16 %v495
  %v2487 = vunpack.c.l.b16 %v496
  %v2488 = vunpack.c.l.b16 %v497
  %v2489 = vunpack.c.l.b16 %v498
  %v2490 = vunpack.c.l.b16 %v499
  %v2491 = vunpack.c.l.b16 %v500
  %v2492 = vunpack.c.l.b16 %v501
  %v2493 = vunpack.c.l.b16 %v502
  %v2494 = vunpack.c.l.b16 %v503
  %v2495 = vunpack.c.l.b16 %v504
  %v2496 = vunpack.c.l.b16 %v505
  %v2497 = vunpack.c.l.b16 %v506
  %v2498 = vunpack.c.l.b16 %v507
  %v2499 = vunpack.c.l.b16 %v508
  %v2500 = vunpack.c.l.b16 %v509
  %v2501 = vunpack.c.l.b16 %v510
  %v2502 = vunpack.c.l.b16 %v511
  %v2503 = vunpack.c.l.b16 %v512
  %v2504 = vunpack.c.l.b16 %v513
  %v2505 = vunpack.c.l.b16 %v514
  %v2506 = vunpack.c.l.b16 %v515
  %v2507 = vunpack.c.l.b16 %v516
  %v2508 = vunpack.c.l.b16 %v517
  %v2509 = vunpack.c.l.b16 %v518
  %v2510 = vunpack.c.l.b16 %v519
  %v2511 = vunpack.c.l.b16 %v520
  %v2512 = vunpack.c.l.b16 %v521
  %v2513 = vunpack.c.l.b16 %v522
  %v2514 = vunpack.c.l.b16 %v523
  %v2515 = vunpack.c.l.b16 %v524
  %v2516 = vunpack.c.l.b16 %v525
  %v2517 = vunpack.c.l.b16 %v526
  %v2518 = vunpack.c.l.b16 %v527
  %v2519 = vunpack.c.l.b16 %v528
  %v2520 = vunpack.c.l.b16 %v529
  %v2521 = vunpack.c.l.b16 %v530
  %v2522 = vunpack.c.l.b16 %v531
  %v2523 = vunpack.c.l.b16 %v532
  %v2524 = vunpack.c.l.b16 %v533
  %v2525 = vunpack.c.l.b16 %v534
  %v2526 = vunpack.c.l.b16 %v535
  %v2527 = vunpack.c.l.b16 %v536
  %v2528 = vunpack.c.l.b16 %v537
  %v2529 = vunpack.c.l.b16 %v538
  %v2530 = vunpack.c.l.b16 %v539
  %v2531 = vunpack.c.l.b16 %v540
  %v2532 = vunpack.c.l.b16 %v541
  %v2533 = vunpack.c.l.b16 %v542
  %v2534 = vunpack.c.l.b16 %v543
  %v2535 = vunpack.c.l.b16 %v544
  %v2536 = vunpack.c.l.b16 %v545
  %v2537 = vunpack.c.l.b16 %v546
  %v2538 = vunpack.c.l.b16 %v547
  %v2539 = vunpack.c.l.b16 %v548
  %v2540 = vunpack.c.l.b16 %v549
  %v2541 = vunpack.c.l.b16 %v550
  %v2542 = vunpack.c.l.b16 %v551
  %v2543 = vunpack.c.l.b16 %v552
  %v2544 = vunpack.c.l.b16 %v553
  %v2545 = vunpack.c.l.b16 %v554
  %v2546 = vunpack.c.l.b16 %v555
  %v2547 = vunpack.c.l.b16 %v556
  %v2548 = vunpack.c.l.b16 %v557
  %v2549 = vunpack.c.l.b16 %v558
  %v2550 = vunpack.c.l.b16 %v559
  %v2551 = vunpack.c.l.b16 %v560
  %v2552 = vunpack.c.l.b16 %v561
  %v2553 = vunpack.c.l.b16 %v562
  %v2554 = vunpack.c.l.b16 %v563
  %v2555 = vunpack.c.l.b16 %v564
  %v2556 = vunpack.c.l.b16 %v565
  %v2557 = vunpack.c.l.b16 %v566
  %v2558 = vunpack.c.l.b16 %v567
  %v2559 = vunpack.c.l.b16 %v568
  %v2560 = vunpack.c.l.b16 %v569
  %v2561 = vunpack.c.l.b16 %v570
  %v2562 = vunpack.c.l.b16 %v571
  %v2563 = vunpack.c.l.b16 %v572
  %v2564 = vunpack.c.l.b16 %v573
  %v2565 = vunpack.c.l.b16 %v574
  %v2566 = vunpack.c.l.b16 %v575
  %v2567 = vunpack.c.l.b16 %v576
  %v2568 = vunpack.c.l.b16 %v577
  %v2569 = vunpack.c.l.b16 %v578
  %v2570 = vunpack.c.l.b16 %v579
  %v2571 = vunpack.c.l.b16 %v580
  %v2572 = vunpack.c.l.b16 %v581
  %v2573 = vunpack.c.l.b16 %v582
  %v2574 = vunpack.c.l.b16 %v583
  %v2575 = vunpack.c.l.b16 %v584
  %v2576 = vunpack.c.l.b16 %v585
  %v2577 = vunpack.c.l.b16 %v586
  %v2578 = vunpack.c.l.b16 %v587
  %v2579 = vunpack.c.l.b16 %v588
  %v2580 = vunpack.c.l.b16 %v589
  %v2581 = vunpack.c.l.b16 %v590
  %v2582 = vunpack.c.l.b16 %v591
  %v2583 = vunpack.c.l.b16 %v592
  %v2584 = vunpack.c.l.b16 %v593
  %v2585 = vunpack.c.l.b16 %v594
  %v2586 = vunpack.c.l.b16 %v595
  %v2587 = vunpack.c.l.b16 %v596
  %v2588 = vunpack.c.l.b16 %v597
  %v2589 = vunpack.c.l.b16 %v598
  %v2590 = vunpack.c.l.b16 %v599
  %v2591 = vunpack.c.l.b16 %v600
  %v2592 = vunpack.c.l.b16 %v601
  %v2593 = vunpack.c.l.b16 %v602
  %v2594 = vunpack.c.l.b16 %v603
  %v2595 = vunpack.c.l.b16 %v604
  %v2596 = vunpack.c.l.b16 %v605
  %v2597 = vunpack.c.l.b16 %v606
  %v2598 = vunpack.c.l.b16 %v607
  %v2599 = vunpack.c.l.b16 %v608
  %v2600 = vunpack.c.l.b16 %v609
  %v2601 = vunpack.c.l.b16 %v610
  %v2602 = vunpack.c.l.b16 %v611
  %v2603 = vunpack.c.l.b16 %v612
  %v2604 = vunpack.c.l.b16 %v613
  %v2605 = vunpack.c.l.b16 %v614
  %v2606 = vunpack.c.l.b16 %v615
  %v2607 = vunpack.c.l.b16 %v616
  %v2608 = vunpack.c.l.b16 %v617
  %v2609 = vunpack.c.l.b16 %v618
  %v2610 = vunpack.c.l.b16 %v619
  %v2611 = vunpack.c.l.b16 %v620
  %v2612 = vunpack.c.l.b16 %v621
  %v2613 = vunpack.c.l.b16 %v622
  %v2614 = vunpack.c.l.b16 %v623
  %v2615 = vunpack.c.l.b16 %v624
  %v2616 = vunpack.c.l.b16 %v625
  %v2617 = vunpack.c.l.b16 %v626
  %v2618 = vunpack.c.l.b16 %v627
  %v2619 = vunpack.c.l.b16 %v628
  %v2620 = vunpack.c.l.b16 %v629
  %v2621 = vunpack.c.l.b16 %v630
  %v2622 = vunpack.c.l.b16 %v631
  %v2623 = vunpack.c.l.b16 %v632
  %v2624 = vunpack.c.l.b16 %v633
  %v2625 = vunpack.c.l.b16 %v634
  %v2626 = vunpack.c.l.b16 %v635
  %v2627 = vunpack.c.l.b16 %v636
  %v2628 = vunpack.c.l.b16 %v637
  %v2629 = vunpack.c.l.b16 %v638
  %v2630 = vunpack.c.l.b16 %v639
  %v2631 = vunpack.c.l.b16 %v640
  %v2632 = vunpack.c.l.b16 %v641
  %v2633 = vunpack.c.l.b16 %v642
  %v2634 = vunpack.c.l.b16 %v643
  %v2635 = vunpack.c.l.b16 %v644
  %v2636 = vunpack.c.l.b16 %v645
  %v2637 = vunpack.c.l.b16 %v646
  %v2638 = vunpack.c.l.b16 %v647
  %v2639 = vunpack.c.l.b16 %v648
  %v2640 = vunpack.c.l.b16 %v649
  %v2641 = vunpack.c.l.b16 %v650
  %v2642 = vunpack.c.l.b16 %v651
  %v2643 = vunpack.c.l.b16 %v652
  %v2644 = vunpack.c.l.b16 %v653
  %v2645 = vunpack.c.l.b16 %v654
  %v2646 = vunpack.c.l.b16 %v655
  %v2647 = vunpack.c.l.b16 %v656
  %v2648 = vunpack.c.l.b16 %v657
  %v2649 = vunpack.c.l.b16 %v658
  %v2650 = vunpack.c.l.b16 %v659
  %v2651 = vunpack.c.l.b16 %v660
  %v2652 = vunpack.c.l.b16 %v661
  %v2653 = vunpack.c.l.b16 %v662
  %v2654 = vunpack.c.l.b16 %v663
  %v2655 = vunpack.c.l.b16 %v664
  %v2656 = vunpack.c.l.b16 %v665
  %v2657 = vunpack.c.l.b16 %v666
  %v2658 = vunpack.c.l.b16 %v667
  %v2659 = vunpack.c.l.b16 %v668
  %v2660 = vunpack.c.l.b16 %v669
  %v2661 = vunpack.c.l.b16 %v670
  %v2662 = vunpack.c.l.b16 %v671
  %v2663 = vunpack.c.l.b16 %v672
  %v2664 = vunpack.c.l.b16 %v673
  %v2665 = vunpack.c.l.b16 %v674
  %v2666 = vunpack.c.l.b16 %v675
  %v2667 = vunpack.c.l.b16 %v676
  %v2668 = vunpack.c.l.b16 %v677
  %v2669 = vunpack.c.l.b16 %v678
  %v2670 = vunpack.c.l.b16 %v679
  %v2671 = vunpack.c.l.b16 %v680
  %v2672 = vunpack.c.l.b16 %v681
  %v2673 = vunpack.c.l.b16 %v682
  %v2674 = vunpack.c.l.b16 %v683
  %v2675 = vunpack.c.l.b16 %v684
  %v2676 = vunpack.c.l.b16 %v685
  %v2677 = vunpack.c.l.b16 %v686
  %v2678 = vunpack.c.l.b16 %v687
  %v2679 = vunpack.c.l.b16 %v688
  %v2680 = vunpack.c.l.b16 %v689
  %v2681 = vunpack.c.l.b16 %v690
  %v2682 = vunpack.c.l.b16 %v691
  %v2683 = vunpack.c.l.b16 %v692
  %v2684 = vunpack.c.l.b16 %v693
  %v2685 = vunpack.c.l.b16 %v694
  %v2686 = vunpack.c.l.b16 %v695
  %v2687 = vunpack.c.l.b16 %v696
  %v2688 = vunpack.c.l.b16 %v697
  %v2689 = vunpack.c.l.b16 %v698
  %v2690 = vunpack.c.l.b16 %v699
  %v2691 = vunpack.c.l.b16 %v700
  %v2692 = vunpack.c.l.b16 %v701
  %v2693 = vunpack.c.l.b16 %v702
  %v2694 = vunpack.c.l.b16 %v703
  %v2695 = vunpack.c.l.b16 %v704
  %v2696 = vunpack.c.l.b16 %v705
  %v2697 = vunpack.c.l.b16 %v706
  %v2698 = vunpack.c.l.b16 %v707
  %v2699 = vunpack.c.l.b16 %v708
  %v2700 = vunpack.c.l.b16 %v709
  %v2701 = vunpack.c.l.b16 %v710
  %v2702 = vunpack.c.l.b16 %v711
  %v2703 = vunpack.c.l.b16 %v712
  %v2704 = vunpack.c.l.b16 %v713
  %v2705 = vunpack.c.l.b16 %v714
  %v2706 = vunpack.c.l.b16 %v715
  %v2707 = vunpack.c.l.b16 %v716
  %v2708 = vunpack.c.l.b16 %v717
  %v2709 = vunpack.c.l.b16 %v718
  %v2710 = vpack.c.b16 %v2199, %v2198
  %v2711 = vpack.c.b16 %v2201, %v2200
  %v2712 = vpack.c.b16 %v2203, %v2202
  %v2713 = vpack.c.b16 %v2205, %v2204
  %v2714 = vpack.c.b16 %v2207, %v2206
  %v2715 = vpack.c.b16 %v2209, %v2208
  %v2716 = vpack.c.b16 %v2211, %v2210
  %v2717 = vpack.c.b16 %v2213, %v2212
  %v2718 = vpack.c.b16 %v2215, %v2214
  %v2719 = vpack.c.b16 %v2217, %v2216
  %v2720 = vpack.c.b16 %v2219, %v2218
  %v2721 = vpack.c.b16 %v2221, %v2220
  %v2722 = vpack.c.b16 %v2223, %v2222
  %v2723 = vpack.c.b16 %v2225, %v2224
  %v2724 = vpack.c.b16 %v2227, %v2226
  %v2725 = vpack.c.b16 %v2229, %v2228
  %v2726 = vpack.c.b16 %v2231, %v2230
  %v2727 = vpack.c.b16 %v2233, %v2232
  %v2728 = vpack.c.b16 %v2235, %v2234
  %v2729 = vpack.c.b16 %v2237, %v2236
  %v2730 = vpack.c.b16 %v2239, %v2238
  %v2731 = vpack.c.b16 %v2241, %v2240
  %v2732 = vpack.c.b16 %v2243, %v2242
  %v2733 = vpack.c.b16 %v2245, %v2244
  %v2734 = vpack.c.b16 %v2247, %v2246
  %v2735 = vpack.c.b16 %v2249, %v2248
  %v2736 = vpack.c.b16 %v2251, %v2250
  %v2737 = vpack.c.b16 %v2253, %v2252
  %v2738 = vpack.c.b16 %v2255, %v2254
  %v2739 = vpack.c.b16 %v2257, %v2256
  %v2740 = vpack.c.b16 %v2259, %v2258
  %v2741 = vpack.c.b16 %v2261, %v2260
  %v2742 = vpack.c.b16 %v2263, %v2262
  %v2743 = vpack.c.b16 %v2265, %v2264
  %v2744 = vpack.c.b16 %v2267, %v2266
  %v2745 = vpack.c.b16 %v2269, %v2268
  %v2746 = vpack.c.b16 %v2271, %v2270
  %v2747 = vpack.c.b16 %v2273, %v2272
  %v2748 = vpack.c.b16 %v2275, %v2274
  %v2749 = vpack.c.b16 %v2277, %v2276
  %v2750 = vpack.c.b16 %v2279, %v2278
  %v2751 = vpack.c.b16 %v2281, %v2280
  %v2752 = vpack.c.b16 %v2283, %v2282
  %v2753 = vpack.c.b16 %v2285, %v2284
  %v2754 = vpack.c.b16 %v2287, %v2286
  %v2755 = vpack.c.b16 %v2289, %v2288
  %v2756 = vpack.c.b16 %v2291, %v2290
  %v2757 = vpack.c.b16 %v2293, %v2292
  %v2758 = vpack.c.b16 %v2295, %v2294
  %v2759 = vpack.c.b16 %v2297, %v2296
  %v2760 = vpack.c.b16 %v2299, %v2298
  %v2761 = vpack.c.b16 %v2301, %v2300
  %v2762 = vpack.c.b16 %v2303, %v2302
  %v2763 = vpack.c.b16 %v2305, %v2304
  %v2764 = vpack.c.b16 %v2307, %v2306
  %v2765 = vpack.c.b16 %v2309, %v2308
  %v2766 = vpack.c.b16 %v2311, %v2310
  %v2767 = vpack.c.b16 %v2313, %v2312
  %v2768 = vpack.c.b16 %v2315, %v2314
  %v2769 = vpack.c.b16 %v2317, %v2316
  %v2770 = vpack.c.b16 %v2319, %v2318
  %v2771 = vpack.c.b16 %v2321, %v2320
  %v2772 = vpack.c.b16 %v2323, %v2322
  %v2773 = vpack.c.b16 %v2325, %v2324
  %v2774 = vpack.c.b16 %v2327, %v2326
  %v2775 = vpack.c.b16 %v2329, %v2328
  %v2776 = vpack.c.b16 %v2331, %v2330
  %v2777 = vpack.c.b16 %v2333, %v2332
  %v2778 = vpack.c.b16 %v2335, %v2334
  %v2779 = vpack.c.b16 %v2337, %v2336
  %v2780 = vpack.c.b16 %v2339, %v2338
  %v2781 = vpack.c.b16 %v2341, %v2340
  %v2782 = vpack.c.b16 %v2343, %v2342
  %v2783 = vpack.c.b16 %v2345, %v2344
  %v2784 = vpack.c.b16 %v2347, %v2346
  %v2785 = vpack.c.b16 %v2349, %v2348
  %v2786 = vpack.c.b16 %v2351, %v2350
  %v2787 = vpack.c.b16 %v2353, %v2352
  %v2788 = vpack.c.b16 %v2355, %v2354
  %v2789 = vpack.c.b16 %v2357, %v2356
  %v2790 = vpack.c.b16 %v2359, %v2358
  %v2791 = vpack.c.b16 %v2361, %v2360
  %v2792 = vpack.c.b16 %v2363, %v2362
  %v2793 = vpack.c.b16 %v2365, %v2364
  %v2794 = vpack.c.b16 %v2367, %v2366
  %v2795 = vpack.c.b16 %v2369, %v2368
  %v2796 = vpack.c.b16 %v2371, %v2370
  %v2797 = vpack.c.b16 %v2373, %v2372
  %v2798 = vpack.c.b16 %v2375, %v2374
  %v2799 = vpack.c.b16 %v2377, %v2376
  %v2800 = vpack.c.b16 %v2379, %v2378
  %v2801 = vpack.c.b16 %v2381, %v2380
  %v2802 = vpack.c.b16 %v2383, %v2382
  %v2803 = vpack.c.b16 %v2385, %v2384
  %v2804 = vpack.c.b16 %v2387, %v2386
  %v2805 = vpack.c.b16 %v2389, %v2388
  %v2806 = vpack.c.b16 %v2391, %v2390
  %v2807 = vpack.c.b16 %v2393, %v2392
  %v2808 = vpack.c.b16 %v2395, %v2394
  %v2809 = vpack.c.b16 %v2397, %v2396
  %v2810 = vpack.c.b16 %v2399, %v2398
  %v2811 = vpack.c.b16 %v2401, %v2400
  %v2812 = vpack.c.b16 %v2403, %v2402
  %v2813 = vpack.c.b16 %v2405, %v2404
  %v2814 = vpack.c.b16 %v2407, %v2406
  %v2815 = vpack.c.b16 %v2409, %v2408
  %v2816 = vpack.c.b16 %v2411, %v2410
  %v2817 = vpack.c.b16 %v2413, %v2412
  %v2818 = vpack.c.b16 %v2415, %v2414
  %v2819 = vpack.c.b16 %v2417, %v2416
  %v2820 = vpack.c.b16 %v2419, %v2418
  %v2821 = vpack.c.b16 %v2421, %v2420
  %v2822 = vpack.c.b16 %v2423, %v2422
  %v2823 = vpack.c.b16 %v2425, %v2424
  %v2824 = vpack.c.b16 %v2427, %v2426
  %v2825 = vpack.c.b16 %v2429, %v2428
  %v2826 = vpack.c.b16 %v2431, %v2430
  %v2827 = vpack.c.b16 %v2433, %v2432
  %v2828 = vpack.c.b16 %v2435, %v2434
  %v2829 = vpack.c.b16 %v2437, %v2436
  %v2830 = vpack.c.b16 %v2439, %v2438
  %v2831 = vpack.c.b16 %v2441, %v2440
  %v2832 = vpack.c.b16 %v2443, %v2442
  %v2833 = vpack.c.b16 %v2445, %v2444
  %v2834 = vpack.c.b16 %v2447, %v2446
  %v2835 = vpack.c.b16 %v2449, %v2448
  %v2836 = vpack.c.b16 %v2451, %v2450
  %v2837 = vpack.c.b16 %v2453, %v2452
  %v2838 = vpack.c.b16 %v2455, %v2454
  %v2839 = vpack.c.b16 %v2457, %v2456
  %v2840 = vpack.c.b16 %v2459, %v2458
  %v2841 = vpack.c.b16 %v2461, %v2460
  %v2842 = vpack.c.b16 %v2463, %v2462
  %v2843 = vpack.c.b16 %v2465, %v2464
  %v2844 = vpack.c.b16 %v2467, %v2466
  %v2845 = vpack.c.b16 %v2469, %v2468
  %v2846 = vpack.c.b16 %v2471, %v2470
  %v2847 = vpack.c.b16 %v2473, %v2472
  %v2848 = vpack.c.b16 %v2475, %v2474
  %v2849 = vpack.c.b16 %v2477, %v2476
  %v2850 = vpack.c.b16 %v2479, %v2478
  %v2851 = vpack.c.b16 %v2481, %v2480
  %v2852 = vpack.c.b16 %v2483, %v2482
  %v2853 = vpack.c.b16 %v2485, %v2484
  %v2854 = vpack.c.b16 %v2487, %v2486
  %v2855 = vpack.c.b16 %v2489, %v2488
  %v2856 = vpack.c.b16 %v2491, %v2490
  %v2857 = vpack.c.b16 %v2493, %v2492
  %v2858 = vpack.c.b16 %v2495, %v2494
  %v2859 = vpack.c.b16 %v2497, %v2496
  %v2860 = vpack.c.b16 %v2499, %v2498
  %v2861 = vpack.c.b16 %v2501, %v2500
  %v2862 = vpack.c.b16 %v2503, %v2502
  %v2863 = vpack.c.b16 %v2505, %v2504
  %v2864 = vpack.c.b16 %v2507, %v2506
  %v2865 = vpack.c.b16 %v2509, %v2508
  %v2866 = vpack.c.b16 %v2511, %v2510
  %v2867 = vpack.c.b16 %v2513, %v2512
  %v2868 = vpack.c.b16 %v2515, %v2514
  %v2869 = vpack.c.b16 %v2517, %v2516
  %v2870 = vpack.c.b16 %v2519, %v2518
  %v2871 = vpack.c.b16 %v2521, %v2520
  %v2872 = vpack.c.b16 %v2523, %v2522
  %v2873 = vpack.c.b16 %v2525, %v2524
  %v2874 = vpack.c.b16 %v2527, %v2526
  %v2875 = vpack.c.b16 %v2529, %v2528
  %v2876 = vpack.c.b16 %v2531, %v2530
  %v2877 = vpack.c.b16 %v2533, %v2532
  %v2878 = vpack.c.b16 %v2535, %v2534
  %v2879 = vpack.c.b16 %v2537, %v2536
  %v2880 = vpack.c.b16 %v2539, %v2538
  %v2881 = vpack.c.b16 %v2541, %v2540
  %v2882 = vpack.c.b16 %v2543, %v2542
  %v2883 = vpack.c.b16 %v2545, %v2544
  %v2884 = vpack.c.b16 %v2547, %v2546
  %v2885 = vpack.c.b16 %v2549, %v2548
  %v2886 = vpack.c.b16 %v2551, %v2550
  %v2887 = vpack.c.b16 %v2553, %v2552
  %v2888 = vpack.c.b16 %v2555, %v2554
  %v2889 = vpack.c.b16 %v2557, %v2556
  %v2890 = vpack.c.b16 %v2559, %v2558
  %v2891 = vpack.c.b16 %v2561, %v2560
  %v2892 = vpack.c.b16 %v2563, %v2562
  %v2893 = vpack.c.b16 %v2565, %v2564
  %v2894 = vpack.c.b16 %v2567, %v2566
  %v2895 = vpack.c.b16 %v2569, %v2568
  %v2896 = vpack.c.b16 %v2571, %v2570
  %v2897 = vpack.c.b16 %v2573, %v2572
  %v2898 = vpack.c.b16 %v2575, %v2574
  %v2899 = vpack.c.b16 %v2577, %v2576
  %v2900 = vpack.c.b16 %v2579, %v2578
  %v2901 = vpack.c.b16 %v2581, %v2580
  %v2902 = vpack.c.b16 %v2583, %v2582
  %v2903 = vpack.c.b16 %v2585, %v2584
  %v2904 = vpack.c.b16 %v2587, %v2586
  %v2905 = vpack.c.b16 %v2589, %v2588
  %v2906 = vpack.c.b16 %v2591, %v2590
  %v2907 = vpack.c.b16 %v2593, %v2592
  %v2908 = vpack.c.b16 %v2595, %v2594
  %v2909 = vpack.c.b16 %v2597, %v2596
  %v2910 = vpack.c.b16 %v2599, %v2598
  %v2911 = vpack.c.b16 %v2601, %v2600
  %v2912 = vpack.c.b16 %v2603, %v2602
  %v2913 = vpack.c.b16 %v2605, %v2604
  %v2914 = vpack.c.b16 %v2607, %v2606
  %v2915 = vpack.c.b16 %v2609, %v2608
  %v2916 = vpack.c.b16 %v2611, %v2610
  %v2917 = vpack.c.b16 %v2613, %v2612
  %v2918 = vpack.c.b16 %v2615, %v2614
  %v2919 = vpack.c.b16 %v2617, %v2616
  %v2920 = vpack.c.b16 %v2619, %v2618
  %v2921 = vpack.c.b16 %v2621, %v2620
  %v2922 = vpack.c.b16 %v2623, %v2622
  %v2923 = vpack.c.b16 %v2625, %v2624
  %v2924 = vpack.c.b16 %v2627, %v2626
  %v2925 = vpack.c.b16 %v2629, %v2628
  %v2926 = vpack.c.b16 %v2631, %v2630
  %v2927 = vpack.c.b16 %v2633, %v2632
  %v2928 = vpack.c.b16 %v2635, %v2634
  %v2929 = vpack.c.b16 %v2637, %v2636
  %v2930 = vpack.c.b16 %v2639, %v2638
  %v2931 = vpack.c.b16 %v2641, %v2640
  %v2932 = vpack.c.b16 %v2643, %v2642
  %v2933 = vpack.c.b16 %v2645, %v2644
  %v2934 = vpack.c.b16 %v2647, %v2646
  %v2935 = vpack.c.b16 %v2649, %v2648
  %v2936 = vpack.c.b16 %v2651, %v2650
  %v2937 = vpack.c.b16 %v2653, %v2652
  %v2938 = vpack.c.b16 %v2655, %v2654
  %v2939 = vpack.c.b16 %v2657, %v2656
  %v2940 = vpack.c.b16 %v2659, %v2658
  %v2941 = vpack.c.b16 %v2661, %v2660
  %v2942 = vpack.c.b16 %v2663, %v2662
  %v2943 = vpack.c.b16 %v2665, %v2664
  %v2944 = vpack.c.b16 %v2667, %v2666
  %v2945 = vpack.c.b16 %v2669, %v2668
  %v2946 = vpack.c.b16 %v2671, %v2670
  %v2947 = vpack.c.b16 %v2673, %v2672
  %v2948 = vpack.c.b16 %v2675, %v2674
  %v2949 = vpack.c.b16 %v2677, %v2676
  %v2950 = vpack.c.b16 %v2679, %v2678
  %v2951 = vpack.c.b16 %v2681, %v2680
  %v2952 = vpack.c.b16 %v2683, %v2682
  %v2953 = vpack.c.b16 %v2685, %v2684
  %v2954 = vpack.c.b16 %v2687, %v2686
  %v2955 = vpack.c.b16 %v2689, %v2688
  %v2956 = vpack.c.b16 %v2691, %v2690
  %v2957 = vpack.c.b16 %v2693, %v2692
  %v2958 = vpack.c.b16 %v2695, %v2694
  %v2959 = vpack.c.b16 %v2697, %v2696
  %v2960 = vpack.c.b16 %v2699, %v2698
  %v2961 = vpack.c.b16 %v2701, %v2700
  %v2962 = vpack.c.b16 %v2703, %v2702
  %v2963 = vpack.c.b16 %v2705, %v2704
  %v2964 = vpack.c.b16 %v2707, %v2706
  %v2965 = vpack.c.b16 %v2709, %v2708
  %3222 = vmatprep.subr.bf16.mxu0 0
  %3223 = vmatpush1.bf16.msra.mxu0 %v2710
  %3224 = vmatprep.subr.bf16.mxu0 0
  %3225 = vmatpush1.bf16.msra.mxu0 %v2711
  %3226 = vmatprep.subr.bf16.mxu0 0
  %3227 = vmatpush1.bf16.msra.mxu0 %v2712
  %3228 = vmatprep.subr.bf16.mxu0 0
  %3229 = vmatpush1.bf16.msra.mxu0 %v2713
  %3230 = vmatprep.subr.bf16.mxu0 0
  %3231 = vmatpush1.bf16.msra.mxu0 %v2714
  %3232 = vmatprep.subr.bf16.mxu0 0
  %3233 = vmatpush1.bf16.msra.mxu0 %v2715
  %3234 = vmatprep.subr.bf16.mxu0 0
  %3235 = vmatpush1.bf16.msra.mxu0 %v2716
  %3236 = vmatprep.subr.bf16.mxu0 0
  %3237 = vmatpush1.bf16.msra.mxu0 %v2717
  %3238 = vmatprep.subr.bf16.mxu0 0
  %3239 = vmatpush1.bf16.msra.mxu0 %v2718
  %3240 = vmatprep.subr.bf16.mxu0 0
  %3241 = vmatpush1.bf16.msra.mxu0 %v2719
  %3242 = vmatprep.subr.bf16.mxu0 0
  %3243 = vmatpush1.bf16.msra.mxu0 %v2720
  %3244 = vmatprep.subr.bf16.mxu0 0
  %3245 = vmatpush1.bf16.msra.mxu0 %v2721
  %3246 = vmatprep.subr.bf16.mxu0 0
  %3247 = vmatpush1.bf16.msra.mxu0 %v2722
  %3248 = vmatprep.subr.bf16.mxu0 0
  %3249 = vmatpush1.bf16.msra.mxu0 %v2723
  %3250 = vmatprep.subr.bf16.mxu0 0
  %3251 = vmatpush1.bf16.msra.mxu0 %v2724
  %3252 = vmatprep.subr.bf16.mxu0 0
  %3253 = vmatpush1.bf16.msra.mxu0 %v2725
  %3254 = vmatprep.mubr.bf16.mxu0 %v1303
  %3255 = vmatmul.mubr.bf16.gmra.mrb[0].mxu0 %v1302
  %v3256 = vpop.f32.mrb[0].mxu0
  %v3257 = vadd.f32 %v724, %v3256
  %v3258 = vpop.f32.mrb[0].mxu0
  %v3259 = vpop.f32.mrb[0].mxu0
  %v3260 = vadd.f32 %v724, %v3259
  %v3261 = vpop.f32.mrb[0].mxu0
  %3262 = vmatprep.mubr.bf16.mxu0 %v1335
  %3263 = vmatmul.mubr.bf16.gmra.mrb[0].mxu0 %v1334
  %v3264 = vpop.f32.mrb[0].mxu0
  %v3265 = vadd.f32 %v724, %v3264
  %v3266 = vpop.f32.mrb[0].mxu0
  %v3267 = vpop.f32.mrb[0].mxu0
  %v3268 = vadd.f32 %v724, %v3267
  %v3269 = vpop.f32.mrb[0].mxu0
  %3270 = vmatprep.mubr.bf16.mxu0 %v1367
  %3271 = vmatmul.mubr.bf16.gmra.mrb[0].mxu0 %v1366
  %v3272 = vpop.f32.mrb[0].mxu0
  %v3273 = vadd.f32 %v724, %v3272
  %v3274 = vpop.f32.mrb[0].mxu0
  %v3275 = vpop.f32.mrb[0].mxu0
  %v3276 = vadd.f32 %v724, %v3275
  %v3277 = vpop.f32.mrb[0].mxu0
  %3278 = vmatprep.mubr.bf16.mxu0 %v1399
  %3279 = vmatmul.mubr.bf16.gmra.mrb[0].mxu0 %v1398
  %v3280 = vpop.f32.mrb[0].mxu0
  %v3281 = vadd.f32 %v724, %v3280
  %v3282 = vpop.f32.mrb[0].mxu0
  %v3283 = vpop.f32.mrb[0].mxu0
  %v3284 = vadd.f32 %v724, %v3283
  %v3285 = vpop.f32.mrb[0].mxu0
  %3286 = vmatprep.mubr.bf16.mxu0 %v1431
  %3287 = vmatmul.mubr.bf16.gmra.mrb[0].mxu0 %v1430
  %v3288 = vpop.f32.mrb[0].mxu0
  %v3289 = vadd.f32 %v724, %v3288
  %v3290 = vpop.f32.mrb[0].mxu0
  %v3291 = vpop.f32.mrb[0].mxu0
  %v3292 = vadd.f32 %v724, %v3291
  %v3293 = vpop.f32.mrb[0].mxu0
  %3294 = vmatprep.mubr.bf16.mxu0 %v1463
  %3295 = vmatmul.mubr.bf16.gmra.mrb[0].mxu0 %v1462
  %v3296 = vpop.f32.mrb[0].mxu0
  %v3297 = vadd.f32 %v724, %v3296
  %v3298 = vpop.f32.mrb[0].mxu0
  %v3299 = vpop.f32.mrb[0].mxu0
  %v3300 = vadd.f32 %v724, %v3299
  %v3301 = vpop.f32.mrb[0].mxu0
  %3302 = vdwg.mxu0
  %3303 = vmatprep.subr.bf16.mxu0 0
  %3304 = vmatpush1.bf16.msra.mxu0 %v2726
  %3305 = vmatprep.subr.bf16.mxu0 0
  %3306 = vmatpush1.bf16.msra.mxu0 %v2727
  %3307 = vmatprep.subr.bf16.mxu0 0
  %3308 = vmatpush1.bf16.msra.mxu0 %v2728
  %3309 = vmatprep.subr.bf16.mxu0 0
  %3310 = vmatpush1.bf16.msra.mxu0 %v2729
  %3311 = vmatprep.subr.bf16.mxu0 0
  %3312 = vmatpush1.bf16.msra.mxu0 %v2730
  %3313 = vmatprep.subr.bf16.mxu0 0
  %3314 = vmatpush1.bf16.msra.mxu0 %v2731
  %3315 = vmatprep.subr.bf16.mxu0 0
  %3316 = vmatpush1.bf16.msra.mxu0 %v2732
  %3317 = vmatprep.subr.bf16.mxu0 0
  %3318 = vmatpush1.bf16.msra.mxu0 %v2733
  %3319 = vmatprep.subr.bf16.mxu0 0
  %3320 = vmatpush1.bf16.msra.mxu0 %v2734
  %3321 = vmatprep.subr.bf16.mxu0 0
  %3322 = vmatpush1.bf16.msra.mxu0 %v2735
  %3323 = vmatprep.subr.bf16.mxu0 0
  %3324 = vmatpush1.bf16.msra.mxu0 %v2736
  %3325 = vmatprep.subr.bf16.mxu0 0
  %3326 = vmatpush1.bf16.msra.mxu0 %v2737
  %3327 = vmatprep.subr.bf16.mxu0 0
  %3328 = vmatpush1.bf16.msra.mxu0 %v2738
  %3329 = vmatprep.subr.bf16.mxu0 0
  %3330 = vmatpush1.bf16.msra.mxu0 %v2739
  %3331 = vmatprep.subr.bf16.mxu0 0
  %3332 = vmatpush1.bf16.msra.mxu0 %v2740
  %3333 = vmatprep.subr.bf16.mxu0 0
  %3334 = vmatpush1.bf16.msra.mxu0 %v2741
  %3335 = vmatprep.mubr.bf16.mxu0 %v1305
  %3336 = vmatmul.mubr.bf16.gmra.mrb[0].mxu0 %v1304
  %v3337 = vpop.f32.mrb[0].mxu0
  %v3338 = vadd.f32 %v3257, %v3337
  %v3339 = vpop.f32.mrb[0].mxu0
  %v3340 = vpop.f32.mrb[0].mxu0
  %v3341 = vadd.f32 %v3260, %v3340
  %v3342 = vpop.f32.mrb[0].mxu0
  %3343 = vmatprep.mubr.bf16.mxu0 %v1337
  %3344 = vmatmul.mubr.bf16.gmra.mrb[0].mxu0 %v1336
  %v3345 = vpop.f32.mrb[0].mxu0
  %v3346 = vadd.f32 %v3265, %v3345
  %v3347 = vpop.f32.mrb[0].mxu0
  %v3348 = vpop.f32.mrb[0].mxu0
  %v3349 = vadd.f32 %v3268, %v3348
  %v3350 = vpop.f32.mrb[0].mxu0
  %3351 = vmatprep.mubr.bf16.mxu0 %v1369
  %3352 = vmatmul.mubr.bf16.gmra.mrb[0].mxu0 %v1368
  %v3353 = vpop.f32.mrb[0].mxu0
  %v3354 = vadd.f32 %v3273, %v3353
  %v3355 = vpop.f32.mrb[0].mxu0
  %v3356 = vpop.f32.mrb[0].mxu0
  %v3357 = vadd.f32 %v3276, %v3356
  %v3358 = vpop.f32.mrb[0].mxu0
  %3359 = vmatprep.mubr.bf16.mxu0 %v1401
  %3360 = vmatmul.mubr.bf16.gmra.mrb[0].mxu0 %v1400
  %v3361 = vpop.f32.mrb[0].mxu0
  %v3362 = vadd.f32 %v3281, %v3361
  %v3363 = vpop.f32.mrb[0].mxu0
  %v3364 = vpop.f32.mrb[0].mxu0
  %v3365 = vadd.f32 %v3284, %v3364
  %v3366 = vpop.f32.mrb[0].mxu0
  %3367 = vmatprep.mubr.bf16.mxu0 %v1433
  %3368 = vmatmul.mubr.bf16.gmra.mrb[0].mxu0 %v1432
  %v3369 = vpop.f32.mrb[0].mxu0
  %v3370 = vadd.f32 %v3289, %v3369
  %v3371 = vpop.f32.mrb[0].mxu0
  %v3372 = vpop.f32.mrb[0].mxu0
  %v3373 = vadd.f32 %v3292, %v3372
  %v3374 = vpop.f32.mrb[0].mxu0
  %3375 = vmatprep.mubr.bf16.mxu0 %v1465
  %3376 = vmatmul.mubr.bf16.gmra.mrb[0].mxu0 %v1464
  %v3377 = vpop.f32.mrb[0].mxu0
  %v3378 = vadd.f32 %v3297, %v3377
  %v3379 = vpop.f32.mrb[0].mxu0
  %v3380 = vpop.f32.mrb[0].mxu0
  %v3381 = vadd.f32 %v3300, %v3380
  %v3382 = vpop.f32.mrb[0].mxu0
  %3383 = vdwg.mxu0
  %3384 = vmatprep.subr.bf16.mxu0 0
  %3385 = vmatpush1.bf16.msra.mxu0 %v2742
  %3386 = vmatprep.subr.bf16.mxu0 0
  %3387 = vmatpush1.bf16.msra.mxu0 %v2743
  %3388 = vmatprep.subr.bf16.mxu0 0
  %3389 = vmatpush1.bf16.msra.mxu0 %v2744
  %3390 = vmatprep.subr.bf16.mxu0 0
  %3391 = vmatpush1.bf16.msra.mxu0 %v2745
  %3392 = vmatprep.subr.bf16.mxu0 0
  %3393 = vmatpush1.bf16.msra.mxu0 %v2746
  %3394 = vmatprep.subr.bf16.mxu0 0
  %3395 = vmatpush1.bf16.msra.mxu0 %v2747
  %3396 = vmatprep.subr.bf16.mxu0 0
  %3397 = vmatpush1.bf16.msra.mxu0 %v2748
  %3398 = vmatprep.subr.bf16.mxu0 0
  %3399 = vmatpush1.bf16.msra.mxu0 %v2749
  %3400 = vmatprep.subr.bf16.mxu0 0
  %3401 = vmatpush1.bf16.msra.mxu0 %v2750
  %3402 = vmatprep.subr.bf16.mxu0 0
  %3403 = vmatpush1.bf16.msra.mxu0 %v2751
  %3404 = vmatprep.subr.bf16.mxu0 0
  %3405 = vmatpush1.bf16.msra.mxu0 %v2752
  %3406 = vmatprep.subr.bf16.mxu0 0
  %3407 = vmatpush1.bf16.msra.mxu0 %v2753
  %3408 = vmatprep.subr.bf16.mxu0 0
  %3409 = vmatpush1.bf16.msra.mxu0 %v2754
  %3410 = vmatprep.subr.bf16.mxu0 0
  %3411 = vmatpush1.bf16.msra.mxu0 %v2755
  %3412 = vmatprep.subr.bf16.mxu0 0
  %3413 = vmatpush1.bf16.msra.mxu0 %v2756
  %3414 = vmatprep.subr.bf16.mxu0 0
  %3415 = vmatpush1.bf16.msra.mxu0 %v2757
  %3416 = vmatprep.mubr.bf16.mxu0 %v1307
  %3417 = vmatmul.mubr.bf16.gmra.mrb[0].mxu0 %v1306
  %v3418 = vpop.f32.mrb[0].mxu0
  %v3419 = vadd.f32 %v3338, %v3418
  %v3420 = vpop.f32.mrb[0].mxu0
  %v3421 = vpop.f32.mrb[0].mxu0
  %v3422 = vadd.f32 %v3341, %v3421
  %v3423 = vpop.f32.mrb[0].mxu0
  %3424 = vmatprep.mubr.bf16.mxu0 %v1339
  %3425 = vmatmul.mubr.bf16.gmra.mrb[0].mxu0 %v1338
  %v3426 = vpop.f32.mrb[0].mxu0
  %v3427 = vadd.f32 %v3346, %v3426
  %v3428 = vpop.f32.mrb[0].mxu0
  %v3429 = vpop.f32.mrb[0].mxu0
  %v3430 = vadd.f32 %v3349, %v3429
  %v3431 = vpop.f32.mrb[0].mxu0
  %3432 = vmatprep.mubr.bf16.mxu0 %v1371
  %3433 = vmatmul.mubr.bf16.gmra.mrb[0].mxu0 %v1370
  %v3434 = vpop.f32.mrb[0].mxu0
  %v3435 = vadd.f32 %v3354, %v3434
  %v3436 = vpop.f32.mrb[0].mxu0
  %v3437 = vpop.f32.mrb[0].mxu0
  %v3438 = vadd.f32 %v3357, %v3437
  %v3439 = vpop.f32.mrb[0].mxu0
  %3440 = vmatprep.mubr.bf16.mxu0 %v1403
  %3441 = vmatmul.mubr.bf16.gmra.mrb[0].mxu0 %v1402
  %v3442 = vpop.f32.mrb[0].mxu0
  %v3443 = vadd.f32 %v3362, %v3442
  %v3444 = vpop.f32.mrb[0].mxu0
  %v3445 = vpop.f32.mrb[0].mxu0
  %v3446 = vadd.f32 %v3365, %v3445
  %v3447 = vpop.f32.mrb[0].mxu0
  %3448 = vmatprep.mubr.bf16.mxu0 %v1435
  %3449 = vmatmul.mubr.bf16.gmra.mrb[0].mxu0 %v1434
  %v3450 = vpop.f32.mrb[0].mxu0
  %v3451 = vadd.f32 %v3370, %v3450
  %v3452 = vpop.f32.mrb[0].mxu0
  %v3453 = vpop.f32.mrb[0].mxu0
  %v3454 = vadd.f32 %v3373, %v3453
  %v3455 = vpop.f32.mrb[0].mxu0
  %3456 = vmatprep.mubr.bf16.mxu0 %v1467
  %3457 = vmatmul.mubr.bf16.gmra.mrb[0].mxu0 %v1466
  %v3458 = vpop.f32.mrb[0].mxu0
  %v3459 = vadd.f32 %v3378, %v3458
  %v3460 = vpop.f32.mrb[0].mxu0
  %v3461 = vpop.f32.mrb[0].mxu0
  %v3462 = vadd.f32 %v3381, %v3461
  %v3463 = vpop.f32.mrb[0].mxu0
  %3464 = vdwg.mxu0
  %3465 = vmatprep.subr.bf16.mxu0 0
  %3466 = vmatpush1.bf16.msra.mxu0 %v2758
  %3467 = vmatprep.subr.bf16.mxu0 0
  %3468 = vmatpush1.bf16.msra.mxu0 %v2759
  %3469 = vmatprep.subr.bf16.mxu0 0
  %3470 = vmatpush1.bf16.msra.mxu0 %v2760
  %3471 = vmatprep.subr.bf16.mxu0 0
  %3472 = vmatpush1.bf16.msra.mxu0 %v2761
  %3473 = vmatprep.subr.bf16.mxu0 0
  %3474 = vmatpush1.bf16.msra.mxu0 %v2762
  %3475 = vmatprep.subr.bf16.mxu0 0
  %3476 = vmatpush1.bf16.msra.mxu0 %v2763
  %3477 = vmatprep.subr.bf16.mxu0 0
  %3478 = vmatpush1.bf16.msra.mxu0 %v2764
  %3479 = vmatprep.subr.bf16.mxu0 0
  %3480 = vmatpush1.bf16.msra.mxu0 %v2765
  %3481 = vmatprep.subr.bf16.mxu0 0
  %3482 = vmatpush1.bf16.msra.mxu0 %v2766
  %3483 = vmatprep.subr.bf16.mxu0 0
  %3484 = vmatpush1.bf16.msra.mxu0 %v2767
  %3485 = vmatprep.subr.bf16.mxu0 0
  %3486 = vmatpush1.bf16.msra.mxu0 %v2768
  %3487 = vmatprep.subr.bf16.mxu0 0
  %3488 = vmatpush1.bf16.msra.mxu0 %v2769
  %3489 = vmatprep.subr.bf16.mxu0 0
  %3490 = vmatpush1.bf16.msra.mxu0 %v2770
  %3491 = vmatprep.subr.bf16.mxu0 0
  %3492 = vmatpush1.bf16.msra.mxu0 %v2771
  %3493 = vmatprep.subr.bf16.mxu0 0
  %3494 = vmatpush1.bf16.msra.mxu0 %v2772
  %3495 = vmatprep.subr.bf16.mxu0 0
  %3496 = vmatpush1.bf16.msra.mxu0 %v2773
  %3497 = vmatprep.mubr.bf16.mxu0 %v1309
  %3498 = vmatmul.mubr.bf16.gmra.mrb[0].mxu0 %v1308
  %v3499 = vpop.f32.mrb[0].mxu0
  %v3500 = vadd.f32 %v3419, %v3499
  %v3501 = vpop.f32.mrb[0].mxu0
  %v3502 = vpop.f32.mrb[0].mxu0
  %v3503 = vadd.f32 %v3422, %v3502
  %v3504 = vpop.f32.mrb[0].mxu0
  %3505 = vmatprep.mubr.bf16.mxu0 %v1341
  %3506 = vmatmul.mubr.bf16.gmra.mrb[0].mxu0 %v1340
  %v3507 = vpop.f32.mrb[0].mxu0
  %v3508 = vadd.f32 %v3427, %v3507
  %v3509 = vpop.f32.mrb[0].mxu0
  %v3510 = vpop.f32.mrb[0].mxu0
  %v3511 = vadd.f32 %v3430, %v3510
  %v3512 = vpop.f32.mrb[0].mxu0
  %3513 = vmatprep.mubr.bf16.mxu0 %v1373
  %3514 = vmatmul.mubr.bf16.gmra.mrb[0].mxu0 %v1372
  %v3515 = vpop.f32.mrb[0].mxu0
  %v3516 = vadd.f32 %v3435, %v3515
  %v3517 = vpop.f32.mrb[0].mxu0
  %v3518 = vpop.f32.mrb[0].mxu0
  %v3519 = vadd.f32 %v3438, %v3518
  %v3520 = vpop.f32.mrb[0].mxu0
  %3521 = vmatprep.mubr.bf16.mxu0 %v1405
  %3522 = vmatmul.mubr.bf16.gmra.mrb[0].mxu0 %v1404
  %v3523 = vpop.f32.mrb[0].mxu0
  %v3524 = vadd.f32 %v3443, %v3523
  %v3525 = vpop.f32.mrb[0].mxu0
  %v3526 = vpop.f32.mrb[0].mxu0
  %v3527 = vadd.f32 %v3446, %v3526
  %v3528 = vpop.f32.mrb[0].mxu0
  %3529 = vmatprep.mubr.bf16.mxu0 %v1437
  %3530 = vmatmul.mubr.bf16.gmra.mrb[0].mxu0 %v1436
  %v3531 = vpop.f32.mrb[0].mxu0
  %v3532 = vadd.f32 %v3451, %v3531
  %v3533 = vpop.f32.mrb[0].mxu0
  %v3534 = vpop.f32.mrb[0].mxu0
  %v3535 = vadd.f32 %v3454, %v3534
  %v3536 = vpop.f32.mrb[0].mxu0
  %3537 = vmatprep.mubr.bf16.mxu0 %v1469
  %3538 = vmatmul.mubr.bf16.gmra.mrb[0].mxu0 %v1468
  %v3539 = vpop.f32.mrb[0].mxu0
  %v3540 = vadd.f32 %v3459, %v3539
  %v3541 = vpop.f32.mrb[0].mxu0
  %v3542 = vpop.f32.mrb[0].mxu0
  %v3543 = vadd.f32 %v3462, %v3542
  %v3544 = vpop.f32.mrb[0].mxu0
  %3545 = vdwg.mxu0
  %3546 = vmatprep.subr.bf16.mxu0 0
  %3547 = vmatpush1.bf16.msra.mxu0 %v2774
  %3548 = vmatprep.subr.bf16.mxu0 0
  %3549 = vmatpush1.bf16.msra.mxu0 %v2775
  %3550 = vmatprep.subr.bf16.mxu0 0
  %3551 = vmatpush1.bf16.msra.mxu0 %v2776
  %3552 = vmatprep.subr.bf16.mxu0 0
  %3553 = vmatpush1.bf16.msra.mxu0 %v2777
  %3554 = vmatprep.subr.bf16.mxu0 0
  %3555 = vmatpush1.bf16.msra.mxu0 %v2778
  %3556 = vmatprep.subr.bf16.mxu0 0
  %3557 = vmatpush1.bf16.msra.mxu0 %v2779
  %3558 = vmatprep.subr.bf16.mxu0 0
  %3559 = vmatpush1.bf16.msra.mxu0 %v2780
  %3560 = vmatprep.subr.bf16.mxu0 0
  %3561 = vmatpush1.bf16.msra.mxu0 %v2781
  %3562 = vmatprep.subr.bf16.mxu0 0
  %3563 = vmatpush1.bf16.msra.mxu0 %v2782
  %3564 = vmatprep.subr.bf16.mxu0 0
  %3565 = vmatpush1.bf16.msra.mxu0 %v2783
  %3566 = vmatprep.subr.bf16.mxu0 0
  %3567 = vmatpush1.bf16.msra.mxu0 %v2784
  %3568 = vmatprep.subr.bf16.mxu0 0
  %3569 = vmatpush1.bf16.msra.mxu0 %v2785
  %3570 = vmatprep.subr.bf16.mxu0 0
  %3571 = vmatpush1.bf16.msra.mxu0 %v2786
  %3572 = vmatprep.subr.bf16.mxu0 0
  %3573 = vmatpush1.bf16.msra.mxu0 %v2787
  %3574 = vmatprep.subr.bf16.mxu0 0
  %3575 = vmatpush1.bf16.msra.mxu0 %v2788
  %3576 = vmatprep.subr.bf16.mxu0 0
  %3577 = vmatpush1.bf16.msra.mxu0 %v2789
  %3578 = vmatprep.mubr.bf16.mxu0 %v1311
  %3579 = vmatmul.mubr.bf16.gmra.mrb[0].mxu0 %v1310
  %v3580 = vpop.f32.mrb[0].mxu0
  %v3581 = vadd.f32 %v3500, %v3580
  %v3582 = vpop.f32.mrb[0].mxu0
  %v3583 = vpop.f32.mrb[0].mxu0
  %v3584 = vadd.f32 %v3503, %v3583
  %v3585 = vpop.f32.mrb[0].mxu0
  %3586 = vmatprep.mubr.bf16.mxu0 %v1343
  %3587 = vmatmul.mubr.bf16.gmra.mrb[0].mxu0 %v1342
  %v3588 = vpop.f32.mrb[0].mxu0
  %v3589 = vadd.f32 %v3508, %v3588
  %v3590 = vpop.f32.mrb[0].mxu0
  %v3591 = vpop.f32.mrb[0].mxu0
  %v3592 = vadd.f32 %v3511, %v3591
  %v3593 = vpop.f32.mrb[0].mxu0
  %3594 = vmatprep.mubr.bf16.mxu0 %v1375
  %3595 = vmatmul.mubr.bf16.gmra.mrb[0].mxu0 %v1374
  %v3596 = vpop.f32.mrb[0].mxu0
  %v3597 = vadd.f32 %v3516, %v3596
  %v3598 = vpop.f32.mrb[0].mxu0
  %v3599 = vpop.f32.mrb[0].mxu0
  %v3600 = vadd.f32 %v3519, %v3599
  %v3601 = vpop.f32.mrb[0].mxu0
  %3602 = vmatprep.mubr.bf16.mxu0 %v1407
  %3603 = vmatmul.mubr.bf16.gmra.mrb[0].mxu0 %v1406
  %v3604 = vpop.f32.mrb[0].mxu0
  %v3605 = vadd.f32 %v3524, %v3604
  %v3606 = vpop.f32.mrb[0].mxu0
  %v3607 = vpop.f32.mrb[0].mxu0
  %v3608 = vadd.f32 %v3527, %v3607
  %v3609 = vpop.f32.mrb[0].mxu0
  %3610 = vmatprep.mubr.bf16.mxu0 %v1439
  %3611 = vmatmul.mubr.bf16.gmra.mrb[0].mxu0 %v1438
  %v3612 = vpop.f32.mrb[0].mxu0
  %v3613 = vadd.f32 %v3532, %v3612
  %v3614 = vpop.f32.mrb[0].mxu0
  %v3615 = vpop.f32.mrb[0].mxu0
  %v3616 = vadd.f32 %v3535, %v3615
  %v3617 = vpop.f32.mrb[0].mxu0
  %3618 = vmatprep.mubr.bf16.mxu0 %v1471
  %3619 = vmatmul.mubr.bf16.gmra.mrb[0].mxu0 %v1470
  %v3620 = vpop.f32.mrb[0].mxu0
  %v3621 = vadd.f32 %v3540, %v3620
  %v3622 = vpop.f32.mrb[0].mxu0
  %v3623 = vpop.f32.mrb[0].mxu0
  %v3624 = vadd.f32 %v3543, %v3623
  %v3625 = vpop.f32.mrb[0].mxu0
  %3626 = vdwg.mxu0
  %3627 = vmatprep.subr.bf16.mxu0 0
  %3628 = vmatpush1.bf16.msra.mxu0 %v2790
  %3629 = vmatprep.subr.bf16.mxu0 0
  %3630 = vmatpush1.bf16.msra.mxu0 %v2791
  %3631 = vmatprep.subr.bf16.mxu0 0
  %3632 = vmatpush1.bf16.msra.mxu0 %v2792
  %3633 = vmatprep.subr.bf16.mxu0 0
  %3634 = vmatpush1.bf16.msra.mxu0 %v2793
  %3635 = vmatprep.subr.bf16.mxu0 0
  %3636 = vmatpush1.bf16.msra.mxu0 %v2794
  %3637 = vmatprep.subr.bf16.mxu0 0
  %3638 = vmatpush1.bf16.msra.mxu0 %v2795
  %3639 = vmatprep.subr.bf16.mxu0 0
  %3640 = vmatpush1.bf16.msra.mxu0 %v2796
  %3641 = vmatprep.subr.bf16.mxu0 0
  %3642 = vmatpush1.bf16.msra.mxu0 %v2797
  %3643 = vmatprep.subr.bf16.mxu0 0
  %3644 = vmatpush1.bf16.msra.mxu0 %v2798
  %3645 = vmatprep.subr.bf16.mxu0 0
  %3646 = vmatpush1.bf16.msra.mxu0 %v2799
  %3647 = vmatprep.subr.bf16.mxu0 0
  %3648 = vmatpush1.bf16.msra.mxu0 %v2800
  %3649 = vmatprep.subr.bf16.mxu0 0
  %3650 = vmatpush1.bf16.msra.mxu0 %v2801
  %3651 = vmatprep.subr.bf16.mxu0 0
  %3652 = vmatpush1.bf16.msra.mxu0 %v2802
  %3653 = vmatprep.subr.bf16.mxu0 0
  %3654 = vmatpush1.bf16.msra.mxu0 %v2803
  %3655 = vmatprep.subr.bf16.mxu0 0
  %3656 = vmatpush1.bf16.msra.mxu0 %v2804
  %3657 = vmatprep.subr.bf16.mxu0 0
  %3658 = vmatpush1.bf16.msra.mxu0 %v2805
  %3659 = vmatprep.mubr.bf16.mxu0 %v1313
  %3660 = vmatmul.mubr.bf16.gmra.mrb[0].mxu0 %v1312
  %v3661 = vpop.f32.mrb[0].mxu0
  %v3662 = vadd.f32 %v3581, %v3661
  %v3663 = vpop.f32.mrb[0].mxu0
  %v3664 = vpop.f32.mrb[0].mxu0
  %v3665 = vadd.f32 %v3584, %v3664
  %v3666 = vpop.f32.mrb[0].mxu0
  %3667 = vmatprep.mubr.bf16.mxu0 %v1345
  %3668 = vmatmul.mubr.bf16.gmra.mrb[0].mxu0 %v1344
  %v3669 = vpop.f32.mrb[0].mxu0
  %v3670 = vadd.f32 %v3589, %v3669
  %v3671 = vpop.f32.mrb[0].mxu0
  %v3672 = vpop.f32.mrb[0].mxu0
  %v3673 = vadd.f32 %v3592, %v3672
  %v3674 = vpop.f32.mrb[0].mxu0
  %3675 = vmatprep.mubr.bf16.mxu0 %v1377
  %3676 = vmatmul.mubr.bf16.gmra.mrb[0].mxu0 %v1376
  %v3677 = vpop.f32.mrb[0].mxu0
  %v3678 = vadd.f32 %v3597, %v3677
  %v3679 = vpop.f32.mrb[0].mxu0
  %v3680 = vpop.f32.mrb[0].mxu0
  %v3681 = vadd.f32 %v3600, %v3680
  %v3682 = vpop.f32.mrb[0].mxu0
  %3683 = vmatprep.mubr.bf16.mxu0 %v1409
  %3684 = vmatmul.mubr.bf16.gmra.mrb[0].mxu0 %v1408
  %v3685 = vpop.f32.mrb[0].mxu0
  %v3686 = vadd.f32 %v3605, %v3685
  %v3687 = vpop.f32.mrb[0].mxu0
  %v3688 = vpop.f32.mrb[0].mxu0
  %v3689 = vadd.f32 %v3608, %v3688
  %v3690 = vpop.f32.mrb[0].mxu0
  %3691 = vmatprep.mubr.bf16.mxu0 %v1441
  %3692 = vmatmul.mubr.bf16.gmra.mrb[0].mxu0 %v1440
  %v3693 = vpop.f32.mrb[0].mxu0
  %v3694 = vadd.f32 %v3613, %v3693
  %v3695 = vpop.f32.mrb[0].mxu0
  %v3696 = vpop.f32.mrb[0].mxu0
  %v3697 = vadd.f32 %v3616, %v3696
  %v3698 = vpop.f32.mrb[0].mxu0
  %3699 = vmatprep.mubr.bf16.mxu0 %v1473
  %3700 = vmatmul.mubr.bf16.gmra.mrb[0].mxu0 %v1472
  %v3701 = vpop.f32.mrb[0].mxu0
  %v3702 = vadd.f32 %v3621, %v3701
  %v3703 = vpop.f32.mrb[0].mxu0
  %v3704 = vpop.f32.mrb[0].mxu0
  %v3705 = vadd.f32 %v3624, %v3704
  %v3706 = vpop.f32.mrb[0].mxu0
  %3707 = vdwg.mxu0
  %3708 = vmatprep.subr.bf16.mxu0 0
  %3709 = vmatpush1.bf16.msra.mxu0 %v2806
  %3710 = vmatprep.subr.bf16.mxu0 0
  %3711 = vmatpush1.bf16.msra.mxu0 %v2807
  %3712 = vmatprep.subr.bf16.mxu0 0
  %3713 = vmatpush1.bf16.msra.mxu0 %v2808
  %3714 = vmatprep.subr.bf16.mxu0 0
  %3715 = vmatpush1.bf16.msra.mxu0 %v2809
  %3716 = vmatprep.subr.bf16.mxu0 0
  %3717 = vmatpush1.bf16.msra.mxu0 %v2810
  %3718 = vmatprep.subr.bf16.mxu0 0
  %3719 = vmatpush1.bf16.msra.mxu0 %v2811
  %3720 = vmatprep.subr.bf16.mxu0 0
  %3721 = vmatpush1.bf16.msra.mxu0 %v2812
  %3722 = vmatprep.subr.bf16.mxu0 0
  %3723 = vmatpush1.bf16.msra.mxu0 %v2813
  %3724 = vmatprep.subr.bf16.mxu0 0
  %3725 = vmatpush1.bf16.msra.mxu0 %v2814
  %3726 = vmatprep.subr.bf16.mxu0 0
  %3727 = vmatpush1.bf16.msra.mxu0 %v2815
  %3728 = vmatprep.subr.bf16.mxu0 0
  %3729 = vmatpush1.bf16.msra.mxu0 %v2816
  %3730 = vmatprep.subr.bf16.mxu0 0
  %3731 = vmatpush1.bf16.msra.mxu0 %v2817
  %3732 = vmatprep.subr.bf16.mxu0 0
  %3733 = vmatpush1.bf16.msra.mxu0 %v2818
  %3734 = vmatprep.subr.bf16.mxu0 0
  %3735 = vmatpush1.bf16.msra.mxu0 %v2819
  %3736 = vmatprep.subr.bf16.mxu0 0
  %3737 = vmatpush1.bf16.msra.mxu0 %v2820
  %3738 = vmatprep.subr.bf16.mxu0 0
  %3739 = vmatpush1.bf16.msra.mxu0 %v2821
  %3740 = vmatprep.mubr.bf16.mxu0 %v1315
  %3741 = vmatmul.mubr.bf16.gmra.mrb[0].mxu0 %v1314
  %v3742 = vpop.f32.mrb[0].mxu0
  %v3743 = vadd.f32 %v3662, %v3742
  %v3744 = vpop.f32.mrb[0].mxu0
  %v3745 = vpop.f32.mrb[0].mxu0
  %v3746 = vadd.f32 %v3665, %v3745
  %v3747 = vpop.f32.mrb[0].mxu0
  %3748 = vmatprep.mubr.bf16.mxu0 %v1347
  %3749 = vmatmul.mubr.bf16.gmra.mrb[0].mxu0 %v1346
  %v3750 = vpop.f32.mrb[0].mxu0
  %v3751 = vadd.f32 %v3670, %v3750
  %v3752 = vpop.f32.mrb[0].mxu0
  %v3753 = vpop.f32.mrb[0].mxu0
  %v3754 = vadd.f32 %v3673, %v3753
  %v3755 = vpop.f32.mrb[0].mxu0
  %3756 = vmatprep.mubr.bf16.mxu0 %v1379
  %3757 = vmatmul.mubr.bf16.gmra.mrb[0].mxu0 %v1378
  %v3758 = vpop.f32.mrb[0].mxu0
  %v3759 = vadd.f32 %v3678, %v3758
  %v3760 = vpop.f32.mrb[0].mxu0
  %v3761 = vpop.f32.mrb[0].mxu0
  %v3762 = vadd.f32 %v3681, %v3761
  %v3763 = vpop.f32.mrb[0].mxu0
  %3764 = vmatprep.mubr.bf16.mxu0 %v1411
  %3765 = vmatmul.mubr.bf16.gmra.mrb[0].mxu0 %v1410
  %v3766 = vpop.f32.mrb[0].mxu0
  %v3767 = vadd.f32 %v3686, %v3766
  %v3768 = vpop.f32.mrb[0].mxu0
  %v3769 = vpop.f32.mrb[0].mxu0
  %v3770 = vadd.f32 %v3689, %v3769
  %v3771 = vpop.f32.mrb[0].mxu0
  %3772 = vmatprep.mubr.bf16.mxu0 %v1443
  %3773 = vmatmul.mubr.bf16.gmra.mrb[0].mxu0 %v1442
  %v3774 = vpop.f32.mrb[0].mxu0
  %v3775 = vadd.f32 %v3694, %v3774
  %v3776 = vpop.f32.mrb[0].mxu0
  %v3777 = vpop.f32.mrb[0].mxu0
  %v3778 = vadd.f32 %v3697, %v3777
  %v3779 = vpop.f32.mrb[0].mxu0
  %3780 = vmatprep.mubr.bf16.mxu0 %v1475
  %3781 = vmatmul.mubr.bf16.gmra.mrb[0].mxu0 %v1474
  %v3782 = vpop.f32.mrb[0].mxu0
  %v3783 = vadd.f32 %v3702, %v3782
  %v3784 = vpop.f32.mrb[0].mxu0
  %v3785 = vpop.f32.mrb[0].mxu0
  %v3786 = vadd.f32 %v3705, %v3785
  %v3787 = vpop.f32.mrb[0].mxu0
  %3788 = vdwg.mxu0
  %3789 = vmatprep.subr.bf16.mxu0 0
  %3790 = vmatpush1.bf16.msra.mxu0 %v2822
  %3791 = vmatprep.subr.bf16.mxu0 0
  %3792 = vmatpush1.bf16.msra.mxu0 %v2823
  %3793 = vmatprep.subr.bf16.mxu0 0
  %3794 = vmatpush1.bf16.msra.mxu0 %v2824
  %3795 = vmatprep.subr.bf16.mxu0 0
  %3796 = vmatpush1.bf16.msra.mxu0 %v2825
  %3797 = vmatprep.subr.bf16.mxu0 0
  %3798 = vmatpush1.bf16.msra.mxu0 %v2826
  %3799 = vmatprep.subr.bf16.mxu0 0
  %3800 = vmatpush1.bf16.msra.mxu0 %v2827
  %3801 = vmatprep.subr.bf16.mxu0 0
  %3802 = vmatpush1.bf16.msra.mxu0 %v2828
  %3803 = vmatprep.subr.bf16.mxu0 0
  %3804 = vmatpush1.bf16.msra.mxu0 %v2829
  %3805 = vmatprep.subr.bf16.mxu0 0
  %3806 = vmatpush1.bf16.msra.mxu0 %v2830
  %3807 = vmatprep.subr.bf16.mxu0 0
  %3808 = vmatpush1.bf16.msra.mxu0 %v2831
  %3809 = vmatprep.subr.bf16.mxu0 0
  %3810 = vmatpush1.bf16.msra.mxu0 %v2832
  %3811 = vmatprep.subr.bf16.mxu0 0
  %3812 = vmatpush1.bf16.msra.mxu0 %v2833
  %3813 = vmatprep.subr.bf16.mxu0 0
  %3814 = vmatpush1.bf16.msra.mxu0 %v2834
  %3815 = vmatprep.subr.bf16.mxu0 0
  %3816 = vmatpush1.bf16.msra.mxu0 %v2835
  %3817 = vmatprep.subr.bf16.mxu0 0
  %3818 = vmatpush1.bf16.msra.mxu0 %v2836
  %3819 = vmatprep.subr.bf16.mxu0 0
  %3820 = vmatpush1.bf16.msra.mxu0 %v2837
  %3821 = vmatprep.mubr.bf16.mxu0 %v1317
  %3822 = vmatmul.mubr.bf16.gmra.mrb[0].mxu0 %v1316
  %v3823 = vpop.f32.mrb[0].mxu0
  %v3824 = vadd.f32 %v3743, %v3823
  %v3825 = vpop.f32.mrb[0].mxu0
  %v3826 = vpop.f32.mrb[0].mxu0
  %v3827 = vadd.f32 %v3746, %v3826
  %v3828 = vpop.f32.mrb[0].mxu0
  %3829 = vmatprep.mubr.bf16.mxu0 %v1349
  %3830 = vmatmul.mubr.bf16.gmra.mrb[0].mxu0 %v1348
  %v3831 = vpop.f32.mrb[0].mxu0
  %v3832 = vadd.f32 %v3751, %v3831
  %v3833 = vpop.f32.mrb[0].mxu0
  %v3834 = vpop.f32.mrb[0].mxu0
  %v3835 = vadd.f32 %v3754, %v3834
  %v3836 = vpop.f32.mrb[0].mxu0
  %3837 = vmatprep.mubr.bf16.mxu0 %v1381
  %3838 = vmatmul.mubr.bf16.gmra.mrb[0].mxu0 %v1380
  %v3839 = vpop.f32.mrb[0].mxu0
  %v3840 = vadd.f32 %v3759, %v3839
  %v3841 = vpop.f32.mrb[0].mxu0
  %v3842 = vpop.f32.mrb[0].mxu0
  %v3843 = vadd.f32 %v3762, %v3842
  %v3844 = vpop.f32.mrb[0].mxu0
  %3845 = vmatprep.mubr.bf16.mxu0 %v1413
  %3846 = vmatmul.mubr.bf16.gmra.mrb[0].mxu0 %v1412
  %v3847 = vpop.f32.mrb[0].mxu0
  %v3848 = vadd.f32 %v3767, %v3847
  %v3849 = vpop.f32.mrb[0].mxu0
  %v3850 = vpop.f32.mrb[0].mxu0
  %v3851 = vadd.f32 %v3770, %v3850
  %v3852 = vpop.f32.mrb[0].mxu0
  %3853 = vmatprep.mubr.bf16.mxu0 %v1445
  %3854 = vmatmul.mubr.bf16.gmra.mrb[0].mxu0 %v1444
  %v3855 = vpop.f32.mrb[0].mxu0
  %v3856 = vadd.f32 %v3775, %v3855
  %v3857 = vpop.f32.mrb[0].mxu0
  %v3858 = vpop.f32.mrb[0].mxu0
  %v3859 = vadd.f32 %v3778, %v3858
  %v3860 = vpop.f32.mrb[0].mxu0
  %3861 = vmatprep.mubr.bf16.mxu0 %v1477
  %3862 = vmatmul.mubr.bf16.gmra.mrb[0].mxu0 %v1476
  %v3863 = vpop.f32.mrb[0].mxu0
  %v3864 = vadd.f32 %v3783, %v3863
  %v3865 = vpop.f32.mrb[0].mxu0
  %v3866 = vpop.f32.mrb[0].mxu0
  %v3867 = vadd.f32 %v3786, %v3866
  %v3868 = vpop.f32.mrb[0].mxu0
  %3869 = vdwg.mxu0
  %3870 = vmatprep.subr.bf16.mxu0 0
  %3871 = vmatpush1.bf16.msra.mxu0 %v2838
  %3872 = vmatprep.subr.bf16.mxu0 0
  %3873 = vmatpush1.bf16.msra.mxu0 %v2839
  %3874 = vmatprep.subr.bf16.mxu0 0
  %3875 = vmatpush1.bf16.msra.mxu0 %v2840
  %3876 = vmatprep.subr.bf16.mxu0 0
  %3877 = vmatpush1.bf16.msra.mxu0 %v2841
  %3878 = vmatprep.subr.bf16.mxu0 0
  %3879 = vmatpush1.bf16.msra.mxu0 %v2842
  %3880 = vmatprep.subr.bf16.mxu0 0
  %3881 = vmatpush1.bf16.msra.mxu0 %v2843
  %3882 = vmatprep.subr.bf16.mxu0 0
  %3883 = vmatpush1.bf16.msra.mxu0 %v2844
  %3884 = vmatprep.subr.bf16.mxu0 0
  %3885 = vmatpush1.bf16.msra.mxu0 %v2845
  %3886 = vmatprep.subr.bf16.mxu0 0
  %3887 = vmatpush1.bf16.msra.mxu0 %v2846
  %3888 = vmatprep.subr.bf16.mxu0 0
  %3889 = vmatpush1.bf16.msra.mxu0 %v2847
  %3890 = vmatprep.subr.bf16.mxu0 0
  %3891 = vmatpush1.bf16.msra.mxu0 %v2848
  %3892 = vmatprep.subr.bf16.mxu0 0
  %3893 = vmatpush1.bf16.msra.mxu0 %v2849
  %3894 = vmatprep.subr.bf16.mxu0 0
  %3895 = vmatpush1.bf16.msra.mxu0 %v2850
  %3896 = vmatprep.subr.bf16.mxu0 0
  %3897 = vmatpush1.bf16.msra.mxu0 %v2851
  %3898 = vmatprep.subr.bf16.mxu0 0
  %3899 = vmatpush1.bf16.msra.mxu0 %v2852
  %3900 = vmatprep.subr.bf16.mxu0 0
  %3901 = vmatpush1.bf16.msra.mxu0 %v2853
  %3902 = vmatprep.mubr.bf16.mxu0 %v1319
  %3903 = vmatmul.mubr.bf16.gmra.mrb[0].mxu0 %v1318
  %v3904 = vpop.f32.mrb[0].mxu0
  %v3905 = vadd.f32 %v3824, %v3904
  %v3906 = vpop.f32.mrb[0].mxu0
  %v3907 = vpop.f32.mrb[0].mxu0
  %v3908 = vadd.f32 %v3827, %v3907
  %v3909 = vpop.f32.mrb[0].mxu0
  %3910 = vmatprep.mubr.bf16.mxu0 %v1351
  %3911 = vmatmul.mubr.bf16.gmra.mrb[0].mxu0 %v1350
  %v3912 = vpop.f32.mrb[0].mxu0
  %v3913 = vadd.f32 %v3832, %v3912
  %v3914 = vpop.f32.mrb[0].mxu0
  %v3915 = vpop.f32.mrb[0].mxu0
  %v3916 = vadd.f32 %v3835, %v3915
  %v3917 = vpop.f32.mrb[0].mxu0
  %3918 = vmatprep.mubr.bf16.mxu0 %v1383
  %3919 = vmatmul.mubr.bf16.gmra.mrb[0].mxu0 %v1382
  %v3920 = vpop.f32.mrb[0].mxu0
  %v3921 = vadd.f32 %v3840, %v3920
  %v3922 = vpop.f32.mrb[0].mxu0
  %v3923 = vpop.f32.mrb[0].mxu0
  %v3924 = vadd.f32 %v3843, %v3923
  %v3925 = vpop.f32.mrb[0].mxu0
  %3926 = vmatprep.mubr.bf16.mxu0 %v1415
  %3927 = vmatmul.mubr.bf16.gmra.mrb[0].mxu0 %v1414
  %v3928 = vpop.f32.mrb[0].mxu0
  %v3929 = vadd.f32 %v3848, %v3928
  %v3930 = vpop.f32.mrb[0].mxu0
  %v3931 = vpop.f32.mrb[0].mxu0
  %v3932 = vadd.f32 %v3851, %v3931
  %v3933 = vpop.f32.mrb[0].mxu0
  %3934 = vmatprep.mubr.bf16.mxu0 %v1447
  %3935 = vmatmul.mubr.bf16.gmra.mrb[0].mxu0 %v1446
  %v3936 = vpop.f32.mrb[0].mxu0
  %v3937 = vadd.f32 %v3856, %v3936
  %v3938 = vpop.f32.mrb[0].mxu0
  %v3939 = vpop.f32.mrb[0].mxu0
  %v3940 = vadd.f32 %v3859, %v3939
  %v3941 = vpop.f32.mrb[0].mxu0
  %3942 = vmatprep.mubr.bf16.mxu0 %v1479
  %3943 = vmatmul.mubr.bf16.gmra.mrb[0].mxu0 %v1478
  %v3944 = vpop.f32.mrb[0].mxu0
  %v3945 = vadd.f32 %v3864, %v3944
  %v3946 = vpop.f32.mrb[0].mxu0
  %v3947 = vpop.f32.mrb[0].mxu0
  %v3948 = vadd.f32 %v3867, %v3947
  %v3949 = vpop.f32.mrb[0].mxu0
  %3950 = vdwg.mxu0
  %3951 = vmatprep.subr.bf16.mxu0 0
  %3952 = vmatpush1.bf16.msra.mxu0 %v2854
  %3953 = vmatprep.subr.bf16.mxu0 0
  %3954 = vmatpush1.bf16.msra.mxu0 %v2855
  %3955 = vmatprep.subr.bf16.mxu0 0
  %3956 = vmatpush1.bf16.msra.mxu0 %v2856
  %3957 = vmatprep.subr.bf16.mxu0 0
  %3958 = vmatpush1.bf16.msra.mxu0 %v2857
  %3959 = vmatprep.subr.bf16.mxu0 0
  %3960 = vmatpush1.bf16.msra.mxu0 %v2858
  %3961 = vmatprep.subr.bf16.mxu0 0
  %3962 = vmatpush1.bf16.msra.mxu0 %v2859
  %3963 = vmatprep.subr.bf16.mxu0 0
  %3964 = vmatpush1.bf16.msra.mxu0 %v2860
  %3965 = vmatprep.subr.bf16.mxu0 0
  %3966 = vmatpush1.bf16.msra.mxu0 %v2861
  %3967 = vmatprep.subr.bf16.mxu0 0
  %3968 = vmatpush1.bf16.msra.mxu0 %v2862
  %3969 = vmatprep.subr.bf16.mxu0 0
  %3970 = vmatpush1.bf16.msra.mxu0 %v2863
  %3971 = vmatprep.subr.bf16.mxu0 0
  %3972 = vmatpush1.bf16.msra.mxu0 %v2864
  %3973 = vmatprep.subr.bf16.mxu0 0
  %3974 = vmatpush1.bf16.msra.mxu0 %v2865
  %3975 = vmatprep.subr.bf16.mxu0 0
  %3976 = vmatpush1.bf16.msra.mxu0 %v2866
  %3977 = vmatprep.subr.bf16.mxu0 0
  %3978 = vmatpush1.bf16.msra.mxu0 %v2867
  %3979 = vmatprep.subr.bf16.mxu0 0
  %3980 = vmatpush1.bf16.msra.mxu0 %v2868
  %3981 = vmatprep.subr.bf16.mxu0 0
  %3982 = vmatpush1.bf16.msra.mxu0 %v2869
  %3983 = vmatprep.mubr.bf16.mxu0 %v1321
  %3984 = vmatmul.mubr.bf16.gmra.mrb[0].mxu0 %v1320
  %v3985 = vpop.f32.mrb[0].mxu0
  %v3986 = vadd.f32 %v3905, %v3985
  %v3987 = vpop.f32.mrb[0].mxu0
  %v3988 = vpop.f32.mrb[0].mxu0
  %v3989 = vadd.f32 %v3908, %v3988
  %v3990 = vpop.f32.mrb[0].mxu0
  %3991 = vmatprep.mubr.bf16.mxu0 %v1353
  %3992 = vmatmul.mubr.bf16.gmra.mrb[0].mxu0 %v1352
  %v3993 = vpop.f32.mrb[0].mxu0
  %v3994 = vadd.f32 %v3913, %v3993
  %v3995 = vpop.f32.mrb[0].mxu0
  %v3996 = vpop.f32.mrb[0].mxu0
  %v3997 = vadd.f32 %v3916, %v3996
  %v3998 = vpop.f32.mrb[0].mxu0
  %3999 = vmatprep.mubr.bf16.mxu0 %v1385
  %4000 = vmatmul.mubr.bf16.gmra.mrb[0].mxu0 %v1384
  %v4001 = vpop.f32.mrb[0].mxu0
  %v4002 = vadd.f32 %v3921, %v4001
  %v4003 = vpop.f32.mrb[0].mxu0
  %v4004 = vpop.f32.mrb[0].mxu0
  %v4005 = vadd.f32 %v3924, %v4004
  %v4006 = vpop.f32.mrb[0].mxu0
  %4007 = vmatprep.mubr.bf16.mxu0 %v1417
  %4008 = vmatmul.mubr.bf16.gmra.mrb[0].mxu0 %v1416
  %v4009 = vpop.f32.mrb[0].mxu0
  %v4010 = vadd.f32 %v3929, %v4009
  %v4011 = vpop.f32.mrb[0].mxu0
  %v4012 = vpop.f32.mrb[0].mxu0
  %v4013 = vadd.f32 %v3932, %v4012
  %v4014 = vpop.f32.mrb[0].mxu0
  %4015 = vmatprep.mubr.bf16.mxu0 %v1449
  %4016 = vmatmul.mubr.bf16.gmra.mrb[0].mxu0 %v1448
  %v4017 = vpop.f32.mrb[0].mxu0
  %v4018 = vadd.f32 %v3937, %v4017
  %v4019 = vpop.f32.mrb[0].mxu0
  %v4020 = vpop.f32.mrb[0].mxu0
  %v4021 = vadd.f32 %v3940, %v4020
  %v4022 = vpop.f32.mrb[0].mxu0
  %4023 = vmatprep.mubr.bf16.mxu0 %v1481
  %4024 = vmatmul.mubr.bf16.gmra.mrb[0].mxu0 %v1480
  %v4025 = vpop.f32.mrb[0].mxu0
  %v4026 = vadd.f32 %v3945, %v4025
  %v4027 = vpop.f32.mrb[0].mxu0
  %v4028 = vpop.f32.mrb[0].mxu0
  %v4029 = vadd.f32 %v3948, %v4028
  %v4030 = vpop.f32.mrb[0].mxu0
  %4031 = vdwg.mxu0
  %4032 = vmatprep.subr.bf16.mxu0 0
  %4033 = vmatpush1.bf16.msra.mxu0 %v2870
  %4034 = vmatprep.subr.bf16.mxu0 0
  %4035 = vmatpush1.bf16.msra.mxu0 %v2871
  %4036 = vmatprep.subr.bf16.mxu0 0
  %4037 = vmatpush1.bf16.msra.mxu0 %v2872
  %4038 = vmatprep.subr.bf16.mxu0 0
  %4039 = vmatpush1.bf16.msra.mxu0 %v2873
  %4040 = vmatprep.subr.bf16.mxu0 0
  %4041 = vmatpush1.bf16.msra.mxu0 %v2874
  %4042 = vmatprep.subr.bf16.mxu0 0
  %4043 = vmatpush1.bf16.msra.mxu0 %v2875
  %4044 = vmatprep.subr.bf16.mxu0 0
  %4045 = vmatpush1.bf16.msra.mxu0 %v2876
  %4046 = vmatprep.subr.bf16.mxu0 0
  %4047 = vmatpush1.bf16.msra.mxu0 %v2877
  %4048 = vmatprep.subr.bf16.mxu0 0
  %4049 = vmatpush1.bf16.msra.mxu0 %v2878
  %4050 = vmatprep.subr.bf16.mxu0 0
  %4051 = vmatpush1.bf16.msra.mxu0 %v2879
  %4052 = vmatprep.subr.bf16.mxu0 0
  %4053 = vmatpush1.bf16.msra.mxu0 %v2880
  %4054 = vmatprep.subr.bf16.mxu0 0
  %4055 = vmatpush1.bf16.msra.mxu0 %v2881
  %4056 = vmatprep.subr.bf16.mxu0 0
  %4057 = vmatpush1.bf16.msra.mxu0 %v2882
  %4058 = vmatprep.subr.bf16.mxu0 0
  %4059 = vmatpush1.bf16.msra.mxu0 %v2883
  %4060 = vmatprep.subr.bf16.mxu0 0
  %4061 = vmatpush1.bf16.msra.mxu0 %v2884
  %4062 = vmatprep.subr.bf16.mxu0 0
  %4063 = vmatpush1.bf16.msra.mxu0 %v2885
  %4064 = vmatprep.mubr.bf16.mxu0 %v1323
  %4065 = vmatmul.mubr.bf16.gmra.mrb[0].mxu0 %v1322
  %v4066 = vpop.f32.mrb[0].mxu0
  %v4067 = vadd.f32 %v3986, %v4066
  %v4068 = vpop.f32.mrb[0].mxu0
  %v4069 = vpop.f32.mrb[0].mxu0
  %v4070 = vadd.f32 %v3989, %v4069
  %v4071 = vpop.f32.mrb[0].mxu0
  %4072 = vmatprep.mubr.bf16.mxu0 %v1355
  %4073 = vmatmul.mubr.bf16.gmra.mrb[0].mxu0 %v1354
  %v4074 = vpop.f32.mrb[0].mxu0
  %v4075 = vadd.f32 %v3994, %v4074
  %v4076 = vpop.f32.mrb[0].mxu0
  %v4077 = vpop.f32.mrb[0].mxu0
  %v4078 = vadd.f32 %v3997, %v4077
  %v4079 = vpop.f32.mrb[0].mxu0
  %4080 = vmatprep.mubr.bf16.mxu0 %v1387
  %4081 = vmatmul.mubr.bf16.gmra.mrb[0].mxu0 %v1386
  %v4082 = vpop.f32.mrb[0].mxu0
  %v4083 = vadd.f32 %v4002, %v4082
  %v4084 = vpop.f32.mrb[0].mxu0
  %v4085 = vpop.f32.mrb[0].mxu0
  %v4086 = vadd.f32 %v4005, %v4085
  %v4087 = vpop.f32.mrb[0].mxu0
  %4088 = vmatprep.mubr.bf16.mxu0 %v1419
  %4089 = vmatmul.mubr.bf16.gmra.mrb[0].mxu0 %v1418
  %v4090 = vpop.f32.mrb[0].mxu0
  %v4091 = vadd.f32 %v4010, %v4090
  %v4092 = vpop.f32.mrb[0].mxu0
  %v4093 = vpop.f32.mrb[0].mxu0
  %v4094 = vadd.f32 %v4013, %v4093
  %v4095 = vpop.f32.mrb[0].mxu0
  %4096 = vmatprep.mubr.bf16.mxu0 %v1451
  %4097 = vmatmul.mubr.bf16.gmra.mrb[0].mxu0 %v1450
  %v4098 = vpop.f32.mrb[0].mxu0
  %v4099 = vadd.f32 %v4018, %v4098
  %v4100 = vpop.f32.mrb[0].mxu0
  %v4101 = vpop.f32.mrb[0].mxu0
  %v4102 = vadd.f32 %v4021, %v4101
  %v4103 = vpop.f32.mrb[0].mxu0
  %4104 = vmatprep.mubr.bf16.mxu0 %v1483
  %4105 = vmatmul.mubr.bf16.gmra.mrb[0].mxu0 %v1482
  %v4106 = vpop.f32.mrb[0].mxu0
  %v4107 = vadd.f32 %v4026, %v4106
  %v4108 = vpop.f32.mrb[0].mxu0
  %v4109 = vpop.f32.mrb[0].mxu0
  %v4110 = vadd.f32 %v4029, %v4109
  %v4111 = vpop.f32.mrb[0].mxu0
  %4112 = vdwg.mxu0
  %4113 = vmatprep.subr.bf16.mxu0 0
  %4114 = vmatpush1.bf16.msra.mxu0 %v2886
  %4115 = vmatprep.subr.bf16.mxu0 0
  %4116 = vmatpush1.bf16.msra.mxu0 %v2887
  %4117 = vmatprep.subr.bf16.mxu0 0
  %4118 = vmatpush1.bf16.msra.mxu0 %v2888
  %4119 = vmatprep.subr.bf16.mxu0 0
  %4120 = vmatpush1.bf16.msra.mxu0 %v2889
  %4121 = vmatprep.subr.bf16.mxu0 0
  %4122 = vmatpush1.bf16.msra.mxu0 %v2890
  %4123 = vmatprep.subr.bf16.mxu0 0
  %4124 = vmatpush1.bf16.msra.mxu0 %v2891
  %4125 = vmatprep.subr.bf16.mxu0 0
  %4126 = vmatpush1.bf16.msra.mxu0 %v2892
  %4127 = vmatprep.subr.bf16.mxu0 0
  %4128 = vmatpush1.bf16.msra.mxu0 %v2893
  %4129 = vmatprep.subr.bf16.mxu0 0
  %4130 = vmatpush1.bf16.msra.mxu0 %v2894
  %4131 = vmatprep.subr.bf16.mxu0 0
  %4132 = vmatpush1.bf16.msra.mxu0 %v2895
  %4133 = vmatprep.subr.bf16.mxu0 0
  %4134 = vmatpush1.bf16.msra.mxu0 %v2896
  %4135 = vmatprep.subr.bf16.mxu0 0
  %4136 = vmatpush1.bf16.msra.mxu0 %v2897
  %4137 = vmatprep.subr.bf16.mxu0 0
  %4138 = vmatpush1.bf16.msra.mxu0 %v2898
  %4139 = vmatprep.subr.bf16.mxu0 0
  %4140 = vmatpush1.bf16.msra.mxu0 %v2899
  %4141 = vmatprep.subr.bf16.mxu0 0
  %4142 = vmatpush1.bf16.msra.mxu0 %v2900
  %4143 = vmatprep.subr.bf16.mxu0 0
  %4144 = vmatpush1.bf16.msra.mxu0 %v2901
  %4145 = vmatprep.mubr.bf16.mxu0 %v1325
  %4146 = vmatmul.mubr.bf16.gmra.mrb[0].mxu0 %v1324
  %v4147 = vpop.f32.mrb[0].mxu0
  %v4148 = vadd.f32 %v4067, %v4147
  %v4149 = vpop.f32.mrb[0].mxu0
  %v4150 = vpop.f32.mrb[0].mxu0
  %v4151 = vadd.f32 %v4070, %v4150
  %v4152 = vpop.f32.mrb[0].mxu0
  %4153 = vmatprep.mubr.bf16.mxu0 %v1357
  %4154 = vmatmul.mubr.bf16.gmra.mrb[0].mxu0 %v1356
  %v4155 = vpop.f32.mrb[0].mxu0
  %v4156 = vadd.f32 %v4075, %v4155
  %v4157 = vpop.f32.mrb[0].mxu0
  %v4158 = vpop.f32.mrb[0].mxu0
  %v4159 = vadd.f32 %v4078, %v4158
  %v4160 = vpop.f32.mrb[0].mxu0
  %4161 = vmatprep.mubr.bf16.mxu0 %v1389
  %4162 = vmatmul.mubr.bf16.gmra.mrb[0].mxu0 %v1388
  %v4163 = vpop.f32.mrb[0].mxu0
  %v4164 = vadd.f32 %v4083, %v4163
  %v4165 = vpop.f32.mrb[0].mxu0
  %v4166 = vpop.f32.mrb[0].mxu0
  %v4167 = vadd.f32 %v4086, %v4166
  %v4168 = vpop.f32.mrb[0].mxu0
  %4169 = vmatprep.mubr.bf16.mxu0 %v1421
  %4170 = vmatmul.mubr.bf16.gmra.mrb[0].mxu0 %v1420
  %v4171 = vpop.f32.mrb[0].mxu0
  %v4172 = vadd.f32 %v4091, %v4171
  %v4173 = vpop.f32.mrb[0].mxu0
  %v4174 = vpop.f32.mrb[0].mxu0
  %v4175 = vadd.f32 %v4094, %v4174
  %v4176 = vpop.f32.mrb[0].mxu0
  %4177 = vmatprep.mubr.bf16.mxu0 %v1453
  %4178 = vmatmul.mubr.bf16.gmra.mrb[0].mxu0 %v1452
  %v4179 = vpop.f32.mrb[0].mxu0
  %v4180 = vadd.f32 %v4099, %v4179
  %v4181 = vpop.f32.mrb[0].mxu0
  %v4182 = vpop.f32.mrb[0].mxu0
  %v4183 = vadd.f32 %v4102, %v4182
  %v4184 = vpop.f32.mrb[0].mxu0
  %4185 = vmatprep.mubr.bf16.mxu0 %v1485
  %4186 = vmatmul.mubr.bf16.gmra.mrb[0].mxu0 %v1484
  %v4187 = vpop.f32.mrb[0].mxu0
  %v4188 = vadd.f32 %v4107, %v4187
  %v4189 = vpop.f32.mrb[0].mxu0
  %v4190 = vpop.f32.mrb[0].mxu0
  %v4191 = vadd.f32 %v4110, %v4190
  %v4192 = vpop.f32.mrb[0].mxu0
  %4193 = vdwg.mxu0
  %4194 = vmatprep.subr.bf16.mxu0 0
  %4195 = vmatpush1.bf16.msra.mxu0 %v2902
  %4196 = vmatprep.subr.bf16.mxu0 0
  %4197 = vmatpush1.bf16.msra.mxu0 %v2903
  %4198 = vmatprep.subr.bf16.mxu0 0
  %4199 = vmatpush1.bf16.msra.mxu0 %v2904
  %4200 = vmatprep.subr.bf16.mxu0 0
  %4201 = vmatpush1.bf16.msra.mxu0 %v2905
  %4202 = vmatprep.subr.bf16.mxu0 0
  %4203 = vmatpush1.bf16.msra.mxu0 %v2906
  %4204 = vmatprep.subr.bf16.mxu0 0
  %4205 = vmatpush1.bf16.msra.mxu0 %v2907
  %4206 = vmatprep.subr.bf16.mxu0 0
  %4207 = vmatpush1.bf16.msra.mxu0 %v2908
  %4208 = vmatprep.subr.bf16.mxu0 0
  %4209 = vmatpush1.bf16.msra.mxu0 %v2909
  %4210 = vmatprep.subr.bf16.mxu0 0
  %4211 = vmatpush1.bf16.msra.mxu0 %v2910
  %4212 = vmatprep.subr.bf16.mxu0 0
  %4213 = vmatpush1.bf16.msra.mxu0 %v2911
  %4214 = vmatprep.subr.bf16.mxu0 0
  %4215 = vmatpush1.bf16.msra.mxu0 %v2912
  %4216 = vmatprep.subr.bf16.mxu0 0
  %4217 = vmatpush1.bf16.msra.mxu0 %v2913
  %4218 = vmatprep.subr.bf16.mxu0 0
  %4219 = vmatpush1.bf16.msra.mxu0 %v2914
  %4220 = vmatprep.subr.bf16.mxu0 0
  %4221 = vmatpush1.bf16.msra.mxu0 %v2915
  %4222 = vmatprep.subr.bf16.mxu0 0
  %4223 = vmatpush1.bf16.msra.mxu0 %v2916
  %4224 = vmatprep.subr.bf16.mxu0 0
  %4225 = vmatpush1.bf16.msra.mxu0 %v2917
  %4226 = vmatprep.mubr.bf16.mxu0 %v1327
  %4227 = vmatmul.mubr.bf16.gmra.mrb[0].mxu0 %v1326
  %v4228 = vpop.f32.mrb[0].mxu0
  %v4229 = vadd.f32 %v4148, %v4228
  %v4230 = vpop.f32.mrb[0].mxu0
  %v4231 = vpop.f32.mrb[0].mxu0
  %v4232 = vadd.f32 %v4151, %v4231
  %v4233 = vpop.f32.mrb[0].mxu0
  %4234 = vmatprep.mubr.bf16.mxu0 %v1359
  %4235 = vmatmul.mubr.bf16.gmra.mrb[0].mxu0 %v1358
  %v4236 = vpop.f32.mrb[0].mxu0
  %v4237 = vadd.f32 %v4156, %v4236
  %v4238 = vpop.f32.mrb[0].mxu0
  %v4239 = vpop.f32.mrb[0].mxu0
  %v4240 = vadd.f32 %v4159, %v4239
  %v4241 = vpop.f32.mrb[0].mxu0
  %4242 = vmatprep.mubr.bf16.mxu0 %v1391
  %4243 = vmatmul.mubr.bf16.gmra.mrb[0].mxu0 %v1390
  %v4244 = vpop.f32.mrb[0].mxu0
  %v4245 = vadd.f32 %v4164, %v4244
  %v4246 = vpop.f32.mrb[0].mxu0
  %v4247 = vpop.f32.mrb[0].mxu0
  %v4248 = vadd.f32 %v4167, %v4247
  %v4249 = vpop.f32.mrb[0].mxu0
  %4250 = vmatprep.mubr.bf16.mxu0 %v1423
  %4251 = vmatmul.mubr.bf16.gmra.mrb[0].mxu0 %v1422
  %v4252 = vpop.f32.mrb[0].mxu0
  %v4253 = vadd.f32 %v4172, %v4252
  %v4254 = vpop.f32.mrb[0].mxu0
  %v4255 = vpop.f32.mrb[0].mxu0
  %v4256 = vadd.f32 %v4175, %v4255
  %v4257 = vpop.f32.mrb[0].mxu0
  %4258 = vmatprep.mubr.bf16.mxu0 %v1455
  %4259 = vmatmul.mubr.bf16.gmra.mrb[0].mxu0 %v1454
  %v4260 = vpop.f32.mrb[0].mxu0
  %v4261 = vadd.f32 %v4180, %v4260
  %v4262 = vpop.f32.mrb[0].mxu0
  %v4263 = vpop.f32.mrb[0].mxu0
  %v4264 = vadd.f32 %v4183, %v4263
  %v4265 = vpop.f32.mrb[0].mxu0
  %4266 = vmatprep.mubr.bf16.mxu0 %v1487
  %4267 = vmatmul.mubr.bf16.gmra.mrb[0].mxu0 %v1486
  %v4268 = vpop.f32.mrb[0].mxu0
  %v4269 = vadd.f32 %v4188, %v4268
  %v4270 = vpop.f32.mrb[0].mxu0
  %v4271 = vpop.f32.mrb[0].mxu0
  %v4272 = vadd.f32 %v4191, %v4271
  %v4273 = vpop.f32.mrb[0].mxu0
  %4274 = vdwg.mxu0
  %4275 = vmatprep.subr.bf16.mxu0 0
  %4276 = vmatpush1.bf16.msra.mxu0 %v2918
  %4277 = vmatprep.subr.bf16.mxu0 0
  %4278 = vmatpush1.bf16.msra.mxu0 %v2919
  %4279 = vmatprep.subr.bf16.mxu0 0
  %4280 = vmatpush1.bf16.msra.mxu0 %v2920
  %4281 = vmatprep.subr.bf16.mxu0 0
  %4282 = vmatpush1.bf16.msra.mxu0 %v2921
  %4283 = vmatprep.subr.bf16.mxu0 0
  %4284 = vmatpush1.bf16.msra.mxu0 %v2922
  %4285 = vmatprep.subr.bf16.mxu0 0
  %4286 = vmatpush1.bf16.msra.mxu0 %v2923
  %4287 = vmatprep.subr.bf16.mxu0 0
  %4288 = vmatpush1.bf16.msra.mxu0 %v2924
  %4289 = vmatprep.subr.bf16.mxu0 0
  %4290 = vmatpush1.bf16.msra.mxu0 %v2925
  %4291 = vmatprep.subr.bf16.mxu0 0
  %4292 = vmatpush1.bf16.msra.mxu0 %v2926
  %4293 = vmatprep.subr.bf16.mxu0 0
  %4294 = vmatpush1.bf16.msra.mxu0 %v2927
  %4295 = vmatprep.subr.bf16.mxu0 0
  %4296 = vmatpush1.bf16.msra.mxu0 %v2928
  %4297 = vmatprep.subr.bf16.mxu0 0
  %4298 = vmatpush1.bf16.msra.mxu0 %v2929
  %4299 = vmatprep.subr.bf16.mxu0 0
  %4300 = vmatpush1.bf16.msra.mxu0 %v2930
  %4301 = vmatprep.subr.bf16.mxu0 0
  %4302 = vmatpush1.bf16.msra.mxu0 %v2931
  %4303 = vmatprep.subr.bf16.mxu0 0
  %4304 = vmatpush1.bf16.msra.mxu0 %v2932
  %4305 = vmatprep.subr.bf16.mxu0 0
  %4306 = vmatpush1.bf16.msra.mxu0 %v2933
  %4307 = vmatprep.mubr.bf16.mxu0 %v1329
  %4308 = vmatmul.mubr.bf16.gmra.mrb[0].mxu0 %v1328
  %v4309 = vpop.f32.mrb[0].mxu0
  %v4310 = vadd.f32 %v4229, %v4309
  %v4311 = vpop.f32.mrb[0].mxu0
  %v4312 = vpop.f32.mrb[0].mxu0
  %v4313 = vadd.f32 %v4232, %v4312
  %v4314 = vpop.f32.mrb[0].mxu0
  %4315 = vmatprep.mubr.bf16.mxu0 %v1361
  %4316 = vmatmul.mubr.bf16.gmra.mrb[0].mxu0 %v1360
  %v4317 = vpop.f32.mrb[0].mxu0
  %v4318 = vadd.f32 %v4237, %v4317
  %v4319 = vpop.f32.mrb[0].mxu0
  %v4320 = vpop.f32.mrb[0].mxu0
  %v4321 = vadd.f32 %v4240, %v4320
  %v4322 = vpop.f32.mrb[0].mxu0
  %4323 = vmatprep.mubr.bf16.mxu0 %v1393
  %4324 = vmatmul.mubr.bf16.gmra.mrb[0].mxu0 %v1392
  %v4325 = vpop.f32.mrb[0].mxu0
  %v4326 = vadd.f32 %v4245, %v4325
  %v4327 = vpop.f32.mrb[0].mxu0
  %v4328 = vpop.f32.mrb[0].mxu0
  %v4329 = vadd.f32 %v4248, %v4328
  %v4330 = vpop.f32.mrb[0].mxu0
  %4331 = vmatprep.mubr.bf16.mxu0 %v1425
  %4332 = vmatmul.mubr.bf16.gmra.mrb[0].mxu0 %v1424
  %v4333 = vpop.f32.mrb[0].mxu0
  %v4334 = vadd.f32 %v4253, %v4333
  %v4335 = vpop.f32.mrb[0].mxu0
  %v4336 = vpop.f32.mrb[0].mxu0
  %v4337 = vadd.f32 %v4256, %v4336
  %v4338 = vpop.f32.mrb[0].mxu0
  %4339 = vmatprep.mubr.bf16.mxu0 %v1457
  %4340 = vmatmul.mubr.bf16.gmra.mrb[0].mxu0 %v1456
  %v4341 = vpop.f32.mrb[0].mxu0
  %v4342 = vadd.f32 %v4261, %v4341
  %v4343 = vpop.f32.mrb[0].mxu0
  %v4344 = vpop.f32.mrb[0].mxu0
  %v4345 = vadd.f32 %v4264, %v4344
  %v4346 = vpop.f32.mrb[0].mxu0
  %4347 = vmatprep.mubr.bf16.mxu0 %v1489
  %4348 = vmatmul.mubr.bf16.gmra.mrb[0].mxu0 %v1488
  %v4349 = vpop.f32.mrb[0].mxu0
  %v4350 = vadd.f32 %v4269, %v4349
  %v4351 = vpop.f32.mrb[0].mxu0
  %v4352 = vpop.f32.mrb[0].mxu0
  %v4353 = vadd.f32 %v4272, %v4352
  %v4354 = vpop.f32.mrb[0].mxu0
  %4355 = vdwg.mxu0
  %4356 = vmatprep.subr.bf16.mxu0 0
  %4357 = vmatpush1.bf16.msra.mxu0 %v2934
  %4358 = vmatprep.subr.bf16.mxu0 0
  %4359 = vmatpush1.bf16.msra.mxu0 %v2935
  %4360 = vmatprep.subr.bf16.mxu0 0
  %4361 = vmatpush1.bf16.msra.mxu0 %v2936
  %4362 = vmatprep.subr.bf16.mxu0 0
  %4363 = vmatpush1.bf16.msra.mxu0 %v2937
  %4364 = vmatprep.subr.bf16.mxu0 0
  %4365 = vmatpush1.bf16.msra.mxu0 %v2938
  %4366 = vmatprep.subr.bf16.mxu0 0
  %4367 = vmatpush1.bf16.msra.mxu0 %v2939
  %4368 = vmatprep.subr.bf16.mxu0 0
  %4369 = vmatpush1.bf16.msra.mxu0 %v2940
  %4370 = vmatprep.subr.bf16.mxu0 0
  %4371 = vmatpush1.bf16.msra.mxu0 %v2941
  %4372 = vmatprep.subr.bf16.mxu0 0
  %4373 = vmatpush1.bf16.msra.mxu0 %v2942
  %4374 = vmatprep.subr.bf16.mxu0 0
  %4375 = vmatpush1.bf16.msra.mxu0 %v2943
  %4376 = vmatprep.subr.bf16.mxu0 0
  %4377 = vmatpush1.bf16.msra.mxu0 %v2944
  %4378 = vmatprep.subr.bf16.mxu0 0
  %4379 = vmatpush1.bf16.msra.mxu0 %v2945
  %4380 = vmatprep.subr.bf16.mxu0 0
  %4381 = vmatpush1.bf16.msra.mxu0 %v2946
  %4382 = vmatprep.subr.bf16.mxu0 0
  %4383 = vmatpush1.bf16.msra.mxu0 %v2947
  %4384 = vmatprep.subr.bf16.mxu0 0
  %4385 = vmatpush1.bf16.msra.mxu0 %v2948
  %4386 = vmatprep.subr.bf16.mxu0 0
  %4387 = vmatpush1.bf16.msra.mxu0 %v2949
  %4388 = vmatprep.mubr.bf16.mxu0 %v1331
  %4389 = vmatmul.mubr.bf16.gmra.mrb[0].mxu0 %v1330
  %v4390 = vpop.f32.mrb[0].mxu0
  %v4391 = vadd.f32 %v4310, %v4390
  %v4392 = vpop.f32.mrb[0].mxu0
  %v4393 = vpop.f32.mrb[0].mxu0
  %v4394 = vadd.f32 %v4313, %v4393
  %v4395 = vpop.f32.mrb[0].mxu0
  %4396 = vmatprep.mubr.bf16.mxu0 %v1363
  %4397 = vmatmul.mubr.bf16.gmra.mrb[0].mxu0 %v1362
  %v4398 = vpop.f32.mrb[0].mxu0
  %v4399 = vadd.f32 %v4318, %v4398
  %v4400 = vpop.f32.mrb[0].mxu0
  %v4401 = vpop.f32.mrb[0].mxu0
  %v4402 = vadd.f32 %v4321, %v4401
  %v4403 = vpop.f32.mrb[0].mxu0
  %4404 = vmatprep.mubr.bf16.mxu0 %v1395
  %4405 = vmatmul.mubr.bf16.gmra.mrb[0].mxu0 %v1394
  %v4406 = vpop.f32.mrb[0].mxu0
  %v4407 = vadd.f32 %v4326, %v4406
  %v4408 = vpop.f32.mrb[0].mxu0
  %v4409 = vpop.f32.mrb[0].mxu0
  %v4410 = vadd.f32 %v4329, %v4409
  %v4411 = vpop.f32.mrb[0].mxu0
  %4412 = vmatprep.mubr.bf16.mxu0 %v1427
  %4413 = vmatmul.mubr.bf16.gmra.mrb[0].mxu0 %v1426
  %v4414 = vpop.f32.mrb[0].mxu0
  %v4415 = vadd.f32 %v4334, %v4414
  %v4416 = vpop.f32.mrb[0].mxu0
  %v4417 = vpop.f32.mrb[0].mxu0
  %v4418 = vadd.f32 %v4337, %v4417
  %v4419 = vpop.f32.mrb[0].mxu0
  %4420 = vmatprep.mubr.bf16.mxu0 %v1459
  %4421 = vmatmul.mubr.bf16.gmra.mrb[0].mxu0 %v1458
  %v4422 = vpop.f32.mrb[0].mxu0
  %v4423 = vadd.f32 %v4342, %v4422
  %v4424 = vpop.f32.mrb[0].mxu0
  %v4425 = vpop.f32.mrb[0].mxu0
  %v4426 = vadd.f32 %v4345, %v4425
  %v4427 = vpop.f32.mrb[0].mxu0
  %4428 = vmatprep.mubr.bf16.mxu0 %v1491
  %4429 = vmatmul.mubr.bf16.gmra.mrb[0].mxu0 %v1490
  %v4430 = vpop.f32.mrb[0].mxu0
  %v4431 = vadd.f32 %v4350, %v4430
  %v4432 = vpop.f32.mrb[0].mxu0
  %v4433 = vpop.f32.mrb[0].mxu0
  %v4434 = vadd.f32 %v4353, %v4433
  %v4435 = vpop.f32.mrb[0].mxu0
  %4436 = vdwg.mxu0
  %4437 = vmatprep.subr.bf16.mxu0 0
  %4438 = vmatpush1.bf16.msra.mxu0 %v2950
  %4439 = vmatprep.subr.bf16.mxu0 0
  %4440 = vmatpush1.bf16.msra.mxu0 %v2951
  %4441 = vmatprep.subr.bf16.mxu0 0
  %4442 = vmatpush1.bf16.msra.mxu0 %v2952
  %4443 = vmatprep.subr.bf16.mxu0 0
  %4444 = vmatpush1.bf16.msra.mxu0 %v2953
  %4445 = vmatprep.subr.bf16.mxu0 0
  %4446 = vmatpush1.bf16.msra.mxu0 %v2954
  %4447 = vmatprep.subr.bf16.mxu0 0
  %4448 = vmatpush1.bf16.msra.mxu0 %v2955
  %4449 = vmatprep.subr.bf16.mxu0 0
  %4450 = vmatpush1.bf16.msra.mxu0 %v2956
  %4451 = vmatprep.subr.bf16.mxu0 0
  %4452 = vmatpush1.bf16.msra.mxu0 %v2957
  %4453 = vmatprep.subr.bf16.mxu0 0
  %4454 = vmatpush1.bf16.msra.mxu0 %v2958
  %4455 = vmatprep.subr.bf16.mxu0 0
  %4456 = vmatpush1.bf16.msra.mxu0 %v2959
  %4457 = vmatprep.subr.bf16.mxu0 0
  %4458 = vmatpush1.bf16.msra.mxu0 %v2960
  %4459 = vmatprep.subr.bf16.mxu0 0
  %4460 = vmatpush1.bf16.msra.mxu0 %v2961
  %4461 = vmatprep.subr.bf16.mxu0 0
  %4462 = vmatpush1.bf16.msra.mxu0 %v2962
  %4463 = vmatprep.subr.bf16.mxu0 0
  %4464 = vmatpush1.bf16.msra.mxu0 %v2963
  %4465 = vmatprep.subr.bf16.mxu0 0
  %4466 = vmatpush1.bf16.msra.mxu0 %v2964
  %4467 = vmatprep.subr.bf16.mxu0 0
  %4468 = vmatpush1.bf16.msra.mxu0 %v2965
  %4469 = vmatprep.mubr.bf16.mxu0 %v1333
  %4470 = vmatmul.mubr.bf16.gmra.mrb[0].mxu0 %v1332
  %v4471 = vpop.f32.mrb[0].mxu0
  %v4472 = vadd.f32 %v4391, %v4471
  %v4473 = vpop.f32.mrb[0].mxu0
  %v4474 = vpop.f32.mrb[0].mxu0
  %v4475 = vadd.f32 %v4394, %v4474
  %v4476 = vpop.f32.mrb[0].mxu0
  %4477 = vmatprep.mubr.bf16.mxu0 %v1365
  %4478 = vmatmul.mubr.bf16.gmra.mrb[0].mxu0 %v1364
  %v4479 = vpop.f32.mrb[0].mxu0
  %v4480 = vadd.f32 %v4399, %v4479
  %v4481 = vpop.f32.mrb[0].mxu0
  %v4482 = vpop.f32.mrb[0].mxu0
  %v4483 = vadd.f32 %v4402, %v4482
  %v4484 = vpop.f32.mrb[0].mxu0
  %4485 = vmatprep.mubr.bf16.mxu0 %v1397
  %4486 = vmatmul.mubr.bf16.gmra.mrb[0].mxu0 %v1396
  %v4487 = vpop.f32.mrb[0].mxu0
  %v4488 = vadd.f32 %v4407, %v4487
  %v4489 = vpop.f32.mrb[0].mxu0
  %v4490 = vpop.f32.mrb[0].mxu0
  %v4491 = vadd.f32 %v4410, %v4490
  %v4492 = vpop.f32.mrb[0].mxu0
  %4493 = vmatprep.mubr.bf16.mxu0 %v1429
  %4494 = vmatmul.mubr.bf16.gmra.mrb[0].mxu0 %v1428
  %v4495 = vpop.f32.mrb[0].mxu0
  %v4496 = vadd.f32 %v4415, %v4495
  %v4497 = vpop.f32.mrb[0].mxu0
  %v4498 = vpop.f32.mrb[0].mxu0
  %v4499 = vadd.f32 %v4418, %v4498
  %v4500 = vpop.f32.mrb[0].mxu0
  %4501 = vmatprep.mubr.bf16.mxu0 %v1461
  %4502 = vmatmul.mubr.bf16.gmra.mrb[0].mxu0 %v1460
  %v4503 = vpop.f32.mrb[0].mxu0
  %v4504 = vadd.f32 %v4423, %v4503
  %v4505 = vpop.f32.mrb[0].mxu0
  %v4506 = vpop.f32.mrb[0].mxu0
  %v4507 = vadd.f32 %v4426, %v4506
  %v4508 = vpop.f32.mrb[0].mxu0
  %4509 = vmatprep.mubr.bf16.mxu0 %v1493
  %4510 = vmatmul.mubr.bf16.gmra.mrb[0].mxu0 %v1492
  %v4511 = vpop.f32.mrb[0].mxu0
  %v4512 = vadd.f32 %v4431, %v4511
  %v4513 = vpop.f32.mrb[0].mxu0
  %v4514 = vpop.f32.mrb[0].mxu0
  %v4515 = vadd.f32 %v4434, %v4514
  %v4516 = vpop.f32.mrb[0].mxu0
  %4517 = vdwg.mxu0
  %v4518 = vmax.f32 %v4472, 0.0
  %v4519 = vmax.f32 %v4475, 0.0
  %v4520 = vmax.f32 %v4480, 0.0
  %v4521 = vmax.f32 %v4483, 0.0
  %v4522 = vmax.f32 %v4488, 0.0
  %v4523 = vmax.f32 %v4491, 0.0
  %v4524 = vmax.f32 %v4496, 0.0
  %v4525 = vmax.f32 %v4499, 0.0
  %v4526 = vmax.f32 %v4504, 0.0
  %v4527 = vmax.f32 %v4507, 0.0
  %v4528 = vmax.f32 %v4512, 0.0
  %v4529 = vmax.f32 %v4515, 0.0
  %v4530 = vpack.c.bf16 %v4519, %v4518
  %v4531 = vpack.c.bf16 %v4521, %v4520
  %v4532 = vpack.c.bf16 %v4523, %v4522
  %v4533 = vpack.c.bf16 %v4525, %v4524
  %v4534 = vpack.c.bf16 %v4527, %v4526
  %v4535 = vpack.c.bf16 %v4529, %v4528
  %v4542 = vunpack.c.l.b16 %v4530
  %v4543 = vunpack.c.h.b16 %v4530
  %v4544 = vunpack.c.l.b16 %v4531
  %v4545 = vunpack.c.h.b16 %v4531
  %v4546 = vunpack.c.l.b16 %v4532
  %v4547 = vunpack.c.h.b16 %v4532
  %v4548 = vunpack.c.l.b16 %v4533
  %v4549 = vunpack.c.h.b16 %v4533
  %v4550 = vunpack.c.l.b16 %v4534
  %v4551 = vunpack.c.h.b16 %v4534
  %v4552 = vunpack.c.l.b16 %v4535
  %v4553 = vunpack.c.h.b16 %v4535
  %v4554 = vpack.c.b16 %v4542, %v4542
  %v4555 = vpack.c.b16 %v4543, %v4543
  %v4556 = vpack.c.b16 %v4544, %v4544
  %v4557 = vpack.c.b16 %v4545, %v4545
  %v4558 = vpack.c.b16 %v4546, %v4546
  %v4559 = vpack.c.b16 %v4547, %v4547
  %v4560 = vpack.c.b16 %v4548, %v4548
  %v4561 = vpack.c.b16 %v4549, %v4549
  %v4562 = vpack.c.b16 %v4550, %v4550
  %v4563 = vpack.c.b16 %v4551, %v4551
  %v4564 = vpack.c.b16 %v4552, %v4552
  %v4565 = vpack.c.b16 %v4553, %v4553
  %vm4578 = vcmask 257024
  %4579 = vst.msk [vmem:[%s3] sm:$0xf] %vm4578, %v4554
  %4580 = vst.msk [vmem:[%s3 + $0x4] sm:$0xf] %vm4578, %v4555
  %4581 = vst.msk [vmem:[%s3 + $0x8] sm:$0xf] %vm4578, %v4556
  %4582 = vst.msk [vmem:[%s3 + $0xc] sm:$0xf] %vm4578, %v4557
  %4583 = vst.msk [vmem:[%s3 + $0x10] sm:$0xf] %vm4578, %v4558
  %4584 = vst.msk [vmem:[%s3 + $0x14] sm:$0xf] %vm4578, %v4559
  %4585 = vst.msk [vmem:[%s3 + $0x18] sm:$0xf] %vm4578, %v4560
  %4586 = vst.msk [vmem:[%s3 + $0x1c] sm:$0xf] %vm4578, %v4561
  %4587 = vst.msk [vmem:[%s3 + $0x20] sm:$0xf] %vm4578, %v4562
  %4588 = vst.msk [vmem:[%s3 + $0x24] sm:$0xf] %vm4578, %v4563
  %4589 = vst.msk [vmem:[%s3 + $0x28] sm:$0xf] %vm4578, %v4564
  %4590 = vst.msk [vmem:[%s3 + $0x2c] sm:$0xf] %vm4578, %v4565
  // Predicated region
  $region14: #{conv3d_autoencoder_forward.11} parent=0 // pred_check
    _
  $region15: #{conv3d_autoencoder_forward.11} parent=0 // pred_check_branch
    %4592 = sbr.rel (0) target = $region17
  $region16: #{conv3d_autoencoder_forward.11} parent=0 // pred_region
    _
  $region17: #{conv3d_autoencoder_forward.11} parent=0 // pred_fallthru
    _
  // Predicated region
  $region18: #{conv3d_autoencoder_forward.11} parent=0 // pred_check
    _
  $region19: #{conv3d_autoencoder_forward.11} parent=0 // pred_check_branch
    %4594 = sbr.rel (0) target = $region21
  $region20: #{conv3d_autoencoder_forward.11} parent=0 // pred_region
    _
  $region21: #{conv3d_autoencoder_forward.11} parent=0 // pred_fallthru
    _

// kernel: conv3d_autoencoder_forward.12
$region0: #{conv3d_autoencoder_forward.12}
  #allocation0 [shape = 'u32[]', space=smem, size = 0x4, offset = 0x4, fixed_abs, tag = 'smem constant byte address 0x4 - core index']
  #allocation1 [shape = 'u32[144,128]{1,0:T(1,128)}', space=vmem, size = 0x12000, scoped, tag = 'internal scratch']
  %s0 = inlined_call_operand.vmem [shape: bf16[16,1536], index: 0, kind: input, shape index: {}]
  %s1 = inlined_call_operand.vmem [shape: bf16[1536,32], index: 1, kind: input, shape index: {}]
  %s2 = inlined_call_operand.vmem [shape: f32[1,32], index: 2, kind: input, shape index: {}]
  %s3 = inlined_call_operand.vmem [shape: bf16[16,32], index: 3, kind: output, shape index: {}]
  %s4 = sld [smem:[#allocation0]]
  $region22: #{conv3d_autoencoder_forward.12} parent=0
    _
  %s6 = ssub.s32 1, %s4
  %s7 = scalar_select 0, %s6, %s4
  // Predicated region
  $region2: #{conv3d_autoencoder_forward.12} parent=0 // pred_check
    _
  $region3: #{conv3d_autoencoder_forward.12} parent=0 // pred_check_branch
    %9 = sbr.rel (0) target = $region5
  $region4: #{conv3d_autoencoder_forward.12} parent=0 // pred_region
    _
  $region5: #{conv3d_autoencoder_forward.12} parent=0 // pred_fallthru
    _
  // Predicated region
  $region6: #{conv3d_autoencoder_forward.12} parent=0 // pred_check
    _
  $region7: #{conv3d_autoencoder_forward.12} parent=0 // pred_check_branch
    %11 = sbr.rel (0) target = $region9
  $region8: #{conv3d_autoencoder_forward.12} parent=0 // pred_region
    _
  $region9: #{conv3d_autoencoder_forward.12} parent=0 // pred_fallthru
    _
  // Predicated region
  $region10: #{conv3d_autoencoder_forward.12} parent=0 // pred_check
    _
  $region11: #{conv3d_autoencoder_forward.12} parent=0 // pred_check_branch
    %13 = sbr.rel (0) target = $region13
  $region12: #{conv3d_autoencoder_forward.12} parent=0 // pred_region
    _
  $region13: #{conv3d_autoencoder_forward.12} parent=0 // pred_fallthru
    _
  %v15 = vld [vmem:[%s0] sm:$0xff]
  %v16 = vld [vmem:[%s0 + $0x8] sm:$0xff]
  %v17 = vld [vmem:[%s0 + $0x10] sm:$0xff]
  %v18 = vld [vmem:[%s0 + $0x18] sm:$0xff]
  %v19 = vld [vmem:[%s0 + $0x20] sm:$0xff]
  %v20 = vld [vmem:[%s0 + $0x28] sm:$0xff]
  %v21 = vld [vmem:[%s0 + $0x30] sm:$0xff]
  %v22 = vld [vmem:[%s0 + $0x38] sm:$0xff]
  %v23 = vld [vmem:[%s0 + $0x40] sm:$0xff]
  %v24 = vld [vmem:[%s0 + $0x48] sm:$0xff]
  %v25 = vld [vmem:[%s0 + $0x50] sm:$0xff]
  %v26 = vld [vmem:[%s0 + $0x58] sm:$0xff]
  %v27 = vld [vmem:[%s1] sm:$0xf]
  %v28 = vld [vmem:[%s1 + $0x4] sm:$0xf]
  %v29 = vld [vmem:[%s1 + $0x8] sm:$0xf]
  %v30 = vld [vmem:[%s1 + $0xc] sm:$0xf]
  %v31 = vld [vmem:[%s1 + $0x10] sm:$0xf]
  %v32 = vld [vmem:[%s1 + $0x14] sm:$0xf]
  %v33 = vld [vmem:[%s1 + $0x18] sm:$0xf]
  %v34 = vld [vmem:[%s1 + $0x1c] sm:$0xf]
  %v35 = vld [vmem:[%s1 + $0x20] sm:$0xf]
  %v36 = vld [vmem:[%s1 + $0x24] sm:$0xf]
  %v37 = vld [vmem:[%s1 + $0x28] sm:$0xf]
  %v38 = vld [vmem:[%s1 + $0x2c] sm:$0xf]
  %v39 = vld [vmem:[%s1 + $0x30] sm:$0xf]
  %v40 = vld [vmem:[%s1 + $0x34] sm:$0xf]
  %v41 = vld [vmem:[%s1 + $0x38] sm:$0xf]
  %v42 = vld [vmem:[%s1 + $0x3c] sm:$0xf]
  %v43 = vld [vmem:[%s1 + $0x40] sm:$0xf]
  %v44 = vld [vmem:[%s1 + $0x44] sm:$0xf]
  %v45 = vld [vmem:[%s1 + $0x48] sm:$0xf]
  %v46 = vld [vmem:[%s1 + $0x4c] sm:$0xf]
  %v47 = vld [vmem:[%s1 + $0x50] sm:$0xf]
  %v48 = vld [vmem:[%s1 + $0x54] sm:$0xf]
  %v49 = vld [vmem:[%s1 + $0x58] sm:$0xf]
  %v50 = vld [vmem:[%s1 + $0x5c] sm:$0xf]
  %v51 = vld [vmem:[%s1 + $0x60] sm:$0xf]
  %v52 = vld [vmem:[%s1 + $0x64] sm:$0xf]
  %v53 = vld [vmem:[%s1 + $0x68] sm:$0xf]
  %v54 = vld [vmem:[%s1 + $0x6c] sm:$0xf]
  %v55 = vld [vmem:[%s1 + $0x70] sm:$0xf]
  %v56 = vld [vmem:[%s1 + $0x74] sm:$0xf]
  %v57 = vld [vmem:[%s1 + $0x78] sm:$0xf]
  %v58 = vld [vmem:[%s1 + $0x7c] sm:$0xf]
  %v59 = vld [vmem:[%s1 + $0x80] sm:$0xf]
  %v60 = vld [vmem:[%s1 + $0x84] sm:$0xf]
  %v61 = vld [vmem:[%s1 + $0x88] sm:$0xf]
  %v62 = vld [vmem:[%s1 + $0x8c] sm:$0xf]
  %v63 = vld [vmem:[%s1 + $0x90] sm:$0xf]
  %v64 = vld [vmem:[%s1 + $0x94] sm:$0xf]
  %v65 = vld [vmem:[%s1 + $0x98] sm:$0xf]
  %v66 = vld [vmem:[%s1 + $0x9c] sm:$0xf]
  %v67 = vld [vmem:[%s1 + $0xa0] sm:$0xf]
  %v68 = vld [vmem:[%s1 + $0xa4] sm:$0xf]
  %v69 = vld [vmem:[%s1 + $0xa8] sm:$0xf]
  %v70 = vld [vmem:[%s1 + $0xac] sm:$0xf]
  %v71 = vld [vmem:[%s1 + $0xb0] sm:$0xf]
  %v72 = vld [vmem:[%s1 + $0xb4] sm:$0xf]
  %v73 = vld [vmem:[%s1 + $0xb8] sm:$0xf]
  %v74 = vld [vmem:[%s1 + $0xbc] sm:$0xf]
  %v75 = vld [vmem:[%s1 + $0xc0] sm:$0xf]
  %v76 = vld [vmem:[%s1 + $0xc4] sm:$0xf]
  %v77 = vld [vmem:[%s1 + $0xc8] sm:$0xf]
  %v78 = vld [vmem:[%s1 + $0xcc] sm:$0xf]
  %v79 = vld [vmem:[%s1 + $0xd0] sm:$0xf]
  %v80 = vld [vmem:[%s1 + $0xd4] sm:$0xf]
  %v81 = vld [vmem:[%s1 + $0xd8] sm:$0xf]
  %v82 = vld [vmem:[%s1 + $0xdc] sm:$0xf]
  %v83 = vld [vmem:[%s1 + $0xe0] sm:$0xf]
  %v84 = vld [vmem:[%s1 + $0xe4] sm:$0xf]
  %v85 = vld [vmem:[%s1 + $0xe8] sm:$0xf]
  %v86 = vld [vmem:[%s1 + $0xec] sm:$0xf]
  %v87 = vld [vmem:[%s1 + $0xf0] sm:$0xf]
  %v88 = vld [vmem:[%s1 + $0xf4] sm:$0xf]
  %v89 = vld [vmem:[%s1 + $0xf8] sm:$0xf]
  %v90 = vld [vmem:[%s1 + $0xfc] sm:$0xf]
  %v91 = vld [vmem:[%s1 + $0x100] sm:$0xf]
  %v92 = vld [vmem:[%s1 + $0x104] sm:$0xf]
  %v93 = vld [vmem:[%s1 + $0x108] sm:$0xf]
  %v94 = vld [vmem:[%s1 + $0x10c] sm:$0xf]
  %v95 = vld [vmem:[%s1 + $0x110] sm:$0xf]
  %v96 = vld [vmem:[%s1 + $0x114] sm:$0xf]
  %v97 = vld [vmem:[%s1 + $0x118] sm:$0xf]
  %v98 = vld [vmem:[%s1 + $0x11c] sm:$0xf]
  %v99 = vld [vmem:[%s1 + $0x120] sm:$0xf]
  %v100 = vld [vmem:[%s1 + $0x124] sm:$0xf]
  %v101 = vld [vmem:[%s1 + $0x128] sm:$0xf]
  %v102 = vld [vmem:[%s1 + $0x12c] sm:$0xf]
  %v103 = vld [vmem:[%s1 + $0x130] sm:$0xf]
  %v104 = vld [vmem:[%s1 + $0x134] sm:$0xf]
  %v105 = vld [vmem:[%s1 + $0x138] sm:$0xf]
  %v106 = vld [vmem:[%s1 + $0x13c] sm:$0xf]
  %v107 = vld [vmem:[%s1 + $0x140] sm:$0xf]
  %v108 = vld [vmem:[%s1 + $0x144] sm:$0xf]
  %v109 = vld [vmem:[%s1 + $0x148] sm:$0xf]
  %v110 = vld [vmem:[%s1 + $0x14c] sm:$0xf]
  %v111 = vld [vmem:[%s1 + $0x150] sm:$0xf]
  %v112 = vld [vmem:[%s1 + $0x154] sm:$0xf]
  %v113 = vld [vmem:[%s1 + $0x158] sm:$0xf]
  %v114 = vld [vmem:[%s1 + $0x15c] sm:$0xf]
  %v115 = vld [vmem:[%s1 + $0x160] sm:$0xf]
  %v116 = vld [vmem:[%s1 + $0x164] sm:$0xf]
  %v117 = vld [vmem:[%s1 + $0x168] sm:$0xf]
  %v118 = vld [vmem:[%s1 + $0x16c] sm:$0xf]
  %v119 = vld [vmem:[%s1 + $0x170] sm:$0xf]
  %v120 = vld [vmem:[%s1 + $0x174] sm:$0xf]
  %v121 = vld [vmem:[%s1 + $0x178] sm:$0xf]
  %v122 = vld [vmem:[%s1 + $0x17c] sm:$0xf]
  %v123 = vld [vmem:[%s1 + $0x180] sm:$0xf]
  %v124 = vld [vmem:[%s1 + $0x184] sm:$0xf]
  %v125 = vld [vmem:[%s1 + $0x188] sm:$0xf]
  %v126 = vld [vmem:[%s1 + $0x18c] sm:$0xf]
  %v127 = vld [vmem:[%s1 + $0x190] sm:$0xf]
  %v128 = vld [vmem:[%s1 + $0x194] sm:$0xf]
  %v129 = vld [vmem:[%s1 + $0x198] sm:$0xf]
  %v130 = vld [vmem:[%s1 + $0x19c] sm:$0xf]
  %v131 = vld [vmem:[%s1 + $0x1a0] sm:$0xf]
  %v132 = vld [vmem:[%s1 + $0x1a4] sm:$0xf]
  %v133 = vld [vmem:[%s1 + $0x1a8] sm:$0xf]
  %v134 = vld [vmem:[%s1 + $0x1ac] sm:$0xf]
  %v135 = vld [vmem:[%s1 + $0x1b0] sm:$0xf]
  %v136 = vld [vmem:[%s1 + $0x1b4] sm:$0xf]
  %v137 = vld [vmem:[%s1 + $0x1b8] sm:$0xf]
  %v138 = vld [vmem:[%s1 + $0x1bc] sm:$0xf]
  %v139 = vld [vmem:[%s1 + $0x1c0] sm:$0xf]
  %v140 = vld [vmem:[%s1 + $0x1c4] sm:$0xf]
  %v141 = vld [vmem:[%s1 + $0x1c8] sm:$0xf]
  %v142 = vld [vmem:[%s1 + $0x1cc] sm:$0xf]
  %v143 = vld [vmem:[%s1 + $0x1d0] sm:$0xf]
  %v144 = vld [vmem:[%s1 + $0x1d4] sm:$0xf]
  %v145 = vld [vmem:[%s1 + $0x1d8] sm:$0xf]
  %v146 = vld [vmem:[%s1 + $0x1dc] sm:$0xf]
  %v147 = vld [vmem:[%s1 + $0x1e0] sm:$0xf]
  %v148 = vld [vmem:[%s1 + $0x1e4] sm:$0xf]
  %v149 = vld [vmem:[%s1 + $0x1e8] sm:$0xf]
  %v150 = vld [vmem:[%s1 + $0x1ec] sm:$0xf]
  %v151 = vld [vmem:[%s1 + $0x1f0] sm:$0xf]
  %v152 = vld [vmem:[%s1 + $0x1f4] sm:$0xf]
  %v153 = vld [vmem:[%s1 + $0x1f8] sm:$0xf]
  %v154 = vld [vmem:[%s1 + $0x1fc] sm:$0xf]
  %v155 = vld [vmem:[%s1 + $0x200] sm:$0xf]
  %v156 = vld [vmem:[%s1 + $0x204] sm:$0xf]
  %v157 = vld [vmem:[%s1 + $0x208] sm:$0xf]
  %v158 = vld [vmem:[%s1 + $0x20c] sm:$0xf]
  %v159 = vld [vmem:[%s1 + $0x210] sm:$0xf]
  %v160 = vld [vmem:[%s1 + $0x214] sm:$0xf]
  %v161 = vld [vmem:[%s1 + $0x218] sm:$0xf]
  %v162 = vld [vmem:[%s1 + $0x21c] sm:$0xf]
  %v163 = vld [vmem:[%s1 + $0x220] sm:$0xf]
  %v164 = vld [vmem:[%s1 + $0x224] sm:$0xf]
  %v165 = vld [vmem:[%s1 + $0x228] sm:$0xf]
  %v166 = vld [vmem:[%s1 + $0x22c] sm:$0xf]
  %v167 = vld [vmem:[%s1 + $0x230] sm:$0xf]
  %v168 = vld [vmem:[%s1 + $0x234] sm:$0xf]
  %v169 = vld [vmem:[%s1 + $0x238] sm:$0xf]
  %v170 = vld [vmem:[%s1 + $0x23c] sm:$0xf]
  %v171 = vld [vmem:[%s1 + $0x240] sm:$0xf]
  %v172 = vld [vmem:[%s1 + $0x244] sm:$0xf]
  %v173 = vld [vmem:[%s1 + $0x248] sm:$0xf]
  %v174 = vld [vmem:[%s1 + $0x24c] sm:$0xf]
  %v175 = vld [vmem:[%s1 + $0x250] sm:$0xf]
  %v176 = vld [vmem:[%s1 + $0x254] sm:$0xf]
  %v177 = vld [vmem:[%s1 + $0x258] sm:$0xf]
  %v178 = vld [vmem:[%s1 + $0x25c] sm:$0xf]
  %v179 = vld [vmem:[%s1 + $0x260] sm:$0xf]
  %v180 = vld [vmem:[%s1 + $0x264] sm:$0xf]
  %v181 = vld [vmem:[%s1 + $0x268] sm:$0xf]
  %v182 = vld [vmem:[%s1 + $0x26c] sm:$0xf]
  %v183 = vld [vmem:[%s1 + $0x270] sm:$0xf]
  %v184 = vld [vmem:[%s1 + $0x274] sm:$0xf]
  %v185 = vld [vmem:[%s1 + $0x278] sm:$0xf]
  %v186 = vld [vmem:[%s1 + $0x27c] sm:$0xf]
  %v187 = vld [vmem:[%s1 + $0x280] sm:$0xf]
  %v188 = vld [vmem:[%s1 + $0x284] sm:$0xf]
  %v189 = vld [vmem:[%s1 + $0x288] sm:$0xf]
  %v190 = vld [vmem:[%s1 + $0x28c] sm:$0xf]
  %v191 = vld [vmem:[%s1 + $0x290] sm:$0xf]
  %v192 = vld [vmem:[%s1 + $0x294] sm:$0xf]
  %v193 = vld [vmem:[%s1 + $0x298] sm:$0xf]
  %v194 = vld [vmem:[%s1 + $0x29c] sm:$0xf]
  %v195 = vld [vmem:[%s1 + $0x2a0] sm:$0xf]
  %v196 = vld [vmem:[%s1 + $0x2a4] sm:$0xf]
  %v197 = vld [vmem:[%s1 + $0x2a8] sm:$0xf]
  %v198 = vld [vmem:[%s1 + $0x2ac] sm:$0xf]
  %v199 = vld [vmem:[%s1 + $0x2b0] sm:$0xf]
  %v200 = vld [vmem:[%s1 + $0x2b4] sm:$0xf]
  %v201 = vld [vmem:[%s1 + $0x2b8] sm:$0xf]
  %v202 = vld [vmem:[%s1 + $0x2bc] sm:$0xf]
  %v203 = vld [vmem:[%s1 + $0x2c0] sm:$0xf]
  %v204 = vld [vmem:[%s1 + $0x2c4] sm:$0xf]
  %v205 = vld [vmem:[%s1 + $0x2c8] sm:$0xf]
  %v206 = vld [vmem:[%s1 + $0x2cc] sm:$0xf]
  %v207 = vld [vmem:[%s1 + $0x2d0] sm:$0xf]
  %v208 = vld [vmem:[%s1 + $0x2d4] sm:$0xf]
  %v209 = vld [vmem:[%s1 + $0x2d8] sm:$0xf]
  %v210 = vld [vmem:[%s1 + $0x2dc] sm:$0xf]
  %v211 = vld [vmem:[%s1 + $0x2e0] sm:$0xf]
  %v212 = vld [vmem:[%s1 + $0x2e4] sm:$0xf]
  %v213 = vld [vmem:[%s1 + $0x2e8] sm:$0xf]
  %v214 = vld [vmem:[%s1 + $0x2ec] sm:$0xf]
  %v215 = vld [vmem:[%s1 + $0x2f0] sm:$0xf]
  %v216 = vld [vmem:[%s1 + $0x2f4] sm:$0xf]
  %v217 = vld [vmem:[%s1 + $0x2f8] sm:$0xf]
  %v218 = vld [vmem:[%s1 + $0x2fc] sm:$0xf]
  %v219 = vld [vmem:[%s2] sm:$0x1]
  %v221 = vlaneseq
  %v222 = vshrl.u32 %v221, 7
  %v223 = vsub.s32 0, %v222
  %v224 = vrot.slane %v219, %v223
  %v238 = vunpack.c.l.b16 %v15
  %v239 = vunpack.c.h.b16 %v15
  %v240 = vunpack.c.l.b16 %v16
  %v241 = vunpack.c.h.b16 %v16
  %v242 = vunpack.c.l.b16 %v17
  %v243 = vunpack.c.h.b16 %v17
  %v244 = vunpack.c.l.b16 %v18
  %v245 = vunpack.c.h.b16 %v18
  %v246 = vunpack.c.l.b16 %v19
  %v247 = vunpack.c.h.b16 %v19
  %v248 = vunpack.c.l.b16 %v20
  %v249 = vunpack.c.h.b16 %v20
  %v250 = vunpack.c.l.b16 %v21
  %v251 = vunpack.c.h.b16 %v21
  %v252 = vunpack.c.l.b16 %v22
  %v253 = vunpack.c.h.b16 %v22
  %v254 = vunpack.c.l.b16 %v23
  %v255 = vunpack.c.h.b16 %v23
  %v256 = vunpack.c.l.b16 %v24
  %v257 = vunpack.c.h.b16 %v24
  %v258 = vunpack.c.l.b16 %v25
  %v259 = vunpack.c.h.b16 %v25
  %v260 = vunpack.c.l.b16 %v26
  %v261 = vunpack.c.h.b16 %v26
  %v262 = vpack.c.b16 %v250, %v238
  %v263 = vpack.c.b16 %v251, %v239
  %v264 = vpack.c.b16 %v252, %v240
  %v265 = vpack.c.b16 %v253, %v241
  %v266 = vpack.c.b16 %v254, %v242
  %v267 = vpack.c.b16 %v255, %v243
  %v268 = vpack.c.b16 %v256, %v244
  %v269 = vpack.c.b16 %v257, %v245
  %v270 = vpack.c.b16 %v258, %v246
  %v271 = vpack.c.b16 %v259, %v247
  %v272 = vpack.c.b16 %v260, %v248
  %v273 = vpack.c.b16 %v261, %v249
  %v478 = vunpack.c.l.b16 %v27
  %v479 = vunpack.c.l.b16 %v28
  %v480 = vunpack.c.l.b16 %v29
  %v481 = vunpack.c.l.b16 %v30
  %v482 = vunpack.c.l.b16 %v31
  %v483 = vunpack.c.l.b16 %v32
  %v484 = vunpack.c.l.b16 %v33
  %v485 = vunpack.c.l.b16 %v34
  %v486 = vunpack.c.l.b16 %v35
  %v487 = vunpack.c.l.b16 %v36
  %v488 = vunpack.c.l.b16 %v37
  %v489 = vunpack.c.l.b16 %v38
  %v490 = vunpack.c.l.b16 %v39
  %v491 = vunpack.c.l.b16 %v40
  %v492 = vunpack.c.l.b16 %v41
  %v493 = vunpack.c.l.b16 %v42
  %v494 = vunpack.c.l.b16 %v43
  %v495 = vunpack.c.l.b16 %v44
  %v496 = vunpack.c.l.b16 %v45
  %v497 = vunpack.c.l.b16 %v46
  %v498 = vunpack.c.l.b16 %v47
  %v499 = vunpack.c.l.b16 %v48
  %v500 = vunpack.c.l.b16 %v49
  %v501 = vunpack.c.l.b16 %v50
  %v502 = vunpack.c.l.b16 %v51
  %v503 = vunpack.c.l.b16 %v52
  %v504 = vunpack.c.l.b16 %v53
  %v505 = vunpack.c.l.b16 %v54
  %v506 = vunpack.c.l.b16 %v55
  %v507 = vunpack.c.l.b16 %v56
  %v508 = vunpack.c.l.b16 %v57
  %v509 = vunpack.c.l.b16 %v58
  %v510 = vunpack.c.l.b16 %v59
  %v511 = vunpack.c.l.b16 %v60
  %v512 = vunpack.c.l.b16 %v61
  %v513 = vunpack.c.l.b16 %v62
  %v514 = vunpack.c.l.b16 %v63
  %v515 = vunpack.c.l.b16 %v64
  %v516 = vunpack.c.l.b16 %v65
  %v517 = vunpack.c.l.b16 %v66
  %v518 = vunpack.c.l.b16 %v67
  %v519 = vunpack.c.l.b16 %v68
  %v520 = vunpack.c.l.b16 %v69
  %v521 = vunpack.c.l.b16 %v70
  %v522 = vunpack.c.l.b16 %v71
  %v523 = vunpack.c.l.b16 %v72
  %v524 = vunpack.c.l.b16 %v73
  %v525 = vunpack.c.l.b16 %v74
  %v526 = vunpack.c.l.b16 %v75
  %v527 = vunpack.c.l.b16 %v76
  %v528 = vunpack.c.l.b16 %v77
  %v529 = vunpack.c.l.b16 %v78
  %v530 = vunpack.c.l.b16 %v79
  %v531 = vunpack.c.l.b16 %v80
  %v532 = vunpack.c.l.b16 %v81
  %v533 = vunpack.c.l.b16 %v82
  %v534 = vunpack.c.l.b16 %v83
  %v535 = vunpack.c.l.b16 %v84
  %v536 = vunpack.c.l.b16 %v85
  %v537 = vunpack.c.l.b16 %v86
  %v538 = vunpack.c.l.b16 %v87
  %v539 = vunpack.c.l.b16 %v88
  %v540 = vunpack.c.l.b16 %v89
  %v541 = vunpack.c.l.b16 %v90
  %v542 = vunpack.c.l.b16 %v91
  %v543 = vunpack.c.l.b16 %v92
  %v544 = vunpack.c.l.b16 %v93
  %v545 = vunpack.c.l.b16 %v94
  %v546 = vunpack.c.l.b16 %v95
  %v547 = vunpack.c.l.b16 %v96
  %v548 = vunpack.c.l.b16 %v97
  %v549 = vunpack.c.l.b16 %v98
  %v550 = vunpack.c.l.b16 %v99
  %v551 = vunpack.c.l.b16 %v100
  %v552 = vunpack.c.l.b16 %v101
  %v553 = vunpack.c.l.b16 %v102
  %v554 = vunpack.c.l.b16 %v103
  %v555 = vunpack.c.l.b16 %v104
  %v556 = vunpack.c.l.b16 %v105
  %v557 = vunpack.c.l.b16 %v106
  %v558 = vunpack.c.l.b16 %v107
  %v559 = vunpack.c.l.b16 %v108
  %v560 = vunpack.c.l.b16 %v109
  %v561 = vunpack.c.l.b16 %v110
  %v562 = vunpack.c.l.b16 %v111
  %v563 = vunpack.c.l.b16 %v112
  %v564 = vunpack.c.l.b16 %v113
  %v565 = vunpack.c.l.b16 %v114
  %v566 = vunpack.c.l.b16 %v115
  %v567 = vunpack.c.l.b16 %v116
  %v568 = vunpack.c.l.b16 %v117
  %v569 = vunpack.c.l.b16 %v118
  %v570 = vunpack.c.l.b16 %v119
  %v571 = vunpack.c.l.b16 %v120
  %v572 = vunpack.c.l.b16 %v121
  %v573 = vunpack.c.l.b16 %v122
  %v574 = vunpack.c.l.b16 %v123
  %v575 = vunpack.c.l.b16 %v124
  %v576 = vunpack.c.l.b16 %v125
  %v577 = vunpack.c.l.b16 %v126
  %v578 = vunpack.c.l.b16 %v127
  %v579 = vunpack.c.l.b16 %v128
  %v580 = vunpack.c.l.b16 %v129
  %v581 = vunpack.c.l.b16 %v130
  %v582 = vunpack.c.l.b16 %v131
  %v583 = vunpack.c.l.b16 %v132
  %v584 = vunpack.c.l.b16 %v133
  %v585 = vunpack.c.l.b16 %v134
  %v586 = vunpack.c.l.b16 %v135
  %v587 = vunpack.c.l.b16 %v136
  %v588 = vunpack.c.l.b16 %v137
  %v589 = vunpack.c.l.b16 %v138
  %v590 = vunpack.c.l.b16 %v139
  %v591 = vunpack.c.l.b16 %v140
  %v592 = vunpack.c.l.b16 %v141
  %v593 = vunpack.c.l.b16 %v142
  %v594 = vunpack.c.l.b16 %v143
  %v595 = vunpack.c.l.b16 %v144
  %v596 = vunpack.c.l.b16 %v145
  %v597 = vunpack.c.l.b16 %v146
  %v598 = vunpack.c.l.b16 %v147
  %v599 = vunpack.c.l.b16 %v148
  %v600 = vunpack.c.l.b16 %v149
  %v601 = vunpack.c.l.b16 %v150
  %v602 = vunpack.c.l.b16 %v151
  %v603 = vunpack.c.l.b16 %v152
  %v604 = vunpack.c.l.b16 %v153
  %v605 = vunpack.c.l.b16 %v154
  %v606 = vunpack.c.l.b16 %v155
  %v607 = vunpack.c.l.b16 %v156
  %v608 = vunpack.c.l.b16 %v157
  %v609 = vunpack.c.l.b16 %v158
  %v610 = vunpack.c.l.b16 %v159
  %v611 = vunpack.c.l.b16 %v160
  %v612 = vunpack.c.l.b16 %v161
  %v613 = vunpack.c.l.b16 %v162
  %v614 = vunpack.c.l.b16 %v163
  %v615 = vunpack.c.l.b16 %v164
  %v616 = vunpack.c.l.b16 %v165
  %v617 = vunpack.c.l.b16 %v166
  %v618 = vunpack.c.l.b16 %v167
  %v619 = vunpack.c.l.b16 %v168
  %v620 = vunpack.c.l.b16 %v169
  %v621 = vunpack.c.l.b16 %v170
  %v622 = vunpack.c.l.b16 %v171
  %v623 = vunpack.c.l.b16 %v172
  %v624 = vunpack.c.l.b16 %v173
  %v625 = vunpack.c.l.b16 %v174
  %v626 = vunpack.c.l.b16 %v175
  %v627 = vunpack.c.l.b16 %v176
  %v628 = vunpack.c.l.b16 %v177
  %v629 = vunpack.c.l.b16 %v178
  %v630 = vunpack.c.l.b16 %v179
  %v631 = vunpack.c.l.b16 %v180
  %v632 = vunpack.c.l.b16 %v181
  %v633 = vunpack.c.l.b16 %v182
  %v634 = vunpack.c.l.b16 %v183
  %v635 = vunpack.c.l.b16 %v184
  %v636 = vunpack.c.l.b16 %v185
  %v637 = vunpack.c.l.b16 %v186
  %v638 = vunpack.c.l.b16 %v187
  %v639 = vunpack.c.l.b16 %v188
  %v640 = vunpack.c.l.b16 %v189
  %v641 = vunpack.c.l.b16 %v190
  %v642 = vunpack.c.l.b16 %v191
  %v643 = vunpack.c.l.b16 %v192
  %v644 = vunpack.c.l.b16 %v193
  %v645 = vunpack.c.l.b16 %v194
  %v646 = vunpack.c.l.b16 %v195
  %v647 = vunpack.c.l.b16 %v196
  %v648 = vunpack.c.l.b16 %v197
  %v649 = vunpack.c.l.b16 %v198
  %v650 = vunpack.c.l.b16 %v199
  %v651 = vunpack.c.l.b16 %v200
  %v652 = vunpack.c.l.b16 %v201
  %v653 = vunpack.c.l.b16 %v202
  %v654 = vunpack.c.l.b16 %v203
  %v655 = vunpack.c.l.b16 %v204
  %v656 = vunpack.c.l.b16 %v205
  %v657 = vunpack.c.l.b16 %v206
  %v658 = vunpack.c.l.b16 %v207
  %v659 = vunpack.c.l.b16 %v208
  %v660 = vunpack.c.l.b16 %v209
  %v661 = vunpack.c.l.b16 %v210
  %v662 = vunpack.c.l.b16 %v211
  %v663 = vunpack.c.l.b16 %v212
  %v664 = vunpack.c.l.b16 %v213
  %v665 = vunpack.c.l.b16 %v214
  %v666 = vunpack.c.l.b16 %v215
  %v667 = vunpack.c.l.b16 %v216
  %v668 = vunpack.c.l.b16 %v217
  %v669 = vunpack.c.l.b16 %v218
  %v670 = vpack.c.b16 %v479, %v478
  %v671 = vpack.c.b16 %v481, %v480
  %v672 = vpack.c.b16 %v483, %v482
  %v673 = vpack.c.b16 %v485, %v484
  %v674 = vpack.c.b16 %v487, %v486
  %v675 = vpack.c.b16 %v489, %v488
  %v676 = vpack.c.b16 %v491, %v490
  %v677 = vpack.c.b16 %v493, %v492
  %v678 = vpack.c.b16 %v495, %v494
  %v679 = vpack.c.b16 %v497, %v496
  %v680 = vpack.c.b16 %v499, %v498
  %v681 = vpack.c.b16 %v501, %v500
  %v682 = vpack.c.b16 %v503, %v502
  %v683 = vpack.c.b16 %v505, %v504
  %v684 = vpack.c.b16 %v507, %v506
  %v685 = vpack.c.b16 %v509, %v508
  %v686 = vpack.c.b16 %v511, %v510
  %v687 = vpack.c.b16 %v513, %v512
  %v688 = vpack.c.b16 %v515, %v514
  %v689 = vpack.c.b16 %v517, %v516
  %v690 = vpack.c.b16 %v519, %v518
  %v691 = vpack.c.b16 %v521, %v520
  %v692 = vpack.c.b16 %v523, %v522
  %v693 = vpack.c.b16 %v525, %v524
  %v694 = vpack.c.b16 %v527, %v526
  %v695 = vpack.c.b16 %v529, %v528
  %v696 = vpack.c.b16 %v531, %v530
  %v697 = vpack.c.b16 %v533, %v532
  %v698 = vpack.c.b16 %v535, %v534
  %v699 = vpack.c.b16 %v537, %v536
  %v700 = vpack.c.b16 %v539, %v538
  %v701 = vpack.c.b16 %v541, %v540
  %v702 = vpack.c.b16 %v543, %v542
  %v703 = vpack.c.b16 %v545, %v544
  %v704 = vpack.c.b16 %v547, %v546
  %v705 = vpack.c.b16 %v549, %v548
  %v706 = vpack.c.b16 %v551, %v550
  %v707 = vpack.c.b16 %v553, %v552
  %v708 = vpack.c.b16 %v555, %v554
  %v709 = vpack.c.b16 %v557, %v556
  %v710 = vpack.c.b16 %v559, %v558
  %v711 = vpack.c.b16 %v561, %v560
  %v712 = vpack.c.b16 %v563, %v562
  %v713 = vpack.c.b16 %v565, %v564
  %v714 = vpack.c.b16 %v567, %v566
  %v715 = vpack.c.b16 %v569, %v568
  %v716 = vpack.c.b16 %v571, %v570
  %v717 = vpack.c.b16 %v573, %v572
  %v718 = vpack.c.b16 %v575, %v574
  %v719 = vpack.c.b16 %v577, %v576
  %v720 = vpack.c.b16 %v579, %v578
  %v721 = vpack.c.b16 %v581, %v580
  %v722 = vpack.c.b16 %v583, %v582
  %v723 = vpack.c.b16 %v585, %v584
  %v724 = vpack.c.b16 %v587, %v586
  %v725 = vpack.c.b16 %v589, %v588
  %v726 = vpack.c.b16 %v591, %v590
  %v727 = vpack.c.b16 %v593, %v592
  %v728 = vpack.c.b16 %v595, %v594
  %v729 = vpack.c.b16 %v597, %v596
  %v730 = vpack.c.b16 %v599, %v598
  %v731 = vpack.c.b16 %v601, %v600
  %v732 = vpack.c.b16 %v603, %v602
  %v733 = vpack.c.b16 %v605, %v604
  %v734 = vpack.c.b16 %v607, %v606
  %v735 = vpack.c.b16 %v609, %v608
  %v736 = vpack.c.b16 %v611, %v610
  %v737 = vpack.c.b16 %v613, %v612
  %v738 = vpack.c.b16 %v615, %v614
  %v739 = vpack.c.b16 %v617, %v616
  %v740 = vpack.c.b16 %v619, %v618
  %v741 = vpack.c.b16 %v621, %v620
  %v742 = vpack.c.b16 %v623, %v622
  %v743 = vpack.c.b16 %v625, %v624
  %v744 = vpack.c.b16 %v627, %v626
  %v745 = vpack.c.b16 %v629, %v628
  %v746 = vpack.c.b16 %v631, %v630
  %v747 = vpack.c.b16 %v633, %v632
  %v748 = vpack.c.b16 %v635, %v634
  %v749 = vpack.c.b16 %v637, %v636
  %v750 = vpack.c.b16 %v639, %v638
  %v751 = vpack.c.b16 %v641, %v640
  %v752 = vpack.c.b16 %v643, %v642
  %v753 = vpack.c.b16 %v645, %v644
  %v754 = vpack.c.b16 %v647, %v646
  %v755 = vpack.c.b16 %v649, %v648
  %v756 = vpack.c.b16 %v651, %v650
  %v757 = vpack.c.b16 %v653, %v652
  %v758 = vpack.c.b16 %v655, %v654
  %v759 = vpack.c.b16 %v657, %v656
  %v760 = vpack.c.b16 %v659, %v658
  %v761 = vpack.c.b16 %v661, %v660
  %v762 = vpack.c.b16 %v663, %v662
  %v763 = vpack.c.b16 %v665, %v664
  %v764 = vpack.c.b16 %v667, %v666
  %v765 = vpack.c.b16 %v669, %v668
  %862 = vmatprep.subr.bf16.mxu0 0
  %863 = vmatpush1.bf16.msra.mxu0 %v670
  %864 = vmatprep.subr.bf16.mxu0 0
  %865 = vmatpush1.bf16.msra.mxu0 %v671
  %866 = vmatprep.subr.bf16.mxu0 0
  %867 = vmatpush1.bf16.msra.mxu0 %v672
  %868 = vmatprep.subr.bf16.mxu0 0
  %869 = vmatpush1.bf16.msra.mxu0 %v673
  %870 = vmatprep.subr.bf16.mxu0 0
  %871 = vmatpush1.bf16.msra.mxu0 %v674
  %872 = vmatprep.subr.bf16.mxu0 0
  %873 = vmatpush1.bf16.msra.mxu0 %v675
  %874 = vmatprep.subr.bf16.mxu0 0
  %875 = vmatpush1.bf16.msra.mxu0 %v676
  %876 = vmatprep.subr.bf16.mxu0 0
  %877 = vmatpush1.bf16.msra.mxu0 %v677
  %878 = vmatprep.subr.bf16.mxu0 0
  %879 = vmatpush1.bf16.msra.mxu0 %v678
  %880 = vmatprep.subr.bf16.mxu0 0
  %881 = vmatpush1.bf16.msra.mxu0 %v679
  %882 = vmatprep.subr.bf16.mxu0 0
  %883 = vmatpush1.bf16.msra.mxu0 %v680
  %884 = vmatprep.subr.bf16.mxu0 0
  %885 = vmatpush1.bf16.msra.mxu0 %v681
  %886 = vmatprep.subr.bf16.mxu0 0
  %887 = vmatpush1.bf16.msra.mxu0 %v682
  %888 = vmatprep.subr.bf16.mxu0 0
  %889 = vmatpush1.bf16.msra.mxu0 %v683
  %890 = vmatprep.subr.bf16.mxu0 0
  %891 = vmatpush1.bf16.msra.mxu0 %v684
  %892 = vmatprep.subr.bf16.mxu0 0
  %893 = vmatpush1.bf16.msra.mxu0 %v685
  %894 = vmatprep.mubr.bf16.mxu0 %v263
  %895 = vmatmul.mubr.bf16.gmra.mrb[0].mxu0 %v262
  %v896 = vpop.f32.mrb[0].mxu0
  %v897 = vadd.f32 %v224, %v896
  %v898 = vpop.f32.mrb[0].mxu0
  %v899 = vpop.f32.mrb[0].mxu0
  %v900 = vadd.f32 %v224, %v899
  %v901 = vpop.f32.mrb[0].mxu0
  %902 = vdwg.mxu0
  %903 = vmatprep.subr.bf16.mxu0 0
  %904 = vmatpush1.bf16.msra.mxu0 %v686
  %905 = vmatprep.subr.bf16.mxu0 0
  %906 = vmatpush1.bf16.msra.mxu0 %v687
  %907 = vmatprep.subr.bf16.mxu0 0
  %908 = vmatpush1.bf16.msra.mxu0 %v688
  %909 = vmatprep.subr.bf16.mxu0 0
  %910 = vmatpush1.bf16.msra.mxu0 %v689
  %911 = vmatprep.subr.bf16.mxu0 0
  %912 = vmatpush1.bf16.msra.mxu0 %v690
  %913 = vmatprep.subr.bf16.mxu0 0
  %914 = vmatpush1.bf16.msra.mxu0 %v691
  %915 = vmatprep.subr.bf16.mxu0 0
  %916 = vmatpush1.bf16.msra.mxu0 %v692
  %917 = vmatprep.subr.bf16.mxu0 0
  %918 = vmatpush1.bf16.msra.mxu0 %v693
  %919 = vmatprep.subr.bf16.mxu0 0
  %920 = vmatpush1.bf16.msra.mxu0 %v694
  %921 = vmatprep.subr.bf16.mxu0 0
  %922 = vmatpush1.bf16.msra.mxu0 %v695
  %923 = vmatprep.subr.bf16.mxu0 0
  %924 = vmatpush1.bf16.msra.mxu0 %v696
  %925 = vmatprep.subr.bf16.mxu0 0
  %926 = vmatpush1.bf16.msra.mxu0 %v697
  %927 = vmatprep.subr.bf16.mxu0 0
  %928 = vmatpush1.bf16.msra.mxu0 %v698
  %929 = vmatprep.subr.bf16.mxu0 0
  %930 = vmatpush1.bf16.msra.mxu0 %v699
  %931 = vmatprep.subr.bf16.mxu0 0
  %932 = vmatpush1.bf16.msra.mxu0 %v700
  %933 = vmatprep.subr.bf16.mxu0 0
  %934 = vmatpush1.bf16.msra.mxu0 %v701
  %935 = vmatprep.mubr.bf16.mxu0 %v265
  %936 = vmatmul.mubr.bf16.gmra.mrb[0].mxu0 %v264
  %v937 = vpop.f32.mrb[0].mxu0
  %v938 = vadd.f32 %v897, %v937
  %v939 = vpop.f32.mrb[0].mxu0
  %v940 = vpop.f32.mrb[0].mxu0
  %v941 = vadd.f32 %v900, %v940
  %v942 = vpop.f32.mrb[0].mxu0
  %943 = vdwg.mxu0
  %944 = vmatprep.subr.bf16.mxu0 0
  %945 = vmatpush1.bf16.msra.mxu0 %v702
  %946 = vmatprep.subr.bf16.mxu0 0
  %947 = vmatpush1.bf16.msra.mxu0 %v703
  %948 = vmatprep.subr.bf16.mxu0 0
  %949 = vmatpush1.bf16.msra.mxu0 %v704
  %950 = vmatprep.subr.bf16.mxu0 0
  %951 = vmatpush1.bf16.msra.mxu0 %v705
  %952 = vmatprep.subr.bf16.mxu0 0
  %953 = vmatpush1.bf16.msra.mxu0 %v706
  %954 = vmatprep.subr.bf16.mxu0 0
  %955 = vmatpush1.bf16.msra.mxu0 %v707
  %956 = vmatprep.subr.bf16.mxu0 0
  %957 = vmatpush1.bf16.msra.mxu0 %v708
  %958 = vmatprep.subr.bf16.mxu0 0
  %959 = vmatpush1.bf16.msra.mxu0 %v709
  %960 = vmatprep.subr.bf16.mxu0 0
  %961 = vmatpush1.bf16.msra.mxu0 %v710
  %962 = vmatprep.subr.bf16.mxu0 0
  %963 = vmatpush1.bf16.msra.mxu0 %v711
  %964 = vmatprep.subr.bf16.mxu0 0
  %965 = vmatpush1.bf16.msra.mxu0 %v712
  %966 = vmatprep.subr.bf16.mxu0 0
  %967 = vmatpush1.bf16.msra.mxu0 %v713
  %968 = vmatprep.subr.bf16.mxu0 0
  %969 = vmatpush1.bf16.msra.mxu0 %v714
  %970 = vmatprep.subr.bf16.mxu0 0
  %971 = vmatpush1.bf16.msra.mxu0 %v715
  %972 = vmatprep.subr.bf16.mxu0 0
  %973 = vmatpush1.bf16.msra.mxu0 %v716
  %974 = vmatprep.subr.bf16.mxu0 0
  %975 = vmatpush1.bf16.msra.mxu0 %v717
  %976 = vmatprep.mubr.bf16.mxu0 %v267
  %977 = vmatmul.mubr.bf16.gmra.mrb[0].mxu0 %v266
  %v978 = vpop.f32.mrb[0].mxu0
  %v979 = vadd.f32 %v938, %v978
  %v980 = vpop.f32.mrb[0].mxu0
  %v981 = vpop.f32.mrb[0].mxu0
  %v982 = vadd.f32 %v941, %v981
  %v983 = vpop.f32.mrb[0].mxu0
  %984 = vdwg.mxu0
  %985 = vmatprep.subr.bf16.mxu0 0
  %986 = vmatpush1.bf16.msra.mxu0 %v718
  %987 = vmatprep.subr.bf16.mxu0 0
  %988 = vmatpush1.bf16.msra.mxu0 %v719
  %989 = vmatprep.subr.bf16.mxu0 0
  %990 = vmatpush1.bf16.msra.mxu0 %v720
  %991 = vmatprep.subr.bf16.mxu0 0
  %992 = vmatpush1.bf16.msra.mxu0 %v721
  %993 = vmatprep.subr.bf16.mxu0 0
  %994 = vmatpush1.bf16.msra.mxu0 %v722
  %995 = vmatprep.subr.bf16.mxu0 0
  %996 = vmatpush1.bf16.msra.mxu0 %v723
  %997 = vmatprep.subr.bf16.mxu0 0
  %998 = vmatpush1.bf16.msra.mxu0 %v724
  %999 = vmatprep.subr.bf16.mxu0 0
  %1000 = vmatpush1.bf16.msra.mxu0 %v725
  %1001 = vmatprep.subr.bf16.mxu0 0
  %1002 = vmatpush1.bf16.msra.mxu0 %v726
  %1003 = vmatprep.subr.bf16.mxu0 0
  %1004 = vmatpush1.bf16.msra.mxu0 %v727
  %1005 = vmatprep.subr.bf16.mxu0 0
  %1006 = vmatpush1.bf16.msra.mxu0 %v728
  %1007 = vmatprep.subr.bf16.mxu0 0
  %1008 = vmatpush1.bf16.msra.mxu0 %v729
  %1009 = vmatprep.subr.bf16.mxu0 0
  %1010 = vmatpush1.bf16.msra.mxu0 %v730
  %1011 = vmatprep.subr.bf16.mxu0 0
  %1012 = vmatpush1.bf16.msra.mxu0 %v731
  %1013 = vmatprep.subr.bf16.mxu0 0
  %1014 = vmatpush1.bf16.msra.mxu0 %v732
  %1015 = vmatprep.subr.bf16.mxu0 0
  %1016 = vmatpush1.bf16.msra.mxu0 %v733
  %1017 = vmatprep.mubr.bf16.mxu0 %v269
  %1018 = vmatmul.mubr.bf16.gmra.mrb[0].mxu0 %v268
  %v1019 = vpop.f32.mrb[0].mxu0
  %v1020 = vadd.f32 %v979, %v1019
  %v1021 = vpop.f32.mrb[0].mxu0
  %v1022 = vpop.f32.mrb[0].mxu0
  %v1023 = vadd.f32 %v982, %v1022
  %v1024 = vpop.f32.mrb[0].mxu0
  %1025 = vdwg.mxu0
  %1026 = vmatprep.subr.bf16.mxu0 0
  %1027 = vmatpush1.bf16.msra.mxu0 %v734
  %1028 = vmatprep.subr.bf16.mxu0 0
  %1029 = vmatpush1.bf16.msra.mxu0 %v735
  %1030 = vmatprep.subr.bf16.mxu0 0
  %1031 = vmatpush1.bf16.msra.mxu0 %v736
  %1032 = vmatprep.subr.bf16.mxu0 0
  %1033 = vmatpush1.bf16.msra.mxu0 %v737
  %1034 = vmatprep.subr.bf16.mxu0 0
  %1035 = vmatpush1.bf16.msra.mxu0 %v738
  %1036 = vmatprep.subr.bf16.mxu0 0
  %1037 = vmatpush1.bf16.msra.mxu0 %v739
  %1038 = vmatprep.subr.bf16.mxu0 0
  %1039 = vmatpush1.bf16.msra.mxu0 %v740
  %1040 = vmatprep.subr.bf16.mxu0 0
  %1041 = vmatpush1.bf16.msra.mxu0 %v741
  %1042 = vmatprep.subr.bf16.mxu0 0
  %1043 = vmatpush1.bf16.msra.mxu0 %v742
  %1044 = vmatprep.subr.bf16.mxu0 0
  %1045 = vmatpush1.bf16.msra.mxu0 %v743
  %1046 = vmatprep.subr.bf16.mxu0 0
  %1047 = vmatpush1.bf16.msra.mxu0 %v744
  %1048 = vmatprep.subr.bf16.mxu0 0
  %1049 = vmatpush1.bf16.msra.mxu0 %v745
  %1050 = vmatprep.subr.bf16.mxu0 0
  %1051 = vmatpush1.bf16.msra.mxu0 %v746
  %1052 = vmatprep.subr.bf16.mxu0 0
  %1053 = vmatpush1.bf16.msra.mxu0 %v747
  %1054 = vmatprep.subr.bf16.mxu0 0
  %1055 = vmatpush1.bf16.msra.mxu0 %v748
  %1056 = vmatprep.subr.bf16.mxu0 0
  %1057 = vmatpush1.bf16.msra.mxu0 %v749
  %1058 = vmatprep.mubr.bf16.mxu0 %v271
  %1059 = vmatmul.mubr.bf16.gmra.mrb[0].mxu0 %v270
  %v1060 = vpop.f32.mrb[0].mxu0
  %v1061 = vadd.f32 %v1020, %v1060
  %v1062 = vpop.f32.mrb[0].mxu0
  %v1063 = vpop.f32.mrb[0].mxu0
  %v1064 = vadd.f32 %v1023, %v1063
  %v1065 = vpop.f32.mrb[0].mxu0
  %1066 = vdwg.mxu0
  %1067 = vmatprep.subr.bf16.mxu0 0
  %1068 = vmatpush1.bf16.msra.mxu0 %v750
  %1069 = vmatprep.subr.bf16.mxu0 0
  %1070 = vmatpush1.bf16.msra.mxu0 %v751
  %1071 = vmatprep.subr.bf16.mxu0 0
  %1072 = vmatpush1.bf16.msra.mxu0 %v752
  %1073 = vmatprep.subr.bf16.mxu0 0
  %1074 = vmatpush1.bf16.msra.mxu0 %v753
  %1075 = vmatprep.subr.bf16.mxu0 0
  %1076 = vmatpush1.bf16.msra.mxu0 %v754
  %1077 = vmatprep.subr.bf16.mxu0 0
  %1078 = vmatpush1.bf16.msra.mxu0 %v755
  %1079 = vmatprep.subr.bf16.mxu0 0
  %1080 = vmatpush1.bf16.msra.mxu0 %v756
  %1081 = vmatprep.subr.bf16.mxu0 0
  %1082 = vmatpush1.bf16.msra.mxu0 %v757
  %1083 = vmatprep.subr.bf16.mxu0 0
  %1084 = vmatpush1.bf16.msra.mxu0 %v758
  %1085 = vmatprep.subr.bf16.mxu0 0
  %1086 = vmatpush1.bf16.msra.mxu0 %v759
  %1087 = vmatprep.subr.bf16.mxu0 0
  %1088 = vmatpush1.bf16.msra.mxu0 %v760
  %1089 = vmatprep.subr.bf16.mxu0 0
  %1090 = vmatpush1.bf16.msra.mxu0 %v761
  %1091 = vmatprep.subr.bf16.mxu0 0
  %1092 = vmatpush1.bf16.msra.mxu0 %v762
  %1093 = vmatprep.subr.bf16.mxu0 0
  %1094 = vmatpush1.bf16.msra.mxu0 %v763
  %1095 = vmatprep.subr.bf16.mxu0 0
  %1096 = vmatpush1.bf16.msra.mxu0 %v764
  %1097 = vmatprep.subr.bf16.mxu0 0
  %1098 = vmatpush1.bf16.msra.mxu0 %v765
  %1099 = vmatprep.mubr.bf16.mxu0 %v273
  %1100 = vmatmul.mubr.bf16.gmra.mrb[0].mxu0 %v272
  %v1101 = vpop.f32.mrb[0].mxu0
  %v1102 = vadd.f32 %v1061, %v1101
  %v1103 = vpop.f32.mrb[0].mxu0
  %v1104 = vpop.f32.mrb[0].mxu0
  %v1105 = vadd.f32 %v1064, %v1104
  %v1106 = vpop.f32.mrb[0].mxu0
  %1107 = vdwg.mxu0
  %v1108 = vpack.c.bf16 %v1105, %v1102
  %v1110 = vunpack.c.l.b16 %v1108
  %v1111 = vunpack.c.h.b16 %v1108
  %v1112 = vpack.c.b16 %v1110, %v1110
  %v1113 = vpack.c.b16 %v1111, %v1111
  %vm1116 = vcmask 257024
  %1117 = vst.msk [vmem:[%s3] sm:$0xf] %vm1116, %v1112
  %1118 = vst.msk [vmem:[%s3 + $0x4] sm:$0xf] %vm1116, %v1113
  // Predicated region
  $region14: #{conv3d_autoencoder_forward.12} parent=0 // pred_check
    _
  $region15: #{conv3d_autoencoder_forward.12} parent=0 // pred_check_branch
    %1120 = sbr.rel (0) target = $region17
  $region16: #{conv3d_autoencoder_forward.12} parent=0 // pred_region
    _
  $region17: #{conv3d_autoencoder_forward.12} parent=0 // pred_fallthru
    _
  // Predicated region
  $region18: #{conv3d_autoencoder_forward.12} parent=0 // pred_check
    _
  $region19: #{conv3d_autoencoder_forward.12} parent=0 // pred_check_branch
    %1122 = sbr.rel (0) target = $region21
  $region20: #{conv3d_autoencoder_forward.12} parent=0 // pred_region
    _
  $region21: #{conv3d_autoencoder_forward.12} parent=0 // pred_fallthru
    _

// kernel: conv3d_autoencoder_forward.13
$region0: #{conv3d_autoencoder_forward.13}
  #allocation0 [shape = 'u32[]', space=smem, size = 0x4, offset = 0x4, fixed_abs, tag = 'smem constant byte address 0x4 - core index']
  #allocation1 [shape = 'u32[144,128]{1,0:T(1,128)}', space=vmem, size = 0x12000, scoped, tag = 'internal scratch']
  %s0 = inlined_call_operand.vmem [shape: bf16[16,32], index: 0, kind: input, shape index: {}]
  %s1 = inlined_call_operand.vmem [shape: bf16[32,1536], index: 1, kind: input, shape index: {}]
  %s2 = inlined_call_operand.vmem [shape: f32[1,1536], index: 2, kind: input, shape index: {}]
  %s3 = inlined_call_operand.vmem [shape: bf16[16,1536], index: 3, kind: output, shape index: {}]
  %s4 = sld [smem:[#allocation0]]
  $region22: #{conv3d_autoencoder_forward.13} parent=0
    _
  %s6 = ssub.s32 1, %s4
  %s7 = scalar_select 0, %s6, %s4
  // Predicated region
  $region2: #{conv3d_autoencoder_forward.13} parent=0 // pred_check
    _
  $region3: #{conv3d_autoencoder_forward.13} parent=0 // pred_check_branch
    %9 = sbr.rel (0) target = $region5
  $region4: #{conv3d_autoencoder_forward.13} parent=0 // pred_region
    _
  $region5: #{conv3d_autoencoder_forward.13} parent=0 // pred_fallthru
    _
  // Predicated region
  $region6: #{conv3d_autoencoder_forward.13} parent=0 // pred_check
    _
  $region7: #{conv3d_autoencoder_forward.13} parent=0 // pred_check_branch
    %11 = sbr.rel (0) target = $region9
  $region8: #{conv3d_autoencoder_forward.13} parent=0 // pred_region
    _
  $region9: #{conv3d_autoencoder_forward.13} parent=0 // pred_fallthru
    _
  // Predicated region
  $region10: #{conv3d_autoencoder_forward.13} parent=0 // pred_check
    _
  $region11: #{conv3d_autoencoder_forward.13} parent=0 // pred_check_branch
    %13 = sbr.rel (0) target = $region13
  $region12: #{conv3d_autoencoder_forward.13} parent=0 // pred_region
    _
  $region13: #{conv3d_autoencoder_forward.13} parent=0 // pred_fallthru
    _
  %v15 = vld [vmem:[%s0] sm:$0xf]
  %v16 = vld [vmem:[%s0 + $0x4] sm:$0xf]
  %v17 = vld [vmem:[%s1] sm:$0xff]
  %v18 = vld [vmem:[%s1 + $0x8] sm:$0xff]
  %v19 = vld [vmem:[%s1 + $0x10] sm:$0xff]
  %v20 = vld [vmem:[%s1 + $0x18] sm:$0xff]
  %v21 = vld [vmem:[%s1 + $0x20] sm:$0xff]
  %v22 = vld [vmem:[%s1 + $0x28] sm:$0xff]
  %v23 = vld [vmem:[%s1 + $0x30] sm:$0xff]
  %v24 = vld [vmem:[%s1 + $0x38] sm:$0xff]
  %v25 = vld [vmem:[%s1 + $0x40] sm:$0xff]
  %v26 = vld [vmem:[%s1 + $0x48] sm:$0xff]
  %v27 = vld [vmem:[%s1 + $0x50] sm:$0xff]
  %v28 = vld [vmem:[%s1 + $0x58] sm:$0xff]
  %v29 = vld [vmem:[%s1 + $0x60] sm:$0xff]
  %v30 = vld [vmem:[%s1 + $0x68] sm:$0xff]
  %v31 = vld [vmem:[%s1 + $0x70] sm:$0xff]
  %v32 = vld [vmem:[%s1 + $0x78] sm:$0xff]
  %v33 = vld [vmem:[%s1 + $0x80] sm:$0xff]
  %v34 = vld [vmem:[%s1 + $0x88] sm:$0xff]
  %v35 = vld [vmem:[%s1 + $0x90] sm:$0xff]
  %v36 = vld [vmem:[%s1 + $0x98] sm:$0xff]
  %v37 = vld [vmem:[%s1 + $0xa0] sm:$0xff]
  %v38 = vld [vmem:[%s1 + $0xa8] sm:$0xff]
  %v39 = vld [vmem:[%s1 + $0xb0] sm:$0xff]
  %v40 = vld [vmem:[%s1 + $0xb8] sm:$0xff]
  %v41 = vld [vmem:[%s2] sm:$0xff]
  %v42 = vld [vmem:[%s2 + $0x8] sm:$0xf]
  %v45 = vlaneseq
  %v46 = vshrl.u32 %v45, 7
  %v47 = vsub.s32 0, %v46
  %v48 = vrot.slane %v41, %v47
  %v49 = vlaneseq
  %v50 = vshrl.u32 %v49, 7
  %v51 = vsub.s32 1, %v50
  %v52 = vrot.slane %v41, %v51
  %v53 = vlaneseq
  %v54 = vshrl.u32 %v53, 7
  %v55 = vsub.s32 2, %v54
  %v56 = vrot.slane %v41, %v55
  %v57 = vlaneseq
  %v58 = vshrl.u32 %v57, 7
  %v59 = vsub.s32 3, %v58
  %v60 = vrot.slane %v41, %v59
  %v61 = vlaneseq
  %v62 = vshrl.u32 %v61, 7
  %v63 = vsub.s32 4, %v62
  %v64 = vrot.slane %v41, %v63
  %v65 = vlaneseq
  %v66 = vshrl.u32 %v65, 7
  %v67 = vsub.s32 5, %v66
  %v68 = vrot.slane %v41, %v67
  %v69 = vlaneseq
  %v70 = vshrl.u32 %v69, 7
  %v71 = vsub.s32 6, %v70
  %v72 = vrot.slane %v41, %v71
  %v73 = vlaneseq
  %v74 = vshrl.u32 %v73, 7
  %v75 = vsub.s32 7, %v74
  %v76 = vrot.slane %v41, %v75
  %v77 = vlaneseq
  %v78 = vshrl.u32 %v77, 7
  %v79 = vsub.s32 0, %v78
  %v80 = vrot.slane %v42, %v79
  %v81 = vlaneseq
  %v82 = vshrl.u32 %v81, 7
  %v83 = vsub.s32 1, %v82
  %v84 = vrot.slane %v42, %v83
  %v85 = vlaneseq
  %v86 = vshrl.u32 %v85, 7
  %v87 = vsub.s32 2, %v86
  %v88 = vrot.slane %v42, %v87
  %v89 = vlaneseq
  %v90 = vshrl.u32 %v89, 7
  %v91 = vsub.s32 3, %v90
  %v92 = vrot.slane %v42, %v91
  %v107 = vunpack.c.l.b16 %v15
  %v108 = vunpack.c.l.b16 %v16
  %v109 = vpack.c.b16 %v108, %v107
  %v134 = vunpack.c.l.b16 %v17
  %v135 = vunpack.c.h.b16 %v17
  %v136 = vunpack.c.l.b16 %v18
  %v137 = vunpack.c.h.b16 %v18
  %v138 = vunpack.c.l.b16 %v19
  %v139 = vunpack.c.h.b16 %v19
  %v140 = vunpack.c.l.b16 %v20
  %v141 = vunpack.c.h.b16 %v20
  %v142 = vunpack.c.l.b16 %v21
  %v143 = vunpack.c.h.b16 %v21
  %v144 = vunpack.c.l.b16 %v22
  %v145 = vunpack.c.h.b16 %v22
  %v146 = vunpack.c.l.b16 %v23
  %v147 = vunpack.c.h.b16 %v23
  %v148 = vunpack.c.l.b16 %v24
  %v149 = vunpack.c.h.b16 %v24
  %v150 = vunpack.c.l.b16 %v25
  %v151 = vunpack.c.h.b16 %v25
  %v152 = vunpack.c.l.b16 %v26
  %v153 = vunpack.c.h.b16 %v26
  %v154 = vunpack.c.l.b16 %v27
  %v155 = vunpack.c.h.b16 %v27
  %v156 = vunpack.c.l.b16 %v28
  %v157 = vunpack.c.h.b16 %v28
  %v158 = vunpack.c.l.b16 %v29
  %v159 = vunpack.c.h.b16 %v29
  %v160 = vunpack.c.l.b16 %v30
  %v161 = vunpack.c.h.b16 %v30
  %v162 = vunpack.c.l.b16 %v31
  %v163 = vunpack.c.h.b16 %v31
  %v164 = vunpack.c.l.b16 %v32
  %v165 = vunpack.c.h.b16 %v32
  %v166 = vunpack.c.l.b16 %v33
  %v167 = vunpack.c.h.b16 %v33
  %v168 = vunpack.c.l.b16 %v34
  %v169 = vunpack.c.h.b16 %v34
  %v170 = vunpack.c.l.b16 %v35
  %v171 = vunpack.c.h.b16 %v35
  %v172 = vunpack.c.l.b16 %v36
  %v173 = vunpack.c.h.b16 %v36
  %v174 = vunpack.c.l.b16 %v37
  %v175 = vunpack.c.h.b16 %v37
  %v176 = vunpack.c.l.b16 %v38
  %v177 = vunpack.c.h.b16 %v38
  %v178 = vunpack.c.l.b16 %v39
  %v179 = vunpack.c.h.b16 %v39
  %v180 = vunpack.c.l.b16 %v40
  %v181 = vunpack.c.h.b16 %v40
  %v182 = vpack.c.b16 %v146, %v134
  %v183 = vpack.c.b16 %v147, %v135
  %v184 = vpack.c.b16 %v148, %v136
  %v185 = vpack.c.b16 %v149, %v137
  %v186 = vpack.c.b16 %v150, %v138
  %v187 = vpack.c.b16 %v151, %v139
  %v188 = vpack.c.b16 %v152, %v140
  %v189 = vpack.c.b16 %v153, %v141
  %v190 = vpack.c.b16 %v154, %v142
  %v191 = vpack.c.b16 %v155, %v143
  %v192 = vpack.c.b16 %v156, %v144
  %v193 = vpack.c.b16 %v157, %v145
  %v194 = vpack.c.b16 %v170, %v158
  %v195 = vpack.c.b16 %v171, %v159
  %v196 = vpack.c.b16 %v172, %v160
  %v197 = vpack.c.b16 %v173, %v161
  %v198 = vpack.c.b16 %v174, %v162
  %v199 = vpack.c.b16 %v175, %v163
  %v200 = vpack.c.b16 %v176, %v164
  %v201 = vpack.c.b16 %v177, %v165
  %v202 = vpack.c.b16 %v178, %v166
  %v203 = vpack.c.b16 %v179, %v167
  %v204 = vpack.c.b16 %v180, %v168
  %v205 = vpack.c.b16 %v181, %v169
  %vm230 = vcmask 261120
  %v232 = vsel %vm230, %v109, 0
  %234 = vmatprep.subr.bf16.mxu0 %v183
  %235 = vmatpush1.bf16.msra.mxu0 %v182
  %236 = vmatprep.subr.bf16.mxu0 %v195
  %237 = vmatpush1.bf16.msra.mxu0 %v194
  %238 = vmatprep.subr.bf16.mxu0 0
  %239 = vmatpush1.bf16.msra.mxu0 0
  %240 = vmatprep.subr.bf16.mxu0 0
  %241 = vmatpush1.bf16.msra.mxu0 0
  %242 = vmatprep.subr.bf16.mxu0 0
  %243 = vmatpush1.bf16.msra.mxu0 0
  %244 = vmatprep.subr.bf16.mxu0 0
  %245 = vmatpush1.bf16.msra.mxu0 0
  %246 = vmatprep.subr.bf16.mxu0 0
  %247 = vmatpush1.bf16.msra.mxu0 0
  %248 = vmatprep.subr.bf16.mxu0 0
  %249 = vmatpush1.bf16.msra.mxu0 0
  %250 = vmatprep.subr.bf16.mxu0 0
  %251 = vmatpush1.bf16.msra.mxu0 0
  %252 = vmatprep.subr.bf16.mxu0 0
  %253 = vmatpush1.bf16.msra.mxu0 0
  %254 = vmatprep.subr.bf16.mxu0 0
  %255 = vmatpush1.bf16.msra.mxu0 0
  %256 = vmatprep.subr.bf16.mxu0 0
  %257 = vmatpush1.bf16.msra.mxu0 0
  %258 = vmatprep.subr.bf16.mxu0 0
  %259 = vmatpush1.bf16.msra.mxu0 0
  %260 = vmatprep.subr.bf16.mxu0 0
  %261 = vmatpush1.bf16.msra.mxu0 0
  %262 = vmatprep.subr.bf16.mxu0 0
  %263 = vmatpush1.bf16.msra.mxu0 0
  %264 = vmatprep.subr.bf16.mxu0 0
  %265 = vmatpush1.bf16.msra.mxu0 0
  %266 = vmatprep.mubr.bf16.mxu0 0
  %267 = vmatmul.mubr.bf16.gmra.mrb[0].mxu0 %v232
  %v268 = vpop.f32.mrb[0].mxu0
  %v269 = vadd.f32 %v48, %v268
  %v270 = vpop.f32.mrb[0].mxu0
  %v271 = vadd.f32 %v52, %v270
  %v272 = vpop.f32.mrb[0].mxu0
  %v273 = vadd.f32 %v48, %v272
  %v274 = vpop.f32.mrb[0].mxu0
  %v275 = vadd.f32 %v52, %v274
  %276 = vdwg.mxu0
  %277 = vmatprep.subr.bf16.mxu0 %v185
  %278 = vmatpush1.bf16.msra.mxu0 %v184
  %279 = vmatprep.subr.bf16.mxu0 %v197
  %280 = vmatpush1.bf16.msra.mxu0 %v196
  %281 = vmatprep.subr.bf16.mxu0 0
  %282 = vmatpush1.bf16.msra.mxu0 0
  %283 = vmatprep.subr.bf16.mxu0 0
  %284 = vmatpush1.bf16.msra.mxu0 0
  %285 = vmatprep.subr.bf16.mxu0 0
  %286 = vmatpush1.bf16.msra.mxu0 0
  %287 = vmatprep.subr.bf16.mxu0 0
  %288 = vmatpush1.bf16.msra.mxu0 0
  %289 = vmatprep.subr.bf16.mxu0 0
  %290 = vmatpush1.bf16.msra.mxu0 0
  %291 = vmatprep.subr.bf16.mxu0 0
  %292 = vmatpush1.bf16.msra.mxu0 0
  %293 = vmatprep.subr.bf16.mxu0 0
  %294 = vmatpush1.bf16.msra.mxu0 0
  %295 = vmatprep.subr.bf16.mxu0 0
  %296 = vmatpush1.bf16.msra.mxu0 0
  %297 = vmatprep.subr.bf16.mxu0 0
  %298 = vmatpush1.bf16.msra.mxu0 0
  %299 = vmatprep.subr.bf16.mxu0 0
  %300 = vmatpush1.bf16.msra.mxu0 0
  %301 = vmatprep.subr.bf16.mxu0 0
  %302 = vmatpush1.bf16.msra.mxu0 0
  %303 = vmatprep.subr.bf16.mxu0 0
  %304 = vmatpush1.bf16.msra.mxu0 0
  %305 = vmatprep.subr.bf16.mxu0 0
  %306 = vmatpush1.bf16.msra.mxu0 0
  %307 = vmatprep.subr.bf16.mxu0 0
  %308 = vmatpush1.bf16.msra.mxu0 0
  %309 = vmatprep.mubr.bf16.mxu0 0
  %310 = vmatmul.mubr.bf16.gmra.mrb[0].mxu0 %v232
  %v311 = vpop.f32.mrb[0].mxu0
  %v312 = vadd.f32 %v56, %v311
  %v313 = vpop.f32.mrb[0].mxu0
  %v314 = vadd.f32 %v60, %v313
  %v315 = vpop.f32.mrb[0].mxu0
  %v316 = vadd.f32 %v56, %v315
  %v317 = vpop.f32.mrb[0].mxu0
  %v318 = vadd.f32 %v60, %v317
  %319 = vdwg.mxu0
  %320 = vmatprep.subr.bf16.mxu0 %v187
  %321 = vmatpush1.bf16.msra.mxu0 %v186
  %322 = vmatprep.subr.bf16.mxu0 %v199
  %323 = vmatpush1.bf16.msra.mxu0 %v198
  %324 = vmatprep.subr.bf16.mxu0 0
  %325 = vmatpush1.bf16.msra.mxu0 0
  %326 = vmatprep.subr.bf16.mxu0 0
  %327 = vmatpush1.bf16.msra.mxu0 0
  %328 = vmatprep.subr.bf16.mxu0 0
  %329 = vmatpush1.bf16.msra.mxu0 0
  %330 = vmatprep.subr.bf16.mxu0 0
  %331 = vmatpush1.bf16.msra.mxu0 0
  %332 = vmatprep.subr.bf16.mxu0 0
  %333 = vmatpush1.bf16.msra.mxu0 0
  %334 = vmatprep.subr.bf16.mxu0 0
  %335 = vmatpush1.bf16.msra.mxu0 0
  %336 = vmatprep.subr.bf16.mxu0 0
  %337 = vmatpush1.bf16.msra.mxu0 0
  %338 = vmatprep.subr.bf16.mxu0 0
  %339 = vmatpush1.bf16.msra.mxu0 0
  %340 = vmatprep.subr.bf16.mxu0 0
  %341 = vmatpush1.bf16.msra.mxu0 0
  %342 = vmatprep.subr.bf16.mxu0 0
  %343 = vmatpush1.bf16.msra.mxu0 0
  %344 = vmatprep.subr.bf16.mxu0 0
  %345 = vmatpush1.bf16.msra.mxu0 0
  %346 = vmatprep.subr.bf16.mxu0 0
  %347 = vmatpush1.bf16.msra.mxu0 0
  %348 = vmatprep.subr.bf16.mxu0 0
  %349 = vmatpush1.bf16.msra.mxu0 0
  %350 = vmatprep.subr.bf16.mxu0 0
  %351 = vmatpush1.bf16.msra.mxu0 0
  %352 = vmatprep.mubr.bf16.mxu0 0
  %353 = vmatmul.mubr.bf16.gmra.mrb[0].mxu0 %v232
  %v354 = vpop.f32.mrb[0].mxu0
  %v355 = vadd.f32 %v64, %v354
  %v356 = vpop.f32.mrb[0].mxu0
  %v357 = vadd.f32 %v68, %v356
  %v358 = vpop.f32.mrb[0].mxu0
  %v359 = vadd.f32 %v64, %v358
  %v360 = vpop.f32.mrb[0].mxu0
  %v361 = vadd.f32 %v68, %v360
  %362 = vdwg.mxu0
  %363 = vmatprep.subr.bf16.mxu0 %v189
  %364 = vmatpush1.bf16.msra.mxu0 %v188
  %365 = vmatprep.subr.bf16.mxu0 %v201
  %366 = vmatpush1.bf16.msra.mxu0 %v200
  %367 = vmatprep.subr.bf16.mxu0 0
  %368 = vmatpush1.bf16.msra.mxu0 0
  %369 = vmatprep.subr.bf16.mxu0 0
  %370 = vmatpush1.bf16.msra.mxu0 0
  %371 = vmatprep.subr.bf16.mxu0 0
  %372 = vmatpush1.bf16.msra.mxu0 0
  %373 = vmatprep.subr.bf16.mxu0 0
  %374 = vmatpush1.bf16.msra.mxu0 0
  %375 = vmatprep.subr.bf16.mxu0 0
  %376 = vmatpush1.bf16.msra.mxu0 0
  %377 = vmatprep.subr.bf16.mxu0 0
  %378 = vmatpush1.bf16.msra.mxu0 0
  %379 = vmatprep.subr.bf16.mxu0 0
  %380 = vmatpush1.bf16.msra.mxu0 0
  %381 = vmatprep.subr.bf16.mxu0 0
  %382 = vmatpush1.bf16.msra.mxu0 0
  %383 = vmatprep.subr.bf16.mxu0 0
  %384 = vmatpush1.bf16.msra.mxu0 0
  %385 = vmatprep.subr.bf16.mxu0 0
  %386 = vmatpush1.bf16.msra.mxu0 0
  %387 = vmatprep.subr.bf16.mxu0 0
  %388 = vmatpush1.bf16.msra.mxu0 0
  %389 = vmatprep.subr.bf16.mxu0 0
  %390 = vmatpush1.bf16.msra.mxu0 0
  %391 = vmatprep.subr.bf16.mxu0 0
  %392 = vmatpush1.bf16.msra.mxu0 0
  %393 = vmatprep.subr.bf16.mxu0 0
  %394 = vmatpush1.bf16.msra.mxu0 0
  %395 = vmatprep.mubr.bf16.mxu0 0
  %396 = vmatmul.mubr.bf16.gmra.mrb[0].mxu0 %v232
  %v397 = vpop.f32.mrb[0].mxu0
  %v398 = vadd.f32 %v72, %v397
  %v399 = vpop.f32.mrb[0].mxu0
  %v400 = vadd.f32 %v76, %v399
  %v401 = vpop.f32.mrb[0].mxu0
  %v402 = vadd.f32 %v72, %v401
  %v403 = vpop.f32.mrb[0].mxu0
  %v404 = vadd.f32 %v76, %v403
  %405 = vdwg.mxu0
  %406 = vmatprep.subr.bf16.mxu0 %v191
  %407 = vmatpush1.bf16.msra.mxu0 %v190
  %408 = vmatprep.subr.bf16.mxu0 %v203
  %409 = vmatpush1.bf16.msra.mxu0 %v202
  %410 = vmatprep.subr.bf16.mxu0 0
  %411 = vmatpush1.bf16.msra.mxu0 0
  %412 = vmatprep.subr.bf16.mxu0 0
  %413 = vmatpush1.bf16.msra.mxu0 0
  %414 = vmatprep.subr.bf16.mxu0 0
  %415 = vmatpush1.bf16.msra.mxu0 0
  %416 = vmatprep.subr.bf16.mxu0 0
  %417 = vmatpush1.bf16.msra.mxu0 0
  %418 = vmatprep.subr.bf16.mxu0 0
  %419 = vmatpush1.bf16.msra.mxu0 0
  %420 = vmatprep.subr.bf16.mxu0 0
  %421 = vmatpush1.bf16.msra.mxu0 0
  %422 = vmatprep.subr.bf16.mxu0 0
  %423 = vmatpush1.bf16.msra.mxu0 0
  %424 = vmatprep.subr.bf16.mxu0 0
  %425 = vmatpush1.bf16.msra.mxu0 0
  %426 = vmatprep.subr.bf16.mxu0 0
  %427 = vmatpush1.bf16.msra.mxu0 0
  %428 = vmatprep.subr.bf16.mxu0 0
  %429 = vmatpush1.bf16.msra.mxu0 0
  %430 = vmatprep.subr.bf16.mxu0 0
  %431 = vmatpush1.bf16.msra.mxu0 0
  %432 = vmatprep.subr.bf16.mxu0 0
  %433 = vmatpush1.bf16.msra.mxu0 0
  %434 = vmatprep.subr.bf16.mxu0 0
  %435 = vmatpush1.bf16.msra.mxu0 0
  %436 = vmatprep.subr.bf16.mxu0 0
  %437 = vmatpush1.bf16.msra.mxu0 0
  %438 = vmatprep.mubr.bf16.mxu0 0
  %439 = vmatmul.mubr.bf16.gmra.mrb[0].mxu0 %v232
  %v440 = vpop.f32.mrb[0].mxu0
  %v441 = vadd.f32 %v80, %v440
  %v442 = vpop.f32.mrb[0].mxu0
  %v443 = vadd.f32 %v84, %v442
  %v444 = vpop.f32.mrb[0].mxu0
  %v445 = vadd.f32 %v80, %v444
  %v446 = vpop.f32.mrb[0].mxu0
  %v447 = vadd.f32 %v84, %v446
  %448 = vdwg.mxu0
  %449 = vmatprep.subr.bf16.mxu0 %v193
  %450 = vmatpush1.bf16.msra.mxu0 %v192
  %451 = vmatprep.subr.bf16.mxu0 %v205
  %452 = vmatpush1.bf16.msra.mxu0 %v204
  %453 = vmatprep.subr.bf16.mxu0 0
  %454 = vmatpush1.bf16.msra.mxu0 0
  %455 = vmatprep.subr.bf16.mxu0 0
  %456 = vmatpush1.bf16.msra.mxu0 0
  %457 = vmatprep.subr.bf16.mxu0 0
  %458 = vmatpush1.bf16.msra.mxu0 0
  %459 = vmatprep.subr.bf16.mxu0 0
  %460 = vmatpush1.bf16.msra.mxu0 0
  %461 = vmatprep.subr.bf16.mxu0 0
  %462 = vmatpush1.bf16.msra.mxu0 0
  %463 = vmatprep.subr.bf16.mxu0 0
  %464 = vmatpush1.bf16.msra.mxu0 0
  %465 = vmatprep.subr.bf16.mxu0 0
  %466 = vmatpush1.bf16.msra.mxu0 0
  %467 = vmatprep.subr.bf16.mxu0 0
  %468 = vmatpush1.bf16.msra.mxu0 0
  %469 = vmatprep.subr.bf16.mxu0 0
  %470 = vmatpush1.bf16.msra.mxu0 0
  %471 = vmatprep.subr.bf16.mxu0 0
  %472 = vmatpush1.bf16.msra.mxu0 0
  %473 = vmatprep.subr.bf16.mxu0 0
  %474 = vmatpush1.bf16.msra.mxu0 0
  %475 = vmatprep.subr.bf16.mxu0 0
  %476 = vmatpush1.bf16.msra.mxu0 0
  %477 = vmatprep.subr.bf16.mxu0 0
  %478 = vmatpush1.bf16.msra.mxu0 0
  %479 = vmatprep.subr.bf16.mxu0 0
  %480 = vmatpush1.bf16.msra.mxu0 0
  %481 = vmatprep.mubr.bf16.mxu0 0
  %482 = vmatmul.mubr.bf16.gmra.mrb[0].mxu0 %v232
  %v483 = vpop.f32.mrb[0].mxu0
  %v484 = vadd.f32 %v88, %v483
  %v485 = vpop.f32.mrb[0].mxu0
  %v486 = vadd.f32 %v92, %v485
  %v487 = vpop.f32.mrb[0].mxu0
  %v488 = vadd.f32 %v88, %v487
  %v489 = vpop.f32.mrb[0].mxu0
  %v490 = vadd.f32 %v92, %v489
  %491 = vdwg.mxu0
  %v492 = vpack.c.bf16 %v273, %v269
  %v493 = vpack.c.bf16 %v275, %v271
  %v494 = vpack.c.bf16 %v316, %v312
  %v495 = vpack.c.bf16 %v318, %v314
  %v496 = vpack.c.bf16 %v359, %v355
  %v497 = vpack.c.bf16 %v361, %v357
  %v498 = vpack.c.bf16 %v402, %v398
  %v499 = vpack.c.bf16 %v404, %v400
  %v500 = vpack.c.bf16 %v445, %v441
  %v501 = vpack.c.bf16 %v447, %v443
  %v502 = vpack.c.bf16 %v488, %v484
  %v503 = vpack.c.bf16 %v490, %v486
  %v516 = vunpack.c.l.b16 %v492
  %v517 = vunpack.c.l.b16 %v493
  %v518 = vunpack.c.l.b16 %v494
  %v519 = vunpack.c.l.b16 %v495
  %v520 = vunpack.c.l.b16 %v496
  %v521 = vunpack.c.l.b16 %v497
  %v522 = vunpack.c.l.b16 %v498
  %v523 = vunpack.c.l.b16 %v499
  %v524 = vunpack.c.l.b16 %v500
  %v525 = vunpack.c.l.b16 %v501
  %v526 = vunpack.c.l.b16 %v502
  %v527 = vunpack.c.l.b16 %v503
  %v528 = vunpack.c.h.b16 %v492
  %v529 = vunpack.c.h.b16 %v493
  %v530 = vunpack.c.h.b16 %v494
  %v531 = vunpack.c.h.b16 %v495
  %v532 = vunpack.c.h.b16 %v496
  %v533 = vunpack.c.h.b16 %v497
  %v534 = vunpack.c.h.b16 %v498
  %v535 = vunpack.c.h.b16 %v499
  %v536 = vunpack.c.h.b16 %v500
  %v537 = vunpack.c.h.b16 %v501
  %v538 = vunpack.c.h.b16 %v502
  %v539 = vunpack.c.h.b16 %v503
  %v540 = vpack.c.b16 %v517, %v516
  %v541 = vpack.c.b16 %v519, %v518
  %v542 = vpack.c.b16 %v521, %v520
  %v543 = vpack.c.b16 %v523, %v522
  %v544 = vpack.c.b16 %v525, %v524
  %v545 = vpack.c.b16 %v527, %v526
  %v546 = vpack.c.b16 %v529, %v528
  %v547 = vpack.c.b16 %v531, %v530
  %v548 = vpack.c.b16 %v533, %v532
  %v549 = vpack.c.b16 %v535, %v534
  %v550 = vpack.c.b16 %v537, %v536
  %v551 = vpack.c.b16 %v539, %v538
  %564 = vst [vmem:[%s3] sm:$0xff] %v540
  %565 = vst [vmem:[%s3 + $0x8] sm:$0xff] %v541
  %566 = vst [vmem:[%s3 + $0x10] sm:$0xff] %v542
  %567 = vst [vmem:[%s3 + $0x18] sm:$0xff] %v543
  %568 = vst [vmem:[%s3 + $0x20] sm:$0xff] %v544
  %569 = vst [vmem:[%s3 + $0x28] sm:$0xff] %v545
  %570 = vst [vmem:[%s3 + $0x30] sm:$0xff] %v546
  %571 = vst [vmem:[%s3 + $0x38] sm:$0xff] %v547
  %572 = vst [vmem:[%s3 + $0x40] sm:$0xff] %v548
  %573 = vst [vmem:[%s3 + $0x48] sm:$0xff] %v549
  %574 = vst [vmem:[%s3 + $0x50] sm:$0xff] %v550
  %575 = vst [vmem:[%s3 + $0x58] sm:$0xff] %v551
  // Predicated region
  $region14: #{conv3d_autoencoder_forward.13} parent=0 // pred_check
    _
  $region15: #{conv3d_autoencoder_forward.13} parent=0 // pred_check_branch
    %577 = sbr.rel (0) target = $region17
  $region16: #{conv3d_autoencoder_forward.13} parent=0 // pred_region
    _
  $region17: #{conv3d_autoencoder_forward.13} parent=0 // pred_fallthru
    _
  // Predicated region
  $region18: #{conv3d_autoencoder_forward.13} parent=0 // pred_check
    _
  $region19: #{conv3d_autoencoder_forward.13} parent=0 // pred_check_branch
    %579 = sbr.rel (0) target = $region21
  $region20: #{conv3d_autoencoder_forward.13} parent=0 // pred_region
    _
  $region21: #{conv3d_autoencoder_forward.13} parent=0 // pred_fallthru
    _

// kernel: conv3d_autoencoder_forward.14
$region0: #{conv3d_autoencoder_forward.14}
  #allocation0 [shape = 'u32[]', space=smem, size = 0x4, offset = 0x4, fixed_abs, tag = 'smem constant byte address 0x4 - core index']
  #allocation1 [shape = 'u32[144,128]{1,0:T(1,128)}', space=vmem, size = 0x12000, scoped, tag = 'internal scratch']
  %s0 = inlined_call_operand.vmem [shape: bf16[96,32], index: 0, kind: input, shape index: {}]
  %s1 = inlined_call_operand.vmem [shape: bf16[32,4096], index: 1, kind: input, shape index: {}]
  %s2 = inlined_call_operand.vmem [shape: f32[1,4096], index: 2, kind: input, shape index: {}]
  %s3 = inlined_call_operand.vmem [shape: f32[96,4096], index: 3, kind: output, shape index: {}]
  %s4 = sld [smem:[#allocation0]]
  $region22: #{conv3d_autoencoder_forward.14} parent=0
    _
  %s6 = ssub.s32 1, %s4
  %s7 = scalar_select 0, %s6, %s4
  // Predicated region
  $region2: #{conv3d_autoencoder_forward.14} parent=0 // pred_check
    _
  $region3: #{conv3d_autoencoder_forward.14} parent=0 // pred_check_branch
    %9 = sbr.rel (0) target = $region5
  $region4: #{conv3d_autoencoder_forward.14} parent=0 // pred_region
    _
  $region5: #{conv3d_autoencoder_forward.14} parent=0 // pred_fallthru
    _
  // Predicated region
  $region6: #{conv3d_autoencoder_forward.14} parent=0 // pred_check
    _
  $region7: #{conv3d_autoencoder_forward.14} parent=0 // pred_check_branch
    %11 = sbr.rel (0) target = $region9
  $region8: #{conv3d_autoencoder_forward.14} parent=0 // pred_region
    _
  $region9: #{conv3d_autoencoder_forward.14} parent=0 // pred_fallthru
    _
  // Predicated region
  $region10: #{conv3d_autoencoder_forward.14} parent=0 // pred_check
    _
  $region11: #{conv3d_autoencoder_forward.14} parent=0 // pred_check_branch
    %13 = sbr.rel (0) target = $region13
  $region12: #{conv3d_autoencoder_forward.14} parent=0 // pred_region
    _
  $region13: #{conv3d_autoencoder_forward.14} parent=0 // pred_fallthru
    _
  %v15 = vld [vmem:[%s0] sm:$0xf]
  %v16 = vld [vmem:[%s0 + $0x4] sm:$0xf]
  %v17 = vld [vmem:[%s0 + $0x8] sm:$0xf]
  %v18 = vld [vmem:[%s0 + $0xc] sm:$0xf]
  %v19 = vld [vmem:[%s0 + $0x10] sm:$0xf]
  %v20 = vld [vmem:[%s0 + $0x14] sm:$0xf]
  %v21 = vld [vmem:[%s0 + $0x18] sm:$0xf]
  %v22 = vld [vmem:[%s0 + $0x1c] sm:$0xf]
  %v23 = vld [vmem:[%s0 + $0x20] sm:$0xf]
  %v24 = vld [vmem:[%s0 + $0x24] sm:$0xf]
  %v25 = vld [vmem:[%s0 + $0x28] sm:$0xf]
  %v26 = vld [vmem:[%s0 + $0x2c] sm:$0xf]
  %v27 = vld [vmem:[%s1] sm:$0xff]
  %v28 = vld [vmem:[%s1 + $0x8] sm:$0xff]
  %v29 = vld [vmem:[%s1 + $0x10] sm:$0xff]
  %v30 = vld [vmem:[%s1 + $0x18] sm:$0xff]
  %v31 = vld [vmem:[%s1 + $0x20] sm:$0xff]
  %v32 = vld [vmem:[%s1 + $0x28] sm:$0xff]
  %v33 = vld [vmem:[%s1 + $0x30] sm:$0xff]
  %v34 = vld [vmem:[%s1 + $0x38] sm:$0xff]
  %v35 = vld [vmem:[%s1 + $0x40] sm:$0xff]
  %v36 = vld [vmem:[%s1 + $0x48] sm:$0xff]
  %v37 = vld [vmem:[%s1 + $0x50] sm:$0xff]
  %v38 = vld [vmem:[%s1 + $0x58] sm:$0xff]
  %v39 = vld [vmem:[%s1 + $0x60] sm:$0xff]
  %v40 = vld [vmem:[%s1 + $0x68] sm:$0xff]
  %v41 = vld [vmem:[%s1 + $0x70] sm:$0xff]
  %v42 = vld [vmem:[%s1 + $0x78] sm:$0xff]
  %v43 = vld [vmem:[%s1 + $0x80] sm:$0xff]
  %v44 = vld [vmem:[%s1 + $0x88] sm:$0xff]
  %v45 = vld [vmem:[%s1 + $0x90] sm:$0xff]
  %v46 = vld [vmem:[%s1 + $0x98] sm:$0xff]
  %v47 = vld [vmem:[%s1 + $0xa0] sm:$0xff]
  %v48 = vld [vmem:[%s1 + $0xa8] sm:$0xff]
  %v49 = vld [vmem:[%s1 + $0xb0] sm:$0xff]
  %v50 = vld [vmem:[%s1 + $0xb8] sm:$0xff]
  %v51 = vld [vmem:[%s1 + $0xc0] sm:$0xff]
  %v52 = vld [vmem:[%s1 + $0xc8] sm:$0xff]
  %v53 = vld [vmem:[%s1 + $0xd0] sm:$0xff]
  %v54 = vld [vmem:[%s1 + $0xd8] sm:$0xff]
  %v55 = vld [vmem:[%s1 + $0xe0] sm:$0xff]
  %v56 = vld [vmem:[%s1 + $0xe8] sm:$0xff]
  %v57 = vld [vmem:[%s1 + $0xf0] sm:$0xff]
  %v58 = vld [vmem:[%s1 + $0xf8] sm:$0xff]
  %v59 = vld [vmem:[%s1 + $0x100] sm:$0xff]
  %v60 = vld [vmem:[%s1 + $0x108] sm:$0xff]
  %v61 = vld [vmem:[%s1 + $0x110] sm:$0xff]
  %v62 = vld [vmem:[%s1 + $0x118] sm:$0xff]
  %v63 = vld [vmem:[%s1 + $0x120] sm:$0xff]
  %v64 = vld [vmem:[%s1 + $0x128] sm:$0xff]
  %v65 = vld [vmem:[%s1 + $0x130] sm:$0xff]
  %v66 = vld [vmem:[%s1 + $0x138] sm:$0xff]
  %v67 = vld [vmem:[%s1 + $0x140] sm:$0xff]
  %v68 = vld [vmem:[%s1 + $0x148] sm:$0xff]
  %v69 = vld [vmem:[%s1 + $0x150] sm:$0xff]
  %v70 = vld [vmem:[%s1 + $0x158] sm:$0xff]
  %v71 = vld [vmem:[%s1 + $0x160] sm:$0xff]
  %v72 = vld [vmem:[%s1 + $0x168] sm:$0xff]
  %v73 = vld [vmem:[%s1 + $0x170] sm:$0xff]
  %v74 = vld [vmem:[%s1 + $0x178] sm:$0xff]
  %v75 = vld [vmem:[%s1 + $0x180] sm:$0xff]
  %v76 = vld [vmem:[%s1 + $0x188] sm:$0xff]
  %v77 = vld [vmem:[%s1 + $0x190] sm:$0xff]
  %v78 = vld [vmem:[%s1 + $0x198] sm:$0xff]
  %v79 = vld [vmem:[%s1 + $0x1a0] sm:$0xff]
  %v80 = vld [vmem:[%s1 + $0x1a8] sm:$0xff]
  %v81 = vld [vmem:[%s1 + $0x1b0] sm:$0xff]
  %v82 = vld [vmem:[%s1 + $0x1b8] sm:$0xff]
  %v83 = vld [vmem:[%s1 + $0x1c0] sm:$0xff]
  %v84 = vld [vmem:[%s1 + $0x1c8] sm:$0xff]
  %v85 = vld [vmem:[%s1 + $0x1d0] sm:$0xff]
  %v86 = vld [vmem:[%s1 + $0x1d8] sm:$0xff]
  %v87 = vld [vmem:[%s1 + $0x1e0] sm:$0xff]
  %v88 = vld [vmem:[%s1 + $0x1e8] sm:$0xff]
  %v89 = vld [vmem:[%s1 + $0x1f0] sm:$0xff]
  %v90 = vld [vmem:[%s1 + $0x1f8] sm:$0xff]
  %v91 = vld [vmem:[%s2] sm:$0xff]
  %v92 = vld [vmem:[%s2 + $0x8] sm:$0xff]
  %v93 = vld [vmem:[%s2 + $0x10] sm:$0xff]
  %v94 = vld [vmem:[%s2 + $0x18] sm:$0xff]
  %v99 = vlaneseq
  %v100 = vshrl.u32 %v99, 7
  %v101 = vsub.s32 0, %v100
  %v102 = vrot.slane %v91, %v101
  %v103 = vlaneseq
  %v104 = vshrl.u32 %v103, 7
  %v105 = vsub.s32 1, %v104
  %v106 = vrot.slane %v91, %v105
  %v107 = vlaneseq
  %v108 = vshrl.u32 %v107, 7
  %v109 = vsub.s32 2, %v108
  %v110 = vrot.slane %v91, %v109
  %v111 = vlaneseq
  %v112 = vshrl.u32 %v111, 7
  %v113 = vsub.s32 3, %v112
  %v114 = vrot.slane %v91, %v113
  %v115 = vlaneseq
  %v116 = vshrl.u32 %v115, 7
  %v117 = vsub.s32 4, %v116
  %v118 = vrot.slane %v91, %v117
  %v119 = vlaneseq
  %v120 = vshrl.u32 %v119, 7
  %v121 = vsub.s32 5, %v120
  %v122 = vrot.slane %v91, %v121
  %v123 = vlaneseq
  %v124 = vshrl.u32 %v123, 7
  %v125 = vsub.s32 6, %v124
  %v126 = vrot.slane %v91, %v125
  %v127 = vlaneseq
  %v128 = vshrl.u32 %v127, 7
  %v129 = vsub.s32 7, %v128
  %v130 = vrot.slane %v91, %v129
  %v131 = vlaneseq
  %v132 = vshrl.u32 %v131, 7
  %v133 = vsub.s32 0, %v132
  %v134 = vrot.slane %v92, %v133
  %v135 = vlaneseq
  %v136 = vshrl.u32 %v135, 7
  %v137 = vsub.s32 1, %v136
  %v138 = vrot.slane %v92, %v137
  %v139 = vlaneseq
  %v140 = vshrl.u32 %v139, 7
  %v141 = vsub.s32 2, %v140
  %v142 = vrot.slane %v92, %v141
  %v143 = vlaneseq
  %v144 = vshrl.u32 %v143, 7
  %v145 = vsub.s32 3, %v144
  %v146 = vrot.slane %v92, %v145
  %v147 = vlaneseq
  %v148 = vshrl.u32 %v147, 7
  %v149 = vsub.s32 4, %v148
  %v150 = vrot.slane %v92, %v149
  %v151 = vlaneseq
  %v152 = vshrl.u32 %v151, 7
  %v153 = vsub.s32 5, %v152
  %v154 = vrot.slane %v92, %v153
  %v155 = vlaneseq
  %v156 = vshrl.u32 %v155, 7
  %v157 = vsub.s32 6, %v156
  %v158 = vrot.slane %v92, %v157
  %v159 = vlaneseq
  %v160 = vshrl.u32 %v159, 7
  %v161 = vsub.s32 7, %v160
  %v162 = vrot.slane %v92, %v161
  %v163 = vlaneseq
  %v164 = vshrl.u32 %v163, 7
  %v165 = vsub.s32 0, %v164
  %v166 = vrot.slane %v93, %v165
  %v167 = vlaneseq
  %v168 = vshrl.u32 %v167, 7
  %v169 = vsub.s32 1, %v168
  %v170 = vrot.slane %v93, %v169
  %v171 = vlaneseq
  %v172 = vshrl.u32 %v171, 7
  %v173 = vsub.s32 2, %v172
  %v174 = vrot.slane %v93, %v173
  %v175 = vlaneseq
  %v176 = vshrl.u32 %v175, 7
  %v177 = vsub.s32 3, %v176
  %v178 = vrot.slane %v93, %v177
  %v179 = vlaneseq
  %v180 = vshrl.u32 %v179, 7
  %v181 = vsub.s32 4, %v180
  %v182 = vrot.slane %v93, %v181
  %v183 = vlaneseq
  %v184 = vshrl.u32 %v183, 7
  %v185 = vsub.s32 5, %v184
  %v186 = vrot.slane %v93, %v185
  %v187 = vlaneseq
  %v188 = vshrl.u32 %v187, 7
  %v189 = vsub.s32 6, %v188
  %v190 = vrot.slane %v93, %v189
  %v191 = vlaneseq
  %v192 = vshrl.u32 %v191, 7
  %v193 = vsub.s32 7, %v192
  %v194 = vrot.slane %v93, %v193
  %v195 = vlaneseq
  %v196 = vshrl.u32 %v195, 7
  %v197 = vsub.s32 0, %v196
  %v198 = vrot.slane %v94, %v197
  %v199 = vlaneseq
  %v200 = vshrl.u32 %v199, 7
  %v201 = vsub.s32 1, %v200
  %v202 = vrot.slane %v94, %v201
  %v203 = vlaneseq
  %v204 = vshrl.u32 %v203, 7
  %v205 = vsub.s32 2, %v204
  %v206 = vrot.slane %v94, %v205
  %v207 = vlaneseq
  %v208 = vshrl.u32 %v207, 7
  %v209 = vsub.s32 3, %v208
  %v210 = vrot.slane %v94, %v209
  %v211 = vlaneseq
  %v212 = vshrl.u32 %v211, 7
  %v213 = vsub.s32 4, %v212
  %v214 = vrot.slane %v94, %v213
  %v215 = vlaneseq
  %v216 = vshrl.u32 %v215, 7
  %v217 = vsub.s32 5, %v216
  %v218 = vrot.slane %v94, %v217
  %v219 = vlaneseq
  %v220 = vshrl.u32 %v219, 7
  %v221 = vsub.s32 6, %v220
  %v222 = vrot.slane %v94, %v221
  %v223 = vlaneseq
  %v224 = vshrl.u32 %v223, 7
  %v225 = vsub.s32 7, %v224
  %v226 = vrot.slane %v94, %v225
  %v271 = vunpack.c.l.b16 %v15
  %v272 = vunpack.c.l.b16 %v16
  %v273 = vunpack.c.l.b16 %v17
  %v274 = vunpack.c.l.b16 %v18
  %v275 = vunpack.c.l.b16 %v19
  %v276 = vunpack.c.l.b16 %v20
  %v277 = vunpack.c.l.b16 %v21
  %v278 = vunpack.c.l.b16 %v22
  %v279 = vunpack.c.l.b16 %v23
  %v280 = vunpack.c.l.b16 %v24
  %v281 = vunpack.c.l.b16 %v25
  %v282 = vunpack.c.l.b16 %v26
  %v283 = vpack.c.b16 %v272, %v271
  %v284 = vpack.c.b16 %v274, %v273
  %v285 = vpack.c.b16 %v276, %v275
  %v286 = vpack.c.b16 %v278, %v277
  %v287 = vpack.c.b16 %v280, %v279
  %v288 = vpack.c.b16 %v282, %v281
  %v353 = vunpack.c.l.b16 %v27
  %v354 = vunpack.c.h.b16 %v27
  %v355 = vunpack.c.l.b16 %v28
  %v356 = vunpack.c.h.b16 %v28
  %v357 = vunpack.c.l.b16 %v29
  %v358 = vunpack.c.h.b16 %v29
  %v359 = vunpack.c.l.b16 %v30
  %v360 = vunpack.c.h.b16 %v30
  %v361 = vunpack.c.l.b16 %v31
  %v362 = vunpack.c.h.b16 %v31
  %v363 = vunpack.c.l.b16 %v32
  %v364 = vunpack.c.h.b16 %v32
  %v365 = vunpack.c.l.b16 %v33
  %v366 = vunpack.c.h.b16 %v33
  %v367 = vunpack.c.l.b16 %v34
  %v368 = vunpack.c.h.b16 %v34
  %v369 = vunpack.c.l.b16 %v35
  %v370 = vunpack.c.h.b16 %v35
  %v371 = vunpack.c.l.b16 %v36
  %v372 = vunpack.c.h.b16 %v36
  %v373 = vunpack.c.l.b16 %v37
  %v374 = vunpack.c.h.b16 %v37
  %v375 = vunpack.c.l.b16 %v38
  %v376 = vunpack.c.h.b16 %v38
  %v377 = vunpack.c.l.b16 %v39
  %v378 = vunpack.c.h.b16 %v39
  %v379 = vunpack.c.l.b16 %v40
  %v380 = vunpack.c.h.b16 %v40
  %v381 = vunpack.c.l.b16 %v41
  %v382 = vunpack.c.h.b16 %v41
  %v383 = vunpack.c.l.b16 %v42
  %v384 = vunpack.c.h.b16 %v42
  %v385 = vunpack.c.l.b16 %v43
  %v386 = vunpack.c.h.b16 %v43
  %v387 = vunpack.c.l.b16 %v44
  %v388 = vunpack.c.h.b16 %v44
  %v389 = vunpack.c.l.b16 %v45
  %v390 = vunpack.c.h.b16 %v45
  %v391 = vunpack.c.l.b16 %v46
  %v392 = vunpack.c.h.b16 %v46
  %v393 = vunpack.c.l.b16 %v47
  %v394 = vunpack.c.h.b16 %v47
  %v395 = vunpack.c.l.b16 %v48
  %v396 = vunpack.c.h.b16 %v48
  %v397 = vunpack.c.l.b16 %v49
  %v398 = vunpack.c.h.b16 %v49
  %v399 = vunpack.c.l.b16 %v50
  %v400 = vunpack.c.h.b16 %v50
  %v401 = vunpack.c.l.b16 %v51
  %v402 = vunpack.c.h.b16 %v51
  %v403 = vunpack.c.l.b16 %v52
  %v404 = vunpack.c.h.b16 %v52
  %v405 = vunpack.c.l.b16 %v53
  %v406 = vunpack.c.h.b16 %v53
  %v407 = vunpack.c.l.b16 %v54
  %v408 = vunpack.c.h.b16 %v54
  %v409 = vunpack.c.l.b16 %v55
  %v410 = vunpack.c.h.b16 %v55
  %v411 = vunpack.c.l.b16 %v56
  %v412 = vunpack.c.h.b16 %v56
  %v413 = vunpack.c.l.b16 %v57
  %v414 = vunpack.c.h.b16 %v57
  %v415 = vunpack.c.l.b16 %v58
  %v416 = vunpack.c.h.b16 %v58
  %v417 = vunpack.c.l.b16 %v59
  %v418 = vunpack.c.h.b16 %v59
  %v419 = vunpack.c.l.b16 %v60
  %v420 = vunpack.c.h.b16 %v60
  %v421 = vunpack.c.l.b16 %v61
  %v422 = vunpack.c.h.b16 %v61
  %v423 = vunpack.c.l.b16 %v62
  %v424 = vunpack.c.h.b16 %v62
  %v425 = vunpack.c.l.b16 %v63
  %v426 = vunpack.c.h.b16 %v63
  %v427 = vunpack.c.l.b16 %v64
  %v428 = vunpack.c.h.b16 %v64
  %v429 = vunpack.c.l.b16 %v65
  %v430 = vunpack.c.h.b16 %v65
  %v431 = vunpack.c.l.b16 %v66
  %v432 = vunpack.c.h.b16 %v66
  %v433 = vunpack.c.l.b16 %v67
  %v434 = vunpack.c.h.b16 %v67
  %v435 = vunpack.c.l.b16 %v68
  %v436 = vunpack.c.h.b16 %v68
  %v437 = vunpack.c.l.b16 %v69
  %v438 = vunpack.c.h.b16 %v69
  %v439 = vunpack.c.l.b16 %v70
  %v440 = vunpack.c.h.b16 %v70
  %v441 = vunpack.c.l.b16 %v71
  %v442 = vunpack.c.h.b16 %v71
  %v443 = vunpack.c.l.b16 %v72
  %v444 = vunpack.c.h.b16 %v72
  %v445 = vunpack.c.l.b16 %v73
  %v446 = vunpack.c.h.b16 %v73
  %v447 = vunpack.c.l.b16 %v74
  %v448 = vunpack.c.h.b16 %v74
  %v449 = vunpack.c.l.b16 %v75
  %v450 = vunpack.c.h.b16 %v75
  %v451 = vunpack.c.l.b16 %v76
  %v452 = vunpack.c.h.b16 %v76
  %v453 = vunpack.c.l.b16 %v77
  %v454 = vunpack.c.h.b16 %v77
  %v455 = vunpack.c.l.b16 %v78
  %v456 = vunpack.c.h.b16 %v78
  %v457 = vunpack.c.l.b16 %v79
  %v458 = vunpack.c.h.b16 %v79
  %v459 = vunpack.c.l.b16 %v80
  %v460 = vunpack.c.h.b16 %v80
  %v461 = vunpack.c.l.b16 %v81
  %v462 = vunpack.c.h.b16 %v81
  %v463 = vunpack.c.l.b16 %v82
  %v464 = vunpack.c.h.b16 %v82
  %v465 = vunpack.c.l.b16 %v83
  %v466 = vunpack.c.h.b16 %v83
  %v467 = vunpack.c.l.b16 %v84
  %v468 = vunpack.c.h.b16 %v84
  %v469 = vunpack.c.l.b16 %v85
  %v470 = vunpack.c.h.b16 %v85
  %v471 = vunpack.c.l.b16 %v86
  %v472 = vunpack.c.h.b16 %v86
  %v473 = vunpack.c.l.b16 %v87
  %v474 = vunpack.c.h.b16 %v87
  %v475 = vunpack.c.l.b16 %v88
  %v476 = vunpack.c.h.b16 %v88
  %v477 = vunpack.c.l.b16 %v89
  %v478 = vunpack.c.h.b16 %v89
  %v479 = vunpack.c.l.b16 %v90
  %v480 = vunpack.c.h.b16 %v90
  %v481 = vpack.c.b16 %v385, %v353
  %v482 = vpack.c.b16 %v386, %v354
  %v483 = vpack.c.b16 %v387, %v355
  %v484 = vpack.c.b16 %v388, %v356
  %v485 = vpack.c.b16 %v389, %v357
  %v486 = vpack.c.b16 %v390, %v358
  %v487 = vpack.c.b16 %v391, %v359
  %v488 = vpack.c.b16 %v392, %v360
  %v489 = vpack.c.b16 %v393, %v361
  %v490 = vpack.c.b16 %v394, %v362
  %v491 = vpack.c.b16 %v395, %v363
  %v492 = vpack.c.b16 %v396, %v364
  %v493 = vpack.c.b16 %v397, %v365
  %v494 = vpack.c.b16 %v398, %v366
  %v495 = vpack.c.b16 %v399, %v367
  %v496 = vpack.c.b16 %v400, %v368
  %v497 = vpack.c.b16 %v401, %v369
  %v498 = vpack.c.b16 %v402, %v370
  %v499 = vpack.c.b16 %v403, %v371
  %v500 = vpack.c.b16 %v404, %v372
  %v501 = vpack.c.b16 %v405, %v373
  %v502 = vpack.c.b16 %v406, %v374
  %v503 = vpack.c.b16 %v407, %v375
  %v504 = vpack.c.b16 %v408, %v376
  %v505 = vpack.c.b16 %v409, %v377
  %v506 = vpack.c.b16 %v410, %v378
  %v507 = vpack.c.b16 %v411, %v379
  %v508 = vpack.c.b16 %v412, %v380
  %v509 = vpack.c.b16 %v413, %v381
  %v510 = vpack.c.b16 %v414, %v382
  %v511 = vpack.c.b16 %v415, %v383
  %v512 = vpack.c.b16 %v416, %v384
  %v513 = vpack.c.b16 %v449, %v417
  %v514 = vpack.c.b16 %v450, %v418
  %v515 = vpack.c.b16 %v451, %v419
  %v516 = vpack.c.b16 %v452, %v420
  %v517 = vpack.c.b16 %v453, %v421
  %v518 = vpack.c.b16 %v454, %v422
  %v519 = vpack.c.b16 %v455, %v423
  %v520 = vpack.c.b16 %v456, %v424
  %v521 = vpack.c.b16 %v457, %v425
  %v522 = vpack.c.b16 %v458, %v426
  %v523 = vpack.c.b16 %v459, %v427
  %v524 = vpack.c.b16 %v460, %v428
  %v525 = vpack.c.b16 %v461, %v429
  %v526 = vpack.c.b16 %v462, %v430
  %v527 = vpack.c.b16 %v463, %v431
  %v528 = vpack.c.b16 %v464, %v432
  %v529 = vpack.c.b16 %v465, %v433
  %v530 = vpack.c.b16 %v466, %v434
  %v531 = vpack.c.b16 %v467, %v435
  %v532 = vpack.c.b16 %v468, %v436
  %v533 = vpack.c.b16 %v469, %v437
  %v534 = vpack.c.b16 %v470, %v438
  %v535 = vpack.c.b16 %v471, %v439
  %v536 = vpack.c.b16 %v472, %v440
  %v537 = vpack.c.b16 %v473, %v441
  %v538 = vpack.c.b16 %v474, %v442
  %v539 = vpack.c.b16 %v475, %v443
  %v540 = vpack.c.b16 %v476, %v444
  %v541 = vpack.c.b16 %v477, %v445
  %v542 = vpack.c.b16 %v478, %v446
  %v543 = vpack.c.b16 %v479, %v447
  %v544 = vpack.c.b16 %v480, %v448
  %vm609 = vcmask 261120
  %v611 = vsel %vm609, %v283, 0
  %v614 = vsel %vm609, %v284, 0
  %v617 = vsel %vm609, %v285, 0
  %v620 = vsel %vm609, %v286, 0
  %v623 = vsel %vm609, %v287, 0
  %v626 = vsel %vm609, %v288, 0
  %628 = vmatprep.subr.bf16.mxu0 %v482
  %629 = vmatpush1.bf16.msra.mxu0 %v481
  %630 = vmatprep.subr.bf16.mxu0 %v514
  %631 = vmatpush1.bf16.msra.mxu0 %v513
  %632 = vmatprep.subr.bf16.mxu0 0
  %633 = vmatpush1.bf16.msra.mxu0 0
  %634 = vmatprep.subr.bf16.mxu0 0
  %635 = vmatpush1.bf16.msra.mxu0 0
  %636 = vmatprep.subr.bf16.mxu0 0
  %637 = vmatpush1.bf16.msra.mxu0 0
  %638 = vmatprep.subr.bf16.mxu0 0
  %639 = vmatpush1.bf16.msra.mxu0 0
  %640 = vmatprep.subr.bf16.mxu0 0
  %641 = vmatpush1.bf16.msra.mxu0 0
  %642 = vmatprep.subr.bf16.mxu0 0
  %643 = vmatpush1.bf16.msra.mxu0 0
  %644 = vmatprep.subr.bf16.mxu0 0
  %645 = vmatpush1.bf16.msra.mxu0 0
  %646 = vmatprep.subr.bf16.mxu0 0
  %647 = vmatpush1.bf16.msra.mxu0 0
  %648 = vmatprep.subr.bf16.mxu0 0
  %649 = vmatpush1.bf16.msra.mxu0 0
  %650 = vmatprep.subr.bf16.mxu0 0
  %651 = vmatpush1.bf16.msra.mxu0 0
  %652 = vmatprep.subr.bf16.mxu0 0
  %653 = vmatpush1.bf16.msra.mxu0 0
  %654 = vmatprep.subr.bf16.mxu0 0
  %655 = vmatpush1.bf16.msra.mxu0 0
  %656 = vmatprep.subr.bf16.mxu0 0
  %657 = vmatpush1.bf16.msra.mxu0 0
  %658 = vmatprep.subr.bf16.mxu0 0
  %659 = vmatpush1.bf16.msra.mxu0 0
  %660 = vmatprep.mubr.bf16.mxu0 0
  %661 = vmatmul.mubr.bf16.gmra.mrb[0].mxu0 %v611
  %v662 = vpop.f32.mrb[0].mxu0
  %v663 = vadd.f32 %v102, %v662
  %v664 = vpop.f32.mrb[0].mxu0
  %v665 = vadd.f32 %v106, %v664
  %v666 = vpop.f32.mrb[0].mxu0
  %v667 = vadd.f32 %v102, %v666
  %v668 = vpop.f32.mrb[0].mxu0
  %v669 = vadd.f32 %v106, %v668
  %670 = vmatprep.mubr.bf16.mxu0 0
  %671 = vmatmul.mubr.bf16.gmra.mrb[0].mxu0 %v614
  %v672 = vpop.f32.mrb[0].mxu0
  %v673 = vadd.f32 %v102, %v672
  %v674 = vpop.f32.mrb[0].mxu0
  %v675 = vadd.f32 %v106, %v674
  %v676 = vpop.f32.mrb[0].mxu0
  %v677 = vadd.f32 %v102, %v676
  %v678 = vpop.f32.mrb[0].mxu0
  %v679 = vadd.f32 %v106, %v678
  %680 = vmatprep.mubr.bf16.mxu0 0
  %681 = vmatmul.mubr.bf16.gmra.mrb[0].mxu0 %v617
  %v682 = vpop.f32.mrb[0].mxu0
  %v683 = vadd.f32 %v102, %v682
  %v684 = vpop.f32.mrb[0].mxu0
  %v685 = vadd.f32 %v106, %v684
  %v686 = vpop.f32.mrb[0].mxu0
  %v687 = vadd.f32 %v102, %v686
  %v688 = vpop.f32.mrb[0].mxu0
  %v689 = vadd.f32 %v106, %v688
  %690 = vmatprep.mubr.bf16.mxu0 0
  %691 = vmatmul.mubr.bf16.gmra.mrb[0].mxu0 %v620
  %v692 = vpop.f32.mrb[0].mxu0
  %v693 = vadd.f32 %v102, %v692
  %v694 = vpop.f32.mrb[0].mxu0
  %v695 = vadd.f32 %v106, %v694
  %v696 = vpop.f32.mrb[0].mxu0
  %v697 = vadd.f32 %v102, %v696
  %v698 = vpop.f32.mrb[0].mxu0
  %v699 = vadd.f32 %v106, %v698
  %700 = vmatprep.mubr.bf16.mxu0 0
  %701 = vmatmul.mubr.bf16.gmra.mrb[0].mxu0 %v623
  %v702 = vpop.f32.mrb[0].mxu0
  %v703 = vadd.f32 %v102, %v702
  %v704 = vpop.f32.mrb[0].mxu0
  %v705 = vadd.f32 %v106, %v704
  %v706 = vpop.f32.mrb[0].mxu0
  %v707 = vadd.f32 %v102, %v706
  %v708 = vpop.f32.mrb[0].mxu0
  %v709 = vadd.f32 %v106, %v708
  %710 = vmatprep.mubr.bf16.mxu0 0
  %711 = vmatmul.mubr.bf16.gmra.mrb[0].mxu0 %v626
  %v712 = vpop.f32.mrb[0].mxu0
  %v713 = vadd.f32 %v102, %v712
  %v714 = vpop.f32.mrb[0].mxu0
  %v715 = vadd.f32 %v106, %v714
  %v716 = vpop.f32.mrb[0].mxu0
  %v717 = vadd.f32 %v102, %v716
  %v718 = vpop.f32.mrb[0].mxu0
  %v719 = vadd.f32 %v106, %v718
  %720 = vdwg.mxu0
  %721 = vmatprep.subr.bf16.mxu0 %v484
  %722 = vmatpush1.bf16.msra.mxu0 %v483
  %723 = vmatprep.subr.bf16.mxu0 %v516
  %724 = vmatpush1.bf16.msra.mxu0 %v515
  %725 = vmatprep.subr.bf16.mxu0 0
  %726 = vmatpush1.bf16.msra.mxu0 0
  %727 = vmatprep.subr.bf16.mxu0 0
  %728 = vmatpush1.bf16.msra.mxu0 0
  %729 = vmatprep.subr.bf16.mxu0 0
  %730 = vmatpush1.bf16.msra.mxu0 0
  %731 = vmatprep.subr.bf16.mxu0 0
  %732 = vmatpush1.bf16.msra.mxu0 0
  %733 = vmatprep.subr.bf16.mxu0 0
  %734 = vmatpush1.bf16.msra.mxu0 0
  %735 = vmatprep.subr.bf16.mxu0 0
  %736 = vmatpush1.bf16.msra.mxu0 0
  %737 = vmatprep.subr.bf16.mxu0 0
  %738 = vmatpush1.bf16.msra.mxu0 0
  %739 = vmatprep.subr.bf16.mxu0 0
  %740 = vmatpush1.bf16.msra.mxu0 0
  %741 = vmatprep.subr.bf16.mxu0 0
  %742 = vmatpush1.bf16.msra.mxu0 0
  %743 = vmatprep.subr.bf16.mxu0 0
  %744 = vmatpush1.bf16.msra.mxu0 0
  %745 = vmatprep.subr.bf16.mxu0 0
  %746 = vmatpush1.bf16.msra.mxu0 0
  %747 = vmatprep.subr.bf16.mxu0 0
  %748 = vmatpush1.bf16.msra.mxu0 0
  %749 = vmatprep.subr.bf16.mxu0 0
  %750 = vmatpush1.bf16.msra.mxu0 0
  %751 = vmatprep.subr.bf16.mxu0 0
  %752 = vmatpush1.bf16.msra.mxu0 0
  %753 = vmatprep.mubr.bf16.mxu0 0
  %754 = vmatmul.mubr.bf16.gmra.mrb[0].mxu0 %v611
  %v755 = vpop.f32.mrb[0].mxu0
  %v756 = vadd.f32 %v110, %v755
  %v757 = vpop.f32.mrb[0].mxu0
  %v758 = vadd.f32 %v114, %v757
  %v759 = vpop.f32.mrb[0].mxu0
  %v760 = vadd.f32 %v110, %v759
  %v761 = vpop.f32.mrb[0].mxu0
  %v762 = vadd.f32 %v114, %v761
  %763 = vmatprep.mubr.bf16.mxu0 0
  %764 = vmatmul.mubr.bf16.gmra.mrb[0].mxu0 %v614
  %v765 = vpop.f32.mrb[0].mxu0
  %v766 = vadd.f32 %v110, %v765
  %v767 = vpop.f32.mrb[0].mxu0
  %v768 = vadd.f32 %v114, %v767
  %v769 = vpop.f32.mrb[0].mxu0
  %v770 = vadd.f32 %v110, %v769
  %v771 = vpop.f32.mrb[0].mxu0
  %v772 = vadd.f32 %v114, %v771
  %773 = vmatprep.mubr.bf16.mxu0 0
  %774 = vmatmul.mubr.bf16.gmra.mrb[0].mxu0 %v617
  %v775 = vpop.f32.mrb[0].mxu0
  %v776 = vadd.f32 %v110, %v775
  %v777 = vpop.f32.mrb[0].mxu0
  %v778 = vadd.f32 %v114, %v777
  %v779 = vpop.f32.mrb[0].mxu0
  %v780 = vadd.f32 %v110, %v779
  %v781 = vpop.f32.mrb[0].mxu0
  %v782 = vadd.f32 %v114, %v781
  %783 = vmatprep.mubr.bf16.mxu0 0
  %784 = vmatmul.mubr.bf16.gmra.mrb[0].mxu0 %v620
  %v785 = vpop.f32.mrb[0].mxu0
  %v786 = vadd.f32 %v110, %v785
  %v787 = vpop.f32.mrb[0].mxu0
  %v788 = vadd.f32 %v114, %v787
  %v789 = vpop.f32.mrb[0].mxu0
  %v790 = vadd.f32 %v110, %v789
  %v791 = vpop.f32.mrb[0].mxu0
  %v792 = vadd.f32 %v114, %v791
  %793 = vmatprep.mubr.bf16.mxu0 0
  %794 = vmatmul.mubr.bf16.gmra.mrb[0].mxu0 %v623
  %v795 = vpop.f32.mrb[0].mxu0
  %v796 = vadd.f32 %v110, %v795
  %v797 = vpop.f32.mrb[0].mxu0
  %v798 = vadd.f32 %v114, %v797
  %v799 = vpop.f32.mrb[0].mxu0
  %v800 = vadd.f32 %v110, %v799
  %v801 = vpop.f32.mrb[0].mxu0
  %v802 = vadd.f32 %v114, %v801
  %803 = vmatprep.mubr.bf16.mxu0 0
  %804 = vmatmul.mubr.bf16.gmra.mrb[0].mxu0 %v626
  %v805 = vpop.f32.mrb[0].mxu0
  %v806 = vadd.f32 %v110, %v805
  %v807 = vpop.f32.mrb[0].mxu0
  %v808 = vadd.f32 %v114, %v807
  %v809 = vpop.f32.mrb[0].mxu0
  %v810 = vadd.f32 %v110, %v809
  %v811 = vpop.f32.mrb[0].mxu0
  %v812 = vadd.f32 %v114, %v811
  %813 = vdwg.mxu0
  %814 = vmatprep.subr.bf16.mxu0 %v486
  %815 = vmatpush1.bf16.msra.mxu0 %v485
  %816 = vmatprep.subr.bf16.mxu0 %v518
  %817 = vmatpush1.bf16.msra.mxu0 %v517
  %818 = vmatprep.subr.bf16.mxu0 0
  %819 = vmatpush1.bf16.msra.mxu0 0
  %820 = vmatprep.subr.bf16.mxu0 0
  %821 = vmatpush1.bf16.msra.mxu0 0
  %822 = vmatprep.subr.bf16.mxu0 0
  %823 = vmatpush1.bf16.msra.mxu0 0
  %824 = vmatprep.subr.bf16.mxu0 0
  %825 = vmatpush1.bf16.msra.mxu0 0
  %826 = vmatprep.subr.bf16.mxu0 0
  %827 = vmatpush1.bf16.msra.mxu0 0
  %828 = vmatprep.subr.bf16.mxu0 0
  %829 = vmatpush1.bf16.msra.mxu0 0
  %830 = vmatprep.subr.bf16.mxu0 0
  %831 = vmatpush1.bf16.msra.mxu0 0
  %832 = vmatprep.subr.bf16.mxu0 0
  %833 = vmatpush1.bf16.msra.mxu0 0
  %834 = vmatprep.subr.bf16.mxu0 0
  %835 = vmatpush1.bf16.msra.mxu0 0
  %836 = vmatprep.subr.bf16.mxu0 0
  %837 = vmatpush1.bf16.msra.mxu0 0
  %838 = vmatprep.subr.bf16.mxu0 0
  %839 = vmatpush1.bf16.msra.mxu0 0
  %840 = vmatprep.subr.bf16.mxu0 0
  %841 = vmatpush1.bf16.msra.mxu0 0
  %842 = vmatprep.subr.bf16.mxu0 0
  %843 = vmatpush1.bf16.msra.mxu0 0
  %844 = vmatprep.subr.bf16.mxu0 0
  %845 = vmatpush1.bf16.msra.mxu0 0
  %846 = vmatprep.mubr.bf16.mxu0 0
  %847 = vmatmul.mubr.bf16.gmra.mrb[0].mxu0 %v611
  %v848 = vpop.f32.mrb[0].mxu0
  %v849 = vadd.f32 %v118, %v848
  %v850 = vpop.f32.mrb[0].mxu0
  %v851 = vadd.f32 %v122, %v850
  %v852 = vpop.f32.mrb[0].mxu0
  %v853 = vadd.f32 %v118, %v852
  %v854 = vpop.f32.mrb[0].mxu0
  %v855 = vadd.f32 %v122, %v854
  %856 = vmatprep.mubr.bf16.mxu0 0
  %857 = vmatmul.mubr.bf16.gmra.mrb[0].mxu0 %v614
  %v858 = vpop.f32.mrb[0].mxu0
  %v859 = vadd.f32 %v118, %v858
  %v860 = vpop.f32.mrb[0].mxu0
  %v861 = vadd.f32 %v122, %v860
  %v862 = vpop.f32.mrb[0].mxu0
  %v863 = vadd.f32 %v118, %v862
  %v864 = vpop.f32.mrb[0].mxu0
  %v865 = vadd.f32 %v122, %v864
  %866 = vmatprep.mubr.bf16.mxu0 0
  %867 = vmatmul.mubr.bf16.gmra.mrb[0].mxu0 %v617
  %v868 = vpop.f32.mrb[0].mxu0
  %v869 = vadd.f32 %v118, %v868
  %v870 = vpop.f32.mrb[0].mxu0
  %v871 = vadd.f32 %v122, %v870
  %v872 = vpop.f32.mrb[0].mxu0
  %v873 = vadd.f32 %v118, %v872
  %v874 = vpop.f32.mrb[0].mxu0
  %v875 = vadd.f32 %v122, %v874
  %876 = vmatprep.mubr.bf16.mxu0 0
  %877 = vmatmul.mubr.bf16.gmra.mrb[0].mxu0 %v620
  %v878 = vpop.f32.mrb[0].mxu0
  %v879 = vadd.f32 %v118, %v878
  %v880 = vpop.f32.mrb[0].mxu0
  %v881 = vadd.f32 %v122, %v880
  %v882 = vpop.f32.mrb[0].mxu0
  %v883 = vadd.f32 %v118, %v882
  %v884 = vpop.f32.mrb[0].mxu0
  %v885 = vadd.f32 %v122, %v884
  %886 = vmatprep.mubr.bf16.mxu0 0
  %887 = vmatmul.mubr.bf16.gmra.mrb[0].mxu0 %v623
  %v888 = vpop.f32.mrb[0].mxu0
  %v889 = vadd.f32 %v118, %v888
  %v890 = vpop.f32.mrb[0].mxu0
  %v891 = vadd.f32 %v122, %v890
  %v892 = vpop.f32.mrb[0].mxu0
  %v893 = vadd.f32 %v118, %v892
  %v894 = vpop.f32.mrb[0].mxu0
  %v895 = vadd.f32 %v122, %v894
  %896 = vmatprep.mubr.bf16.mxu0 0
  %897 = vmatmul.mubr.bf16.gmra.mrb[0].mxu0 %v626
  %v898 = vpop.f32.mrb[0].mxu0
  %v899 = vadd.f32 %v118, %v898
  %v900 = vpop.f32.mrb[0].mxu0
  %v901 = vadd.f32 %v122, %v900
  %v902 = vpop.f32.mrb[0].mxu0
  %v903 = vadd.f32 %v118, %v902
  %v904 = vpop.f32.mrb[0].mxu0
  %v905 = vadd.f32 %v122, %v904
  %906 = vdwg.mxu0
  %907 = vmatprep.subr.bf16.mxu0 %v488
  %908 = vmatpush1.bf16.msra.mxu0 %v487
  %909 = vmatprep.subr.bf16.mxu0 %v520
  %910 = vmatpush1.bf16.msra.mxu0 %v519
  %911 = vmatprep.subr.bf16.mxu0 0
  %912 = vmatpush1.bf16.msra.mxu0 0
  %913 = vmatprep.subr.bf16.mxu0 0
  %914 = vmatpush1.bf16.msra.mxu0 0
  %915 = vmatprep.subr.bf16.mxu0 0
  %916 = vmatpush1.bf16.msra.mxu0 0
  %917 = vmatprep.subr.bf16.mxu0 0
  %918 = vmatpush1.bf16.msra.mxu0 0
  %919 = vmatprep.subr.bf16.mxu0 0
  %920 = vmatpush1.bf16.msra.mxu0 0
  %921 = vmatprep.subr.bf16.mxu0 0
  %922 = vmatpush1.bf16.msra.mxu0 0
  %923 = vmatprep.subr.bf16.mxu0 0
  %924 = vmatpush1.bf16.msra.mxu0 0
  %925 = vmatprep.subr.bf16.mxu0 0
  %926 = vmatpush1.bf16.msra.mxu0 0
  %927 = vmatprep.subr.bf16.mxu0 0
  %928 = vmatpush1.bf16.msra.mxu0 0
  %929 = vmatprep.subr.bf16.mxu0 0
  %930 = vmatpush1.bf16.msra.mxu0 0
  %931 = vmatprep.subr.bf16.mxu0 0
  %932 = vmatpush1.bf16.msra.mxu0 0
  %933 = vmatprep.subr.bf16.mxu0 0
  %934 = vmatpush1.bf16.msra.mxu0 0
  %935 = vmatprep.subr.bf16.mxu0 0
  %936 = vmatpush1.bf16.msra.mxu0 0
  %937 = vmatprep.subr.bf16.mxu0 0
  %938 = vmatpush1.bf16.msra.mxu0 0
  %939 = vmatprep.mubr.bf16.mxu0 0
  %940 = vmatmul.mubr.bf16.gmra.mrb[0].mxu0 %v611
  %v941 = vpop.f32.mrb[0].mxu0
  %v942 = vadd.f32 %v126, %v941
  %v943 = vpop.f32.mrb[0].mxu0
  %v944 = vadd.f32 %v130, %v943
  %v945 = vpop.f32.mrb[0].mxu0
  %v946 = vadd.f32 %v126, %v945
  %v947 = vpop.f32.mrb[0].mxu0
  %v948 = vadd.f32 %v130, %v947
  %949 = vmatprep.mubr.bf16.mxu0 0
  %950 = vmatmul.mubr.bf16.gmra.mrb[0].mxu0 %v614
  %v951 = vpop.f32.mrb[0].mxu0
  %v952 = vadd.f32 %v126, %v951
  %v953 = vpop.f32.mrb[0].mxu0
  %v954 = vadd.f32 %v130, %v953
  %v955 = vpop.f32.mrb[0].mxu0
  %v956 = vadd.f32 %v126, %v955
  %v957 = vpop.f32.mrb[0].mxu0
  %v958 = vadd.f32 %v130, %v957
  %959 = vmatprep.mubr.bf16.mxu0 0
  %960 = vmatmul.mubr.bf16.gmra.mrb[0].mxu0 %v617
  %v961 = vpop.f32.mrb[0].mxu0
  %v962 = vadd.f32 %v126, %v961
  %v963 = vpop.f32.mrb[0].mxu0
  %v964 = vadd.f32 %v130, %v963
  %v965 = vpop.f32.mrb[0].mxu0
  %v966 = vadd.f32 %v126, %v965
  %v967 = vpop.f32.mrb[0].mxu0
  %v968 = vadd.f32 %v130, %v967
  %969 = vmatprep.mubr.bf16.mxu0 0
  %970 = vmatmul.mubr.bf16.gmra.mrb[0].mxu0 %v620
  %v971 = vpop.f32.mrb[0].mxu0
  %v972 = vadd.f32 %v126, %v971
  %v973 = vpop.f32.mrb[0].mxu0
  %v974 = vadd.f32 %v130, %v973
  %v975 = vpop.f32.mrb[0].mxu0
  %v976 = vadd.f32 %v126, %v975
  %v977 = vpop.f32.mrb[0].mxu0
  %v978 = vadd.f32 %v130, %v977
  %979 = vmatprep.mubr.bf16.mxu0 0
  %980 = vmatmul.mubr.bf16.gmra.mrb[0].mxu0 %v623
  %v981 = vpop.f32.mrb[0].mxu0
  %v982 = vadd.f32 %v126, %v981
  %v983 = vpop.f32.mrb[0].mxu0
  %v984 = vadd.f32 %v130, %v983
  %v985 = vpop.f32.mrb[0].mxu0
  %v986 = vadd.f32 %v126, %v985
  %v987 = vpop.f32.mrb[0].mxu0
  %v988 = vadd.f32 %v130, %v987
  %989 = vmatprep.mubr.bf16.mxu0 0
  %990 = vmatmul.mubr.bf16.gmra.mrb[0].mxu0 %v626
  %v991 = vpop.f32.mrb[0].mxu0
  %v992 = vadd.f32 %v126, %v991
  %v993 = vpop.f32.mrb[0].mxu0
  %v994 = vadd.f32 %v130, %v993
  %v995 = vpop.f32.mrb[0].mxu0
  %v996 = vadd.f32 %v126, %v995
  %v997 = vpop.f32.mrb[0].mxu0
  %v998 = vadd.f32 %v130, %v997
  %999 = vdwg.mxu0
  %1000 = vmatprep.subr.bf16.mxu0 %v490
  %1001 = vmatpush1.bf16.msra.mxu0 %v489
  %1002 = vmatprep.subr.bf16.mxu0 %v522
  %1003 = vmatpush1.bf16.msra.mxu0 %v521
  %1004 = vmatprep.subr.bf16.mxu0 0
  %1005 = vmatpush1.bf16.msra.mxu0 0
  %1006 = vmatprep.subr.bf16.mxu0 0
  %1007 = vmatpush1.bf16.msra.mxu0 0
  %1008 = vmatprep.subr.bf16.mxu0 0
  %1009 = vmatpush1.bf16.msra.mxu0 0
  %1010 = vmatprep.subr.bf16.mxu0 0
  %1011 = vmatpush1.bf16.msra.mxu0 0
  %1012 = vmatprep.subr.bf16.mxu0 0
  %1013 = vmatpush1.bf16.msra.mxu0 0
  %1014 = vmatprep.subr.bf16.mxu0 0
  %1015 = vmatpush1.bf16.msra.mxu0 0
  %1016 = vmatprep.subr.bf16.mxu0 0
  %1017 = vmatpush1.bf16.msra.mxu0 0
  %1018 = vmatprep.subr.bf16.mxu0 0
  %1019 = vmatpush1.bf16.msra.mxu0 0
  %1020 = vmatprep.subr.bf16.mxu0 0
  %1021 = vmatpush1.bf16.msra.mxu0 0
  %1022 = vmatprep.subr.bf16.mxu0 0
  %1023 = vmatpush1.bf16.msra.mxu0 0
  %1024 = vmatprep.subr.bf16.mxu0 0
  %1025 = vmatpush1.bf16.msra.mxu0 0
  %1026 = vmatprep.subr.bf16.mxu0 0
  %1027 = vmatpush1.bf16.msra.mxu0 0
  %1028 = vmatprep.subr.bf16.mxu0 0
  %1029 = vmatpush1.bf16.msra.mxu0 0
  %1030 = vmatprep.subr.bf16.mxu0 0
  %1031 = vmatpush1.bf16.msra.mxu0 0
  %1032 = vmatprep.mubr.bf16.mxu0 0
  %1033 = vmatmul.mubr.bf16.gmra.mrb[0].mxu0 %v611
  %v1034 = vpop.f32.mrb[0].mxu0
  %v1035 = vadd.f32 %v134, %v1034
  %v1036 = vpop.f32.mrb[0].mxu0
  %v1037 = vadd.f32 %v138, %v1036
  %v1038 = vpop.f32.mrb[0].mxu0
  %v1039 = vadd.f32 %v134, %v1038
  %v1040 = vpop.f32.mrb[0].mxu0
  %v1041 = vadd.f32 %v138, %v1040
  %1042 = vmatprep.mubr.bf16.mxu0 0
  %1043 = vmatmul.mubr.bf16.gmra.mrb[0].mxu0 %v614
  %v1044 = vpop.f32.mrb[0].mxu0
  %v1045 = vadd.f32 %v134, %v1044
  %v1046 = vpop.f32.mrb[0].mxu0
  %v1047 = vadd.f32 %v138, %v1046
  %v1048 = vpop.f32.mrb[0].mxu0
  %v1049 = vadd.f32 %v134, %v1048
  %v1050 = vpop.f32.mrb[0].mxu0
  %v1051 = vadd.f32 %v138, %v1050
  %1052 = vmatprep.mubr.bf16.mxu0 0
  %1053 = vmatmul.mubr.bf16.gmra.mrb[0].mxu0 %v617
  %v1054 = vpop.f32.mrb[0].mxu0
  %v1055 = vadd.f32 %v134, %v1054
  %v1056 = vpop.f32.mrb[0].mxu0
  %v1057 = vadd.f32 %v138, %v1056
  %v1058 = vpop.f32.mrb[0].mxu0
  %v1059 = vadd.f32 %v134, %v1058
  %v1060 = vpop.f32.mrb[0].mxu0
  %v1061 = vadd.f32 %v138, %v1060
  %1062 = vmatprep.mubr.bf16.mxu0 0
  %1063 = vmatmul.mubr.bf16.gmra.mrb[0].mxu0 %v620
  %v1064 = vpop.f32.mrb[0].mxu0
  %v1065 = vadd.f32 %v134, %v1064
  %v1066 = vpop.f32.mrb[0].mxu0
  %v1067 = vadd.f32 %v138, %v1066
  %v1068 = vpop.f32.mrb[0].mxu0
  %v1069 = vadd.f32 %v134, %v1068
  %v1070 = vpop.f32.mrb[0].mxu0
  %v1071 = vadd.f32 %v138, %v1070
  %1072 = vmatprep.mubr.bf16.mxu0 0
  %1073 = vmatmul.mubr.bf16.gmra.mrb[0].mxu0 %v623
  %v1074 = vpop.f32.mrb[0].mxu0
  %v1075 = vadd.f32 %v134, %v1074
  %v1076 = vpop.f32.mrb[0].mxu0
  %v1077 = vadd.f32 %v138, %v1076
  %v1078 = vpop.f32.mrb[0].mxu0
  %v1079 = vadd.f32 %v134, %v1078
  %v1080 = vpop.f32.mrb[0].mxu0
  %v1081 = vadd.f32 %v138, %v1080
  %1082 = vmatprep.mubr.bf16.mxu0 0
  %1083 = vmatmul.mubr.bf16.gmra.mrb[0].mxu0 %v626
  %v1084 = vpop.f32.mrb[0].mxu0
  %v1085 = vadd.f32 %v134, %v1084
  %v1086 = vpop.f32.mrb[0].mxu0
  %v1087 = vadd.f32 %v138, %v1086
  %v1088 = vpop.f32.mrb[0].mxu0
  %v1089 = vadd.f32 %v134, %v1088
  %v1090 = vpop.f32.mrb[0].mxu0
  %v1091 = vadd.f32 %v138, %v1090
  %1092 = vdwg.mxu0
  %1093 = vmatprep.subr.bf16.mxu0 %v492
  %1094 = vmatpush1.bf16.msra.mxu0 %v491
  %1095 = vmatprep.subr.bf16.mxu0 %v524
  %1096 = vmatpush1.bf16.msra.mxu0 %v523
  %1097 = vmatprep.subr.bf16.mxu0 0
  %1098 = vmatpush1.bf16.msra.mxu0 0
  %1099 = vmatprep.subr.bf16.mxu0 0
  %1100 = vmatpush1.bf16.msra.mxu0 0
  %1101 = vmatprep.subr.bf16.mxu0 0
  %1102 = vmatpush1.bf16.msra.mxu0 0
  %1103 = vmatprep.subr.bf16.mxu0 0
  %1104 = vmatpush1.bf16.msra.mxu0 0
  %1105 = vmatprep.subr.bf16.mxu0 0
  %1106 = vmatpush1.bf16.msra.mxu0 0
  %1107 = vmatprep.subr.bf16.mxu0 0
  %1108 = vmatpush1.bf16.msra.mxu0 0
  %1109 = vmatprep.subr.bf16.mxu0 0
  %1110 = vmatpush1.bf16.msra.mxu0 0
  %1111 = vmatprep.subr.bf16.mxu0 0
  %1112 = vmatpush1.bf16.msra.mxu0 0
  %1113 = vmatprep.subr.bf16.mxu0 0
  %1114 = vmatpush1.bf16.msra.mxu0 0
  %1115 = vmatprep.subr.bf16.mxu0 0
  %1116 = vmatpush1.bf16.msra.mxu0 0
  %1117 = vmatprep.subr.bf16.mxu0 0
  %1118 = vmatpush1.bf16.msra.mxu0 0
  %1119 = vmatprep.subr.bf16.mxu0 0
  %1120 = vmatpush1.bf16.msra.mxu0 0
  %1121 = vmatprep.subr.bf16.mxu0 0
  %1122 = vmatpush1.bf16.msra.mxu0 0
  %1123 = vmatprep.subr.bf16.mxu0 0
  %1124 = vmatpush1.bf16.msra.mxu0 0
  %1125 = vmatprep.mubr.bf16.mxu0 0
  %1126 = vmatmul.mubr.bf16.gmra.mrb[0].mxu0 %v611
  %v1127 = vpop.f32.mrb[0].mxu0
  %v1128 = vadd.f32 %v142, %v1127
  %v1129 = vpop.f32.mrb[0].mxu0
  %v1130 = vadd.f32 %v146, %v1129
  %v1131 = vpop.f32.mrb[0].mxu0
  %v1132 = vadd.f32 %v142, %v1131
  %v1133 = vpop.f32.mrb[0].mxu0
  %v1134 = vadd.f32 %v146, %v1133
  %1135 = vmatprep.mubr.bf16.mxu0 0
  %1136 = vmatmul.mubr.bf16.gmra.mrb[0].mxu0 %v614
  %v1137 = vpop.f32.mrb[0].mxu0
  %v1138 = vadd.f32 %v142, %v1137
  %v1139 = vpop.f32.mrb[0].mxu0
  %v1140 = vadd.f32 %v146, %v1139
  %v1141 = vpop.f32.mrb[0].mxu0
  %v1142 = vadd.f32 %v142, %v1141
  %v1143 = vpop.f32.mrb[0].mxu0
  %v1144 = vadd.f32 %v146, %v1143
  %1145 = vmatprep.mubr.bf16.mxu0 0
  %1146 = vmatmul.mubr.bf16.gmra.mrb[0].mxu0 %v617
  %v1147 = vpop.f32.mrb[0].mxu0
  %v1148 = vadd.f32 %v142, %v1147
  %v1149 = vpop.f32.mrb[0].mxu0
  %v1150 = vadd.f32 %v146, %v1149
  %v1151 = vpop.f32.mrb[0].mxu0
  %v1152 = vadd.f32 %v142, %v1151
  %v1153 = vpop.f32.mrb[0].mxu0
  %v1154 = vadd.f32 %v146, %v1153
  %1155 = vmatprep.mubr.bf16.mxu0 0
  %1156 = vmatmul.mubr.bf16.gmra.mrb[0].mxu0 %v620
  %v1157 = vpop.f32.mrb[0].mxu0
  %v1158 = vadd.f32 %v142, %v1157
  %v1159 = vpop.f32.mrb[0].mxu0
  %v1160 = vadd.f32 %v146, %v1159
  %v1161 = vpop.f32.mrb[0].mxu0
  %v1162 = vadd.f32 %v142, %v1161
  %v1163 = vpop.f32.mrb[0].mxu0
  %v1164 = vadd.f32 %v146, %v1163
  %1165 = vmatprep.mubr.bf16.mxu0 0
  %1166 = vmatmul.mubr.bf16.gmra.mrb[0].mxu0 %v623
  %v1167 = vpop.f32.mrb[0].mxu0
  %v1168 = vadd.f32 %v142, %v1167
  %v1169 = vpop.f32.mrb[0].mxu0
  %v1170 = vadd.f32 %v146, %v1169
  %v1171 = vpop.f32.mrb[0].mxu0
  %v1172 = vadd.f32 %v142, %v1171
  %v1173 = vpop.f32.mrb[0].mxu0
  %v1174 = vadd.f32 %v146, %v1173
  %1175 = vmatprep.mubr.bf16.mxu0 0
  %1176 = vmatmul.mubr.bf16.gmra.mrb[0].mxu0 %v626
  %v1177 = vpop.f32.mrb[0].mxu0
  %v1178 = vadd.f32 %v142, %v1177
  %v1179 = vpop.f32.mrb[0].mxu0
  %v1180 = vadd.f32 %v146, %v1179
  %v1181 = vpop.f32.mrb[0].mxu0
  %v1182 = vadd.f32 %v142, %v1181
  %v1183 = vpop.f32.mrb[0].mxu0
  %v1184 = vadd.f32 %v146, %v1183
  %1185 = vdwg.mxu0
  %1186 = vmatprep.subr.bf16.mxu0 %v494
  %1187 = vmatpush1.bf16.msra.mxu0 %v493
  %1188 = vmatprep.subr.bf16.mxu0 %v526
  %1189 = vmatpush1.bf16.msra.mxu0 %v525
  %1190 = vmatprep.subr.bf16.mxu0 0
  %1191 = vmatpush1.bf16.msra.mxu0 0
  %1192 = vmatprep.subr.bf16.mxu0 0
  %1193 = vmatpush1.bf16.msra.mxu0 0
  %1194 = vmatprep.subr.bf16.mxu0 0
  %1195 = vmatpush1.bf16.msra.mxu0 0
  %1196 = vmatprep.subr.bf16.mxu0 0
  %1197 = vmatpush1.bf16.msra.mxu0 0
  %1198 = vmatprep.subr.bf16.mxu0 0
  %1199 = vmatpush1.bf16.msra.mxu0 0
  %1200 = vmatprep.subr.bf16.mxu0 0
  %1201 = vmatpush1.bf16.msra.mxu0 0
  %1202 = vmatprep.subr.bf16.mxu0 0
  %1203 = vmatpush1.bf16.msra.mxu0 0
  %1204 = vmatprep.subr.bf16.mxu0 0
  %1205 = vmatpush1.bf16.msra.mxu0 0
  %1206 = vmatprep.subr.bf16.mxu0 0
  %1207 = vmatpush1.bf16.msra.mxu0 0
  %1208 = vmatprep.subr.bf16.mxu0 0
  %1209 = vmatpush1.bf16.msra.mxu0 0
  %1210 = vmatprep.subr.bf16.mxu0 0
  %1211 = vmatpush1.bf16.msra.mxu0 0
  %1212 = vmatprep.subr.bf16.mxu0 0
  %1213 = vmatpush1.bf16.msra.mxu0 0
  %1214 = vmatprep.subr.bf16.mxu0 0
  %1215 = vmatpush1.bf16.msra.mxu0 0
  %1216 = vmatprep.subr.bf16.mxu0 0
  %1217 = vmatpush1.bf16.msra.mxu0 0
  %1218 = vmatprep.mubr.bf16.mxu0 0
  %1219 = vmatmul.mubr.bf16.gmra.mrb[0].mxu0 %v611
  %v1220 = vpop.f32.mrb[0].mxu0
  %v1221 = vadd.f32 %v150, %v1220
  %v1222 = vpop.f32.mrb[0].mxu0
  %v1223 = vadd.f32 %v154, %v1222
  %v1224 = vpop.f32.mrb[0].mxu0
  %v1225 = vadd.f32 %v150, %v1224
  %v1226 = vpop.f32.mrb[0].mxu0
  %v1227 = vadd.f32 %v154, %v1226
  %1228 = vmatprep.mubr.bf16.mxu0 0
  %1229 = vmatmul.mubr.bf16.gmra.mrb[0].mxu0 %v614
  %v1230 = vpop.f32.mrb[0].mxu0
  %v1231 = vadd.f32 %v150, %v1230
  %v1232 = vpop.f32.mrb[0].mxu0
  %v1233 = vadd.f32 %v154, %v1232
  %v1234 = vpop.f32.mrb[0].mxu0
  %v1235 = vadd.f32 %v150, %v1234
  %v1236 = vpop.f32.mrb[0].mxu0
  %v1237 = vadd.f32 %v154, %v1236
  %1238 = vmatprep.mubr.bf16.mxu0 0
  %1239 = vmatmul.mubr.bf16.gmra.mrb[0].mxu0 %v617
  %v1240 = vpop.f32.mrb[0].mxu0
  %v1241 = vadd.f32 %v150, %v1240
  %v1242 = vpop.f32.mrb[0].mxu0
  %v1243 = vadd.f32 %v154, %v1242
  %v1244 = vpop.f32.mrb[0].mxu0
  %v1245 = vadd.f32 %v150, %v1244
  %v1246 = vpop.f32.mrb[0].mxu0
  %v1247 = vadd.f32 %v154, %v1246
  %1248 = vmatprep.mubr.bf16.mxu0 0
  %1249 = vmatmul.mubr.bf16.gmra.mrb[0].mxu0 %v620
  %v1250 = vpop.f32.mrb[0].mxu0
  %v1251 = vadd.f32 %v150, %v1250
  %v1252 = vpop.f32.mrb[0].mxu0
  %v1253 = vadd.f32 %v154, %v1252
  %v1254 = vpop.f32.mrb[0].mxu0
  %v1255 = vadd.f32 %v150, %v1254
  %v1256 = vpop.f32.mrb[0].mxu0
  %v1257 = vadd.f32 %v154, %v1256
  %1258 = vmatprep.mubr.bf16.mxu0 0
  %1259 = vmatmul.mubr.bf16.gmra.mrb[0].mxu0 %v623
  %v1260 = vpop.f32.mrb[0].mxu0
  %v1261 = vadd.f32 %v150, %v1260
  %v1262 = vpop.f32.mrb[0].mxu0
  %v1263 = vadd.f32 %v154, %v1262
  %v1264 = vpop.f32.mrb[0].mxu0
  %v1265 = vadd.f32 %v150, %v1264
  %v1266 = vpop.f32.mrb[0].mxu0
  %v1267 = vadd.f32 %v154, %v1266
  %1268 = vmatprep.mubr.bf16.mxu0 0
  %1269 = vmatmul.mubr.bf16.gmra.mrb[0].mxu0 %v626
  %v1270 = vpop.f32.mrb[0].mxu0
  %v1271 = vadd.f32 %v150, %v1270
  %v1272 = vpop.f32.mrb[0].mxu0
  %v1273 = vadd.f32 %v154, %v1272
  %v1274 = vpop.f32.mrb[0].mxu0
  %v1275 = vadd.f32 %v150, %v1274
  %v1276 = vpop.f32.mrb[0].mxu0
  %v1277 = vadd.f32 %v154, %v1276
  %1278 = vdwg.mxu0
  %1279 = vmatprep.subr.bf16.mxu0 %v496
  %1280 = vmatpush1.bf16.msra.mxu0 %v495
  %1281 = vmatprep.subr.bf16.mxu0 %v528
  %1282 = vmatpush1.bf16.msra.mxu0 %v527
  %1283 = vmatprep.subr.bf16.mxu0 0
  %1284 = vmatpush1.bf16.msra.mxu0 0
  %1285 = vmatprep.subr.bf16.mxu0 0
  %1286 = vmatpush1.bf16.msra.mxu0 0
  %1287 = vmatprep.subr.bf16.mxu0 0
  %1288 = vmatpush1.bf16.msra.mxu0 0
  %1289 = vmatprep.subr.bf16.mxu0 0
  %1290 = vmatpush1.bf16.msra.mxu0 0
  %1291 = vmatprep.subr.bf16.mxu0 0
  %1292 = vmatpush1.bf16.msra.mxu0 0
  %1293 = vmatprep.subr.bf16.mxu0 0
  %1294 = vmatpush1.bf16.msra.mxu0 0
  %1295 = vmatprep.subr.bf16.mxu0 0
  %1296 = vmatpush1.bf16.msra.mxu0 0
  %1297 = vmatprep.subr.bf16.mxu0 0
  %1298 = vmatpush1.bf16.msra.mxu0 0
  %1299 = vmatprep.subr.bf16.mxu0 0
  %1300 = vmatpush1.bf16.msra.mxu0 0
  %1301 = vmatprep.subr.bf16.mxu0 0
  %1302 = vmatpush1.bf16.msra.mxu0 0
  %1303 = vmatprep.subr.bf16.mxu0 0
  %1304 = vmatpush1.bf16.msra.mxu0 0
  %1305 = vmatprep.subr.bf16.mxu0 0
  %1306 = vmatpush1.bf16.msra.mxu0 0
  %1307 = vmatprep.subr.bf16.mxu0 0
  %1308 = vmatpush1.bf16.msra.mxu0 0
  %1309 = vmatprep.subr.bf16.mxu0 0
  %1310 = vmatpush1.bf16.msra.mxu0 0
  %1311 = vmatprep.mubr.bf16.mxu0 0
  %1312 = vmatmul.mubr.bf16.gmra.mrb[0].mxu0 %v611
  %v1313 = vpop.f32.mrb[0].mxu0
  %v1314 = vadd.f32 %v158, %v1313
  %v1315 = vpop.f32.mrb[0].mxu0
  %v1316 = vadd.f32 %v162, %v1315
  %v1317 = vpop.f32.mrb[0].mxu0
  %v1318 = vadd.f32 %v158, %v1317
  %v1319 = vpop.f32.mrb[0].mxu0
  %v1320 = vadd.f32 %v162, %v1319
  %1321 = vmatprep.mubr.bf16.mxu0 0
  %1322 = vmatmul.mubr.bf16.gmra.mrb[0].mxu0 %v614
  %v1323 = vpop.f32.mrb[0].mxu0
  %v1324 = vadd.f32 %v158, %v1323
  %v1325 = vpop.f32.mrb[0].mxu0
  %v1326 = vadd.f32 %v162, %v1325
  %v1327 = vpop.f32.mrb[0].mxu0
  %v1328 = vadd.f32 %v158, %v1327
  %v1329 = vpop.f32.mrb[0].mxu0
  %v1330 = vadd.f32 %v162, %v1329
  %1331 = vmatprep.mubr.bf16.mxu0 0
  %1332 = vmatmul.mubr.bf16.gmra.mrb[0].mxu0 %v617
  %v1333 = vpop.f32.mrb[0].mxu0
  %v1334 = vadd.f32 %v158, %v1333
  %v1335 = vpop.f32.mrb[0].mxu0
  %v1336 = vadd.f32 %v162, %v1335
  %v1337 = vpop.f32.mrb[0].mxu0
  %v1338 = vadd.f32 %v158, %v1337
  %v1339 = vpop.f32.mrb[0].mxu0
  %v1340 = vadd.f32 %v162, %v1339
  %1341 = vmatprep.mubr.bf16.mxu0 0
  %1342 = vmatmul.mubr.bf16.gmra.mrb[0].mxu0 %v620
  %v1343 = vpop.f32.mrb[0].mxu0
  %v1344 = vadd.f32 %v158, %v1343
  %v1345 = vpop.f32.mrb[0].mxu0
  %v1346 = vadd.f32 %v162, %v1345
  %v1347 = vpop.f32.mrb[0].mxu0
  %v1348 = vadd.f32 %v158, %v1347
  %v1349 = vpop.f32.mrb[0].mxu0
  %v1350 = vadd.f32 %v162, %v1349
  %1351 = vmatprep.mubr.bf16.mxu0 0
  %1352 = vmatmul.mubr.bf16.gmra.mrb[0].mxu0 %v623
  %v1353 = vpop.f32.mrb[0].mxu0
  %v1354 = vadd.f32 %v158, %v1353
  %v1355 = vpop.f32.mrb[0].mxu0
  %v1356 = vadd.f32 %v162, %v1355
  %v1357 = vpop.f32.mrb[0].mxu0
  %v1358 = vadd.f32 %v158, %v1357
  %v1359 = vpop.f32.mrb[0].mxu0
  %v1360 = vadd.f32 %v162, %v1359
  %1361 = vmatprep.mubr.bf16.mxu0 0
  %1362 = vmatmul.mubr.bf16.gmra.mrb[0].mxu0 %v626
  %v1363 = vpop.f32.mrb[0].mxu0
  %v1364 = vadd.f32 %v158, %v1363
  %v1365 = vpop.f32.mrb[0].mxu0
  %v1366 = vadd.f32 %v162, %v1365
  %v1367 = vpop.f32.mrb[0].mxu0
  %v1368 = vadd.f32 %v158, %v1367
  %v1369 = vpop.f32.mrb[0].mxu0
  %v1370 = vadd.f32 %v162, %v1369
  %1371 = vdwg.mxu0
  %1372 = vmatprep.subr.bf16.mxu0 %v498
  %1373 = vmatpush1.bf16.msra.mxu0 %v497
  %1374 = vmatprep.subr.bf16.mxu0 %v530
  %1375 = vmatpush1.bf16.msra.mxu0 %v529
  %1376 = vmatprep.subr.bf16.mxu0 0
  %1377 = vmatpush1.bf16.msra.mxu0 0
  %1378 = vmatprep.subr.bf16.mxu0 0
  %1379 = vmatpush1.bf16.msra.mxu0 0
  %1380 = vmatprep.subr.bf16.mxu0 0
  %1381 = vmatpush1.bf16.msra.mxu0 0
  %1382 = vmatprep.subr.bf16.mxu0 0
  %1383 = vmatpush1.bf16.msra.mxu0 0
  %1384 = vmatprep.subr.bf16.mxu0 0
  %1385 = vmatpush1.bf16.msra.mxu0 0
  %1386 = vmatprep.subr.bf16.mxu0 0
  %1387 = vmatpush1.bf16.msra.mxu0 0
  %1388 = vmatprep.subr.bf16.mxu0 0
  %1389 = vmatpush1.bf16.msra.mxu0 0
  %1390 = vmatprep.subr.bf16.mxu0 0
  %1391 = vmatpush1.bf16.msra.mxu0 0
  %1392 = vmatprep.subr.bf16.mxu0 0
  %1393 = vmatpush1.bf16.msra.mxu0 0
  %1394 = vmatprep.subr.bf16.mxu0 0
  %1395 = vmatpush1.bf16.msra.mxu0 0
  %1396 = vmatprep.subr.bf16.mxu0 0
  %1397 = vmatpush1.bf16.msra.mxu0 0
  %1398 = vmatprep.subr.bf16.mxu0 0
  %1399 = vmatpush1.bf16.msra.mxu0 0
  %1400 = vmatprep.subr.bf16.mxu0 0
  %1401 = vmatpush1.bf16.msra.mxu0 0
  %1402 = vmatprep.subr.bf16.mxu0 0
  %1403 = vmatpush1.bf16.msra.mxu0 0
  %1404 = vmatprep.mubr.bf16.mxu0 0
  %1405 = vmatmul.mubr.bf16.gmra.mrb[0].mxu0 %v611
  %v1406 = vpop.f32.mrb[0].mxu0
  %v1407 = vadd.f32 %v166, %v1406
  %v1408 = vpop.f32.mrb[0].mxu0
  %v1409 = vadd.f32 %v170, %v1408
  %v1410 = vpop.f32.mrb[0].mxu0
  %v1411 = vadd.f32 %v166, %v1410
  %v1412 = vpop.f32.mrb[0].mxu0
  %v1413 = vadd.f32 %v170, %v1412
  %1414 = vmatprep.mubr.bf16.mxu0 0
  %1415 = vmatmul.mubr.bf16.gmra.mrb[0].mxu0 %v614
  %v1416 = vpop.f32.mrb[0].mxu0
  %v1417 = vadd.f32 %v166, %v1416
  %v1418 = vpop.f32.mrb[0].mxu0
  %v1419 = vadd.f32 %v170, %v1418
  %v1420 = vpop.f32.mrb[0].mxu0
  %v1421 = vadd.f32 %v166, %v1420
  %v1422 = vpop.f32.mrb[0].mxu0
  %v1423 = vadd.f32 %v170, %v1422
  %1424 = vmatprep.mubr.bf16.mxu0 0
  %1425 = vmatmul.mubr.bf16.gmra.mrb[0].mxu0 %v617
  %v1426 = vpop.f32.mrb[0].mxu0
  %v1427 = vadd.f32 %v166, %v1426
  %v1428 = vpop.f32.mrb[0].mxu0
  %v1429 = vadd.f32 %v170, %v1428
  %v1430 = vpop.f32.mrb[0].mxu0
  %v1431 = vadd.f32 %v166, %v1430
  %v1432 = vpop.f32.mrb[0].mxu0
  %v1433 = vadd.f32 %v170, %v1432
  %1434 = vmatprep.mubr.bf16.mxu0 0
  %1435 = vmatmul.mubr.bf16.gmra.mrb[0].mxu0 %v620
  %v1436 = vpop.f32.mrb[0].mxu0
  %v1437 = vadd.f32 %v166, %v1436
  %v1438 = vpop.f32.mrb[0].mxu0
  %v1439 = vadd.f32 %v170, %v1438
  %v1440 = vpop.f32.mrb[0].mxu0
  %v1441 = vadd.f32 %v166, %v1440
  %v1442 = vpop.f32.mrb[0].mxu0
  %v1443 = vadd.f32 %v170, %v1442
  %1444 = vmatprep.mubr.bf16.mxu0 0
  %1445 = vmatmul.mubr.bf16.gmra.mrb[0].mxu0 %v623
  %v1446 = vpop.f32.mrb[0].mxu0
  %v1447 = vadd.f32 %v166, %v1446
  %v1448 = vpop.f32.mrb[0].mxu0
  %v1449 = vadd.f32 %v170, %v1448
  %v1450 = vpop.f32.mrb[0].mxu0
  %v1451 = vadd.f32 %v166, %v1450
  %v1452 = vpop.f32.mrb[0].mxu0
  %v1453 = vadd.f32 %v170, %v1452
  %1454 = vmatprep.mubr.bf16.mxu0 0
  %1455 = vmatmul.mubr.bf16.gmra.mrb[0].mxu0 %v626
  %v1456 = vpop.f32.mrb[0].mxu0
  %v1457 = vadd.f32 %v166, %v1456
  %v1458 = vpop.f32.mrb[0].mxu0
  %v1459 = vadd.f32 %v170, %v1458
  %v1460 = vpop.f32.mrb[0].mxu0
  %v1461 = vadd.f32 %v166, %v1460
  %v1462 = vpop.f32.mrb[0].mxu0
  %v1463 = vadd.f32 %v170, %v1462
  %1464 = vdwg.mxu0
  %1465 = vmatprep.subr.bf16.mxu0 %v500
  %1466 = vmatpush1.bf16.msra.mxu0 %v499
  %1467 = vmatprep.subr.bf16.mxu0 %v532
  %1468 = vmatpush1.bf16.msra.mxu0 %v531
  %1469 = vmatprep.subr.bf16.mxu0 0
  %1470 = vmatpush1.bf16.msra.mxu0 0
  %1471 = vmatprep.subr.bf16.mxu0 0
  %1472 = vmatpush1.bf16.msra.mxu0 0
  %1473 = vmatprep.subr.bf16.mxu0 0
  %1474 = vmatpush1.bf16.msra.mxu0 0
  %1475 = vmatprep.subr.bf16.mxu0 0
  %1476 = vmatpush1.bf16.msra.mxu0 0
  %1477 = vmatprep.subr.bf16.mxu0 0
  %1478 = vmatpush1.bf16.msra.mxu0 0
  %1479 = vmatprep.subr.bf16.mxu0 0
  %1480 = vmatpush1.bf16.msra.mxu0 0
  %1481 = vmatprep.subr.bf16.mxu0 0
  %1482 = vmatpush1.bf16.msra.mxu0 0
  %1483 = vmatprep.subr.bf16.mxu0 0
  %1484 = vmatpush1.bf16.msra.mxu0 0
  %1485 = vmatprep.subr.bf16.mxu0 0
  %1486 = vmatpush1.bf16.msra.mxu0 0
  %1487 = vmatprep.subr.bf16.mxu0 0
  %1488 = vmatpush1.bf16.msra.mxu0 0
  %1489 = vmatprep.subr.bf16.mxu0 0
  %1490 = vmatpush1.bf16.msra.mxu0 0
  %1491 = vmatprep.subr.bf16.mxu0 0
  %1492 = vmatpush1.bf16.msra.mxu0 0
  %1493 = vmatprep.subr.bf16.mxu0 0
  %1494 = vmatpush1.bf16.msra.mxu0 0
  %1495 = vmatprep.subr.bf16.mxu0 0
  %1496 = vmatpush1.bf16.msra.mxu0 0
  %1497 = vmatprep.mubr.bf16.mxu0 0
  %1498 = vmatmul.mubr.bf16.gmra.mrb[0].mxu0 %v611
  %v1499 = vpop.f32.mrb[0].mxu0
  %v1500 = vadd.f32 %v174, %v1499
  %v1501 = vpop.f32.mrb[0].mxu0
  %v1502 = vadd.f32 %v178, %v1501
  %v1503 = vpop.f32.mrb[0].mxu0
  %v1504 = vadd.f32 %v174, %v1503
  %v1505 = vpop.f32.mrb[0].mxu0
  %v1506 = vadd.f32 %v178, %v1505
  %1507 = vmatprep.mubr.bf16.mxu0 0
  %1508 = vmatmul.mubr.bf16.gmra.mrb[0].mxu0 %v614
  %v1509 = vpop.f32.mrb[0].mxu0
  %v1510 = vadd.f32 %v174, %v1509
  %v1511 = vpop.f32.mrb[0].mxu0
  %v1512 = vadd.f32 %v178, %v1511
  %v1513 = vpop.f32.mrb[0].mxu0
  %v1514 = vadd.f32 %v174, %v1513
  %v1515 = vpop.f32.mrb[0].mxu0
  %v1516 = vadd.f32 %v178, %v1515
  %1517 = vmatprep.mubr.bf16.mxu0 0
  %1518 = vmatmul.mubr.bf16.gmra.mrb[0].mxu0 %v617
  %v1519 = vpop.f32.mrb[0].mxu0
  %v1520 = vadd.f32 %v174, %v1519
  %v1521 = vpop.f32.mrb[0].mxu0
  %v1522 = vadd.f32 %v178, %v1521
  %v1523 = vpop.f32.mrb[0].mxu0
  %v1524 = vadd.f32 %v174, %v1523
  %v1525 = vpop.f32.mrb[0].mxu0
  %v1526 = vadd.f32 %v178, %v1525
  %1527 = vmatprep.mubr.bf16.mxu0 0
  %1528 = vmatmul.mubr.bf16.gmra.mrb[0].mxu0 %v620
  %v1529 = vpop.f32.mrb[0].mxu0
  %v1530 = vadd.f32 %v174, %v1529
  %v1531 = vpop.f32.mrb[0].mxu0
  %v1532 = vadd.f32 %v178, %v1531
  %v1533 = vpop.f32.mrb[0].mxu0
  %v1534 = vadd.f32 %v174, %v1533
  %v1535 = vpop.f32.mrb[0].mxu0
  %v1536 = vadd.f32 %v178, %v1535
  %1537 = vmatprep.mubr.bf16.mxu0 0
  %1538 = vmatmul.mubr.bf16.gmra.mrb[0].mxu0 %v623
  %v1539 = vpop.f32.mrb[0].mxu0
  %v1540 = vadd.f32 %v174, %v1539
  %v1541 = vpop.f32.mrb[0].mxu0
  %v1542 = vadd.f32 %v178, %v1541
  %v1543 = vpop.f32.mrb[0].mxu0
  %v1544 = vadd.f32 %v174, %v1543
  %v1545 = vpop.f32.mrb[0].mxu0
  %v1546 = vadd.f32 %v178, %v1545
  %1547 = vmatprep.mubr.bf16.mxu0 0
  %1548 = vmatmul.mubr.bf16.gmra.mrb[0].mxu0 %v626
  %v1549 = vpop.f32.mrb[0].mxu0
  %v1550 = vadd.f32 %v174, %v1549
  %v1551 = vpop.f32.mrb[0].mxu0
  %v1552 = vadd.f32 %v178, %v1551
  %v1553 = vpop.f32.mrb[0].mxu0
  %v1554 = vadd.f32 %v174, %v1553
  %v1555 = vpop.f32.mrb[0].mxu0
  %v1556 = vadd.f32 %v178, %v1555
  %1557 = vdwg.mxu0
  %1558 = vmatprep.subr.bf16.mxu0 %v502
  %1559 = vmatpush1.bf16.msra.mxu0 %v501
  %1560 = vmatprep.subr.bf16.mxu0 %v534
  %1561 = vmatpush1.bf16.msra.mxu0 %v533
  %1562 = vmatprep.subr.bf16.mxu0 0
  %1563 = vmatpush1.bf16.msra.mxu0 0
  %1564 = vmatprep.subr.bf16.mxu0 0
  %1565 = vmatpush1.bf16.msra.mxu0 0
  %1566 = vmatprep.subr.bf16.mxu0 0
  %1567 = vmatpush1.bf16.msra.mxu0 0
  %1568 = vmatprep.subr.bf16.mxu0 0
  %1569 = vmatpush1.bf16.msra.mxu0 0
  %1570 = vmatprep.subr.bf16.mxu0 0
  %1571 = vmatpush1.bf16.msra.mxu0 0
  %1572 = vmatprep.subr.bf16.mxu0 0
  %1573 = vmatpush1.bf16.msra.mxu0 0
  %1574 = vmatprep.subr.bf16.mxu0 0
  %1575 = vmatpush1.bf16.msra.mxu0 0
  %1576 = vmatprep.subr.bf16.mxu0 0
  %1577 = vmatpush1.bf16.msra.mxu0 0
  %1578 = vmatprep.subr.bf16.mxu0 0
  %1579 = vmatpush1.bf16.msra.mxu0 0
  %1580 = vmatprep.subr.bf16.mxu0 0
  %1581 = vmatpush1.bf16.msra.mxu0 0
  %1582 = vmatprep.subr.bf16.mxu0 0
  %1583 = vmatpush1.bf16.msra.mxu0 0
  %1584 = vmatprep.subr.bf16.mxu0 0
  %1585 = vmatpush1.bf16.msra.mxu0 0
  %1586 = vmatprep.subr.bf16.mxu0 0
  %1587 = vmatpush1.bf16.msra.mxu0 0
  %1588 = vmatprep.subr.bf16.mxu0 0
  %1589 = vmatpush1.bf16.msra.mxu0 0
  %1590 = vmatprep.mubr.bf16.mxu0 0
  %1591 = vmatmul.mubr.bf16.gmra.mrb[0].mxu0 %v611
  %v1592 = vpop.f32.mrb[0].mxu0
  %v1593 = vadd.f32 %v182, %v1592
  %v1594 = vpop.f32.mrb[0].mxu0
  %v1595 = vadd.f32 %v186, %v1594
  %v1596 = vpop.f32.mrb[0].mxu0
  %v1597 = vadd.f32 %v182, %v1596
  %v1598 = vpop.f32.mrb[0].mxu0
  %v1599 = vadd.f32 %v186, %v1598
  %1600 = vmatprep.mubr.bf16.mxu0 0
  %1601 = vmatmul.mubr.bf16.gmra.mrb[0].mxu0 %v614
  %v1602 = vpop.f32.mrb[0].mxu0
  %v1603 = vadd.f32 %v182, %v1602
  %v1604 = vpop.f32.mrb[0].mxu0
  %v1605 = vadd.f32 %v186, %v1604
  %v1606 = vpop.f32.mrb[0].mxu0
  %v1607 = vadd.f32 %v182, %v1606
  %v1608 = vpop.f32.mrb[0].mxu0
  %v1609 = vadd.f32 %v186, %v1608
  %1610 = vmatprep.mubr.bf16.mxu0 0
  %1611 = vmatmul.mubr.bf16.gmra.mrb[0].mxu0 %v617
  %v1612 = vpop.f32.mrb[0].mxu0
  %v1613 = vadd.f32 %v182, %v1612
  %v1614 = vpop.f32.mrb[0].mxu0
  %v1615 = vadd.f32 %v186, %v1614
  %v1616 = vpop.f32.mrb[0].mxu0
  %v1617 = vadd.f32 %v182, %v1616
  %v1618 = vpop.f32.mrb[0].mxu0
  %v1619 = vadd.f32 %v186, %v1618
  %1620 = vmatprep.mubr.bf16.mxu0 0
  %1621 = vmatmul.mubr.bf16.gmra.mrb[0].mxu0 %v620
  %v1622 = vpop.f32.mrb[0].mxu0
  %v1623 = vadd.f32 %v182, %v1622
  %v1624 = vpop.f32.mrb[0].mxu0
  %v1625 = vadd.f32 %v186, %v1624
  %v1626 = vpop.f32.mrb[0].mxu0
  %v1627 = vadd.f32 %v182, %v1626
  %v1628 = vpop.f32.mrb[0].mxu0
  %v1629 = vadd.f32 %v186, %v1628
  %1630 = vmatprep.mubr.bf16.mxu0 0
  %1631 = vmatmul.mubr.bf16.gmra.mrb[0].mxu0 %v623
  %v1632 = vpop.f32.mrb[0].mxu0
  %v1633 = vadd.f32 %v182, %v1632
  %v1634 = vpop.f32.mrb[0].mxu0
  %v1635 = vadd.f32 %v186, %v1634
  %v1636 = vpop.f32.mrb[0].mxu0
  %v1637 = vadd.f32 %v182, %v1636
  %v1638 = vpop.f32.mrb[0].mxu0
  %v1639 = vadd.f32 %v186, %v1638
  %1640 = vmatprep.mubr.bf16.mxu0 0
  %1641 = vmatmul.mubr.bf16.gmra.mrb[0].mxu0 %v626
  %v1642 = vpop.f32.mrb[0].mxu0
  %v1643 = vadd.f32 %v182, %v1642
  %v1644 = vpop.f32.mrb[0].mxu0
  %v1645 = vadd.f32 %v186, %v1644
  %v1646 = vpop.f32.mrb[0].mxu0
  %v1647 = vadd.f32 %v182, %v1646
  %v1648 = vpop.f32.mrb[0].mxu0
  %v1649 = vadd.f32 %v186, %v1648
  %1650 = vdwg.mxu0
  %1651 = vmatprep.subr.bf16.mxu0 %v504
  %1652 = vmatpush1.bf16.msra.mxu0 %v503
  %1653 = vmatprep.subr.bf16.mxu0 %v536
  %1654 = vmatpush1.bf16.msra.mxu0 %v535
  %1655 = vmatprep.subr.bf16.mxu0 0
  %1656 = vmatpush1.bf16.msra.mxu0 0
  %1657 = vmatprep.subr.bf16.mxu0 0
  %1658 = vmatpush1.bf16.msra.mxu0 0
  %1659 = vmatprep.subr.bf16.mxu0 0
  %1660 = vmatpush1.bf16.msra.mxu0 0
  %1661 = vmatprep.subr.bf16.mxu0 0
  %1662 = vmatpush1.bf16.msra.mxu0 0
  %1663 = vmatprep.subr.bf16.mxu0 0
  %1664 = vmatpush1.bf16.msra.mxu0 0
  %1665 = vmatprep.subr.bf16.mxu0 0
  %1666 = vmatpush1.bf16.msra.mxu0 0
  %1667 = vmatprep.subr.bf16.mxu0 0
  %1668 = vmatpush1.bf16.msra.mxu0 0
  %1669 = vmatprep.subr.bf16.mxu0 0
  %1670 = vmatpush1.bf16.msra.mxu0 0
  %1671 = vmatprep.subr.bf16.mxu0 0
  %1672 = vmatpush1.bf16.msra.mxu0 0
  %1673 = vmatprep.subr.bf16.mxu0 0
  %1674 = vmatpush1.bf16.msra.mxu0 0
  %1675 = vmatprep.subr.bf16.mxu0 0
  %1676 = vmatpush1.bf16.msra.mxu0 0
  %1677 = vmatprep.subr.bf16.mxu0 0
  %1678 = vmatpush1.bf16.msra.mxu0 0
  %1679 = vmatprep.subr.bf16.mxu0 0
  %1680 = vmatpush1.bf16.msra.mxu0 0
  %1681 = vmatprep.subr.bf16.mxu0 0
  %1682 = vmatpush1.bf16.msra.mxu0 0
  %1683 = vmatprep.mubr.bf16.mxu0 0
  %1684 = vmatmul.mubr.bf16.gmra.mrb[0].mxu0 %v611
  %v1685 = vpop.f32.mrb[0].mxu0
  %v1686 = vadd.f32 %v190, %v1685
  %v1687 = vpop.f32.mrb[0].mxu0
  %v1688 = vadd.f32 %v194, %v1687
  %v1689 = vpop.f32.mrb[0].mxu0
  %v1690 = vadd.f32 %v190, %v1689
  %v1691 = vpop.f32.mrb[0].mxu0
  %v1692 = vadd.f32 %v194, %v1691
  %1693 = vmatprep.mubr.bf16.mxu0 0
  %1694 = vmatmul.mubr.bf16.gmra.mrb[0].mxu0 %v614
  %v1695 = vpop.f32.mrb[0].mxu0
  %v1696 = vadd.f32 %v190, %v1695
  %v1697 = vpop.f32.mrb[0].mxu0
  %v1698 = vadd.f32 %v194, %v1697
  %v1699 = vpop.f32.mrb[0].mxu0
  %v1700 = vadd.f32 %v190, %v1699
  %v1701 = vpop.f32.mrb[0].mxu0
  %v1702 = vadd.f32 %v194, %v1701
  %1703 = vmatprep.mubr.bf16.mxu0 0
  %1704 = vmatmul.mubr.bf16.gmra.mrb[0].mxu0 %v617
  %v1705 = vpop.f32.mrb[0].mxu0
  %v1706 = vadd.f32 %v190, %v1705
  %v1707 = vpop.f32.mrb[0].mxu0
  %v1708 = vadd.f32 %v194, %v1707
  %v1709 = vpop.f32.mrb[0].mxu0
  %v1710 = vadd.f32 %v190, %v1709
  %v1711 = vpop.f32.mrb[0].mxu0
  %v1712 = vadd.f32 %v194, %v1711
  %1713 = vmatprep.mubr.bf16.mxu0 0
  %1714 = vmatmul.mubr.bf16.gmra.mrb[0].mxu0 %v620
  %v1715 = vpop.f32.mrb[0].mxu0
  %v1716 = vadd.f32 %v190, %v1715
  %v1717 = vpop.f32.mrb[0].mxu0
  %v1718 = vadd.f32 %v194, %v1717
  %v1719 = vpop.f32.mrb[0].mxu0
  %v1720 = vadd.f32 %v190, %v1719
  %v1721 = vpop.f32.mrb[0].mxu0
  %v1722 = vadd.f32 %v194, %v1721
  %1723 = vmatprep.mubr.bf16.mxu0 0
  %1724 = vmatmul.mubr.bf16.gmra.mrb[0].mxu0 %v623
  %v1725 = vpop.f32.mrb[0].mxu0
  %v1726 = vadd.f32 %v190, %v1725
  %v1727 = vpop.f32.mrb[0].mxu0
  %v1728 = vadd.f32 %v194, %v1727
  %v1729 = vpop.f32.mrb[0].mxu0
  %v1730 = vadd.f32 %v190, %v1729
  %v1731 = vpop.f32.mrb[0].mxu0
  %v1732 = vadd.f32 %v194, %v1731
  %1733 = vmatprep.mubr.bf16.mxu0 0
  %1734 = vmatmul.mubr.bf16.gmra.mrb[0].mxu0 %v626
  %v1735 = vpop.f32.mrb[0].mxu0
  %v1736 = vadd.f32 %v190, %v1735
  %v1737 = vpop.f32.mrb[0].mxu0
  %v1738 = vadd.f32 %v194, %v1737
  %v1739 = vpop.f32.mrb[0].mxu0
  %v1740 = vadd.f32 %v190, %v1739
  %v1741 = vpop.f32.mrb[0].mxu0
  %v1742 = vadd.f32 %v194, %v1741
  %1743 = vdwg.mxu0
  %1744 = vmatprep.subr.bf16.mxu0 %v506
  %1745 = vmatpush1.bf16.msra.mxu0 %v505
  %1746 = vmatprep.subr.bf16.mxu0 %v538
  %1747 = vmatpush1.bf16.msra.mxu0 %v537
  %1748 = vmatprep.subr.bf16.mxu0 0
  %1749 = vmatpush1.bf16.msra.mxu0 0
  %1750 = vmatprep.subr.bf16.mxu0 0
  %1751 = vmatpush1.bf16.msra.mxu0 0
  %1752 = vmatprep.subr.bf16.mxu0 0
  %1753 = vmatpush1.bf16.msra.mxu0 0
  %1754 = vmatprep.subr.bf16.mxu0 0
  %1755 = vmatpush1.bf16.msra.mxu0 0
  %1756 = vmatprep.subr.bf16.mxu0 0
  %1757 = vmatpush1.bf16.msra.mxu0 0
  %1758 = vmatprep.subr.bf16.mxu0 0
  %1759 = vmatpush1.bf16.msra.mxu0 0
  %1760 = vmatprep.subr.bf16.mxu0 0
  %1761 = vmatpush1.bf16.msra.mxu0 0
  %1762 = vmatprep.subr.bf16.mxu0 0
  %1763 = vmatpush1.bf16.msra.mxu0 0
  %1764 = vmatprep.subr.bf16.mxu0 0
  %1765 = vmatpush1.bf16.msra.mxu0 0
  %1766 = vmatprep.subr.bf16.mxu0 0
  %1767 = vmatpush1.bf16.msra.mxu0 0
  %1768 = vmatprep.subr.bf16.mxu0 0
  %1769 = vmatpush1.bf16.msra.mxu0 0
  %1770 = vmatprep.subr.bf16.mxu0 0
  %1771 = vmatpush1.bf16.msra.mxu0 0
  %1772 = vmatprep.subr.bf16.mxu0 0
  %1773 = vmatpush1.bf16.msra.mxu0 0
  %1774 = vmatprep.subr.bf16.mxu0 0
  %1775 = vmatpush1.bf16.msra.mxu0 0
  %1776 = vmatprep.mubr.bf16.mxu0 0
  %1777 = vmatmul.mubr.bf16.gmra.mrb[0].mxu0 %v611
  %v1778 = vpop.f32.mrb[0].mxu0
  %v1779 = vadd.f32 %v198, %v1778
  %v1780 = vpop.f32.mrb[0].mxu0
  %v1781 = vadd.f32 %v202, %v1780
  %v1782 = vpop.f32.mrb[0].mxu0
  %v1783 = vadd.f32 %v198, %v1782
  %v1784 = vpop.f32.mrb[0].mxu0
  %v1785 = vadd.f32 %v202, %v1784
  %1786 = vmatprep.mubr.bf16.mxu0 0
  %1787 = vmatmul.mubr.bf16.gmra.mrb[0].mxu0 %v614
  %v1788 = vpop.f32.mrb[0].mxu0
  %v1789 = vadd.f32 %v198, %v1788
  %v1790 = vpop.f32.mrb[0].mxu0
  %v1791 = vadd.f32 %v202, %v1790
  %v1792 = vpop.f32.mrb[0].mxu0
  %v1793 = vadd.f32 %v198, %v1792
  %v1794 = vpop.f32.mrb[0].mxu0
  %v1795 = vadd.f32 %v202, %v1794
  %1796 = vmatprep.mubr.bf16.mxu0 0
  %1797 = vmatmul.mubr.bf16.gmra.mrb[0].mxu0 %v617
  %v1798 = vpop.f32.mrb[0].mxu0
  %v1799 = vadd.f32 %v198, %v1798
  %v1800 = vpop.f32.mrb[0].mxu0
  %v1801 = vadd.f32 %v202, %v1800
  %v1802 = vpop.f32.mrb[0].mxu0
  %v1803 = vadd.f32 %v198, %v1802
  %v1804 = vpop.f32.mrb[0].mxu0
  %v1805 = vadd.f32 %v202, %v1804
  %1806 = vmatprep.mubr.bf16.mxu0 0
  %1807 = vmatmul.mubr.bf16.gmra.mrb[0].mxu0 %v620
  %v1808 = vpop.f32.mrb[0].mxu0
  %v1809 = vadd.f32 %v198, %v1808
  %v1810 = vpop.f32.mrb[0].mxu0
  %v1811 = vadd.f32 %v202, %v1810
  %v1812 = vpop.f32.mrb[0].mxu0
  %v1813 = vadd.f32 %v198, %v1812
  %v1814 = vpop.f32.mrb[0].mxu0
  %v1815 = vadd.f32 %v202, %v1814
  %1816 = vmatprep.mubr.bf16.mxu0 0
  %1817 = vmatmul.mubr.bf16.gmra.mrb[0].mxu0 %v623
  %v1818 = vpop.f32.mrb[0].mxu0
  %v1819 = vadd.f32 %v198, %v1818
  %v1820 = vpop.f32.mrb[0].mxu0
  %v1821 = vadd.f32 %v202, %v1820
  %v1822 = vpop.f32.mrb[0].mxu0
  %v1823 = vadd.f32 %v198, %v1822
  %v1824 = vpop.f32.mrb[0].mxu0
  %v1825 = vadd.f32 %v202, %v1824
  %1826 = vmatprep.mubr.bf16.mxu0 0
  %1827 = vmatmul.mubr.bf16.gmra.mrb[0].mxu0 %v626
  %v1828 = vpop.f32.mrb[0].mxu0
  %v1829 = vadd.f32 %v198, %v1828
  %v1830 = vpop.f32.mrb[0].mxu0
  %v1831 = vadd.f32 %v202, %v1830
  %v1832 = vpop.f32.mrb[0].mxu0
  %v1833 = vadd.f32 %v198, %v1832
  %v1834 = vpop.f32.mrb[0].mxu0
  %v1835 = vadd.f32 %v202, %v1834
  %1836 = vdwg.mxu0
  %1837 = vmatprep.subr.bf16.mxu0 %v508
  %1838 = vmatpush1.bf16.msra.mxu0 %v507
  %1839 = vmatprep.subr.bf16.mxu0 %v540
  %1840 = vmatpush1.bf16.msra.mxu0 %v539
  %1841 = vmatprep.subr.bf16.mxu0 0
  %1842 = vmatpush1.bf16.msra.mxu0 0
  %1843 = vmatprep.subr.bf16.mxu0 0
  %1844 = vmatpush1.bf16.msra.mxu0 0
  %1845 = vmatprep.subr.bf16.mxu0 0
  %1846 = vmatpush1.bf16.msra.mxu0 0
  %1847 = vmatprep.subr.bf16.mxu0 0
  %1848 = vmatpush1.bf16.msra.mxu0 0
  %1849 = vmatprep.subr.bf16.mxu0 0
  %1850 = vmatpush1.bf16.msra.mxu0 0
  %1851 = vmatprep.subr.bf16.mxu0 0
  %1852 = vmatpush1.bf16.msra.mxu0 0
  %1853 = vmatprep.subr.bf16.mxu0 0
  %1854 = vmatpush1.bf16.msra.mxu0 0
  %1855 = vmatprep.subr.bf16.mxu0 0
  %1856 = vmatpush1.bf16.msra.mxu0 0
  %1857 = vmatprep.subr.bf16.mxu0 0
  %1858 = vmatpush1.bf16.msra.mxu0 0
  %1859 = vmatprep.subr.bf16.mxu0 0
  %1860 = vmatpush1.bf16.msra.mxu0 0
  %1861 = vmatprep.subr.bf16.mxu0 0
  %1862 = vmatpush1.bf16.msra.mxu0 0
  %1863 = vmatprep.subr.bf16.mxu0 0
  %1864 = vmatpush1.bf16.msra.mxu0 0
  %1865 = vmatprep.subr.bf16.mxu0 0
  %1866 = vmatpush1.bf16.msra.mxu0 0
  %1867 = vmatprep.subr.bf16.mxu0 0
  %1868 = vmatpush1.bf16.msra.mxu0 0
  %1869 = vmatprep.mubr.bf16.mxu0 0
  %1870 = vmatmul.mubr.bf16.gmra.mrb[0].mxu0 %v611
  %v1871 = vpop.f32.mrb[0].mxu0
  %v1872 = vadd.f32 %v206, %v1871
  %v1873 = vpop.f32.mrb[0].mxu0
  %v1874 = vadd.f32 %v210, %v1873
  %v1875 = vpop.f32.mrb[0].mxu0
  %v1876 = vadd.f32 %v206, %v1875
  %v1877 = vpop.f32.mrb[0].mxu0
  %v1878 = vadd.f32 %v210, %v1877
  %1879 = vmatprep.mubr.bf16.mxu0 0
  %1880 = vmatmul.mubr.bf16.gmra.mrb[0].mxu0 %v614
  %v1881 = vpop.f32.mrb[0].mxu0
  %v1882 = vadd.f32 %v206, %v1881
  %v1883 = vpop.f32.mrb[0].mxu0
  %v1884 = vadd.f32 %v210, %v1883
  %v1885 = vpop.f32.mrb[0].mxu0
  %v1886 = vadd.f32 %v206, %v1885
  %v1887 = vpop.f32.mrb[0].mxu0
  %v1888 = vadd.f32 %v210, %v1887
  %1889 = vmatprep.mubr.bf16.mxu0 0
  %1890 = vmatmul.mubr.bf16.gmra.mrb[0].mxu0 %v617
  %v1891 = vpop.f32.mrb[0].mxu0
  %v1892 = vadd.f32 %v206, %v1891
  %v1893 = vpop.f32.mrb[0].mxu0
  %v1894 = vadd.f32 %v210, %v1893
  %v1895 = vpop.f32.mrb[0].mxu0
  %v1896 = vadd.f32 %v206, %v1895
  %v1897 = vpop.f32.mrb[0].mxu0
  %v1898 = vadd.f32 %v210, %v1897
  %1899 = vmatprep.mubr.bf16.mxu0 0
  %1900 = vmatmul.mubr.bf16.gmra.mrb[0].mxu0 %v620
  %v1901 = vpop.f32.mrb[0].mxu0
  %v1902 = vadd.f32 %v206, %v1901
  %v1903 = vpop.f32.mrb[0].mxu0
  %v1904 = vadd.f32 %v210, %v1903
  %v1905 = vpop.f32.mrb[0].mxu0
  %v1906 = vadd.f32 %v206, %v1905
  %v1907 = vpop.f32.mrb[0].mxu0
  %v1908 = vadd.f32 %v210, %v1907
  %1909 = vmatprep.mubr.bf16.mxu0 0
  %1910 = vmatmul.mubr.bf16.gmra.mrb[0].mxu0 %v623
  %v1911 = vpop.f32.mrb[0].mxu0
  %v1912 = vadd.f32 %v206, %v1911
  %v1913 = vpop.f32.mrb[0].mxu0
  %v1914 = vadd.f32 %v210, %v1913
  %v1915 = vpop.f32.mrb[0].mxu0
  %v1916 = vadd.f32 %v206, %v1915
  %v1917 = vpop.f32.mrb[0].mxu0
  %v1918 = vadd.f32 %v210, %v1917
  %1919 = vmatprep.mubr.bf16.mxu0 0
  %1920 = vmatmul.mubr.bf16.gmra.mrb[0].mxu0 %v626
  %v1921 = vpop.f32.mrb[0].mxu0
  %v1922 = vadd.f32 %v206, %v1921
  %v1923 = vpop.f32.mrb[0].mxu0
  %v1924 = vadd.f32 %v210, %v1923
  %v1925 = vpop.f32.mrb[0].mxu0
  %v1926 = vadd.f32 %v206, %v1925
  %v1927 = vpop.f32.mrb[0].mxu0
  %v1928 = vadd.f32 %v210, %v1927
  %1929 = vdwg.mxu0
  %1930 = vmatprep.subr.bf16.mxu0 %v510
  %1931 = vmatpush1.bf16.msra.mxu0 %v509
  %1932 = vmatprep.subr.bf16.mxu0 %v542
  %1933 = vmatpush1.bf16.msra.mxu0 %v541
  %1934 = vmatprep.subr.bf16.mxu0 0
  %1935 = vmatpush1.bf16.msra.mxu0 0
  %1936 = vmatprep.subr.bf16.mxu0 0
  %1937 = vmatpush1.bf16.msra.mxu0 0
  %1938 = vmatprep.subr.bf16.mxu0 0
  %1939 = vmatpush1.bf16.msra.mxu0 0
  %1940 = vmatprep.subr.bf16.mxu0 0
  %1941 = vmatpush1.bf16.msra.mxu0 0
  %1942 = vmatprep.subr.bf16.mxu0 0
  %1943 = vmatpush1.bf16.msra.mxu0 0
  %1944 = vmatprep.subr.bf16.mxu0 0
  %1945 = vmatpush1.bf16.msra.mxu0 0
  %1946 = vmatprep.subr.bf16.mxu0 0
  %1947 = vmatpush1.bf16.msra.mxu0 0
  %1948 = vmatprep.subr.bf16.mxu0 0
  %1949 = vmatpush1.bf16.msra.mxu0 0
  %1950 = vmatprep.subr.bf16.mxu0 0
  %1951 = vmatpush1.bf16.msra.mxu0 0
  %1952 = vmatprep.subr.bf16.mxu0 0
  %1953 = vmatpush1.bf16.msra.mxu0 0
  %1954 = vmatprep.subr.bf16.mxu0 0
  %1955 = vmatpush1.bf16.msra.mxu0 0
  %1956 = vmatprep.subr.bf16.mxu0 0
  %1957 = vmatpush1.bf16.msra.mxu0 0
  %1958 = vmatprep.subr.bf16.mxu0 0
  %1959 = vmatpush1.bf16.msra.mxu0 0
  %1960 = vmatprep.subr.bf16.mxu0 0
  %1961 = vmatpush1.bf16.msra.mxu0 0
  %1962 = vmatprep.mubr.bf16.mxu0 0
  %1963 = vmatmul.mubr.bf16.gmra.mrb[0].mxu0 %v611
  %v1964 = vpop.f32.mrb[0].mxu0
  %v1965 = vadd.f32 %v214, %v1964
  %v1966 = vpop.f32.mrb[0].mxu0
  %v1967 = vadd.f32 %v218, %v1966
  %v1968 = vpop.f32.mrb[0].mxu0
  %v1969 = vadd.f32 %v214, %v1968
  %v1970 = vpop.f32.mrb[0].mxu0
  %v1971 = vadd.f32 %v218, %v1970
  %1972 = vmatprep.mubr.bf16.mxu0 0
  %1973 = vmatmul.mubr.bf16.gmra.mrb[0].mxu0 %v614
  %v1974 = vpop.f32.mrb[0].mxu0
  %v1975 = vadd.f32 %v214, %v1974
  %v1976 = vpop.f32.mrb[0].mxu0
  %v1977 = vadd.f32 %v218, %v1976
  %v1978 = vpop.f32.mrb[0].mxu0
  %v1979 = vadd.f32 %v214, %v1978
  %v1980 = vpop.f32.mrb[0].mxu0
  %v1981 = vadd.f32 %v218, %v1980
  %1982 = vmatprep.mubr.bf16.mxu0 0
  %1983 = vmatmul.mubr.bf16.gmra.mrb[0].mxu0 %v617
  %v1984 = vpop.f32.mrb[0].mxu0
  %v1985 = vadd.f32 %v214, %v1984
  %v1986 = vpop.f32.mrb[0].mxu0
  %v1987 = vadd.f32 %v218, %v1986
  %v1988 = vpop.f32.mrb[0].mxu0
  %v1989 = vadd.f32 %v214, %v1988
  %v1990 = vpop.f32.mrb[0].mxu0
  %v1991 = vadd.f32 %v218, %v1990
  %1992 = vmatprep.mubr.bf16.mxu0 0
  %1993 = vmatmul.mubr.bf16.gmra.mrb[0].mxu0 %v620
  %v1994 = vpop.f32.mrb[0].mxu0
  %v1995 = vadd.f32 %v214, %v1994
  %v1996 = vpop.f32.mrb[0].mxu0
  %v1997 = vadd.f32 %v218, %v1996
  %v1998 = vpop.f32.mrb[0].mxu0
  %v1999 = vadd.f32 %v214, %v1998
  %v2000 = vpop.f32.mrb[0].mxu0
  %v2001 = vadd.f32 %v218, %v2000
  %2002 = vmatprep.mubr.bf16.mxu0 0
  %2003 = vmatmul.mubr.bf16.gmra.mrb[0].mxu0 %v623
  %v2004 = vpop.f32.mrb[0].mxu0
  %v2005 = vadd.f32 %v214, %v2004
  %v2006 = vpop.f32.mrb[0].mxu0
  %v2007 = vadd.f32 %v218, %v2006
  %v2008 = vpop.f32.mrb[0].mxu0
  %v2009 = vadd.f32 %v214, %v2008
  %v2010 = vpop.f32.mrb[0].mxu0
  %v2011 = vadd.f32 %v218, %v2010
  %2012 = vmatprep.mubr.bf16.mxu0 0
  %2013 = vmatmul.mubr.bf16.gmra.mrb[0].mxu0 %v626
  %v2014 = vpop.f32.mrb[0].mxu0
  %v2015 = vadd.f32 %v214, %v2014
  %v2016 = vpop.f32.mrb[0].mxu0
  %v2017 = vadd.f32 %v218, %v2016
  %v2018 = vpop.f32.mrb[0].mxu0
  %v2019 = vadd.f32 %v214, %v2018
  %v2020 = vpop.f32.mrb[0].mxu0
  %v2021 = vadd.f32 %v218, %v2020
  %2022 = vdwg.mxu0
  %2023 = vmatprep.subr.bf16.mxu0 %v512
  %2024 = vmatpush1.bf16.msra.mxu0 %v511
  %2025 = vmatprep.subr.bf16.mxu0 %v544
  %2026 = vmatpush1.bf16.msra.mxu0 %v543
  %2027 = vmatprep.subr.bf16.mxu0 0
  %2028 = vmatpush1.bf16.msra.mxu0 0
  %2029 = vmatprep.subr.bf16.mxu0 0
  %2030 = vmatpush1.bf16.msra.mxu0 0
  %2031 = vmatprep.subr.bf16.mxu0 0
  %2032 = vmatpush1.bf16.msra.mxu0 0
  %2033 = vmatprep.subr.bf16.mxu0 0
  %2034 = vmatpush1.bf16.msra.mxu0 0
  %2035 = vmatprep.subr.bf16.mxu0 0
  %2036 = vmatpush1.bf16.msra.mxu0 0
  %2037 = vmatprep.subr.bf16.mxu0 0
  %2038 = vmatpush1.bf16.msra.mxu0 0
  %2039 = vmatprep.subr.bf16.mxu0 0
  %2040 = vmatpush1.bf16.msra.mxu0 0
  %2041 = vmatprep.subr.bf16.mxu0 0
  %2042 = vmatpush1.bf16.msra.mxu0 0
  %2043 = vmatprep.subr.bf16.mxu0 0
  %2044 = vmatpush1.bf16.msra.mxu0 0
  %2045 = vmatprep.subr.bf16.mxu0 0
  %2046 = vmatpush1.bf16.msra.mxu0 0
  %2047 = vmatprep.subr.bf16.mxu0 0
  %2048 = vmatpush1.bf16.msra.mxu0 0
  %2049 = vmatprep.subr.bf16.mxu0 0
  %2050 = vmatpush1.bf16.msra.mxu0 0
  %2051 = vmatprep.subr.bf16.mxu0 0
  %2052 = vmatpush1.bf16.msra.mxu0 0
  %2053 = vmatprep.subr.bf16.mxu0 0
  %2054 = vmatpush1.bf16.msra.mxu0 0
  %2055 = vmatprep.mubr.bf16.mxu0 0
  %2056 = vmatmul.mubr.bf16.gmra.mrb[0].mxu0 %v611
  %v2057 = vpop.f32.mrb[0].mxu0
  %v2058 = vadd.f32 %v222, %v2057
  %v2059 = vpop.f32.mrb[0].mxu0
  %v2060 = vadd.f32 %v226, %v2059
  %v2061 = vpop.f32.mrb[0].mxu0
  %v2062 = vadd.f32 %v222, %v2061
  %v2063 = vpop.f32.mrb[0].mxu0
  %v2064 = vadd.f32 %v226, %v2063
  %2065 = vmatprep.mubr.bf16.mxu0 0
  %2066 = vmatmul.mubr.bf16.gmra.mrb[0].mxu0 %v614
  %v2067 = vpop.f32.mrb[0].mxu0
  %v2068 = vadd.f32 %v222, %v2067
  %v2069 = vpop.f32.mrb[0].mxu0
  %v2070 = vadd.f32 %v226, %v2069
  %v2071 = vpop.f32.mrb[0].mxu0
  %v2072 = vadd.f32 %v222, %v2071
  %v2073 = vpop.f32.mrb[0].mxu0
  %v2074 = vadd.f32 %v226, %v2073
  %2075 = vmatprep.mubr.bf16.mxu0 0
  %2076 = vmatmul.mubr.bf16.gmra.mrb[0].mxu0 %v617
  %v2077 = vpop.f32.mrb[0].mxu0
  %v2078 = vadd.f32 %v222, %v2077
  %v2079 = vpop.f32.mrb[0].mxu0
  %v2080 = vadd.f32 %v226, %v2079
  %v2081 = vpop.f32.mrb[0].mxu0
  %v2082 = vadd.f32 %v222, %v2081
  %v2083 = vpop.f32.mrb[0].mxu0
  %v2084 = vadd.f32 %v226, %v2083
  %2085 = vmatprep.mubr.bf16.mxu0 0
  %2086 = vmatmul.mubr.bf16.gmra.mrb[0].mxu0 %v620
  %v2087 = vpop.f32.mrb[0].mxu0
  %v2088 = vadd.f32 %v222, %v2087
  %v2089 = vpop.f32.mrb[0].mxu0
  %v2090 = vadd.f32 %v226, %v2089
  %v2091 = vpop.f32.mrb[0].mxu0
  %v2092 = vadd.f32 %v222, %v2091
  %v2093 = vpop.f32.mrb[0].mxu0
  %v2094 = vadd.f32 %v226, %v2093
  %2095 = vmatprep.mubr.bf16.mxu0 0
  %2096 = vmatmul.mubr.bf16.gmra.mrb[0].mxu0 %v623
  %v2097 = vpop.f32.mrb[0].mxu0
  %v2098 = vadd.f32 %v222, %v2097
  %v2099 = vpop.f32.mrb[0].mxu0
  %v2100 = vadd.f32 %v226, %v2099
  %v2101 = vpop.f32.mrb[0].mxu0
  %v2102 = vadd.f32 %v222, %v2101
  %v2103 = vpop.f32.mrb[0].mxu0
  %v2104 = vadd.f32 %v226, %v2103
  %2105 = vmatprep.mubr.bf16.mxu0 0
  %2106 = vmatmul.mubr.bf16.gmra.mrb[0].mxu0 %v626
  %v2107 = vpop.f32.mrb[0].mxu0
  %v2108 = vadd.f32 %v222, %v2107
  %v2109 = vpop.f32.mrb[0].mxu0
  %v2110 = vadd.f32 %v226, %v2109
  %v2111 = vpop.f32.mrb[0].mxu0
  %v2112 = vadd.f32 %v222, %v2111
  %v2113 = vpop.f32.mrb[0].mxu0
  %v2114 = vadd.f32 %v226, %v2113
  %2115 = vdwg.mxu0
  %2116 = vst [vmem:[%s3] sm:$0xff] %v663
  %2117 = vst [vmem:[%s3 + $0x8] sm:$0xff] %v665
  %2118 = vst [vmem:[%s3 + $0x10] sm:$0xff] %v756
  %2119 = vst [vmem:[%s3 + $0x18] sm:$0xff] %v758
  %2120 = vst [vmem:[%s3 + $0x20] sm:$0xff] %v849
  %2121 = vst [vmem:[%s3 + $0x28] sm:$0xff] %v851
  %2122 = vst [vmem:[%s3 + $0x30] sm:$0xff] %v942
  %2123 = vst [vmem:[%s3 + $0x38] sm:$0xff] %v944
  %2124 = vst [vmem:[%s3 + $0x40] sm:$0xff] %v1035
  %2125 = vst [vmem:[%s3 + $0x48] sm:$0xff] %v1037
  %2126 = vst [vmem:[%s3 + $0x50] sm:$0xff] %v1128
  %2127 = vst [vmem:[%s3 + $0x58] sm:$0xff] %v1130
  %2128 = vst [vmem:[%s3 + $0x60] sm:$0xff] %v1221
  %2129 = vst [vmem:[%s3 + $0x68] sm:$0xff] %v1223
  %2130 = vst [vmem:[%s3 + $0x70] sm:$0xff] %v1314
  %2131 = vst [vmem:[%s3 + $0x78] sm:$0xff] %v1316
  %2132 = vst [vmem:[%s3 + $0x80] sm:$0xff] %v1407
  %2133 = vst [vmem:[%s3 + $0x88] sm:$0xff] %v1409
  %2134 = vst [vmem:[%s3 + $0x90] sm:$0xff] %v1500
  %2135 = vst [vmem:[%s3 + $0x98] sm:$0xff] %v1502
  %2136 = vst [vmem:[%s3 + $0xa0] sm:$0xff] %v1593
  %2137 = vst [vmem:[%s3 + $0xa8] sm:$0xff] %v1595
  %2138 = vst [vmem:[%s3 + $0xb0] sm:$0xff] %v1686
  %2139 = vst [vmem:[%s3 + $0xb8] sm:$0xff] %v1688
  %2140 = vst [vmem:[%s3 + $0xc0] sm:$0xff] %v1779
  %2141 = vst [vmem:[%s3 + $0xc8] sm:$0xff] %v1781
  %2142 = vst [vmem:[%s3 + $0xd0] sm:$0xff] %v1872
  %2143 = vst [vmem:[%s3 + $0xd8] sm:$0xff] %v1874
  %2144 = vst [vmem:[%s3 + $0xe0] sm:$0xff] %v1965
  %2145 = vst [vmem:[%s3 + $0xe8] sm:$0xff] %v1967
  %2146 = vst [vmem:[%s3 + $0xf0] sm:$0xff] %v2058
  %2147 = vst [vmem:[%s3 + $0xf8] sm:$0xff] %v2060
  %2148 = vst [vmem:[%s3 + $0x100] sm:$0xff] %v667
  %2149 = vst [vmem:[%s3 + $0x108] sm:$0xff] %v669
  %2150 = vst [vmem:[%s3 + $0x110] sm:$0xff] %v760
  %2151 = vst [vmem:[%s3 + $0x118] sm:$0xff] %v762
  %2152 = vst [vmem:[%s3 + $0x120] sm:$0xff] %v853
  %2153 = vst [vmem:[%s3 + $0x128] sm:$0xff] %v855
  %2154 = vst [vmem:[%s3 + $0x130] sm:$0xff] %v946
  %2155 = vst [vmem:[%s3 + $0x138] sm:$0xff] %v948
  %2156 = vst [vmem:[%s3 + $0x140] sm:$0xff] %v1039
  %2157 = vst [vmem:[%s3 + $0x148] sm:$0xff] %v1041
  %2158 = vst [vmem:[%s3 + $0x150] sm:$0xff] %v1132
  %2159 = vst [vmem:[%s3 + $0x158] sm:$0xff] %v1134
  %2160 = vst [vmem:[%s3 + $0x160] sm:$0xff] %v1225
  %2161 = vst [vmem:[%s3 + $0x168] sm:$0xff] %v1227
  %2162 = vst [vmem:[%s3 + $0x170] sm:$0xff] %v1318
  %2163 = vst [vmem:[%s3 + $0x178] sm:$0xff] %v1320
  %2164 = vst [vmem:[%s3 + $0x180] sm:$0xff] %v1411
  %2165 = vst [vmem:[%s3 + $0x188] sm:$0xff] %v1413
  %2166 = vst [vmem:[%s3 + $0x190] sm:$0xff] %v1504
  %2167 = vst [vmem:[%s3 + $0x198] sm:$0xff] %v1506
  %2168 = vst [vmem:[%s3 + $0x1a0] sm:$0xff] %v1597
  %2169 = vst [vmem:[%s3 + $0x1a8] sm:$0xff] %v1599
  %2170 = vst [vmem:[%s3 + $0x1b0] sm:$0xff] %v1690
  %2171 = vst [vmem:[%s3 + $0x1b8] sm:$0xff] %v1692
  %2172 = vst [vmem:[%s3 + $0x1c0] sm:$0xff] %v1783
  %2173 = vst [vmem:[%s3 + $0x1c8] sm:$0xff] %v1785
  %2174 = vst [vmem:[%s3 + $0x1d0] sm:$0xff] %v1876
  %2175 = vst [vmem:[%s3 + $0x1d8] sm:$0xff] %v1878
  %2176 = vst [vmem:[%s3 + $0x1e0] sm:$0xff] %v1969
  %2177 = vst [vmem:[%s3 + $0x1e8] sm:$0xff] %v1971
  %2178 = vst [vmem:[%s3 + $0x1f0] sm:$0xff] %v2062
  %2179 = vst [vmem:[%s3 + $0x1f8] sm:$0xff] %v2064
  %2180 = vst [vmem:[%s3 + $0x200] sm:$0xff] %v673
  %2181 = vst [vmem:[%s3 + $0x208] sm:$0xff] %v675
  %2182 = vst [vmem:[%s3 + $0x210] sm:$0xff] %v766
  %2183 = vst [vmem:[%s3 + $0x218] sm:$0xff] %v768
  %2184 = vst [vmem:[%s3 + $0x220] sm:$0xff] %v859
  %2185 = vst [vmem:[%s3 + $0x228] sm:$0xff] %v861
  %2186 = vst [vmem:[%s3 + $0x230] sm:$0xff] %v952
  %2187 = vst [vmem:[%s3 + $0x238] sm:$0xff] %v954
  %2188 = vst [vmem:[%s3 + $0x240] sm:$0xff] %v1045
  %2189 = vst [vmem:[%s3 + $0x248] sm:$0xff] %v1047
  %2190 = vst [vmem:[%s3 + $0x250] sm:$0xff] %v1138
  %2191 = vst [vmem:[%s3 + $0x258] sm:$0xff] %v1140
  %2192 = vst [vmem:[%s3 + $0x260] sm:$0xff] %v1231
  %2193 = vst [vmem:[%s3 + $0x268] sm:$0xff] %v1233
  %2194 = vst [vmem:[%s3 + $0x270] sm:$0xff] %v1324
  %2195 = vst [vmem:[%s3 + $0x278] sm:$0xff] %v1326
  %2196 = vst [vmem:[%s3 + $0x280] sm:$0xff] %v1417
  %2197 = vst [vmem:[%s3 + $0x288] sm:$0xff] %v1419
  %2198 = vst [vmem:[%s3 + $0x290] sm:$0xff] %v1510
  %2199 = vst [vmem:[%s3 + $0x298] sm:$0xff] %v1512
  %2200 = vst [vmem:[%s3 + $0x2a0] sm:$0xff] %v1603
  %2201 = vst [vmem:[%s3 + $0x2a8] sm:$0xff] %v1605
  %2202 = vst [vmem:[%s3 + $0x2b0] sm:$0xff] %v1696
  %2203 = vst [vmem:[%s3 + $0x2b8] sm:$0xff] %v1698
  %2204 = vst [vmem:[%s3 + $0x2c0] sm:$0xff] %v1789
  %2205 = vst [vmem:[%s3 + $0x2c8] sm:$0xff] %v1791
  %2206 = vst [vmem:[%s3 + $0x2d0] sm:$0xff] %v1882
  %2207 = vst [vmem:[%s3 + $0x2d8] sm:$0xff] %v1884
  %2208 = vst [vmem:[%s3 + $0x2e0] sm:$0xff] %v1975
  %2209 = vst [vmem:[%s3 + $0x2e8] sm:$0xff] %v1977
  %2210 = vst [vmem:[%s3 + $0x2f0] sm:$0xff] %v2068
  %2211 = vst [vmem:[%s3 + $0x2f8] sm:$0xff] %v2070
  %2212 = vst [vmem:[%s3 + $0x300] sm:$0xff] %v677
  %2213 = vst [vmem:[%s3 + $0x308] sm:$0xff] %v679
  %2214 = vst [vmem:[%s3 + $0x310] sm:$0xff] %v770
  %2215 = vst [vmem:[%s3 + $0x318] sm:$0xff] %v772
  %2216 = vst [vmem:[%s3 + $0x320] sm:$0xff] %v863
  %2217 = vst [vmem:[%s3 + $0x328] sm:$0xff] %v865
  %2218 = vst [vmem:[%s3 + $0x330] sm:$0xff] %v956
  %2219 = vst [vmem:[%s3 + $0x338] sm:$0xff] %v958
  %2220 = vst [vmem:[%s3 + $0x340] sm:$0xff] %v1049
  %2221 = vst [vmem:[%s3 + $0x348] sm:$0xff] %v1051
  %2222 = vst [vmem:[%s3 + $0x350] sm:$0xff] %v1142
  %2223 = vst [vmem:[%s3 + $0x358] sm:$0xff] %v1144
  %2224 = vst [vmem:[%s3 + $0x360] sm:$0xff] %v1235
  %2225 = vst [vmem:[%s3 + $0x368] sm:$0xff] %v1237
  %2226 = vst [vmem:[%s3 + $0x370] sm:$0xff] %v1328
  %2227 = vst [vmem:[%s3 + $0x378] sm:$0xff] %v1330
  %2228 = vst [vmem:[%s3 + $0x380] sm:$0xff] %v1421
  %2229 = vst [vmem:[%s3 + $0x388] sm:$0xff] %v1423
  %2230 = vst [vmem:[%s3 + $0x390] sm:$0xff] %v1514
  %2231 = vst [vmem:[%s3 + $0x398] sm:$0xff] %v1516
  %2232 = vst [vmem:[%s3 + $0x3a0] sm:$0xff] %v1607
  %2233 = vst [vmem:[%s3 + $0x3a8] sm:$0xff] %v1609
  %2234 = vst [vmem:[%s3 + $0x3b0] sm:$0xff] %v1700
  %2235 = vst [vmem:[%s3 + $0x3b8] sm:$0xff] %v1702
  %2236 = vst [vmem:[%s3 + $0x3c0] sm:$0xff] %v1793
  %2237 = vst [vmem:[%s3 + $0x3c8] sm:$0xff] %v1795
  %2238 = vst [vmem:[%s3 + $0x3d0] sm:$0xff] %v1886
  %2239 = vst [vmem:[%s3 + $0x3d8] sm:$0xff] %v1888
  %2240 = vst [vmem:[%s3 + $0x3e0] sm:$0xff] %v1979
  %2241 = vst [vmem:[%s3 + $0x3e8] sm:$0xff] %v1981
  %2242 = vst [vmem:[%s3 + $0x3f0] sm:$0xff] %v2072
  %2243 = vst [vmem:[%s3 + $0x3f8] sm:$0xff] %v2074
  %2244 = vst [vmem:[%s3 + $0x400] sm:$0xff] %v683
  %2245 = vst [vmem:[%s3 + $0x408] sm:$0xff] %v685
  %2246 = vst [vmem:[%s3 + $0x410] sm:$0xff] %v776
  %2247 = vst [vmem:[%s3 + $0x418] sm:$0xff] %v778
  %2248 = vst [vmem:[%s3 + $0x420] sm:$0xff] %v869
  %2249 = vst [vmem:[%s3 + $0x428] sm:$0xff] %v871
  %2250 = vst [vmem:[%s3 + $0x430] sm:$0xff] %v962
  %2251 = vst [vmem:[%s3 + $0x438] sm:$0xff] %v964
  %2252 = vst [vmem:[%s3 + $0x440] sm:$0xff] %v1055
  %2253 = vst [vmem:[%s3 + $0x448] sm:$0xff] %v1057
  %2254 = vst [vmem:[%s3 + $0x450] sm:$0xff] %v1148
  %2255 = vst [vmem:[%s3 + $0x458] sm:$0xff] %v1150
  %2256 = vst [vmem:[%s3 + $0x460] sm:$0xff] %v1241
  %2257 = vst [vmem:[%s3 + $0x468] sm:$0xff] %v1243
  %2258 = vst [vmem:[%s3 + $0x470] sm:$0xff] %v1334
  %2259 = vst [vmem:[%s3 + $0x478] sm:$0xff] %v1336
  %2260 = vst [vmem:[%s3 + $0x480] sm:$0xff] %v1427
  %2261 = vst [vmem:[%s3 + $0x488] sm:$0xff] %v1429
  %2262 = vst [vmem:[%s3 + $0x490] sm:$0xff] %v1520
  %2263 = vst [vmem:[%s3 + $0x498] sm:$0xff] %v1522
  %2264 = vst [vmem:[%s3 + $0x4a0] sm:$0xff] %v1613
  %2265 = vst [vmem:[%s3 + $0x4a8] sm:$0xff] %v1615
  %2266 = vst [vmem:[%s3 + $0x4b0] sm:$0xff] %v1706
  %2267 = vst [vmem:[%s3 + $0x4b8] sm:$0xff] %v1708
  %2268 = vst [vmem:[%s3 + $0x4c0] sm:$0xff] %v1799
  %2269 = vst [vmem:[%s3 + $0x4c8] sm:$0xff] %v1801
  %2270 = vst [vmem:[%s3 + $0x4d0] sm:$0xff] %v1892
  %2271 = vst [vmem:[%s3 + $0x4d8] sm:$0xff] %v1894
  %2272 = vst [vmem:[%s3 + $0x4e0] sm:$0xff] %v1985
  %2273 = vst [vmem:[%s3 + $0x4e8] sm:$0xff] %v1987
  %2274 = vst [vmem:[%s3 + $0x4f0] sm:$0xff] %v2078
  %2275 = vst [vmem:[%s3 + $0x4f8] sm:$0xff] %v2080
  %2276 = vst [vmem:[%s3 + $0x500] sm:$0xff] %v687
  %2277 = vst [vmem:[%s3 + $0x508] sm:$0xff] %v689
  %2278 = vst [vmem:[%s3 + $0x510] sm:$0xff] %v780
  %2279 = vst [vmem:[%s3 + $0x518] sm:$0xff] %v782
  %2280 = vst [vmem:[%s3 + $0x520] sm:$0xff] %v873
  %2281 = vst [vmem:[%s3 + $0x528] sm:$0xff] %v875
  %2282 = vst [vmem:[%s3 + $0x530] sm:$0xff] %v966
  %2283 = vst [vmem:[%s3 + $0x538] sm:$0xff] %v968
  %2284 = vst [vmem:[%s3 + $0x540] sm:$0xff] %v1059
  %2285 = vst [vmem:[%s3 + $0x548] sm:$0xff] %v1061
  %2286 = vst [vmem:[%s3 + $0x550] sm:$0xff] %v1152
  %2287 = vst [vmem:[%s3 + $0x558] sm:$0xff] %v1154
  %2288 = vst [vmem:[%s3 + $0x560] sm:$0xff] %v1245
  %2289 = vst [vmem:[%s3 + $0x568] sm:$0xff] %v1247
  %2290 = vst [vmem:[%s3 + $0x570] sm:$0xff] %v1338
  %2291 = vst [vmem:[%s3 + $0x578] sm:$0xff] %v1340
  %2292 = vst [vmem:[%s3 + $0x580] sm:$0xff] %v1431
  %2293 = vst [vmem:[%s3 + $0x588] sm:$0xff] %v1433
  %2294 = vst [vmem:[%s3 + $0x590] sm:$0xff] %v1524
  %2295 = vst [vmem:[%s3 + $0x598] sm:$0xff] %v1526
  %2296 = vst [vmem:[%s3 + $0x5a0] sm:$0xff] %v1617
  %2297 = vst [vmem:[%s3 + $0x5a8] sm:$0xff] %v1619
  %2298 = vst [vmem:[%s3 + $0x5b0] sm:$0xff] %v1710
  %2299 = vst [vmem:[%s3 + $0x5b8] sm:$0xff] %v1712
  %2300 = vst [vmem:[%s3 + $0x5c0] sm:$0xff] %v1803
  %2301 = vst [vmem:[%s3 + $0x5c8] sm:$0xff] %v1805
  %2302 = vst [vmem:[%s3 + $0x5d0] sm:$0xff] %v1896
  %2303 = vst [vmem:[%s3 + $0x5d8] sm:$0xff] %v1898
  %2304 = vst [vmem:[%s3 + $0x5e0] sm:$0xff] %v1989
  %2305 = vst [vmem:[%s3 + $0x5e8] sm:$0xff] %v1991
  %2306 = vst [vmem:[%s3 + $0x5f0] sm:$0xff] %v2082
  %2307 = vst [vmem:[%s3 + $0x5f8] sm:$0xff] %v2084
  %2308 = vst [vmem:[%s3 + $0x600] sm:$0xff] %v693
  %2309 = vst [vmem:[%s3 + $0x608] sm:$0xff] %v695
  %2310 = vst [vmem:[%s3 + $0x610] sm:$0xff] %v786
  %2311 = vst [vmem:[%s3 + $0x618] sm:$0xff] %v788
  %2312 = vst [vmem:[%s3 + $0x620] sm:$0xff] %v879
  %2313 = vst [vmem:[%s3 + $0x628] sm:$0xff] %v881
  %2314 = vst [vmem:[%s3 + $0x630] sm:$0xff] %v972
  %2315 = vst [vmem:[%s3 + $0x638] sm:$0xff] %v974
  %2316 = vst [vmem:[%s3 + $0x640] sm:$0xff] %v1065
  %2317 = vst [vmem:[%s3 + $0x648] sm:$0xff] %v1067
  %2318 = vst [vmem:[%s3 + $0x650] sm:$0xff] %v1158
  %2319 = vst [vmem:[%s3 + $0x658] sm:$0xff] %v1160
  %2320 = vst [vmem:[%s3 + $0x660] sm:$0xff] %v1251
  %2321 = vst [vmem:[%s3 + $0x668] sm:$0xff] %v1253
  %2322 = vst [vmem:[%s3 + $0x670] sm:$0xff] %v1344
  %2323 = vst [vmem:[%s3 + $0x678] sm:$0xff] %v1346
  %2324 = vst [vmem:[%s3 + $0x680] sm:$0xff] %v1437
  %2325 = vst [vmem:[%s3 + $0x688] sm:$0xff] %v1439
  %2326 = vst [vmem:[%s3 + $0x690] sm:$0xff] %v1530
  %2327 = vst [vmem:[%s3 + $0x698] sm:$0xff] %v1532
  %2328 = vst [vmem:[%s3 + $0x6a0] sm:$0xff] %v1623
  %2329 = vst [vmem:[%s3 + $0x6a8] sm:$0xff] %v1625
  %2330 = vst [vmem:[%s3 + $0x6b0] sm:$0xff] %v1716
  %2331 = vst [vmem:[%s3 + $0x6b8] sm:$0xff] %v1718
  %2332 = vst [vmem:[%s3 + $0x6c0] sm:$0xff] %v1809
  %2333 = vst [vmem:[%s3 + $0x6c8] sm:$0xff] %v1811
  %2334 = vst [vmem:[%s3 + $0x6d0] sm:$0xff] %v1902
  %2335 = vst [vmem:[%s3 + $0x6d8] sm:$0xff] %v1904
  %2336 = vst [vmem:[%s3 + $0x6e0] sm:$0xff] %v1995
  %2337 = vst [vmem:[%s3 + $0x6e8] sm:$0xff] %v1997
  %2338 = vst [vmem:[%s3 + $0x6f0] sm:$0xff] %v2088
  %2339 = vst [vmem:[%s3 + $0x6f8] sm:$0xff] %v2090
  %2340 = vst [vmem:[%s3 + $0x700] sm:$0xff] %v697
  %2341 = vst [vmem:[%s3 + $0x708] sm:$0xff] %v699
  %2342 = vst [vmem:[%s3 + $0x710] sm:$0xff] %v790
  %2343 = vst [vmem:[%s3 + $0x718] sm:$0xff] %v792
  %2344 = vst [vmem:[%s3 + $0x720] sm:$0xff] %v883
  %2345 = vst [vmem:[%s3 + $0x728] sm:$0xff] %v885
  %2346 = vst [vmem:[%s3 + $0x730] sm:$0xff] %v976
  %2347 = vst [vmem:[%s3 + $0x738] sm:$0xff] %v978
  %2348 = vst [vmem:[%s3 + $0x740] sm:$0xff] %v1069
  %2349 = vst [vmem:[%s3 + $0x748] sm:$0xff] %v1071
  %2350 = vst [vmem:[%s3 + $0x750] sm:$0xff] %v1162
  %2351 = vst [vmem:[%s3 + $0x758] sm:$0xff] %v1164
  %2352 = vst [vmem:[%s3 + $0x760] sm:$0xff] %v1255
  %2353 = vst [vmem:[%s3 + $0x768] sm:$0xff] %v1257
  %2354 = vst [vmem:[%s3 + $0x770] sm:$0xff] %v1348
  %2355 = vst [vmem:[%s3 + $0x778] sm:$0xff] %v1350
  %2356 = vst [vmem:[%s3 + $0x780] sm:$0xff] %v1441
  %2357 = vst [vmem:[%s3 + $0x788] sm:$0xff] %v1443
  %2358 = vst [vmem:[%s3 + $0x790] sm:$0xff] %v1534
  %2359 = vst [vmem:[%s3 + $0x798] sm:$0xff] %v1536
  %2360 = vst [vmem:[%s3 + $0x7a0] sm:$0xff] %v1627
  %2361 = vst [vmem:[%s3 + $0x7a8] sm:$0xff] %v1629
  %2362 = vst [vmem:[%s3 + $0x7b0] sm:$0xff] %v1720
  %2363 = vst [vmem:[%s3 + $0x7b8] sm:$0xff] %v1722
  %2364 = vst [vmem:[%s3 + $0x7c0] sm:$0xff] %v1813
  %2365 = vst [vmem:[%s3 + $0x7c8] sm:$0xff] %v1815
  %2366 = vst [vmem:[%s3 + $0x7d0] sm:$0xff] %v1906
  %2367 = vst [vmem:[%s3 + $0x7d8] sm:$0xff] %v1908
  %2368 = vst [vmem:[%s3 + $0x7e0] sm:$0xff] %v1999
  %2369 = vst [vmem:[%s3 + $0x7e8] sm:$0xff] %v2001
  %2370 = vst [vmem:[%s3 + $0x7f0] sm:$0xff] %v2092
  %2371 = vst [vmem:[%s3 + $0x7f8] sm:$0xff] %v2094
  %2372 = vst [vmem:[%s3 + $0x800] sm:$0xff] %v703
  %2373 = vst [vmem:[%s3 + $0x808] sm:$0xff] %v705
  %2374 = vst [vmem:[%s3 + $0x810] sm:$0xff] %v796
  %2375 = vst [vmem:[%s3 + $0x818] sm:$0xff] %v798
  %2376 = vst [vmem:[%s3 + $0x820] sm:$0xff] %v889
  %2377 = vst [vmem:[%s3 + $0x828] sm:$0xff] %v891
  %2378 = vst [vmem:[%s3 + $0x830] sm:$0xff] %v982
  %2379 = vst [vmem:[%s3 + $0x838] sm:$0xff] %v984
  %2380 = vst [vmem:[%s3 + $0x840] sm:$0xff] %v1075
  %2381 = vst [vmem:[%s3 + $0x848] sm:$0xff] %v1077
  %2382 = vst [vmem:[%s3 + $0x850] sm:$0xff] %v1168
  %2383 = vst [vmem:[%s3 + $0x858] sm:$0xff] %v1170
  %2384 = vst [vmem:[%s3 + $0x860] sm:$0xff] %v1261
  %2385 = vst [vmem:[%s3 + $0x868] sm:$0xff] %v1263
  %2386 = vst [vmem:[%s3 + $0x870] sm:$0xff] %v1354
  %2387 = vst [vmem:[%s3 + $0x878] sm:$0xff] %v1356
  %2388 = vst [vmem:[%s3 + $0x880] sm:$0xff] %v1447
  %2389 = vst [vmem:[%s3 + $0x888] sm:$0xff] %v1449
  %2390 = vst [vmem:[%s3 + $0x890] sm:$0xff] %v1540
  %2391 = vst [vmem:[%s3 + $0x898] sm:$0xff] %v1542
  %2392 = vst [vmem:[%s3 + $0x8a0] sm:$0xff] %v1633
  %2393 = vst [vmem:[%s3 + $0x8a8] sm:$0xff] %v1635
  %2394 = vst [vmem:[%s3 + $0x8b0] sm:$0xff] %v1726
  %2395 = vst [vmem:[%s3 + $0x8b8] sm:$0xff] %v1728
  %2396 = vst [vmem:[%s3 + $0x8c0] sm:$0xff] %v1819
  %2397 = vst [vmem:[%s3 + $0x8c8] sm:$0xff] %v1821
  %2398 = vst [vmem:[%s3 + $0x8d0] sm:$0xff] %v1912
  %2399 = vst [vmem:[%s3 + $0x8d8] sm:$0xff] %v1914
  %2400 = vst [vmem:[%s3 + $0x8e0] sm:$0xff] %v2005
  %2401 = vst [vmem:[%s3 + $0x8e8] sm:$0xff] %v2007
  %2402 = vst [vmem:[%s3 + $0x8f0] sm:$0xff] %v2098
  %2403 = vst [vmem:[%s3 + $0x8f8] sm:$0xff] %v2100
  %2404 = vst [vmem:[%s3 + $0x900] sm:$0xff] %v707
  %2405 = vst [vmem:[%s3 + $0x908] sm:$0xff] %v709
  %2406 = vst [vmem:[%s3 + $0x910] sm:$0xff] %v800
  %2407 = vst [vmem:[%s3 + $0x918] sm:$0xff] %v802
  %2408 = vst [vmem:[%s3 + $0x920] sm:$0xff] %v893
  %2409 = vst [vmem:[%s3 + $0x928] sm:$0xff] %v895
  %2410 = vst [vmem:[%s3 + $0x930] sm:$0xff] %v986
  %2411 = vst [vmem:[%s3 + $0x938] sm:$0xff] %v988
  %2412 = vst [vmem:[%s3 + $0x940] sm:$0xff] %v1079
  %2413 = vst [vmem:[%s3 + $0x948] sm:$0xff] %v1081
  %2414 = vst [vmem:[%s3 + $0x950] sm:$0xff] %v1172
  %2415 = vst [vmem:[%s3 + $0x958] sm:$0xff] %v1174
  %2416 = vst [vmem:[%s3 + $0x960] sm:$0xff] %v1265
  %2417 = vst [vmem:[%s3 + $0x968] sm:$0xff] %v1267
  %2418 = vst [vmem:[%s3 + $0x970] sm:$0xff] %v1358
  %2419 = vst [vmem:[%s3 + $0x978] sm:$0xff] %v1360
  %2420 = vst [vmem:[%s3 + $0x980] sm:$0xff] %v1451
  %2421 = vst [vmem:[%s3 + $0x988] sm:$0xff] %v1453
  %2422 = vst [vmem:[%s3 + $0x990] sm:$0xff] %v1544
  %2423 = vst [vmem:[%s3 + $0x998] sm:$0xff] %v1546
  %2424 = vst [vmem:[%s3 + $0x9a0] sm:$0xff] %v1637
  %2425 = vst [vmem:[%s3 + $0x9a8] sm:$0xff] %v1639
  %2426 = vst [vmem:[%s3 + $0x9b0] sm:$0xff] %v1730
  %2427 = vst [vmem:[%s3 + $0x9b8] sm:$0xff] %v1732
  %2428 = vst [vmem:[%s3 + $0x9c0] sm:$0xff] %v1823
  %2429 = vst [vmem:[%s3 + $0x9c8] sm:$0xff] %v1825
  %2430 = vst [vmem:[%s3 + $0x9d0] sm:$0xff] %v1916
  %2431 = vst [vmem:[%s3 + $0x9d8] sm:$0xff] %v1918
  %2432 = vst [vmem:[%s3 + $0x9e0] sm:$0xff] %v2009
  %2433 = vst [vmem:[%s3 + $0x9e8] sm:$0xff] %v2011
  %2434 = vst [vmem:[%s3 + $0x9f0] sm:$0xff] %v2102
  %2435 = vst [vmem:[%s3 + $0x9f8] sm:$0xff] %v2104
  %2436 = vst [vmem:[%s3 + $0xa00] sm:$0xff] %v713
  %2437 = vst [vmem:[%s3 + $0xa08] sm:$0xff] %v715
  %2438 = vst [vmem:[%s3 + $0xa10] sm:$0xff] %v806
  %2439 = vst [vmem:[%s3 + $0xa18] sm:$0xff] %v808
  %2440 = vst [vmem:[%s3 + $0xa20] sm:$0xff] %v899
  %2441 = vst [vmem:[%s3 + $0xa28] sm:$0xff] %v901
  %2442 = vst [vmem:[%s3 + $0xa30] sm:$0xff] %v992
  %2443 = vst [vmem:[%s3 + $0xa38] sm:$0xff] %v994
  %2444 = vst [vmem:[%s3 + $0xa40] sm:$0xff] %v1085
  %2445 = vst [vmem:[%s3 + $0xa48] sm:$0xff] %v1087
  %2446 = vst [vmem:[%s3 + $0xa50] sm:$0xff] %v1178
  %2447 = vst [vmem:[%s3 + $0xa58] sm:$0xff] %v1180
  %2448 = vst [vmem:[%s3 + $0xa60] sm:$0xff] %v1271
  %2449 = vst [vmem:[%s3 + $0xa68] sm:$0xff] %v1273
  %2450 = vst [vmem:[%s3 + $0xa70] sm:$0xff] %v1364
  %2451 = vst [vmem:[%s3 + $0xa78] sm:$0xff] %v1366
  %2452 = vst [vmem:[%s3 + $0xa80] sm:$0xff] %v1457
  %2453 = vst [vmem:[%s3 + $0xa88] sm:$0xff] %v1459
  %2454 = vst [vmem:[%s3 + $0xa90] sm:$0xff] %v1550
  %2455 = vst [vmem:[%s3 + $0xa98] sm:$0xff] %v1552
  %2456 = vst [vmem:[%s3 + $0xaa0] sm:$0xff] %v1643
  %2457 = vst [vmem:[%s3 + $0xaa8] sm:$0xff] %v1645
  %2458 = vst [vmem:[%s3 + $0xab0] sm:$0xff] %v1736
  %2459 = vst [vmem:[%s3 + $0xab8] sm:$0xff] %v1738
  %2460 = vst [vmem:[%s3 + $0xac0] sm:$0xff] %v1829
  %2461 = vst [vmem:[%s3 + $0xac8] sm:$0xff] %v1831
  %2462 = vst [vmem:[%s3 + $0xad0] sm:$0xff] %v1922
  %2463 = vst [vmem:[%s3 + $0xad8] sm:$0xff] %v1924
  %2464 = vst [vmem:[%s3 + $0xae0] sm:$0xff] %v2015
  %2465 = vst [vmem:[%s3 + $0xae8] sm:$0xff] %v2017
  %2466 = vst [vmem:[%s3 + $0xaf0] sm:$0xff] %v2108
  %2467 = vst [vmem:[%s3 + $0xaf8] sm:$0xff] %v2110
  %2468 = vst [vmem:[%s3 + $0xb00] sm:$0xff] %v717
  %2469 = vst [vmem:[%s3 + $0xb08] sm:$0xff] %v719
  %2470 = vst [vmem:[%s3 + $0xb10] sm:$0xff] %v810
  %2471 = vst [vmem:[%s3 + $0xb18] sm:$0xff] %v812
  %2472 = vst [vmem:[%s3 + $0xb20] sm:$0xff] %v903
  %2473 = vst [vmem:[%s3 + $0xb28] sm:$0xff] %v905
  %2474 = vst [vmem:[%s3 + $0xb30] sm:$0xff] %v996
  %2475 = vst [vmem:[%s3 + $0xb38] sm:$0xff] %v998
  %2476 = vst [vmem:[%s3 + $0xb40] sm:$0xff] %v1089
  %2477 = vst [vmem:[%s3 + $0xb48] sm:$0xff] %v1091
  %2478 = vst [vmem:[%s3 + $0xb50] sm:$0xff] %v1182
  %2479 = vst [vmem:[%s3 + $0xb58] sm:$0xff] %v1184
  %2480 = vst [vmem:[%s3 + $0xb60] sm:$0xff] %v1275
  %2481 = vst [vmem:[%s3 + $0xb68] sm:$0xff] %v1277
  %2482 = vst [vmem:[%s3 + $0xb70] sm:$0xff] %v1368
  %2483 = vst [vmem:[%s3 + $0xb78] sm:$0xff] %v1370
  %2484 = vst [vmem:[%s3 + $0xb80] sm:$0xff] %v1461
  %2485 = vst [vmem:[%s3 + $0xb88] sm:$0xff] %v1463
  %2486 = vst [vmem:[%s3 + $0xb90] sm:$0xff] %v1554
  %2487 = vst [vmem:[%s3 + $0xb98] sm:$0xff] %v1556
  %2488 = vst [vmem:[%s3 + $0xba0] sm:$0xff] %v1647
  %2489 = vst [vmem:[%s3 + $0xba8] sm:$0xff] %v1649
  %2490 = vst [vmem:[%s3 + $0xbb0] sm:$0xff] %v1740
  %2491 = vst [vmem:[%s3 + $0xbb8] sm:$0xff] %v1742
  %2492 = vst [vmem:[%s3 + $0xbc0] sm:$0xff] %v1833
  %2493 = vst [vmem:[%s3 + $0xbc8] sm:$0xff] %v1835
  %2494 = vst [vmem:[%s3 + $0xbd0] sm:$0xff] %v1926
  %2495 = vst [vmem:[%s3 + $0xbd8] sm:$0xff] %v1928
  %2496 = vst [vmem:[%s3 + $0xbe0] sm:$0xff] %v2019
  %2497 = vst [vmem:[%s3 + $0xbe8] sm:$0xff] %v2021
  %2498 = vst [vmem:[%s3 + $0xbf0] sm:$0xff] %v2112
  %2499 = vst [vmem:[%s3 + $0xbf8] sm:$0xff] %v2114
  // Predicated region
  $region14: #{conv3d_autoencoder_forward.14} parent=0 // pred_check
    _
  $region15: #{conv3d_autoencoder_forward.14} parent=0 // pred_check_branch
    %2501 = sbr.rel (0) target = $region17
  $region16: #{conv3d_autoencoder_forward.14} parent=0 // pred_region
    _
  $region17: #{conv3d_autoencoder_forward.14} parent=0 // pred_fallthru
    _
  // Predicated region
  $region18: #{conv3d_autoencoder_forward.14} parent=0 // pred_check
    _
  $region19: #{conv3d_autoencoder_forward.14} parent=0 // pred_check_branch
    %2503 = sbr.rel (0) target = $region21
  $region20: #{conv3d_autoencoder_forward.14} parent=0 // pred_region
    _
  $region21: #{conv3d_autoencoder_forward.14} parent=0 // pred_fallthru
    _

// kernel: conv3d_autoencoder_forward.15
$region0: #{conv3d_autoencoder_forward.15}
  #allocation0 [shape = 'u32[]', space=smem, size = 0x4, offset = 0x4, fixed_abs, tag = 'smem constant byte address 0x4 - core index']
  #allocation1 [shape = 'u32[144,128]{1,0:T(1,128)}', space=vmem, size = 0x12000, scoped, tag = 'internal scratch']
  %s0 = inlined_call_operand.vmem [shape: f32[1024,64], index: 0, kind: input, shape index: {}]
  %s1 = inlined_call_operand.vmem [shape: f32[1,64], index: 1, kind: input, shape index: {}]
  %s2 = inlined_call_operand.vmem [shape: bf16[1024,64], index: 2, kind: output, shape index: {}]
  %s3 = sld [smem:[#allocation0]]
  $region41: #{conv3d_autoencoder_forward.15} parent=0
    _
  %s5 = ssub.s32 1, %s3
  %s6 = scalar_select 0, %s5, %s3
  loop: start=0, step=1, limit=6
  $region2: #{conv3d_autoencoder_forward.15} parent=0 // loop_pre_header
    _
  $region3: #{conv3d_autoencoder_forward.15} parent=0 // loop_header
    %s8 = sphi 0, %s12
    %p9 = scmp.ge.s32.totalorder %s8, 6
    %s18 = sphi 0, %s20
    %s21 = sphi 0, %s18
    %s22 = sphi 0, %s21
    %s38 = sphi 0, %s22
    %s42 = sphi 0, %s42
    %s44 = sphi 0, %s42
    %s45 = sphi 0, %s44
    %s59 = sphi 0, %s45
    %s65 = sphi 0, %s67
    %s68 = sphi 0, %s65
    %s69 = sphi 0, %s68
    %s85 = sphi 0, %s69
  $region4: #{conv3d_autoencoder_forward.15} parent=0 // loop_header_branch
    %11 = sbr.rel (%p9) target = $region8
  $region5: #{conv3d_autoencoder_forward.15} parent=0 // loop_body
    %s13 = ssub.s32 %s8, 1
    %s14 = ssub.s32 %s8, 2
    %s15 = sadd.s32 %s8, 1
    %s16 = ssub.s32 %s8, %s15
    %p17 = scmp.eq.s32.totalorder %s16, 0
    %s19 = sadd.s32 %s18, 1
    %s20 = scalar_select %p17, %s18, %s19
    %p23 = pneg %p17
    %p24 = scmp.eq.s32.totalorder %s8, 3
    %p25 = por %p23, %p24
    %p26 = scmp.ne.s32.totalorder %s18, %s21
    %p27 = scmp.eq.s32.totalorder %s8, 0
    %p28 = por %p26, %p27
    %p29 = scmp.ne.s32.totalorder %s18, %s21
    %p30 = scmp.eq.s32.totalorder %s13, 3
    %p31 = por %p29, %p30
    %p32 = scmp.ne.s32.totalorder %s21, %s22
    %p33 = scmp.eq.s32.totalorder %s13, 0
    %p34 = por %p32, %p33
    %p35 = scmp.ne.s32.totalorder %s21, %s22
    %p36 = scmp.eq.s32.totalorder %s14, 3
    %p37 = por %p35, %p36
    %p39 = scmp.ne.s32.totalorder %s22, %s38
    %p40 = scmp.eq.s32.totalorder %s14, 0
    %p41 = por %p39, %p40
    %s43 = sadd.s32 %s42, 1
    %p46 = scmp.eq.s32.totalorder %s8, 3
    %p47 = scmp.ne.s32.totalorder %s42, %s44
    %p48 = scmp.eq.s32.totalorder %s8, 0
    %p49 = por %p47, %p48
    %p50 = scmp.ne.s32.totalorder %s42, %s44
    %p51 = scmp.eq.s32.totalorder %s13, 3
    %p52 = por %p50, %p51
    %p53 = scmp.ne.s32.totalorder %s44, %s45
    %p54 = scmp.eq.s32.totalorder %s13, 0
    %p55 = por %p53, %p54
    %p56 = scmp.ne.s32.totalorder %s44, %s45
    %p57 = scmp.eq.s32.totalorder %s14, 3
    %p58 = por %p56, %p57
    %p60 = scmp.ne.s32.totalorder %s45, %s59
    %p61 = scmp.eq.s32.totalorder %s14, 0
    %p62 = por %p60, %p61
    %s63 = ssub.s32 %s8, %s15
    %p64 = scmp.eq.s32.totalorder %s63, 0
    %s66 = sadd.s32 %s65, 1
    %s67 = scalar_select %p64, %s65, %s66
    %p70 = pneg %p64
    %p71 = scmp.eq.s32.totalorder %s8, 3
    %p72 = por %p70, %p71
    %p73 = scmp.ne.s32.totalorder %s65, %s68
    %p74 = scmp.eq.s32.totalorder %s8, 0
    %p75 = por %p73, %p74
    %p76 = scmp.ne.s32.totalorder %s65, %s68
    %p77 = scmp.eq.s32.totalorder %s13, 3
    %p78 = por %p76, %p77
    %p79 = scmp.ne.s32.totalorder %s68, %s69
    %p80 = scmp.eq.s32.totalorder %s13, 0
    %p81 = por %p79, %p80
    %p82 = scmp.ne.s32.totalorder %s68, %s69
    %p83 = scmp.eq.s32.totalorder %s14, 3
    %p84 = por %p82, %p83
    %p86 = scmp.ne.s32.totalorder %s69, %s85
    %p87 = scmp.eq.s32.totalorder %s14, 0
    %p88 = por %p86, %p87
    %p89 = scmp.le.s32.totalorder 1, %s8
    %p90 = scmp.lt.s32.totalorder %s8, 5
    %p91 = pnand %p89, %p90
    %p92 = pneg %p91
    // Predicated region
    $region9: #{conv3d_autoencoder_forward.15} parent=5 // pred_check
      _
    $region10: #{conv3d_autoencoder_forward.15} parent=5 // pred_check_branch
      %94 = sbr.rel (%p91) target = $region12
    $region11: #{conv3d_autoencoder_forward.15} parent=5 // pred_region
      %s95 = ssub.s32 %s8, 1
      // Predicated region
      $region13: #{conv3d_autoencoder_forward.15} parent=11 // pred_check
        %p96 = pneg %p55
      $region14: #{conv3d_autoencoder_forward.15} parent=11 // pred_check_branch
        %98 = sbr.rel (%p96) target = $region16
      $region15: #{conv3d_autoencoder_forward.15} parent=11 // pred_region
        _
      $region16: #{conv3d_autoencoder_forward.15} parent=11 // pred_fallthru
        _
    $region12: #{conv3d_autoencoder_forward.15} parent=5 // pred_fallthru
      _
    %p99 = scmp.lt.s32.totalorder %s8, 4
    // Predicated region
    $region17: #{conv3d_autoencoder_forward.15} parent=5 // pred_check
      %p100 = pneg %p99
    $region18: #{conv3d_autoencoder_forward.15} parent=5 // pred_check_branch
      %102 = sbr.rel (%p100) target = $region20
    $region19: #{conv3d_autoencoder_forward.15} parent=5 // pred_region
      // Predicated region
      $region21: #{conv3d_autoencoder_forward.15} parent=19 // pred_check
        %p103 = pneg %p28
      $region22: #{conv3d_autoencoder_forward.15} parent=19 // pred_check_branch
        %105 = sbr.rel (%p103) target = $region24
      $region23: #{conv3d_autoencoder_forward.15} parent=19 // pred_region
        %s106 = smul.u32 32, %s8
        %p107 = scmp.lt.s32.totalorder %s106, 127
        %s108 = scalar_select %p107, %s106, 127
        %s109 = smul.addr %s108, 8
        %s110 = scalar_lea.vmem %s0, %s109
        %s111 = smul.u32 32, %s8
      $region24: #{conv3d_autoencoder_forward.15} parent=19 // pred_fallthru
        _
    $region20: #{conv3d_autoencoder_forward.15} parent=5 // pred_fallthru
      _
    %p112 = scmp.le.s32.totalorder 1, %s8
    %p113 = scmp.lt.s32.totalorder %s8, 5
    %p114 = pnand %p112, %p113
    %p115 = pneg %p114
    // Predicated region
    $region25: #{conv3d_autoencoder_forward.15} parent=5 // pred_check
      _
    $region26: #{conv3d_autoencoder_forward.15} parent=5 // pred_check_branch
      %117 = sbr.rel (%p114) target = $region28
    $region27: #{conv3d_autoencoder_forward.15} parent=5 // pred_region
      %s118 = ssub.s32 %s8, 1
      %s119 = smul.u32 32, %s13
      %p120 = scmp.lt.s32.totalorder %s119, 127
      %s121 = scalar_select %p120, %s119, 127
      %s122 = smul.addr %s121, 8
      %s123 = scalar_lea.vmem %s0, %s122
      %p124 = pneg %p34
      %p125 = pneg %p31
      %p126 = pneg %p55
      %p127 = pneg %p52
      %p128 = pneg %p81
      %p129 = pneg %p78
      %s130 = smul.u32 32, %s13
      %p131 = scmp.lt.s32.totalorder %s130, 127
      %s132 = scalar_select %p131, %s130, 127
      %s133 = smul.addr %s132, 4
      %s134 = scalar_lea.vmem %s2, %s133
      %s135 = smul.u32 32, %s13
      %p136 = scmp.lt.s32.totalorder %s135, 127
      %s137 = scalar_select %p136, %s135, 127
      %s138 = smul.addr %s137, 8
      %s139 = scalar_lea.vmem %s0, %s138
      %s140 = smul.u32 32, %s13
      %s141 = smul.u32 32, %s13
      %p142 = scmp.lt.s32.totalorder %s141, 127
      %s143 = scalar_select %p142, %s141, 127
      %s144 = smul.addr %s143, 4
      %s145 = scalar_lea.vmem %s2, %s144
      %s146 = smul.u32 32, %s13
      %v147 = vld [vmem:[%s139] sm:$0xff]
      %v148 = vld [vmem:[%s139 + $0x8] sm:$0xff]
      %v149 = vld [vmem:[%s139 + $0x10] sm:$0xff]
      %v150 = vld [vmem:[%s139 + $0x18] sm:$0xff]
      %v151 = vld [vmem:[%s139 + $0x20] sm:$0xff]
      %v152 = vld [vmem:[%s139 + $0x28] sm:$0xff]
      %v153 = vld [vmem:[%s139 + $0x30] sm:$0xff]
      %v154 = vld [vmem:[%s139 + $0x38] sm:$0xff]
      %v155 = vld [vmem:[%s139 + $0x40] sm:$0xff]
      %v156 = vld [vmem:[%s139 + $0x48] sm:$0xff]
      %v157 = vld [vmem:[%s139 + $0x50] sm:$0xff]
      %v158 = vld [vmem:[%s139 + $0x58] sm:$0xff]
      %v159 = vld [vmem:[%s139 + $0x60] sm:$0xff]
      %v160 = vld [vmem:[%s139 + $0x68] sm:$0xff]
      %v161 = vld [vmem:[%s139 + $0x70] sm:$0xff]
      %v162 = vld [vmem:[%s139 + $0x78] sm:$0xff]
      %v163 = vld [vmem:[%s139 + $0x80] sm:$0xff]
      %v164 = vld [vmem:[%s139 + $0x88] sm:$0xff]
      %v165 = vld [vmem:[%s139 + $0x90] sm:$0xff]
      %v166 = vld [vmem:[%s139 + $0x98] sm:$0xff]
      %v167 = vld [vmem:[%s139 + $0xa0] sm:$0xff]
      %v168 = vld [vmem:[%s139 + $0xa8] sm:$0xff]
      %v169 = vld [vmem:[%s139 + $0xb0] sm:$0xff]
      %v170 = vld [vmem:[%s139 + $0xb8] sm:$0xff]
      %v171 = vld [vmem:[%s139 + $0xc0] sm:$0xff]
      %v172 = vld [vmem:[%s139 + $0xc8] sm:$0xff]
      %v173 = vld [vmem:[%s139 + $0xd0] sm:$0xff]
      %v174 = vld [vmem:[%s139 + $0xd8] sm:$0xff]
      %v175 = vld [vmem:[%s139 + $0xe0] sm:$0xff]
      %v176 = vld [vmem:[%s139 + $0xe8] sm:$0xff]
      %v177 = vld [vmem:[%s139 + $0xf0] sm:$0xff]
      %v178 = vld [vmem:[%s139 + $0xf8] sm:$0xff]
      %v179 = vld [vmem:[%s1] sm:$0x1]
      %v181 = vlaneseq
      %v182 = vshrl.u32 %v181, 7
      %v183 = vsub.s32 0, %v182
      %v184 = vrot.slane %v179, %v183
      %v186 = vadd.f32 %v147, %v184
      %v187 = vadd.f32 %v148, %v184
      %v188 = vadd.f32 %v149, %v184
      %v189 = vadd.f32 %v150, %v184
      %v190 = vadd.f32 %v151, %v184
      %v191 = vadd.f32 %v152, %v184
      %v192 = vadd.f32 %v153, %v184
      %v193 = vadd.f32 %v154, %v184
      %v194 = vadd.f32 %v155, %v184
      %v195 = vadd.f32 %v156, %v184
      %v196 = vadd.f32 %v157, %v184
      %v197 = vadd.f32 %v158, %v184
      %v198 = vadd.f32 %v159, %v184
      %v199 = vadd.f32 %v160, %v184
      %v200 = vadd.f32 %v161, %v184
      %v201 = vadd.f32 %v162, %v184
      %v202 = vadd.f32 %v163, %v184
      %v203 = vadd.f32 %v164, %v184
      %v204 = vadd.f32 %v165, %v184
      %v205 = vadd.f32 %v166, %v184
      %v206 = vadd.f32 %v167, %v184
      %v207 = vadd.f32 %v168, %v184
      %v208 = vadd.f32 %v169, %v184
      %v209 = vadd.f32 %v170, %v184
      %v210 = vadd.f32 %v171, %v184
      %v211 = vadd.f32 %v172, %v184
      %v212 = vadd.f32 %v173, %v184
      %v213 = vadd.f32 %v174, %v184
      %v214 = vadd.f32 %v175, %v184
      %v215 = vadd.f32 %v176, %v184
      %v216 = vadd.f32 %v177, %v184
      %v217 = vadd.f32 %v178, %v184
      %v218 = vmax.f32 %v186, 0.0
      %v219 = vmax.f32 %v187, 0.0
      %v220 = vmax.f32 %v188, 0.0
      %v221 = vmax.f32 %v189, 0.0
      %v222 = vmax.f32 %v190, 0.0
      %v223 = vmax.f32 %v191, 0.0
      %v224 = vmax.f32 %v192, 0.0
      %v225 = vmax.f32 %v193, 0.0
      %v226 = vmax.f32 %v194, 0.0
      %v227 = vmax.f32 %v195, 0.0
      %v228 = vmax.f32 %v196, 0.0
      %v229 = vmax.f32 %v197, 0.0
      %v230 = vmax.f32 %v198, 0.0
      %v231 = vmax.f32 %v199, 0.0
      %v232 = vmax.f32 %v200, 0.0
      %v233 = vmax.f32 %v201, 0.0
      %v234 = vmax.f32 %v202, 0.0
      %v235 = vmax.f32 %v203, 0.0
      %v236 = vmax.f32 %v204, 0.0
      %v237 = vmax.f32 %v205, 0.0
      %v238 = vmax.f32 %v206, 0.0
      %v239 = vmax.f32 %v207, 0.0
      %v240 = vmax.f32 %v208, 0.0
      %v241 = vmax.f32 %v209, 0.0
      %v242 = vmax.f32 %v210, 0.0
      %v243 = vmax.f32 %v211, 0.0
      %v244 = vmax.f32 %v212, 0.0
      %v245 = vmax.f32 %v213, 0.0
      %v246 = vmax.f32 %v214, 0.0
      %v247 = vmax.f32 %v215, 0.0
      %v248 = vmax.f32 %v216, 0.0
      %v249 = vmax.f32 %v217, 0.0
      %v250 = vpack.c.bf16 %v219, %v218
      %v251 = vpack.c.bf16 %v221, %v220
      %v252 = vpack.c.bf16 %v223, %v222
      %v253 = vpack.c.bf16 %v225, %v224
      %v254 = vpack.c.bf16 %v227, %v226
      %v255 = vpack.c.bf16 %v229, %v228
      %v256 = vpack.c.bf16 %v231, %v230
      %v257 = vpack.c.bf16 %v233, %v232
      %v258 = vpack.c.bf16 %v235, %v234
      %v259 = vpack.c.bf16 %v237, %v236
      %v260 = vpack.c.bf16 %v239, %v238
      %v261 = vpack.c.bf16 %v241, %v240
      %v262 = vpack.c.bf16 %v243, %v242
      %v263 = vpack.c.bf16 %v245, %v244
      %v264 = vpack.c.bf16 %v247, %v246
      %v265 = vpack.c.bf16 %v249, %v248
      %v282 = vunpack.c.l.b16 %v250
      %v283 = vunpack.c.h.b16 %v250
      %v284 = vunpack.c.l.b16 %v251
      %v285 = vunpack.c.h.b16 %v251
      %v286 = vunpack.c.l.b16 %v252
      %v287 = vunpack.c.h.b16 %v252
      %v288 = vunpack.c.l.b16 %v253
      %v289 = vunpack.c.h.b16 %v253
      %v290 = vunpack.c.l.b16 %v254
      %v291 = vunpack.c.h.b16 %v254
      %v292 = vunpack.c.l.b16 %v255
      %v293 = vunpack.c.h.b16 %v255
      %v294 = vunpack.c.l.b16 %v256
      %v295 = vunpack.c.h.b16 %v256
      %v296 = vunpack.c.l.b16 %v257
      %v297 = vunpack.c.h.b16 %v257
      %v298 = vunpack.c.l.b16 %v258
      %v299 = vunpack.c.h.b16 %v258
      %v300 = vunpack.c.l.b16 %v259
      %v301 = vunpack.c.h.b16 %v259
      %v302 = vunpack.c.l.b16 %v260
      %v303 = vunpack.c.h.b16 %v260
      %v304 = vunpack.c.l.b16 %v261
      %v305 = vunpack.c.h.b16 %v261
      %v306 = vunpack.c.l.b16 %v262
      %v307 = vunpack.c.h.b16 %v262
      %v308 = vunpack.c.l.b16 %v263
      %v309 = vunpack.c.h.b16 %v263
      %v310 = vunpack.c.l.b16 %v264
      %v311 = vunpack.c.h.b16 %v264
      %v312 = vunpack.c.l.b16 %v265
      %v313 = vunpack.c.h.b16 %v265
      %v314 = vpack.c.b16 %v282, %v282
      %v315 = vpack.c.b16 %v283, %v283
      %v316 = vpack.c.b16 %v284, %v284
      %v317 = vpack.c.b16 %v285, %v285
      %v318 = vpack.c.b16 %v286, %v286
      %v319 = vpack.c.b16 %v287, %v287
      %v320 = vpack.c.b16 %v288, %v288
      %v321 = vpack.c.b16 %v289, %v289
      %v322 = vpack.c.b16 %v290, %v290
      %v323 = vpack.c.b16 %v291, %v291
      %v324 = vpack.c.b16 %v292, %v292
      %v325 = vpack.c.b16 %v293, %v293
      %v326 = vpack.c.b16 %v294, %v294
      %v327 = vpack.c.b16 %v295, %v295
      %v328 = vpack.c.b16 %v296, %v296
      %v329 = vpack.c.b16 %v297, %v297
      %v330 = vpack.c.b16 %v298, %v298
      %v331 = vpack.c.b16 %v299, %v299
      %v332 = vpack.c.b16 %v300, %v300
      %v333 = vpack.c.b16 %v301, %v301
      %v334 = vpack.c.b16 %v302, %v302
      %v335 = vpack.c.b16 %v303, %v303
      %v336 = vpack.c.b16 %v304, %v304
      %v337 = vpack.c.b16 %v305, %v305
      %v338 = vpack.c.b16 %v306, %v306
      %v339 = vpack.c.b16 %v307, %v307
      %v340 = vpack.c.b16 %v308, %v308
      %v341 = vpack.c.b16 %v309, %v309
      %v342 = vpack.c.b16 %v310, %v310
      %v343 = vpack.c.b16 %v311, %v311
      %v344 = vpack.c.b16 %v312, %v312
      %v345 = vpack.c.b16 %v313, %v313
      %vm378 = vcmask 519168
      %379 = vst.msk [vmem:[%s145] sm:$0xf] %vm378, %v314
      %380 = vst.msk [vmem:[%s145 + $0x4] sm:$0xf] %vm378, %v315
      %381 = vst.msk [vmem:[%s145 + $0x8] sm:$0xf] %vm378, %v316
      %382 = vst.msk [vmem:[%s145 + $0xc] sm:$0xf] %vm378, %v317
      %383 = vst.msk [vmem:[%s145 + $0x10] sm:$0xf] %vm378, %v318
      %384 = vst.msk [vmem:[%s145 + $0x14] sm:$0xf] %vm378, %v319
      %385 = vst.msk [vmem:[%s145 + $0x18] sm:$0xf] %vm378, %v320
      %386 = vst.msk [vmem:[%s145 + $0x1c] sm:$0xf] %vm378, %v321
      %387 = vst.msk [vmem:[%s145 + $0x20] sm:$0xf] %vm378, %v322
      %388 = vst.msk [vmem:[%s145 + $0x24] sm:$0xf] %vm378, %v323
      %389 = vst.msk [vmem:[%s145 + $0x28] sm:$0xf] %vm378, %v324
      %390 = vst.msk [vmem:[%s145 + $0x2c] sm:$0xf] %vm378, %v325
      %391 = vst.msk [vmem:[%s145 + $0x30] sm:$0xf] %vm378, %v326
      %392 = vst.msk [vmem:[%s145 + $0x34] sm:$0xf] %vm378, %v327
      %393 = vst.msk [vmem:[%s145 + $0x38] sm:$0xf] %vm378, %v328
      %394 = vst.msk [vmem:[%s145 + $0x3c] sm:$0xf] %vm378, %v329
      %395 = vst.msk [vmem:[%s145 + $0x40] sm:$0xf] %vm378, %v330
      %396 = vst.msk [vmem:[%s145 + $0x44] sm:$0xf] %vm378, %v331
      %397 = vst.msk [vmem:[%s145 + $0x48] sm:$0xf] %vm378, %v332
      %398 = vst.msk [vmem:[%s145 + $0x4c] sm:$0xf] %vm378, %v333
      %399 = vst.msk [vmem:[%s145 + $0x50] sm:$0xf] %vm378, %v334
      %400 = vst.msk [vmem:[%s145 + $0x54] sm:$0xf] %vm378, %v335
      %401 = vst.msk [vmem:[%s145 + $0x58] sm:$0xf] %vm378, %v336
      %402 = vst.msk [vmem:[%s145 + $0x5c] sm:$0xf] %vm378, %v337
      %403 = vst.msk [vmem:[%s145 + $0x60] sm:$0xf] %vm378, %v338
      %404 = vst.msk [vmem:[%s145 + $0x64] sm:$0xf] %vm378, %v339
      %405 = vst.msk [vmem:[%s145 + $0x68] sm:$0xf] %vm378, %v340
      %406 = vst.msk [vmem:[%s145 + $0x6c] sm:$0xf] %vm378, %v341
      %407 = vst.msk [vmem:[%s145 + $0x70] sm:$0xf] %vm378, %v342
      %408 = vst.msk [vmem:[%s145 + $0x74] sm:$0xf] %vm378, %v343
      %409 = vst.msk [vmem:[%s145 + $0x78] sm:$0xf] %vm378, %v344
      %410 = vst.msk [vmem:[%s145 + $0x7c] sm:$0xf] %vm378, %v345
      %s411 = smul.u32 32, %s13
      %p412 = scmp.lt.s32.totalorder %s411, 127
      %s413 = scalar_select %p412, %s411, 127
      %s414 = smul.addr %s413, 4
      %s415 = scalar_lea.vmem %s2, %s414
      // Predicated region
      $region29: #{conv3d_autoencoder_forward.15} parent=27 // pred_check
        %p416 = pneg %p78
      $region30: #{conv3d_autoencoder_forward.15} parent=27 // pred_check_branch
        %418 = sbr.rel (%p416) target = $region32
      $region31: #{conv3d_autoencoder_forward.15} parent=27 // pred_region
        %s419 = smul.u32 32, %s13
      $region32: #{conv3d_autoencoder_forward.15} parent=27 // pred_fallthru
        _
    $region28: #{conv3d_autoencoder_forward.15} parent=5 // pred_fallthru
      _
    %p420 = scmp.le.s32.totalorder 2, %s8
    // Predicated region
    $region33: #{conv3d_autoencoder_forward.15} parent=5 // pred_check
      %p421 = pneg %p420
    $region34: #{conv3d_autoencoder_forward.15} parent=5 // pred_check_branch
      %423 = sbr.rel (%p421) target = $region36
    $region35: #{conv3d_autoencoder_forward.15} parent=5 // pred_region
      %s424 = ssub.s32 %s8, 2
      // Predicated region
      $region37: #{conv3d_autoencoder_forward.15} parent=35 // pred_check
        %p425 = pneg %p84
      $region38: #{conv3d_autoencoder_forward.15} parent=35 // pred_check_branch
        %427 = sbr.rel (%p425) target = $region40
      $region39: #{conv3d_autoencoder_forward.15} parent=35 // pred_region
        %s428 = smul.u32 32, %s14
        %p429 = scmp.lt.s32.totalorder %s428, 127
        %s430 = scalar_select %p429, %s428, 127
        %s431 = smul.addr %s430, 4
        %s432 = scalar_lea.vmem %s2, %s431
      $region40: #{conv3d_autoencoder_forward.15} parent=35 // pred_fallthru
        _
    $region36: #{conv3d_autoencoder_forward.15} parent=5 // pred_fallthru
      _
  $region6: #{conv3d_autoencoder_forward.15} parent=0 // loop_footer
    %s12 = sadd.s32 1, %s8
  $region7: #{conv3d_autoencoder_forward.15} parent=0 // loop_footer_branch
    %7 = sbr.rel target = $region3
  $region8: #{conv3d_autoencoder_forward.15} parent=0 // loop_exit
    _

// kernel: conv3d_autoencoder_forward.16
$region0: #{conv3d_autoencoder_forward.16}
  #allocation0 [shape = 'u32[]', space=smem, size = 0x4, offset = 0x4, fixed_abs, tag = 'smem constant byte address 0x4 - core index']
  #allocation1 [shape = 'u32[144,128]{1,0:T(1,128)}', space=vmem, size = 0x12000, scoped, tag = 'internal scratch']
  %s0 = inlined_call_operand.vmem [shape: bf16[1024,64], index: 0, kind: input, shape index: {}]
  %s1 = inlined_call_operand.vmem [shape: bf16[64,864], index: 1, kind: input, shape index: {}]
  %s2 = inlined_call_operand.vmem [shape: f32[1,864], index: 2, kind: input, shape index: {}]
  %s3 = inlined_call_operand.vmem [shape: f32[1024,864], index: 3, kind: output, shape index: {}]
  %s4 = sld [smem:[#allocation0]]
  $region45: #{conv3d_autoencoder_forward.16} parent=0
    _
  %s6 = ssub.s32 1, %s4
  %s7 = scalar_select 0, %s6, %s4
  loop: start=0, step=1, limit=6
  $region2: #{conv3d_autoencoder_forward.16} parent=0 // loop_pre_header
    _
  $region3: #{conv3d_autoencoder_forward.16} parent=0 // loop_header
    %s9 = sphi 0, %s13
    %p10 = scmp.ge.s32.totalorder %s9, 6
    %s19 = sphi 0, %s21
    %s22 = sphi 0, %s19
    %s23 = sphi 0, %s22
    %s39 = sphi 0, %s23
    %s43 = sphi 0, %s43
    %s45 = sphi 0, %s43
    %s46 = sphi 0, %s45
    %s60 = sphi 0, %s46
    %s64 = sphi 0, %s64
    %s66 = sphi 0, %s64
    %s67 = sphi 0, %s66
    %s81 = sphi 0, %s67
    %s87 = sphi 0, %s89
    %s90 = sphi 0, %s87
    %s91 = sphi 0, %s90
    %s107 = sphi 0, %s91
  $region4: #{conv3d_autoencoder_forward.16} parent=0 // loop_header_branch
    %12 = sbr.rel (%p10) target = $region8
  $region5: #{conv3d_autoencoder_forward.16} parent=0 // loop_body
    %s14 = ssub.s32 %s9, 1
    %s15 = ssub.s32 %s9, 2
    %s16 = sadd.s32 %s9, 1
    %s17 = ssub.s32 %s9, %s16
    %p18 = scmp.eq.s32.totalorder %s17, 0
    %s20 = sadd.s32 %s19, 1
    %s21 = scalar_select %p18, %s19, %s20
    %p24 = pneg %p18
    %p25 = scmp.eq.s32.totalorder %s9, 3
    %p26 = por %p24, %p25
    %p27 = scmp.ne.s32.totalorder %s19, %s22
    %p28 = scmp.eq.s32.totalorder %s9, 0
    %p29 = por %p27, %p28
    %p30 = scmp.ne.s32.totalorder %s19, %s22
    %p31 = scmp.eq.s32.totalorder %s14, 3
    %p32 = por %p30, %p31
    %p33 = scmp.ne.s32.totalorder %s22, %s23
    %p34 = scmp.eq.s32.totalorder %s14, 0
    %p35 = por %p33, %p34
    %p36 = scmp.ne.s32.totalorder %s22, %s23
    %p37 = scmp.eq.s32.totalorder %s15, 3
    %p38 = por %p36, %p37
    %p40 = scmp.ne.s32.totalorder %s23, %s39
    %p41 = scmp.eq.s32.totalorder %s15, 0
    %p42 = por %p40, %p41
    %s44 = sadd.s32 %s43, 1
    %p47 = scmp.eq.s32.totalorder %s9, 3
    %p48 = scmp.ne.s32.totalorder %s43, %s45
    %p49 = scmp.eq.s32.totalorder %s9, 0
    %p50 = por %p48, %p49
    %p51 = scmp.ne.s32.totalorder %s43, %s45
    %p52 = scmp.eq.s32.totalorder %s14, 3
    %p53 = por %p51, %p52
    %p54 = scmp.ne.s32.totalorder %s45, %s46
    %p55 = scmp.eq.s32.totalorder %s14, 0
    %p56 = por %p54, %p55
    %p57 = scmp.ne.s32.totalorder %s45, %s46
    %p58 = scmp.eq.s32.totalorder %s15, 3
    %p59 = por %p57, %p58
    %p61 = scmp.ne.s32.totalorder %s46, %s60
    %p62 = scmp.eq.s32.totalorder %s15, 0
    %p63 = por %p61, %p62
    %s65 = sadd.s32 %s64, 1
    %p68 = scmp.eq.s32.totalorder %s9, 3
    %p69 = scmp.ne.s32.totalorder %s64, %s66
    %p70 = scmp.eq.s32.totalorder %s9, 0
    %p71 = por %p69, %p70
    %p72 = scmp.ne.s32.totalorder %s64, %s66
    %p73 = scmp.eq.s32.totalorder %s14, 3
    %p74 = por %p72, %p73
    %p75 = scmp.ne.s32.totalorder %s66, %s67
    %p76 = scmp.eq.s32.totalorder %s14, 0
    %p77 = por %p75, %p76
    %p78 = scmp.ne.s32.totalorder %s66, %s67
    %p79 = scmp.eq.s32.totalorder %s15, 3
    %p80 = por %p78, %p79
    %p82 = scmp.ne.s32.totalorder %s67, %s81
    %p83 = scmp.eq.s32.totalorder %s15, 0
    %p84 = por %p82, %p83
    %s85 = ssub.s32 %s9, %s16
    %p86 = scmp.eq.s32.totalorder %s85, 0
    %s88 = sadd.s32 %s87, 1
    %s89 = scalar_select %p86, %s87, %s88
    %p92 = pneg %p86
    %p93 = scmp.eq.s32.totalorder %s9, 3
    %p94 = por %p92, %p93
    %p95 = scmp.ne.s32.totalorder %s87, %s90
    %p96 = scmp.eq.s32.totalorder %s9, 0
    %p97 = por %p95, %p96
    %p98 = scmp.ne.s32.totalorder %s87, %s90
    %p99 = scmp.eq.s32.totalorder %s14, 3
    %p100 = por %p98, %p99
    %p101 = scmp.ne.s32.totalorder %s90, %s91
    %p102 = scmp.eq.s32.totalorder %s14, 0
    %p103 = por %p101, %p102
    %p104 = scmp.ne.s32.totalorder %s90, %s91
    %p105 = scmp.eq.s32.totalorder %s15, 3
    %p106 = por %p104, %p105
    %p108 = scmp.ne.s32.totalorder %s91, %s107
    %p109 = scmp.eq.s32.totalorder %s15, 0
    %p110 = por %p108, %p109
    %p111 = scmp.le.s32.totalorder 1, %s9
    %p112 = scmp.lt.s32.totalorder %s9, 5
    %p113 = pnand %p111, %p112
    %p114 = pneg %p113
    // Predicated region
    $region9: #{conv3d_autoencoder_forward.16} parent=5 // pred_check
      _
    $region10: #{conv3d_autoencoder_forward.16} parent=5 // pred_check_branch
      %116 = sbr.rel (%p113) target = $region12
    $region11: #{conv3d_autoencoder_forward.16} parent=5 // pred_region
      %s117 = ssub.s32 %s9, 1
      // Predicated region
      $region13: #{conv3d_autoencoder_forward.16} parent=11 // pred_check
        %p118 = pneg %p56
      $region14: #{conv3d_autoencoder_forward.16} parent=11 // pred_check_branch
        %120 = sbr.rel (%p118) target = $region16
      $region15: #{conv3d_autoencoder_forward.16} parent=11 // pred_region
        _
      $region16: #{conv3d_autoencoder_forward.16} parent=11 // pred_fallthru
        _
      // Predicated region
      $region17: #{conv3d_autoencoder_forward.16} parent=11 // pred_check
        %p121 = pneg %p77
      $region18: #{conv3d_autoencoder_forward.16} parent=11 // pred_check_branch
        %123 = sbr.rel (%p121) target = $region20
      $region19: #{conv3d_autoencoder_forward.16} parent=11 // pred_region
        _
      $region20: #{conv3d_autoencoder_forward.16} parent=11 // pred_fallthru
        _
    $region12: #{conv3d_autoencoder_forward.16} parent=5 // pred_fallthru
      _
    %p124 = scmp.lt.s32.totalorder %s9, 4
    // Predicated region
    $region21: #{conv3d_autoencoder_forward.16} parent=5 // pred_check
      %p125 = pneg %p124
    $region22: #{conv3d_autoencoder_forward.16} parent=5 // pred_check_branch
      %127 = sbr.rel (%p125) target = $region24
    $region23: #{conv3d_autoencoder_forward.16} parent=5 // pred_region
      // Predicated region
      $region25: #{conv3d_autoencoder_forward.16} parent=23 // pred_check
        %p128 = pneg %p29
      $region26: #{conv3d_autoencoder_forward.16} parent=23 // pred_check_branch
        %130 = sbr.rel (%p128) target = $region28
      $region27: #{conv3d_autoencoder_forward.16} parent=23 // pred_region
        %s131 = smul.u32 32, %s9
        %p132 = scmp.lt.s32.totalorder %s131, 127
        %s133 = scalar_select %p132, %s131, 127
        %s134 = smul.addr %s133, 4
        %s135 = scalar_lea.vmem %s0, %s134
        %s136 = smul.u32 32, %s9
      $region28: #{conv3d_autoencoder_forward.16} parent=23 // pred_fallthru
        _
    $region24: #{conv3d_autoencoder_forward.16} parent=5 // pred_fallthru
      _
    %p137 = scmp.le.s32.totalorder 1, %s9
    %p138 = scmp.lt.s32.totalorder %s9, 5
    %p139 = pnand %p137, %p138
    %p140 = pneg %p139
    // Predicated region
    $region29: #{conv3d_autoencoder_forward.16} parent=5 // pred_check
      _
    $region30: #{conv3d_autoencoder_forward.16} parent=5 // pred_check_branch
      %142 = sbr.rel (%p139) target = $region32
    $region31: #{conv3d_autoencoder_forward.16} parent=5 // pred_region
      %s143 = ssub.s32 %s9, 1
      %s144 = smul.u32 32, %s14
      %p145 = scmp.lt.s32.totalorder %s144, 127
      %s146 = scalar_select %p145, %s144, 127
      %s147 = smul.addr %s146, 4
      %s148 = scalar_lea.vmem %s0, %s147
      %p149 = pneg %p35
      %p150 = pneg %p32
      %p151 = pneg %p56
      %p152 = pneg %p53
      %p153 = pneg %p77
      %p154 = pneg %p74
      %p155 = pneg %p103
      %p156 = pneg %p100
      %s157 = smul.u32 32, %s14
      %p158 = scmp.lt.s32.totalorder %s157, 127
      %s159 = scalar_select %p158, %s157, 127
      %s160 = smul.addr %s159, 7
      %s161 = smul.addr %s160, 8
      %s162 = scalar_lea.vmem %s3, %s161
      %s163 = smul.u32 32, %s14
      %p164 = scmp.lt.s32.totalorder %s163, 127
      %s165 = scalar_select %p164, %s163, 127
      %s166 = smul.addr %s165, 4
      %s167 = scalar_lea.vmem %s0, %s166
      %s168 = smul.u32 32, %s14
      %s169 = smul.u32 32, %s14
      %p170 = scmp.lt.s32.totalorder %s169, 127
      %s171 = scalar_select %p170, %s169, 127
      %s172 = smul.addr %s171, 7
      %s173 = smul.addr %s172, 8
      %s174 = scalar_lea.vmem %s3, %s173
      %s175 = smul.u32 32, %s14
      %v177 = vld [vmem:[%s167] sm:$0xf]
      %v178 = vld [vmem:[%s167 + $0x4] sm:$0xf]
      %v179 = vld [vmem:[%s167 + $0x8] sm:$0xf]
      %v180 = vld [vmem:[%s167 + $0xc] sm:$0xf]
      %v181 = vld [vmem:[%s167 + $0x10] sm:$0xf]
      %v182 = vld [vmem:[%s167 + $0x14] sm:$0xf]
      %v183 = vld [vmem:[%s167 + $0x18] sm:$0xf]
      %v184 = vld [vmem:[%s167 + $0x1c] sm:$0xf]
      %v185 = vld [vmem:[%s167 + $0x20] sm:$0xf]
      %v186 = vld [vmem:[%s167 + $0x24] sm:$0xf]
      %v187 = vld [vmem:[%s167 + $0x28] sm:$0xf]
      %v188 = vld [vmem:[%s167 + $0x2c] sm:$0xf]
      %v189 = vld [vmem:[%s167 + $0x30] sm:$0xf]
      %v190 = vld [vmem:[%s167 + $0x34] sm:$0xf]
      %v191 = vld [vmem:[%s167 + $0x38] sm:$0xf]
      %v192 = vld [vmem:[%s167 + $0x3c] sm:$0xf]
      %v193 = vld [vmem:[%s167 + $0x40] sm:$0xf]
      %v194 = vld [vmem:[%s167 + $0x44] sm:$0xf]
      %v195 = vld [vmem:[%s167 + $0x48] sm:$0xf]
      %v196 = vld [vmem:[%s167 + $0x4c] sm:$0xf]
      %v197 = vld [vmem:[%s167 + $0x50] sm:$0xf]
      %v198 = vld [vmem:[%s167 + $0x54] sm:$0xf]
      %v199 = vld [vmem:[%s167 + $0x58] sm:$0xf]
      %v200 = vld [vmem:[%s167 + $0x5c] sm:$0xf]
      %v201 = vld [vmem:[%s167 + $0x60] sm:$0xf]
      %v202 = vld [vmem:[%s167 + $0x64] sm:$0xf]
      %v203 = vld [vmem:[%s167 + $0x68] sm:$0xf]
      %v204 = vld [vmem:[%s167 + $0x6c] sm:$0xf]
      %v205 = vld [vmem:[%s167 + $0x70] sm:$0xf]
      %v206 = vld [vmem:[%s167 + $0x74] sm:$0xf]
      %v207 = vld [vmem:[%s167 + $0x78] sm:$0xf]
      %v208 = vld [vmem:[%s167 + $0x7c] sm:$0xf]
      %v209 = vld [vmem:[%s1] sm:$0xff]
      %v210 = vld [vmem:[%s1 + $0x8] sm:$0xff]
      %v211 = vld [vmem:[%s1 + $0x10] sm:$0xff]
      %v212 = vld [vmem:[%s1 + $0x18] sm:$0xf]
      %v213 = vld [vmem:[%s1 + $0x1c] sm:$0xff]
      %v214 = vld [vmem:[%s1 + $0x24] sm:$0xff]
      %v215 = vld [vmem:[%s1 + $0x2c] sm:$0xff]
      %v216 = vld [vmem:[%s1 + $0x34] sm:$0xf]
      %v217 = vld [vmem:[%s1 + $0x38] sm:$0xff]
      %v218 = vld [vmem:[%s1 + $0x40] sm:$0xff]
      %v219 = vld [vmem:[%s1 + $0x48] sm:$0xff]
      %v220 = vld [vmem:[%s1 + $0x50] sm:$0xf]
      %v221 = vld [vmem:[%s1 + $0x54] sm:$0xff]
      %v222 = vld [vmem:[%s1 + $0x5c] sm:$0xff]
      %v223 = vld [vmem:[%s1 + $0x64] sm:$0xff]
      %v224 = vld [vmem:[%s1 + $0x6c] sm:$0xf]
      %v225 = vld [vmem:[%s1 + $0x70] sm:$0xff]
      %v226 = vld [vmem:[%s1 + $0x78] sm:$0xff]
      %v227 = vld [vmem:[%s1 + $0x80] sm:$0xff]
      %v228 = vld [vmem:[%s1 + $0x88] sm:$0xf]
      %v229 = vld [vmem:[%s1 + $0x8c] sm:$0xff]
      %v230 = vld [vmem:[%s1 + $0x94] sm:$0xff]
      %v231 = vld [vmem:[%s1 + $0x9c] sm:$0xff]
      %v232 = vld [vmem:[%s1 + $0xa4] sm:$0xf]
      %v233 = vld [vmem:[%s1 + $0xa8] sm:$0xff]
      %v234 = vld [vmem:[%s1 + $0xb0] sm:$0xff]
      %v235 = vld [vmem:[%s1 + $0xb8] sm:$0xff]
      %v236 = vld [vmem:[%s1 + $0xc0] sm:$0xf]
      %v237 = vld [vmem:[%s1 + $0xc4] sm:$0xff]
      %v238 = vld [vmem:[%s1 + $0xcc] sm:$0xff]
      %v239 = vld [vmem:[%s1 + $0xd4] sm:$0xff]
      %v240 = vld [vmem:[%s1 + $0xdc] sm:$0xf]
      %v241 = vld [vmem:[%s2] sm:$0x7f]
      %v243 = vlaneseq
      %v244 = vshrl.u32 %v243, 7
      %v245 = vsub.s32 0, %v244
      %v246 = vrot.slane %v241, %v245
      %v247 = vlaneseq
      %v248 = vshrl.u32 %v247, 7
      %v249 = vsub.s32 1, %v248
      %v250 = vrot.slane %v241, %v249
      %v251 = vlaneseq
      %v252 = vshrl.u32 %v251, 7
      %v253 = vsub.s32 2, %v252
      %v254 = vrot.slane %v241, %v253
      %v255 = vlaneseq
      %v256 = vshrl.u32 %v255, 7
      %v257 = vsub.s32 3, %v256
      %v258 = vrot.slane %v241, %v257
      %v259 = vlaneseq
      %v260 = vshrl.u32 %v259, 7
      %v261 = vsub.s32 4, %v260
      %v262 = vrot.slane %v241, %v261
      %v263 = vlaneseq
      %v264 = vshrl.u32 %v263, 7
      %v265 = vsub.s32 5, %v264
      %v266 = vrot.slane %v241, %v265
      %v267 = vlaneseq
      %v268 = vshrl.u32 %v267, 7
      %v269 = vsub.s32 6, %v268
      %v270 = vrot.slane %v241, %v269
      %v310 = vunpack.c.l.b16 %v177
      %v311 = vunpack.c.l.b16 %v178
      %v312 = vunpack.c.l.b16 %v179
      %v313 = vunpack.c.l.b16 %v180
      %v314 = vunpack.c.l.b16 %v181
      %v315 = vunpack.c.l.b16 %v182
      %v316 = vunpack.c.l.b16 %v183
      %v317 = vunpack.c.l.b16 %v184
      %v318 = vunpack.c.l.b16 %v185
      %v319 = vunpack.c.l.b16 %v186
      %v320 = vunpack.c.l.b16 %v187
      %v321 = vunpack.c.l.b16 %v188
      %v322 = vunpack.c.l.b16 %v189
      %v323 = vunpack.c.l.b16 %v190
      %v324 = vunpack.c.l.b16 %v191
      %v325 = vunpack.c.l.b16 %v192
      %v326 = vunpack.c.l.b16 %v193
      %v327 = vunpack.c.l.b16 %v194
      %v328 = vunpack.c.l.b16 %v195
      %v329 = vunpack.c.l.b16 %v196
      %v330 = vunpack.c.l.b16 %v197
      %v331 = vunpack.c.l.b16 %v198
      %v332 = vunpack.c.l.b16 %v199
      %v333 = vunpack.c.l.b16 %v200
      %v334 = vunpack.c.l.b16 %v201
      %v335 = vunpack.c.l.b16 %v202
      %v336 = vunpack.c.l.b16 %v203
      %v337 = vunpack.c.l.b16 %v204
      %v338 = vunpack.c.l.b16 %v205
      %v339 = vunpack.c.l.b16 %v206
      %v340 = vunpack.c.l.b16 %v207
      %v341 = vunpack.c.l.b16 %v208
      %v342 = vpack.c.b16 %v311, %v310
      %v343 = vpack.c.b16 %v313, %v312
      %v344 = vpack.c.b16 %v315, %v314
      %v345 = vpack.c.b16 %v317, %v316
      %v346 = vpack.c.b16 %v319, %v318
      %v347 = vpack.c.b16 %v321, %v320
      %v348 = vpack.c.b16 %v323, %v322
      %v349 = vpack.c.b16 %v325, %v324
      %v350 = vpack.c.b16 %v327, %v326
      %v351 = vpack.c.b16 %v329, %v328
      %v352 = vpack.c.b16 %v331, %v330
      %v353 = vpack.c.b16 %v333, %v332
      %v354 = vpack.c.b16 %v335, %v334
      %v355 = vpack.c.b16 %v337, %v336
      %v356 = vpack.c.b16 %v339, %v338
      %v357 = vpack.c.b16 %v341, %v340
      %v390 = vunpack.c.l.b16 %v209
      %v391 = vunpack.c.h.b16 %v209
      %v392 = vunpack.c.l.b16 %v210
      %v393 = vunpack.c.h.b16 %v210
      %v394 = vunpack.c.l.b16 %v211
      %v395 = vunpack.c.h.b16 %v211
      %v396 = vunpack.c.l.b16 %v212
      %v397 = vunpack.c.l.b16 %v213
      %v398 = vunpack.c.h.b16 %v213
      %v399 = vunpack.c.l.b16 %v214
      %v400 = vunpack.c.h.b16 %v214
      %v401 = vunpack.c.l.b16 %v215
      %v402 = vunpack.c.h.b16 %v215
      %v403 = vunpack.c.l.b16 %v216
      %v404 = vunpack.c.l.b16 %v217
      %v405 = vunpack.c.h.b16 %v217
      %v406 = vunpack.c.l.b16 %v218
      %v407 = vunpack.c.h.b16 %v218
      %v408 = vunpack.c.l.b16 %v219
      %v409 = vunpack.c.h.b16 %v219
      %v410 = vunpack.c.l.b16 %v220
      %v411 = vunpack.c.l.b16 %v221
      %v412 = vunpack.c.h.b16 %v221
      %v413 = vunpack.c.l.b16 %v222
      %v414 = vunpack.c.h.b16 %v222
      %v415 = vunpack.c.l.b16 %v223
      %v416 = vunpack.c.h.b16 %v223
      %v417 = vunpack.c.l.b16 %v224
      %v418 = vunpack.c.l.b16 %v225
      %v419 = vunpack.c.h.b16 %v225
      %v420 = vunpack.c.l.b16 %v226
      %v421 = vunpack.c.h.b16 %v226
      %v422 = vunpack.c.l.b16 %v227
      %v423 = vunpack.c.h.b16 %v227
      %v424 = vunpack.c.l.b16 %v228
      %v425 = vunpack.c.l.b16 %v229
      %v426 = vunpack.c.h.b16 %v229
      %v427 = vunpack.c.l.b16 %v230
      %v428 = vunpack.c.h.b16 %v230
      %v429 = vunpack.c.l.b16 %v231
      %v430 = vunpack.c.h.b16 %v231
      %v431 = vunpack.c.l.b16 %v232
      %v432 = vunpack.c.l.b16 %v233
      %v433 = vunpack.c.h.b16 %v233
      %v434 = vunpack.c.l.b16 %v234
      %v435 = vunpack.c.h.b16 %v234
      %v436 = vunpack.c.l.b16 %v235
      %v437 = vunpack.c.h.b16 %v235
      %v438 = vunpack.c.l.b16 %v236
      %v439 = vunpack.c.l.b16 %v237
      %v440 = vunpack.c.h.b16 %v237
      %v441 = vunpack.c.l.b16 %v238
      %v442 = vunpack.c.h.b16 %v238
      %v443 = vunpack.c.l.b16 %v239
      %v444 = vunpack.c.h.b16 %v239
      %v445 = vunpack.c.l.b16 %v240
      %v446 = vpack.c.b16 %v397, %v390
      %v447 = vpack.c.b16 %v398, %v391
      %v448 = vpack.c.b16 %v399, %v392
      %v449 = vpack.c.b16 %v400, %v393
      %v450 = vpack.c.b16 %v401, %v394
      %v451 = vpack.c.b16 %v402, %v395
      %v452 = vpack.c.b16 %v403, %v396
      %v453 = vpack.c.b16 %v411, %v404
      %v454 = vpack.c.b16 %v412, %v405
      %v455 = vpack.c.b16 %v413, %v406
      %v456 = vpack.c.b16 %v414, %v407
      %v457 = vpack.c.b16 %v415, %v408
      %v458 = vpack.c.b16 %v416, %v409
      %v459 = vpack.c.b16 %v417, %v410
      %v460 = vpack.c.b16 %v425, %v418
      %v461 = vpack.c.b16 %v426, %v419
      %v462 = vpack.c.b16 %v427, %v420
      %v463 = vpack.c.b16 %v428, %v421
      %v464 = vpack.c.b16 %v429, %v422
      %v465 = vpack.c.b16 %v430, %v423
      %v466 = vpack.c.b16 %v431, %v424
      %v467 = vpack.c.b16 %v439, %v432
      %v468 = vpack.c.b16 %v440, %v433
      %v469 = vpack.c.b16 %v441, %v434
      %v470 = vpack.c.b16 %v442, %v435
      %v471 = vpack.c.b16 %v443, %v436
      %v472 = vpack.c.b16 %v444, %v437
      %v473 = vpack.c.b16 %v445, %v438
      %vm502 = vcmask 523264
      %v504 = vsel %vm502, %v342, 0
      %v507 = vsel %vm502, %v343, 0
      %v510 = vsel %vm502, %v344, 0
      %v513 = vsel %vm502, %v345, 0
      %v516 = vsel %vm502, %v346, 0
      %v519 = vsel %vm502, %v347, 0
      %v522 = vsel %vm502, %v348, 0
      %v525 = vsel %vm502, %v349, 0
      %v528 = vsel %vm502, %v350, 0
      %v531 = vsel %vm502, %v351, 0
      %v534 = vsel %vm502, %v352, 0
      %v537 = vsel %vm502, %v353, 0
      %v540 = vsel %vm502, %v354, 0
      %v543 = vsel %vm502, %v355, 0
      %v546 = vsel %vm502, %v356, 0
      %v549 = vsel %vm502, %v357, 0
      %551 = vmatprep.subr.bf16.mxu0 %v447
      %552 = vmatpush1.bf16.msra.mxu0 %v446
      %553 = vmatprep.subr.bf16.mxu0 %v454
      %554 = vmatpush1.bf16.msra.mxu0 %v453
      %555 = vmatprep.subr.bf16.mxu0 %v461
      %556 = vmatpush1.bf16.msra.mxu0 %v460
      %557 = vmatprep.subr.bf16.mxu0 %v468
      %558 = vmatpush1.bf16.msra.mxu0 %v467
      %559 = vmatprep.subr.bf16.mxu0 0
      %560 = vmatpush1.bf16.msra.mxu0 0
      %561 = vmatprep.subr.bf16.mxu0 0
      %562 = vmatpush1.bf16.msra.mxu0 0
      %563 = vmatprep.subr.bf16.mxu0 0
      %564 = vmatpush1.bf16.msra.mxu0 0
      %565 = vmatprep.subr.bf16.mxu0 0
      %566 = vmatpush1.bf16.msra.mxu0 0
      %567 = vmatprep.subr.bf16.mxu0 0
      %568 = vmatpush1.bf16.msra.mxu0 0
      %569 = vmatprep.subr.bf16.mxu0 0
      %570 = vmatpush1.bf16.msra.mxu0 0
      %571 = vmatprep.subr.bf16.mxu0 0
      %572 = vmatpush1.bf16.msra.mxu0 0
      %573 = vmatprep.subr.bf16.mxu0 0
      %574 = vmatpush1.bf16.msra.mxu0 0
      %575 = vmatprep.subr.bf16.mxu0 0
      %576 = vmatpush1.bf16.msra.mxu0 0
      %577 = vmatprep.subr.bf16.mxu0 0
      %578 = vmatpush1.bf16.msra.mxu0 0
      %579 = vmatprep.subr.bf16.mxu0 0
      %580 = vmatpush1.bf16.msra.mxu0 0
      %581 = vmatprep.subr.bf16.mxu0 0
      %582 = vmatpush1.bf16.msra.mxu0 0
      %583 = vmatprep.mubr.bf16.mxu0 0
      %584 = vmatmul.mubr.bf16.gmra.mrb[0].mxu0 %v504
      %v585 = vpop.f32.mrb[0].mxu0
      %v586 = vadd.f32 %v246, %v585
      %v587 = vpop.f32.mrb[0].mxu0
      %v588 = vadd.f32 %v250, %v587
      %v589 = vpop.f32.mrb[0].mxu0
      %v590 = vadd.f32 %v246, %v589
      %v591 = vpop.f32.mrb[0].mxu0
      %v592 = vadd.f32 %v250, %v591
      %593 = vmatprep.mubr.bf16.mxu0 0
      %594 = vmatmul.mubr.bf16.gmra.mrb[0].mxu0 %v507
      %v595 = vpop.f32.mrb[0].mxu0
      %v596 = vadd.f32 %v246, %v595
      %v597 = vpop.f32.mrb[0].mxu0
      %v598 = vadd.f32 %v250, %v597
      %v599 = vpop.f32.mrb[0].mxu0
      %v600 = vadd.f32 %v246, %v599
      %v601 = vpop.f32.mrb[0].mxu0
      %v602 = vadd.f32 %v250, %v601
      %603 = vmatprep.mubr.bf16.mxu0 0
      %604 = vmatmul.mubr.bf16.gmra.mrb[0].mxu0 %v510
      %v605 = vpop.f32.mrb[0].mxu0
      %v606 = vadd.f32 %v246, %v605
      %v607 = vpop.f32.mrb[0].mxu0
      %v608 = vadd.f32 %v250, %v607
      %v609 = vpop.f32.mrb[0].mxu0
      %v610 = vadd.f32 %v246, %v609
      %v611 = vpop.f32.mrb[0].mxu0
      %v612 = vadd.f32 %v250, %v611
      %613 = vmatprep.mubr.bf16.mxu0 0
      %614 = vmatmul.mubr.bf16.gmra.mrb[0].mxu0 %v513
      %v615 = vpop.f32.mrb[0].mxu0
      %v616 = vadd.f32 %v246, %v615
      %v617 = vpop.f32.mrb[0].mxu0
      %v618 = vadd.f32 %v250, %v617
      %v619 = vpop.f32.mrb[0].mxu0
      %v620 = vadd.f32 %v246, %v619
      %v621 = vpop.f32.mrb[0].mxu0
      %v622 = vadd.f32 %v250, %v621
      %623 = vmatprep.mubr.bf16.mxu0 0
      %624 = vmatmul.mubr.bf16.gmra.mrb[0].mxu0 %v516
      %v625 = vpop.f32.mrb[0].mxu0
      %v626 = vadd.f32 %v246, %v625
      %v627 = vpop.f32.mrb[0].mxu0
      %v628 = vadd.f32 %v250, %v627
      %v629 = vpop.f32.mrb[0].mxu0
      %v630 = vadd.f32 %v246, %v629
      %v631 = vpop.f32.mrb[0].mxu0
      %v632 = vadd.f32 %v250, %v631
      %633 = vmatprep.mubr.bf16.mxu0 0
      %634 = vmatmul.mubr.bf16.gmra.mrb[0].mxu0 %v519
      %v635 = vpop.f32.mrb[0].mxu0
      %v636 = vadd.f32 %v246, %v635
      %v637 = vpop.f32.mrb[0].mxu0
      %v638 = vadd.f32 %v250, %v637
      %v639 = vpop.f32.mrb[0].mxu0
      %v640 = vadd.f32 %v246, %v639
      %v641 = vpop.f32.mrb[0].mxu0
      %v642 = vadd.f32 %v250, %v641
      %643 = vmatprep.mubr.bf16.mxu0 0
      %644 = vmatmul.mubr.bf16.gmra.mrb[0].mxu0 %v522
      %v645 = vpop.f32.mrb[0].mxu0
      %v646 = vadd.f32 %v246, %v645
      %v647 = vpop.f32.mrb[0].mxu0
      %v648 = vadd.f32 %v250, %v647
      %v649 = vpop.f32.mrb[0].mxu0
      %v650 = vadd.f32 %v246, %v649
      %v651 = vpop.f32.mrb[0].mxu0
      %v652 = vadd.f32 %v250, %v651
      %653 = vmatprep.mubr.bf16.mxu0 0
      %654 = vmatmul.mubr.bf16.gmra.mrb[0].mxu0 %v525
      %v655 = vpop.f32.mrb[0].mxu0
      %v656 = vadd.f32 %v246, %v655
      %v657 = vpop.f32.mrb[0].mxu0
      %v658 = vadd.f32 %v250, %v657
      %v659 = vpop.f32.mrb[0].mxu0
      %v660 = vadd.f32 %v246, %v659
      %v661 = vpop.f32.mrb[0].mxu0
      %v662 = vadd.f32 %v250, %v661
      %663 = vmatprep.mubr.bf16.mxu0 0
      %664 = vmatmul.mubr.bf16.gmra.mrb[0].mxu0 %v528
      %v665 = vpop.f32.mrb[0].mxu0
      %v666 = vadd.f32 %v246, %v665
      %v667 = vpop.f32.mrb[0].mxu0
      %v668 = vadd.f32 %v250, %v667
      %v669 = vpop.f32.mrb[0].mxu0
      %v670 = vadd.f32 %v246, %v669
      %v671 = vpop.f32.mrb[0].mxu0
      %v672 = vadd.f32 %v250, %v671
      %673 = vmatprep.mubr.bf16.mxu0 0
      %674 = vmatmul.mubr.bf16.gmra.mrb[0].mxu0 %v531
      %v675 = vpop.f32.mrb[0].mxu0
      %v676 = vadd.f32 %v246, %v675
      %v677 = vpop.f32.mrb[0].mxu0
      %v678 = vadd.f32 %v250, %v677
      %v679 = vpop.f32.mrb[0].mxu0
      %v680 = vadd.f32 %v246, %v679
      %v681 = vpop.f32.mrb[0].mxu0
      %v682 = vadd.f32 %v250, %v681
      %683 = vmatprep.mubr.bf16.mxu0 0
      %684 = vmatmul.mubr.bf16.gmra.mrb[0].mxu0 %v534
      %v685 = vpop.f32.mrb[0].mxu0
      %v686 = vadd.f32 %v246, %v685
      %v687 = vpop.f32.mrb[0].mxu0
      %v688 = vadd.f32 %v250, %v687
      %v689 = vpop.f32.mrb[0].mxu0
      %v690 = vadd.f32 %v246, %v689
      %v691 = vpop.f32.mrb[0].mxu0
      %v692 = vadd.f32 %v250, %v691
      %693 = vmatprep.mubr.bf16.mxu0 0
      %694 = vmatmul.mubr.bf16.gmra.mrb[0].mxu0 %v537
      %v695 = vpop.f32.mrb[0].mxu0
      %v696 = vadd.f32 %v246, %v695
      %v697 = vpop.f32.mrb[0].mxu0
      %v698 = vadd.f32 %v250, %v697
      %v699 = vpop.f32.mrb[0].mxu0
      %v700 = vadd.f32 %v246, %v699
      %v701 = vpop.f32.mrb[0].mxu0
      %v702 = vadd.f32 %v250, %v701
      %703 = vmatprep.mubr.bf16.mxu0 0
      %704 = vmatmul.mubr.bf16.gmra.mrb[0].mxu0 %v540
      %v705 = vpop.f32.mrb[0].mxu0
      %v706 = vadd.f32 %v246, %v705
      %v707 = vpop.f32.mrb[0].mxu0
      %v708 = vadd.f32 %v250, %v707
      %v709 = vpop.f32.mrb[0].mxu0
      %v710 = vadd.f32 %v246, %v709
      %v711 = vpop.f32.mrb[0].mxu0
      %v712 = vadd.f32 %v250, %v711
      %713 = vmatprep.mubr.bf16.mxu0 0
      %714 = vmatmul.mubr.bf16.gmra.mrb[0].mxu0 %v543
      %v715 = vpop.f32.mrb[0].mxu0
      %v716 = vadd.f32 %v246, %v715
      %v717 = vpop.f32.mrb[0].mxu0
      %v718 = vadd.f32 %v250, %v717
      %v719 = vpop.f32.mrb[0].mxu0
      %v720 = vadd.f32 %v246, %v719
      %v721 = vpop.f32.mrb[0].mxu0
      %v722 = vadd.f32 %v250, %v721
      %723 = vmatprep.mubr.bf16.mxu0 0
      %724 = vmatmul.mubr.bf16.gmra.mrb[0].mxu0 %v546
      %v725 = vpop.f32.mrb[0].mxu0
      %v726 = vadd.f32 %v246, %v725
      %v727 = vpop.f32.mrb[0].mxu0
      %v728 = vadd.f32 %v250, %v727
      %v729 = vpop.f32.mrb[0].mxu0
      %v730 = vadd.f32 %v246, %v729
      %v731 = vpop.f32.mrb[0].mxu0
      %v732 = vadd.f32 %v250, %v731
      %733 = vmatprep.mubr.bf16.mxu0 0
      %734 = vmatmul.mubr.bf16.gmra.mrb[0].mxu0 %v549
      %v735 = vpop.f32.mrb[0].mxu0
      %v736 = vadd.f32 %v246, %v735
      %v737 = vpop.f32.mrb[0].mxu0
      %v738 = vadd.f32 %v250, %v737
      %v739 = vpop.f32.mrb[0].mxu0
      %v740 = vadd.f32 %v246, %v739
      %v741 = vpop.f32.mrb[0].mxu0
      %v742 = vadd.f32 %v250, %v741
      %743 = vdwg.mxu0
      %744 = vmatprep.subr.bf16.mxu0 %v449
      %745 = vmatpush1.bf16.msra.mxu0 %v448
      %746 = vmatprep.subr.bf16.mxu0 %v456
      %747 = vmatpush1.bf16.msra.mxu0 %v455
      %748 = vmatprep.subr.bf16.mxu0 %v463
      %749 = vmatpush1.bf16.msra.mxu0 %v462
      %750 = vmatprep.subr.bf16.mxu0 %v470
      %751 = vmatpush1.bf16.msra.mxu0 %v469
      %752 = vmatprep.subr.bf16.mxu0 0
      %753 = vmatpush1.bf16.msra.mxu0 0
      %754 = vmatprep.subr.bf16.mxu0 0
      %755 = vmatpush1.bf16.msra.mxu0 0
      %756 = vmatprep.subr.bf16.mxu0 0
      %757 = vmatpush1.bf16.msra.mxu0 0
      %758 = vmatprep.subr.bf16.mxu0 0
      %759 = vmatpush1.bf16.msra.mxu0 0
      %760 = vmatprep.subr.bf16.mxu0 0
      %761 = vmatpush1.bf16.msra.mxu0 0
      %762 = vmatprep.subr.bf16.mxu0 0
      %763 = vmatpush1.bf16.msra.mxu0 0
      %764 = vmatprep.subr.bf16.mxu0 0
      %765 = vmatpush1.bf16.msra.mxu0 0
      %766 = vmatprep.subr.bf16.mxu0 0
      %767 = vmatpush1.bf16.msra.mxu0 0
      %768 = vmatprep.subr.bf16.mxu0 0
      %769 = vmatpush1.bf16.msra.mxu0 0
      %770 = vmatprep.subr.bf16.mxu0 0
      %771 = vmatpush1.bf16.msra.mxu0 0
      %772 = vmatprep.subr.bf16.mxu0 0
      %773 = vmatpush1.bf16.msra.mxu0 0
      %774 = vmatprep.subr.bf16.mxu0 0
      %775 = vmatpush1.bf16.msra.mxu0 0
      %776 = vmatprep.mubr.bf16.mxu0 0
      %777 = vmatmul.mubr.bf16.gmra.mrb[0].mxu0 %v504
      %v778 = vpop.f32.mrb[0].mxu0
      %v779 = vadd.f32 %v254, %v778
      %v780 = vpop.f32.mrb[0].mxu0
      %v781 = vadd.f32 %v258, %v780
      %v782 = vpop.f32.mrb[0].mxu0
      %v783 = vadd.f32 %v254, %v782
      %v784 = vpop.f32.mrb[0].mxu0
      %v785 = vadd.f32 %v258, %v784
      %786 = vmatprep.mubr.bf16.mxu0 0
      %787 = vmatmul.mubr.bf16.gmra.mrb[0].mxu0 %v507
      %v788 = vpop.f32.mrb[0].mxu0
      %v789 = vadd.f32 %v254, %v788
      %v790 = vpop.f32.mrb[0].mxu0
      %v791 = vadd.f32 %v258, %v790
      %v792 = vpop.f32.mrb[0].mxu0
      %v793 = vadd.f32 %v254, %v792
      %v794 = vpop.f32.mrb[0].mxu0
      %v795 = vadd.f32 %v258, %v794
      %796 = vmatprep.mubr.bf16.mxu0 0
      %797 = vmatmul.mubr.bf16.gmra.mrb[0].mxu0 %v510
      %v798 = vpop.f32.mrb[0].mxu0
      %v799 = vadd.f32 %v254, %v798
      %v800 = vpop.f32.mrb[0].mxu0
      %v801 = vadd.f32 %v258, %v800
      %v802 = vpop.f32.mrb[0].mxu0
      %v803 = vadd.f32 %v254, %v802
      %v804 = vpop.f32.mrb[0].mxu0
      %v805 = vadd.f32 %v258, %v804
      %806 = vmatprep.mubr.bf16.mxu0 0
      %807 = vmatmul.mubr.bf16.gmra.mrb[0].mxu0 %v513
      %v808 = vpop.f32.mrb[0].mxu0
      %v809 = vadd.f32 %v254, %v808
      %v810 = vpop.f32.mrb[0].mxu0
      %v811 = vadd.f32 %v258, %v810
      %v812 = vpop.f32.mrb[0].mxu0
      %v813 = vadd.f32 %v254, %v812
      %v814 = vpop.f32.mrb[0].mxu0
      %v815 = vadd.f32 %v258, %v814
      %816 = vmatprep.mubr.bf16.mxu0 0
      %817 = vmatmul.mubr.bf16.gmra.mrb[0].mxu0 %v516
      %v818 = vpop.f32.mrb[0].mxu0
      %v819 = vadd.f32 %v254, %v818
      %v820 = vpop.f32.mrb[0].mxu0
      %v821 = vadd.f32 %v258, %v820
      %v822 = vpop.f32.mrb[0].mxu0
      %v823 = vadd.f32 %v254, %v822
      %v824 = vpop.f32.mrb[0].mxu0
      %v825 = vadd.f32 %v258, %v824
      %826 = vmatprep.mubr.bf16.mxu0 0
      %827 = vmatmul.mubr.bf16.gmra.mrb[0].mxu0 %v519
      %v828 = vpop.f32.mrb[0].mxu0
      %v829 = vadd.f32 %v254, %v828
      %v830 = vpop.f32.mrb[0].mxu0
      %v831 = vadd.f32 %v258, %v830
      %v832 = vpop.f32.mrb[0].mxu0
      %v833 = vadd.f32 %v254, %v832
      %v834 = vpop.f32.mrb[0].mxu0
      %v835 = vadd.f32 %v258, %v834
      %836 = vmatprep.mubr.bf16.mxu0 0
      %837 = vmatmul.mubr.bf16.gmra.mrb[0].mxu0 %v522
      %v838 = vpop.f32.mrb[0].mxu0
      %v839 = vadd.f32 %v254, %v838
      %v840 = vpop.f32.mrb[0].mxu0
      %v841 = vadd.f32 %v258, %v840
      %v842 = vpop.f32.mrb[0].mxu0
      %v843 = vadd.f32 %v254, %v842
      %v844 = vpop.f32.mrb[0].mxu0
      %v845 = vadd.f32 %v258, %v844
      %846 = vmatprep.mubr.bf16.mxu0 0
      %847 = vmatmul.mubr.bf16.gmra.mrb[0].mxu0 %v525
      %v848 = vpop.f32.mrb[0].mxu0
      %v849 = vadd.f32 %v254, %v848
      %v850 = vpop.f32.mrb[0].mxu0
      %v851 = vadd.f32 %v258, %v850
      %v852 = vpop.f32.mrb[0].mxu0
      %v853 = vadd.f32 %v254, %v852
      %v854 = vpop.f32.mrb[0].mxu0
      %v855 = vadd.f32 %v258, %v854
      %856 = vmatprep.mubr.bf16.mxu0 0
      %857 = vmatmul.mubr.bf16.gmra.mrb[0].mxu0 %v528
      %v858 = vpop.f32.mrb[0].mxu0
      %v859 = vadd.f32 %v254, %v858
      %v860 = vpop.f32.mrb[0].mxu0
      %v861 = vadd.f32 %v258, %v860
      %v862 = vpop.f32.mrb[0].mxu0
      %v863 = vadd.f32 %v254, %v862
      %v864 = vpop.f32.mrb[0].mxu0
      %v865 = vadd.f32 %v258, %v864
      %866 = vmatprep.mubr.bf16.mxu0 0
      %867 = vmatmul.mubr.bf16.gmra.mrb[0].mxu0 %v531
      %v868 = vpop.f32.mrb[0].mxu0
      %v869 = vadd.f32 %v254, %v868
      %v870 = vpop.f32.mrb[0].mxu0
      %v871 = vadd.f32 %v258, %v870
      %v872 = vpop.f32.mrb[0].mxu0
      %v873 = vadd.f32 %v254, %v872
      %v874 = vpop.f32.mrb[0].mxu0
      %v875 = vadd.f32 %v258, %v874
      %876 = vmatprep.mubr.bf16.mxu0 0
      %877 = vmatmul.mubr.bf16.gmra.mrb[0].mxu0 %v534
      %v878 = vpop.f32.mrb[0].mxu0
      %v879 = vadd.f32 %v254, %v878
      %v880 = vpop.f32.mrb[0].mxu0
      %v881 = vadd.f32 %v258, %v880
      %v882 = vpop.f32.mrb[0].mxu0
      %v883 = vadd.f32 %v254, %v882
      %v884 = vpop.f32.mrb[0].mxu0
      %v885 = vadd.f32 %v258, %v884
      %886 = vmatprep.mubr.bf16.mxu0 0
      %887 = vmatmul.mubr.bf16.gmra.mrb[0].mxu0 %v537
      %v888 = vpop.f32.mrb[0].mxu0
      %v889 = vadd.f32 %v254, %v888
      %v890 = vpop.f32.mrb[0].mxu0
      %v891 = vadd.f32 %v258, %v890
      %v892 = vpop.f32.mrb[0].mxu0
      %v893 = vadd.f32 %v254, %v892
      %v894 = vpop.f32.mrb[0].mxu0
      %v895 = vadd.f32 %v258, %v894
      %896 = vmatprep.mubr.bf16.mxu0 0
      %897 = vmatmul.mubr.bf16.gmra.mrb[0].mxu0 %v540
      %v898 = vpop.f32.mrb[0].mxu0
      %v899 = vadd.f32 %v254, %v898
      %v900 = vpop.f32.mrb[0].mxu0
      %v901 = vadd.f32 %v258, %v900
      %v902 = vpop.f32.mrb[0].mxu0
      %v903 = vadd.f32 %v254, %v902
      %v904 = vpop.f32.mrb[0].mxu0
      %v905 = vadd.f32 %v258, %v904
      %906 = vmatprep.mubr.bf16.mxu0 0
      %907 = vmatmul.mubr.bf16.gmra.mrb[0].mxu0 %v543
      %v908 = vpop.f32.mrb[0].mxu0
      %v909 = vadd.f32 %v254, %v908
      %v910 = vpop.f32.mrb[0].mxu0
      %v911 = vadd.f32 %v258, %v910
      %v912 = vpop.f32.mrb[0].mxu0
      %v913 = vadd.f32 %v254, %v912
      %v914 = vpop.f32.mrb[0].mxu0
      %v915 = vadd.f32 %v258, %v914
      %916 = vmatprep.mubr.bf16.mxu0 0
      %917 = vmatmul.mubr.bf16.gmra.mrb[0].mxu0 %v546
      %v918 = vpop.f32.mrb[0].mxu0
      %v919 = vadd.f32 %v254, %v918
      %v920 = vpop.f32.mrb[0].mxu0
      %v921 = vadd.f32 %v258, %v920
      %v922 = vpop.f32.mrb[0].mxu0
      %v923 = vadd.f32 %v254, %v922
      %v924 = vpop.f32.mrb[0].mxu0
      %v925 = vadd.f32 %v258, %v924
      %926 = vmatprep.mubr.bf16.mxu0 0
      %927 = vmatmul.mubr.bf16.gmra.mrb[0].mxu0 %v549
      %v928 = vpop.f32.mrb[0].mxu0
      %v929 = vadd.f32 %v254, %v928
      %v930 = vpop.f32.mrb[0].mxu0
      %v931 = vadd.f32 %v258, %v930
      %v932 = vpop.f32.mrb[0].mxu0
      %v933 = vadd.f32 %v254, %v932
      %v934 = vpop.f32.mrb[0].mxu0
      %v935 = vadd.f32 %v258, %v934
      %936 = vdwg.mxu0
      %937 = vmatprep.subr.bf16.mxu0 %v451
      %938 = vmatpush1.bf16.msra.mxu0 %v450
      %939 = vmatprep.subr.bf16.mxu0 %v458
      %940 = vmatpush1.bf16.msra.mxu0 %v457
      %941 = vmatprep.subr.bf16.mxu0 %v465
      %942 = vmatpush1.bf16.msra.mxu0 %v464
      %943 = vmatprep.subr.bf16.mxu0 %v472
      %944 = vmatpush1.bf16.msra.mxu0 %v471
      %945 = vmatprep.subr.bf16.mxu0 0
      %946 = vmatpush1.bf16.msra.mxu0 0
      %947 = vmatprep.subr.bf16.mxu0 0
      %948 = vmatpush1.bf16.msra.mxu0 0
      %949 = vmatprep.subr.bf16.mxu0 0
      %950 = vmatpush1.bf16.msra.mxu0 0
      %951 = vmatprep.subr.bf16.mxu0 0
      %952 = vmatpush1.bf16.msra.mxu0 0
      %953 = vmatprep.subr.bf16.mxu0 0
      %954 = vmatpush1.bf16.msra.mxu0 0
      %955 = vmatprep.subr.bf16.mxu0 0
      %956 = vmatpush1.bf16.msra.mxu0 0
      %957 = vmatprep.subr.bf16.mxu0 0
      %958 = vmatpush1.bf16.msra.mxu0 0
      %959 = vmatprep.subr.bf16.mxu0 0
      %960 = vmatpush1.bf16.msra.mxu0 0
      %961 = vmatprep.subr.bf16.mxu0 0
      %962 = vmatpush1.bf16.msra.mxu0 0
      %963 = vmatprep.subr.bf16.mxu0 0
      %964 = vmatpush1.bf16.msra.mxu0 0
      %965 = vmatprep.subr.bf16.mxu0 0
      %966 = vmatpush1.bf16.msra.mxu0 0
      %967 = vmatprep.subr.bf16.mxu0 0
      %968 = vmatpush1.bf16.msra.mxu0 0
      %969 = vmatprep.mubr.bf16.mxu0 0
      %970 = vmatmul.mubr.bf16.gmra.mrb[0].mxu0 %v504
      %v971 = vpop.f32.mrb[0].mxu0
      %v972 = vadd.f32 %v262, %v971
      %v973 = vpop.f32.mrb[0].mxu0
      %v974 = vadd.f32 %v266, %v973
      %v975 = vpop.f32.mrb[0].mxu0
      %v976 = vadd.f32 %v262, %v975
      %v977 = vpop.f32.mrb[0].mxu0
      %v978 = vadd.f32 %v266, %v977
      %979 = vmatprep.mubr.bf16.mxu0 0
      %980 = vmatmul.mubr.bf16.gmra.mrb[0].mxu0 %v507
      %v981 = vpop.f32.mrb[0].mxu0
      %v982 = vadd.f32 %v262, %v981
      %v983 = vpop.f32.mrb[0].mxu0
      %v984 = vadd.f32 %v266, %v983
      %v985 = vpop.f32.mrb[0].mxu0
      %v986 = vadd.f32 %v262, %v985
      %v987 = vpop.f32.mrb[0].mxu0
      %v988 = vadd.f32 %v266, %v987
      %989 = vmatprep.mubr.bf16.mxu0 0
      %990 = vmatmul.mubr.bf16.gmra.mrb[0].mxu0 %v510
      %v991 = vpop.f32.mrb[0].mxu0
      %v992 = vadd.f32 %v262, %v991
      %v993 = vpop.f32.mrb[0].mxu0
      %v994 = vadd.f32 %v266, %v993
      %v995 = vpop.f32.mrb[0].mxu0
      %v996 = vadd.f32 %v262, %v995
      %v997 = vpop.f32.mrb[0].mxu0
      %v998 = vadd.f32 %v266, %v997
      %999 = vmatprep.mubr.bf16.mxu0 0
      %1000 = vmatmul.mubr.bf16.gmra.mrb[0].mxu0 %v513
      %v1001 = vpop.f32.mrb[0].mxu0
      %v1002 = vadd.f32 %v262, %v1001
      %v1003 = vpop.f32.mrb[0].mxu0
      %v1004 = vadd.f32 %v266, %v1003
      %v1005 = vpop.f32.mrb[0].mxu0
      %v1006 = vadd.f32 %v262, %v1005
      %v1007 = vpop.f32.mrb[0].mxu0
      %v1008 = vadd.f32 %v266, %v1007
      %1009 = vmatprep.mubr.bf16.mxu0 0
      %1010 = vmatmul.mubr.bf16.gmra.mrb[0].mxu0 %v516
      %v1011 = vpop.f32.mrb[0].mxu0
      %v1012 = vadd.f32 %v262, %v1011
      %v1013 = vpop.f32.mrb[0].mxu0
      %v1014 = vadd.f32 %v266, %v1013
      %v1015 = vpop.f32.mrb[0].mxu0
      %v1016 = vadd.f32 %v262, %v1015
      %v1017 = vpop.f32.mrb[0].mxu0
      %v1018 = vadd.f32 %v266, %v1017
      %1019 = vmatprep.mubr.bf16.mxu0 0
      %1020 = vmatmul.mubr.bf16.gmra.mrb[0].mxu0 %v519
      %v1021 = vpop.f32.mrb[0].mxu0
      %v1022 = vadd.f32 %v262, %v1021
      %v1023 = vpop.f32.mrb[0].mxu0
      %v1024 = vadd.f32 %v266, %v1023
      %v1025 = vpop.f32.mrb[0].mxu0
      %v1026 = vadd.f32 %v262, %v1025
      %v1027 = vpop.f32.mrb[0].mxu0
      %v1028 = vadd.f32 %v266, %v1027
      %1029 = vmatprep.mubr.bf16.mxu0 0
      %1030 = vmatmul.mubr.bf16.gmra.mrb[0].mxu0 %v522
      %v1031 = vpop.f32.mrb[0].mxu0
      %v1032 = vadd.f32 %v262, %v1031
      %v1033 = vpop.f32.mrb[0].mxu0
      %v1034 = vadd.f32 %v266, %v1033
      %v1035 = vpop.f32.mrb[0].mxu0
      %v1036 = vadd.f32 %v262, %v1035
      %v1037 = vpop.f32.mrb[0].mxu0
      %v1038 = vadd.f32 %v266, %v1037
      %1039 = vmatprep.mubr.bf16.mxu0 0
      %1040 = vmatmul.mubr.bf16.gmra.mrb[0].mxu0 %v525
      %v1041 = vpop.f32.mrb[0].mxu0
      %v1042 = vadd.f32 %v262, %v1041
      %v1043 = vpop.f32.mrb[0].mxu0
      %v1044 = vadd.f32 %v266, %v1043
      %v1045 = vpop.f32.mrb[0].mxu0
      %v1046 = vadd.f32 %v262, %v1045
      %v1047 = vpop.f32.mrb[0].mxu0
      %v1048 = vadd.f32 %v266, %v1047
      %1049 = vmatprep.mubr.bf16.mxu0 0
      %1050 = vmatmul.mubr.bf16.gmra.mrb[0].mxu0 %v528
      %v1051 = vpop.f32.mrb[0].mxu0
      %v1052 = vadd.f32 %v262, %v1051
      %v1053 = vpop.f32.mrb[0].mxu0
      %v1054 = vadd.f32 %v266, %v1053
      %v1055 = vpop.f32.mrb[0].mxu0
      %v1056 = vadd.f32 %v262, %v1055
      %v1057 = vpop.f32.mrb[0].mxu0
      %v1058 = vadd.f32 %v266, %v1057
      %1059 = vmatprep.mubr.bf16.mxu0 0
      %1060 = vmatmul.mubr.bf16.gmra.mrb[0].mxu0 %v531
      %v1061 = vpop.f32.mrb[0].mxu0
      %v1062 = vadd.f32 %v262, %v1061
      %v1063 = vpop.f32.mrb[0].mxu0
      %v1064 = vadd.f32 %v266, %v1063
      %v1065 = vpop.f32.mrb[0].mxu0
      %v1066 = vadd.f32 %v262, %v1065
      %v1067 = vpop.f32.mrb[0].mxu0
      %v1068 = vadd.f32 %v266, %v1067
      %1069 = vmatprep.mubr.bf16.mxu0 0
      %1070 = vmatmul.mubr.bf16.gmra.mrb[0].mxu0 %v534
      %v1071 = vpop.f32.mrb[0].mxu0
      %v1072 = vadd.f32 %v262, %v1071
      %v1073 = vpop.f32.mrb[0].mxu0
      %v1074 = vadd.f32 %v266, %v1073
      %v1075 = vpop.f32.mrb[0].mxu0
      %v1076 = vadd.f32 %v262, %v1075
      %v1077 = vpop.f32.mrb[0].mxu0
      %v1078 = vadd.f32 %v266, %v1077
      %1079 = vmatprep.mubr.bf16.mxu0 0
      %1080 = vmatmul.mubr.bf16.gmra.mrb[0].mxu0 %v537
      %v1081 = vpop.f32.mrb[0].mxu0
      %v1082 = vadd.f32 %v262, %v1081
      %v1083 = vpop.f32.mrb[0].mxu0
      %v1084 = vadd.f32 %v266, %v1083
      %v1085 = vpop.f32.mrb[0].mxu0
      %v1086 = vadd.f32 %v262, %v1085
      %v1087 = vpop.f32.mrb[0].mxu0
      %v1088 = vadd.f32 %v266, %v1087
      %1089 = vmatprep.mubr.bf16.mxu0 0
      %1090 = vmatmul.mubr.bf16.gmra.mrb[0].mxu0 %v540
      %v1091 = vpop.f32.mrb[0].mxu0
      %v1092 = vadd.f32 %v262, %v1091
      %v1093 = vpop.f32.mrb[0].mxu0
      %v1094 = vadd.f32 %v266, %v1093
      %v1095 = vpop.f32.mrb[0].mxu0
      %v1096 = vadd.f32 %v262, %v1095
      %v1097 = vpop.f32.mrb[0].mxu0
      %v1098 = vadd.f32 %v266, %v1097
      %1099 = vmatprep.mubr.bf16.mxu0 0
      %1100 = vmatmul.mubr.bf16.gmra.mrb[0].mxu0 %v543
      %v1101 = vpop.f32.mrb[0].mxu0
      %v1102 = vadd.f32 %v262, %v1101
      %v1103 = vpop.f32.mrb[0].mxu0
      %v1104 = vadd.f32 %v266, %v1103
      %v1105 = vpop.f32.mrb[0].mxu0
      %v1106 = vadd.f32 %v262, %v1105
      %v1107 = vpop.f32.mrb[0].mxu0
      %v1108 = vadd.f32 %v266, %v1107
      %1109 = vmatprep.mubr.bf16.mxu0 0
      %1110 = vmatmul.mubr.bf16.gmra.mrb[0].mxu0 %v546
      %v1111 = vpop.f32.mrb[0].mxu0
      %v1112 = vadd.f32 %v262, %v1111
      %v1113 = vpop.f32.mrb[0].mxu0
      %v1114 = vadd.f32 %v266, %v1113
      %v1115 = vpop.f32.mrb[0].mxu0
      %v1116 = vadd.f32 %v262, %v1115
      %v1117 = vpop.f32.mrb[0].mxu0
      %v1118 = vadd.f32 %v266, %v1117
      %1119 = vmatprep.mubr.bf16.mxu0 0
      %1120 = vmatmul.mubr.bf16.gmra.mrb[0].mxu0 %v549
      %v1121 = vpop.f32.mrb[0].mxu0
      %v1122 = vadd.f32 %v262, %v1121
      %v1123 = vpop.f32.mrb[0].mxu0
      %v1124 = vadd.f32 %v266, %v1123
      %v1125 = vpop.f32.mrb[0].mxu0
      %v1126 = vadd.f32 %v262, %v1125
      %v1127 = vpop.f32.mrb[0].mxu0
      %v1128 = vadd.f32 %v266, %v1127
      %1129 = vdwg.mxu0
      %1130 = vmatprep.subr.bf16.mxu0 0
      %1131 = vmatpush1.bf16.msra.mxu0 %v452
      %1132 = vmatprep.subr.bf16.mxu0 0
      %1133 = vmatpush1.bf16.msra.mxu0 %v459
      %1134 = vmatprep.subr.bf16.mxu0 0
      %1135 = vmatpush1.bf16.msra.mxu0 %v466
      %1136 = vmatprep.subr.bf16.mxu0 0
      %1137 = vmatpush1.bf16.msra.mxu0 %v473
      %1138 = vmatprep.subr.bf16.mxu0 0
      %1139 = vmatpush1.bf16.msra.mxu0 0
      %1140 = vmatprep.subr.bf16.mxu0 0
      %1141 = vmatpush1.bf16.msra.mxu0 0
      %1142 = vmatprep.subr.bf16.mxu0 0
      %1143 = vmatpush1.bf16.msra.mxu0 0
      %1144 = vmatprep.subr.bf16.mxu0 0
      %1145 = vmatpush1.bf16.msra.mxu0 0
      %1146 = vmatprep.subr.bf16.mxu0 0
      %1147 = vmatpush1.bf16.msra.mxu0 0
      %1148 = vmatprep.subr.bf16.mxu0 0
      %1149 = vmatpush1.bf16.msra.mxu0 0
      %1150 = vmatprep.subr.bf16.mxu0 0
      %1151 = vmatpush1.bf16.msra.mxu0 0
      %1152 = vmatprep.subr.bf16.mxu0 0
      %1153 = vmatpush1.bf16.msra.mxu0 0
      %1154 = vmatprep.subr.bf16.mxu0 0
      %1155 = vmatpush1.bf16.msra.mxu0 0
      %1156 = vmatprep.subr.bf16.mxu0 0
      %1157 = vmatpush1.bf16.msra.mxu0 0
      %1158 = vmatprep.subr.bf16.mxu0 0
      %1159 = vmatpush1.bf16.msra.mxu0 0
      %1160 = vmatprep.subr.bf16.mxu0 0
      %1161 = vmatpush1.bf16.msra.mxu0 0
      %1162 = vmatprep.mubr.bf16.mxu0 0
      %1163 = vmatmul.mubr.bf16.gmra.mrb[0].mxu0 %v504
      %v1164 = vpop.f32.mrb[0].mxu0
      %v1165 = vadd.f32 %v270, %v1164
      %v1166 = vpop.f32.mrb[0].mxu0
      %v1167 = vpop.f32.mrb[0].mxu0
      %v1168 = vadd.f32 %v270, %v1167
      %v1169 = vpop.f32.mrb[0].mxu0
      %1170 = vmatprep.mubr.bf16.mxu0 0
      %1171 = vmatmul.mubr.bf16.gmra.mrb[0].mxu0 %v507
      %v1172 = vpop.f32.mrb[0].mxu0
      %v1173 = vadd.f32 %v270, %v1172
      %v1174 = vpop.f32.mrb[0].mxu0
      %v1175 = vpop.f32.mrb[0].mxu0
      %v1176 = vadd.f32 %v270, %v1175
      %v1177 = vpop.f32.mrb[0].mxu0
      %1178 = vmatprep.mubr.bf16.mxu0 0
      %1179 = vmatmul.mubr.bf16.gmra.mrb[0].mxu0 %v510
      %v1180 = vpop.f32.mrb[0].mxu0
      %v1181 = vadd.f32 %v270, %v1180
      %v1182 = vpop.f32.mrb[0].mxu0
      %v1183 = vpop.f32.mrb[0].mxu0
      %v1184 = vadd.f32 %v270, %v1183
      %v1185 = vpop.f32.mrb[0].mxu0
      %1186 = vmatprep.mubr.bf16.mxu0 0
      %1187 = vmatmul.mubr.bf16.gmra.mrb[0].mxu0 %v513
      %v1188 = vpop.f32.mrb[0].mxu0
      %v1189 = vadd.f32 %v270, %v1188
      %v1190 = vpop.f32.mrb[0].mxu0
      %v1191 = vpop.f32.mrb[0].mxu0
      %v1192 = vadd.f32 %v270, %v1191
      %v1193 = vpop.f32.mrb[0].mxu0
      %1194 = vmatprep.mubr.bf16.mxu0 0
      %1195 = vmatmul.mubr.bf16.gmra.mrb[0].mxu0 %v516
      %v1196 = vpop.f32.mrb[0].mxu0
      %v1197 = vadd.f32 %v270, %v1196
      %v1198 = vpop.f32.mrb[0].mxu0
      %v1199 = vpop.f32.mrb[0].mxu0
      %v1200 = vadd.f32 %v270, %v1199
      %v1201 = vpop.f32.mrb[0].mxu0
      %1202 = vmatprep.mubr.bf16.mxu0 0
      %1203 = vmatmul.mubr.bf16.gmra.mrb[0].mxu0 %v519
      %v1204 = vpop.f32.mrb[0].mxu0
      %v1205 = vadd.f32 %v270, %v1204
      %v1206 = vpop.f32.mrb[0].mxu0
      %v1207 = vpop.f32.mrb[0].mxu0
      %v1208 = vadd.f32 %v270, %v1207
      %v1209 = vpop.f32.mrb[0].mxu0
      %1210 = vmatprep.mubr.bf16.mxu0 0
      %1211 = vmatmul.mubr.bf16.gmra.mrb[0].mxu0 %v522
      %v1212 = vpop.f32.mrb[0].mxu0
      %v1213 = vadd.f32 %v270, %v1212
      %v1214 = vpop.f32.mrb[0].mxu0
      %v1215 = vpop.f32.mrb[0].mxu0
      %v1216 = vadd.f32 %v270, %v1215
      %v1217 = vpop.f32.mrb[0].mxu0
      %1218 = vmatprep.mubr.bf16.mxu0 0
      %1219 = vmatmul.mubr.bf16.gmra.mrb[0].mxu0 %v525
      %v1220 = vpop.f32.mrb[0].mxu0
      %v1221 = vadd.f32 %v270, %v1220
      %v1222 = vpop.f32.mrb[0].mxu0
      %v1223 = vpop.f32.mrb[0].mxu0
      %v1224 = vadd.f32 %v270, %v1223
      %v1225 = vpop.f32.mrb[0].mxu0
      %1226 = vmatprep.mubr.bf16.mxu0 0
      %1227 = vmatmul.mubr.bf16.gmra.mrb[0].mxu0 %v528
      %v1228 = vpop.f32.mrb[0].mxu0
      %v1229 = vadd.f32 %v270, %v1228
      %v1230 = vpop.f32.mrb[0].mxu0
      %v1231 = vpop.f32.mrb[0].mxu0
      %v1232 = vadd.f32 %v270, %v1231
      %v1233 = vpop.f32.mrb[0].mxu0
      %1234 = vmatprep.mubr.bf16.mxu0 0
      %1235 = vmatmul.mubr.bf16.gmra.mrb[0].mxu0 %v531
      %v1236 = vpop.f32.mrb[0].mxu0
      %v1237 = vadd.f32 %v270, %v1236
      %v1238 = vpop.f32.mrb[0].mxu0
      %v1239 = vpop.f32.mrb[0].mxu0
      %v1240 = vadd.f32 %v270, %v1239
      %v1241 = vpop.f32.mrb[0].mxu0
      %1242 = vmatprep.mubr.bf16.mxu0 0
      %1243 = vmatmul.mubr.bf16.gmra.mrb[0].mxu0 %v534
      %v1244 = vpop.f32.mrb[0].mxu0
      %v1245 = vadd.f32 %v270, %v1244
      %v1246 = vpop.f32.mrb[0].mxu0
      %v1247 = vpop.f32.mrb[0].mxu0
      %v1248 = vadd.f32 %v270, %v1247
      %v1249 = vpop.f32.mrb[0].mxu0
      %1250 = vmatprep.mubr.bf16.mxu0 0
      %1251 = vmatmul.mubr.bf16.gmra.mrb[0].mxu0 %v537
      %v1252 = vpop.f32.mrb[0].mxu0
      %v1253 = vadd.f32 %v270, %v1252
      %v1254 = vpop.f32.mrb[0].mxu0
      %v1255 = vpop.f32.mrb[0].mxu0
      %v1256 = vadd.f32 %v270, %v1255
      %v1257 = vpop.f32.mrb[0].mxu0
      %1258 = vmatprep.mubr.bf16.mxu0 0
      %1259 = vmatmul.mubr.bf16.gmra.mrb[0].mxu0 %v540
      %v1260 = vpop.f32.mrb[0].mxu0
      %v1261 = vadd.f32 %v270, %v1260
      %v1262 = vpop.f32.mrb[0].mxu0
      %v1263 = vpop.f32.mrb[0].mxu0
      %v1264 = vadd.f32 %v270, %v1263
      %v1265 = vpop.f32.mrb[0].mxu0
      %1266 = vmatprep.mubr.bf16.mxu0 0
      %1267 = vmatmul.mubr.bf16.gmra.mrb[0].mxu0 %v543
      %v1268 = vpop.f32.mrb[0].mxu0
      %v1269 = vadd.f32 %v270, %v1268
      %v1270 = vpop.f32.mrb[0].mxu0
      %v1271 = vpop.f32.mrb[0].mxu0
      %v1272 = vadd.f32 %v270, %v1271
      %v1273 = vpop.f32.mrb[0].mxu0
      %1274 = vmatprep.mubr.bf16.mxu0 0
      %1275 = vmatmul.mubr.bf16.gmra.mrb[0].mxu0 %v546
      %v1276 = vpop.f32.mrb[0].mxu0
      %v1277 = vadd.f32 %v270, %v1276
      %v1278 = vpop.f32.mrb[0].mxu0
      %v1279 = vpop.f32.mrb[0].mxu0
      %v1280 = vadd.f32 %v270, %v1279
      %v1281 = vpop.f32.mrb[0].mxu0
      %1282 = vmatprep.mubr.bf16.mxu0 0
      %1283 = vmatmul.mubr.bf16.gmra.mrb[0].mxu0 %v549
      %v1284 = vpop.f32.mrb[0].mxu0
      %v1285 = vadd.f32 %v270, %v1284
      %v1286 = vpop.f32.mrb[0].mxu0
      %v1287 = vpop.f32.mrb[0].mxu0
      %v1288 = vadd.f32 %v270, %v1287
      %v1289 = vpop.f32.mrb[0].mxu0
      %1290 = vdwg.mxu0
      %1291 = vst [vmem:[%s174] sm:$0xff] %v586
      %1292 = vst [vmem:[%s174 + $0x8] sm:$0xff] %v588
      %1293 = vst [vmem:[%s174 + $0x10] sm:$0xff] %v779
      %1294 = vst [vmem:[%s174 + $0x18] sm:$0xff] %v781
      %1295 = vst [vmem:[%s174 + $0x20] sm:$0xff] %v972
      %1296 = vst [vmem:[%s174 + $0x28] sm:$0xff] %v974
      %vm1297 = vcmask 785408
      %1298 = vst.msk [vmem:[%s174 + $0x30] sm:$0xff] %vm1297, %v1165
      %1299 = vst [vmem:[%s174 + $0x38] sm:$0xff] %v590
      %1300 = vst [vmem:[%s174 + $0x40] sm:$0xff] %v592
      %1301 = vst [vmem:[%s174 + $0x48] sm:$0xff] %v783
      %1302 = vst [vmem:[%s174 + $0x50] sm:$0xff] %v785
      %1303 = vst [vmem:[%s174 + $0x58] sm:$0xff] %v976
      %1304 = vst [vmem:[%s174 + $0x60] sm:$0xff] %v978
      %1305 = vst.msk [vmem:[%s174 + $0x68] sm:$0xff] %vm1297, %v1168
      %1306 = vst [vmem:[%s174 + $0x70] sm:$0xff] %v596
      %1307 = vst [vmem:[%s174 + $0x78] sm:$0xff] %v598
      %1308 = vst [vmem:[%s174 + $0x80] sm:$0xff] %v789
      %1309 = vst [vmem:[%s174 + $0x88] sm:$0xff] %v791
      %1310 = vst [vmem:[%s174 + $0x90] sm:$0xff] %v982
      %1311 = vst [vmem:[%s174 + $0x98] sm:$0xff] %v984
      %1312 = vst.msk [vmem:[%s174 + $0xa0] sm:$0xff] %vm1297, %v1173
      %1313 = vst [vmem:[%s174 + $0xa8] sm:$0xff] %v600
      %1314 = vst [vmem:[%s174 + $0xb0] sm:$0xff] %v602
      %1315 = vst [vmem:[%s174 + $0xb8] sm:$0xff] %v793
      %1316 = vst [vmem:[%s174 + $0xc0] sm:$0xff] %v795
      %1317 = vst [vmem:[%s174 + $0xc8] sm:$0xff] %v986
      %1318 = vst [vmem:[%s174 + $0xd0] sm:$0xff] %v988
      %1319 = vst.msk [vmem:[%s174 + $0xd8] sm:$0xff] %vm1297, %v1176
      %1320 = vst [vmem:[%s174 + $0xe0] sm:$0xff] %v606
      %1321 = vst [vmem:[%s174 + $0xe8] sm:$0xff] %v608
      %1322 = vst [vmem:[%s174 + $0xf0] sm:$0xff] %v799
      %1323 = vst [vmem:[%s174 + $0xf8] sm:$0xff] %v801
      %1324 = vst [vmem:[%s174 + $0x100] sm:$0xff] %v992
      %1325 = vst [vmem:[%s174 + $0x108] sm:$0xff] %v994
      %1326 = vst.msk [vmem:[%s174 + $0x110] sm:$0xff] %vm1297, %v1181
      %1327 = vst [vmem:[%s174 + $0x118] sm:$0xff] %v610
      %1328 = vst [vmem:[%s174 + $0x120] sm:$0xff] %v612
      %1329 = vst [vmem:[%s174 + $0x128] sm:$0xff] %v803
      %1330 = vst [vmem:[%s174 + $0x130] sm:$0xff] %v805
      %1331 = vst [vmem:[%s174 + $0x138] sm:$0xff] %v996
      %1332 = vst [vmem:[%s174 + $0x140] sm:$0xff] %v998
      %1333 = vst.msk [vmem:[%s174 + $0x148] sm:$0xff] %vm1297, %v1184
      %1334 = vst [vmem:[%s174 + $0x150] sm:$0xff] %v616
      %1335 = vst [vmem:[%s174 + $0x158] sm:$0xff] %v618
      %1336 = vst [vmem:[%s174 + $0x160] sm:$0xff] %v809
      %1337 = vst [vmem:[%s174 + $0x168] sm:$0xff] %v811
      %1338 = vst [vmem:[%s174 + $0x170] sm:$0xff] %v1002
      %1339 = vst [vmem:[%s174 + $0x178] sm:$0xff] %v1004
      %1340 = vst.msk [vmem:[%s174 + $0x180] sm:$0xff] %vm1297, %v1189
      %1341 = vst [vmem:[%s174 + $0x188] sm:$0xff] %v620
      %1342 = vst [vmem:[%s174 + $0x190] sm:$0xff] %v622
      %1343 = vst [vmem:[%s174 + $0x198] sm:$0xff] %v813
      %1344 = vst [vmem:[%s174 + $0x1a0] sm:$0xff] %v815
      %1345 = vst [vmem:[%s174 + $0x1a8] sm:$0xff] %v1006
      %1346 = vst [vmem:[%s174 + $0x1b0] sm:$0xff] %v1008
      %1347 = vst.msk [vmem:[%s174 + $0x1b8] sm:$0xff] %vm1297, %v1192
      %1348 = vst [vmem:[%s174 + $0x1c0] sm:$0xff] %v626
      %1349 = vst [vmem:[%s174 + $0x1c8] sm:$0xff] %v628
      %1350 = vst [vmem:[%s174 + $0x1d0] sm:$0xff] %v819
      %1351 = vst [vmem:[%s174 + $0x1d8] sm:$0xff] %v821
      %1352 = vst [vmem:[%s174 + $0x1e0] sm:$0xff] %v1012
      %1353 = vst [vmem:[%s174 + $0x1e8] sm:$0xff] %v1014
      %1354 = vst.msk [vmem:[%s174 + $0x1f0] sm:$0xff] %vm1297, %v1197
      %1355 = vst [vmem:[%s174 + $0x1f8] sm:$0xff] %v630
      %1356 = vst [vmem:[%s174 + $0x200] sm:$0xff] %v632
      %1357 = vst [vmem:[%s174 + $0x208] sm:$0xff] %v823
      %1358 = vst [vmem:[%s174 + $0x210] sm:$0xff] %v825
      %1359 = vst [vmem:[%s174 + $0x218] sm:$0xff] %v1016
      %1360 = vst [vmem:[%s174 + $0x220] sm:$0xff] %v1018
      %1361 = vst.msk [vmem:[%s174 + $0x228] sm:$0xff] %vm1297, %v1200
      %1362 = vst [vmem:[%s174 + $0x230] sm:$0xff] %v636
      %1363 = vst [vmem:[%s174 + $0x238] sm:$0xff] %v638
      %1364 = vst [vmem:[%s174 + $0x240] sm:$0xff] %v829
      %1365 = vst [vmem:[%s174 + $0x248] sm:$0xff] %v831
      %1366 = vst [vmem:[%s174 + $0x250] sm:$0xff] %v1022
      %1367 = vst [vmem:[%s174 + $0x258] sm:$0xff] %v1024
      %1368 = vst.msk [vmem:[%s174 + $0x260] sm:$0xff] %vm1297, %v1205
      %1369 = vst [vmem:[%s174 + $0x268] sm:$0xff] %v640
      %1370 = vst [vmem:[%s174 + $0x270] sm:$0xff] %v642
      %1371 = vst [vmem:[%s174 + $0x278] sm:$0xff] %v833
      %1372 = vst [vmem:[%s174 + $0x280] sm:$0xff] %v835
      %1373 = vst [vmem:[%s174 + $0x288] sm:$0xff] %v1026
      %1374 = vst [vmem:[%s174 + $0x290] sm:$0xff] %v1028
      %1375 = vst.msk [vmem:[%s174 + $0x298] sm:$0xff] %vm1297, %v1208
      %1376 = vst [vmem:[%s174 + $0x2a0] sm:$0xff] %v646
      %1377 = vst [vmem:[%s174 + $0x2a8] sm:$0xff] %v648
      %1378 = vst [vmem:[%s174 + $0x2b0] sm:$0xff] %v839
      %1379 = vst [vmem:[%s174 + $0x2b8] sm:$0xff] %v841
      %1380 = vst [vmem:[%s174 + $0x2c0] sm:$0xff] %v1032
      %1381 = vst [vmem:[%s174 + $0x2c8] sm:$0xff] %v1034
      %1382 = vst.msk [vmem:[%s174 + $0x2d0] sm:$0xff] %vm1297, %v1213
      %1383 = vst [vmem:[%s174 + $0x2d8] sm:$0xff] %v650
      %1384 = vst [vmem:[%s174 + $0x2e0] sm:$0xff] %v652
      %1385 = vst [vmem:[%s174 + $0x2e8] sm:$0xff] %v843
      %1386 = vst [vmem:[%s174 + $0x2f0] sm:$0xff] %v845
      %1387 = vst [vmem:[%s174 + $0x2f8] sm:$0xff] %v1036
      %1388 = vst [vmem:[%s174 + $0x300] sm:$0xff] %v1038
      %1389 = vst.msk [vmem:[%s174 + $0x308] sm:$0xff] %vm1297, %v1216
      %1390 = vst [vmem:[%s174 + $0x310] sm:$0xff] %v656
      %1391 = vst [vmem:[%s174 + $0x318] sm:$0xff] %v658
      %1392 = vst [vmem:[%s174 + $0x320] sm:$0xff] %v849
      %1393 = vst [vmem:[%s174 + $0x328] sm:$0xff] %v851
      %1394 = vst [vmem:[%s174 + $0x330] sm:$0xff] %v1042
      %1395 = vst [vmem:[%s174 + $0x338] sm:$0xff] %v1044
      %1396 = vst.msk [vmem:[%s174 + $0x340] sm:$0xff] %vm1297, %v1221
      %1397 = vst [vmem:[%s174 + $0x348] sm:$0xff] %v660
      %1398 = vst [vmem:[%s174 + $0x350] sm:$0xff] %v662
      %1399 = vst [vmem:[%s174 + $0x358] sm:$0xff] %v853
      %1400 = vst [vmem:[%s174 + $0x360] sm:$0xff] %v855
      %1401 = vst [vmem:[%s174 + $0x368] sm:$0xff] %v1046
      %1402 = vst [vmem:[%s174 + $0x370] sm:$0xff] %v1048
      %1403 = vst.msk [vmem:[%s174 + $0x378] sm:$0xff] %vm1297, %v1224
      %1404 = vst [vmem:[%s174 + $0x380] sm:$0xff] %v666
      %1405 = vst [vmem:[%s174 + $0x388] sm:$0xff] %v668
      %1406 = vst [vmem:[%s174 + $0x390] sm:$0xff] %v859
      %1407 = vst [vmem:[%s174 + $0x398] sm:$0xff] %v861
      %1408 = vst [vmem:[%s174 + $0x3a0] sm:$0xff] %v1052
      %1409 = vst [vmem:[%s174 + $0x3a8] sm:$0xff] %v1054
      %1410 = vst.msk [vmem:[%s174 + $0x3b0] sm:$0xff] %vm1297, %v1229
      %1411 = vst [vmem:[%s174 + $0x3b8] sm:$0xff] %v670
      %1412 = vst [vmem:[%s174 + $0x3c0] sm:$0xff] %v672
      %1413 = vst [vmem:[%s174 + $0x3c8] sm:$0xff] %v863
      %1414 = vst [vmem:[%s174 + $0x3d0] sm:$0xff] %v865
      %1415 = vst [vmem:[%s174 + $0x3d8] sm:$0xff] %v1056
      %1416 = vst [vmem:[%s174 + $0x3e0] sm:$0xff] %v1058
      %1417 = vst.msk [vmem:[%s174 + $0x3e8] sm:$0xff] %vm1297, %v1232
      %1418 = vst [vmem:[%s174 + $0x3f0] sm:$0xff] %v676
      %1419 = vst [vmem:[%s174 + $0x3f8] sm:$0xff] %v678
      %1420 = vst [vmem:[%s174 + $0x400] sm:$0xff] %v869
      %1421 = vst [vmem:[%s174 + $0x408] sm:$0xff] %v871
      %1422 = vst [vmem:[%s174 + $0x410] sm:$0xff] %v1062
      %1423 = vst [vmem:[%s174 + $0x418] sm:$0xff] %v1064
      %1424 = vst.msk [vmem:[%s174 + $0x420] sm:$0xff] %vm1297, %v1237
      %1425 = vst [vmem:[%s174 + $0x428] sm:$0xff] %v680
      %1426 = vst [vmem:[%s174 + $0x430] sm:$0xff] %v682
      %1427 = vst [vmem:[%s174 + $0x438] sm:$0xff] %v873
      %1428 = vst [vmem:[%s174 + $0x440] sm:$0xff] %v875
      %1429 = vst [vmem:[%s174 + $0x448] sm:$0xff] %v1066
      %1430 = vst [vmem:[%s174 + $0x450] sm:$0xff] %v1068
      %1431 = vst.msk [vmem:[%s174 + $0x458] sm:$0xff] %vm1297, %v1240
      %1432 = vst [vmem:[%s174 + $0x460] sm:$0xff] %v686
      %1433 = vst [vmem:[%s174 + $0x468] sm:$0xff] %v688
      %1434 = vst [vmem:[%s174 + $0x470] sm:$0xff] %v879
      %1435 = vst [vmem:[%s174 + $0x478] sm:$0xff] %v881
      %1436 = vst [vmem:[%s174 + $0x480] sm:$0xff] %v1072
      %1437 = vst [vmem:[%s174 + $0x488] sm:$0xff] %v1074
      %1438 = vst.msk [vmem:[%s174 + $0x490] sm:$0xff] %vm1297, %v1245
      %1439 = vst [vmem:[%s174 + $0x498] sm:$0xff] %v690
      %1440 = vst [vmem:[%s174 + $0x4a0] sm:$0xff] %v692
      %1441 = vst [vmem:[%s174 + $0x4a8] sm:$0xff] %v883
      %1442 = vst [vmem:[%s174 + $0x4b0] sm:$0xff] %v885
      %1443 = vst [vmem:[%s174 + $0x4b8] sm:$0xff] %v1076
      %1444 = vst [vmem:[%s174 + $0x4c0] sm:$0xff] %v1078
      %1445 = vst.msk [vmem:[%s174 + $0x4c8] sm:$0xff] %vm1297, %v1248
      %1446 = vst [vmem:[%s174 + $0x4d0] sm:$0xff] %v696
      %1447 = vst [vmem:[%s174 + $0x4d8] sm:$0xff] %v698
      %1448 = vst [vmem:[%s174 + $0x4e0] sm:$0xff] %v889
      %1449 = vst [vmem:[%s174 + $0x4e8] sm:$0xff] %v891
      %1450 = vst [vmem:[%s174 + $0x4f0] sm:$0xff] %v1082
      %1451 = vst [vmem:[%s174 + $0x4f8] sm:$0xff] %v1084
      %1452 = vst.msk [vmem:[%s174 + $0x500] sm:$0xff] %vm1297, %v1253
      %1453 = vst [vmem:[%s174 + $0x508] sm:$0xff] %v700
      %1454 = vst [vmem:[%s174 + $0x510] sm:$0xff] %v702
      %1455 = vst [vmem:[%s174 + $0x518] sm:$0xff] %v893
      %1456 = vst [vmem:[%s174 + $0x520] sm:$0xff] %v895
      %1457 = vst [vmem:[%s174 + $0x528] sm:$0xff] %v1086
      %1458 = vst [vmem:[%s174 + $0x530] sm:$0xff] %v1088
      %1459 = vst.msk [vmem:[%s174 + $0x538] sm:$0xff] %vm1297, %v1256
      %1460 = vst [vmem:[%s174 + $0x540] sm:$0xff] %v706
      %1461 = vst [vmem:[%s174 + $0x548] sm:$0xff] %v708
      %1462 = vst [vmem:[%s174 + $0x550] sm:$0xff] %v899
      %1463 = vst [vmem:[%s174 + $0x558] sm:$0xff] %v901
      %1464 = vst [vmem:[%s174 + $0x560] sm:$0xff] %v1092
      %1465 = vst [vmem:[%s174 + $0x568] sm:$0xff] %v1094
      %1466 = vst.msk [vmem:[%s174 + $0x570] sm:$0xff] %vm1297, %v1261
      %1467 = vst [vmem:[%s174 + $0x578] sm:$0xff] %v710
      %1468 = vst [vmem:[%s174 + $0x580] sm:$0xff] %v712
      %1469 = vst [vmem:[%s174 + $0x588] sm:$0xff] %v903
      %1470 = vst [vmem:[%s174 + $0x590] sm:$0xff] %v905
      %1471 = vst [vmem:[%s174 + $0x598] sm:$0xff] %v1096
      %1472 = vst [vmem:[%s174 + $0x5a0] sm:$0xff] %v1098
      %1473 = vst.msk [vmem:[%s174 + $0x5a8] sm:$0xff] %vm1297, %v1264
      %1474 = vst [vmem:[%s174 + $0x5b0] sm:$0xff] %v716
      %1475 = vst [vmem:[%s174 + $0x5b8] sm:$0xff] %v718
      %1476 = vst [vmem:[%s174 + $0x5c0] sm:$0xff] %v909
      %1477 = vst [vmem:[%s174 + $0x5c8] sm:$0xff] %v911
      %1478 = vst [vmem:[%s174 + $0x5d0] sm:$0xff] %v1102
      %1479 = vst [vmem:[%s174 + $0x5d8] sm:$0xff] %v1104
      %1480 = vst.msk [vmem:[%s174 + $0x5e0] sm:$0xff] %vm1297, %v1269
      %1481 = vst [vmem:[%s174 + $0x5e8] sm:$0xff] %v720
      %1482 = vst [vmem:[%s174 + $0x5f0] sm:$0xff] %v722
      %1483 = vst [vmem:[%s174 + $0x5f8] sm:$0xff] %v913
      %1484 = vst [vmem:[%s174 + $0x600] sm:$0xff] %v915
      %1485 = vst [vmem:[%s174 + $0x608] sm:$0xff] %v1106
      %1486 = vst [vmem:[%s174 + $0x610] sm:$0xff] %v1108
      %1487 = vst.msk [vmem:[%s174 + $0x618] sm:$0xff] %vm1297, %v1272
      %1488 = vst [vmem:[%s174 + $0x620] sm:$0xff] %v726
      %1489 = vst [vmem:[%s174 + $0x628] sm:$0xff] %v728
      %1490 = vst [vmem:[%s174 + $0x630] sm:$0xff] %v919
      %1491 = vst [vmem:[%s174 + $0x638] sm:$0xff] %v921
      %1492 = vst [vmem:[%s174 + $0x640] sm:$0xff] %v1112
      %1493 = vst [vmem:[%s174 + $0x648] sm:$0xff] %v1114
      %1494 = vst.msk [vmem:[%s174 + $0x650] sm:$0xff] %vm1297, %v1277
      %1495 = vst [vmem:[%s174 + $0x658] sm:$0xff] %v730
      %1496 = vst [vmem:[%s174 + $0x660] sm:$0xff] %v732
      %1497 = vst [vmem:[%s174 + $0x668] sm:$0xff] %v923
      %1498 = vst [vmem:[%s174 + $0x670] sm:$0xff] %v925
      %1499 = vst [vmem:[%s174 + $0x678] sm:$0xff] %v1116
      %1500 = vst [vmem:[%s174 + $0x680] sm:$0xff] %v1118
      %1501 = vst.msk [vmem:[%s174 + $0x688] sm:$0xff] %vm1297, %v1280
      %1502 = vst [vmem:[%s174 + $0x690] sm:$0xff] %v736
      %1503 = vst [vmem:[%s174 + $0x698] sm:$0xff] %v738
      %1504 = vst [vmem:[%s174 + $0x6a0] sm:$0xff] %v929
      %1505 = vst [vmem:[%s174 + $0x6a8] sm:$0xff] %v931
      %1506 = vst [vmem:[%s174 + $0x6b0] sm:$0xff] %v1122
      %1507 = vst [vmem:[%s174 + $0x6b8] sm:$0xff] %v1124
      %1508 = vst.msk [vmem:[%s174 + $0x6c0] sm:$0xff] %vm1297, %v1285
      %1509 = vst [vmem:[%s174 + $0x6c8] sm:$0xff] %v740
      %1510 = vst [vmem:[%s174 + $0x6d0] sm:$0xff] %v742
      %1511 = vst [vmem:[%s174 + $0x6d8] sm:$0xff] %v933
      %1512 = vst [vmem:[%s174 + $0x6e0] sm:$0xff] %v935
      %1513 = vst [vmem:[%s174 + $0x6e8] sm:$0xff] %v1126
      %1514 = vst [vmem:[%s174 + $0x6f0] sm:$0xff] %v1128
      %1515 = vst.msk [vmem:[%s174 + $0x6f8] sm:$0xff] %vm1297, %v1288
      %s1516 = smul.u32 32, %s14
      %p1517 = scmp.lt.s32.totalorder %s1516, 127
      %s1518 = scalar_select %p1517, %s1516, 127
      %s1519 = smul.addr %s1518, 7
      %s1520 = smul.addr %s1519, 8
      %s1521 = scalar_lea.vmem %s3, %s1520
      // Predicated region
      $region33: #{conv3d_autoencoder_forward.16} parent=31 // pred_check
        %p1522 = pneg %p100
      $region34: #{conv3d_autoencoder_forward.16} parent=31 // pred_check_branch
        %1524 = sbr.rel (%p1522) target = $region36
      $region35: #{conv3d_autoencoder_forward.16} parent=31 // pred_region
        %s1525 = smul.u32 32, %s14
      $region36: #{conv3d_autoencoder_forward.16} parent=31 // pred_fallthru
        _
    $region32: #{conv3d_autoencoder_forward.16} parent=5 // pred_fallthru
      _
    %p1526 = scmp.le.s32.totalorder 2, %s9
    // Predicated region
    $region37: #{conv3d_autoencoder_forward.16} parent=5 // pred_check
      %p1527 = pneg %p1526
    $region38: #{conv3d_autoencoder_forward.16} parent=5 // pred_check_branch
      %1529 = sbr.rel (%p1527) target = $region40
    $region39: #{conv3d_autoencoder_forward.16} parent=5 // pred_region
      %s1530 = ssub.s32 %s9, 2
      // Predicated region
      $region41: #{conv3d_autoencoder_forward.16} parent=39 // pred_check
        %p1531 = pneg %p106
      $region42: #{conv3d_autoencoder_forward.16} parent=39 // pred_check_branch
        %1533 = sbr.rel (%p1531) target = $region44
      $region43: #{conv3d_autoencoder_forward.16} parent=39 // pred_region
        %s1534 = smul.u32 32, %s15
        %p1535 = scmp.lt.s32.totalorder %s1534, 127
        %s1536 = scalar_select %p1535, %s1534, 127
        %s1537 = smul.addr %s1536, 7
        %s1538 = smul.addr %s1537, 8
        %s1539 = scalar_lea.vmem %s3, %s1538
      $region44: #{conv3d_autoencoder_forward.16} parent=39 // pred_fallthru
        _
    $region40: #{conv3d_autoencoder_forward.16} parent=5 // pred_fallthru
      _
  $region6: #{conv3d_autoencoder_forward.16} parent=0 // loop_footer
    %s13 = sadd.s32 1, %s9
  $region7: #{conv3d_autoencoder_forward.16} parent=0 // loop_footer_branch
    %8 = sbr.rel target = $region3
  $region8: #{conv3d_autoencoder_forward.16} parent=0 // loop_exit
    _

// kernel: conv3d_autoencoder_forward.17
$region0: #{conv3d_autoencoder_forward.17}
  #allocation0 [shape = 'u32[]', space=smem, size = 0x4, offset = 0x4, fixed_abs, tag = 'smem constant byte address 0x4 - core index']
  #allocation1 [shape = 'u32[144,128]{1,0:T(1,128)}', space=vmem, size = 0x12000, scoped, tag = 'internal scratch']
  %s0 = inlined_call_operand.vmem [shape: f32[4608,32], index: 0, kind: input, shape index: {}]
  %s1 = inlined_call_operand.vmem [shape: f32[1,32], index: 1, kind: input, shape index: {}]
  %s2 = inlined_call_operand.vmem [shape: bf16[4608,32], index: 2, kind: output, shape index: {}]
  %s3 = sld [smem:[#allocation0]]
  $region41: #{conv3d_autoencoder_forward.17} parent=0
    _
  %s5 = ssub.s32 1, %s3
  %s6 = scalar_select 0, %s5, %s3
  loop: start=0, step=1, limit=20
  $region2: #{conv3d_autoencoder_forward.17} parent=0 // loop_pre_header
    _
  $region3: #{conv3d_autoencoder_forward.17} parent=0 // loop_header
    %s8 = sphi 0, %s12
    %p9 = scmp.ge.s32.totalorder %s8, 20
    %s18 = sphi 0, %s20
    %s21 = sphi 0, %s18
    %s22 = sphi 0, %s21
    %s38 = sphi 0, %s22
    %s42 = sphi 0, %s42
    %s44 = sphi 0, %s42
    %s45 = sphi 0, %s44
    %s59 = sphi 0, %s45
    %s65 = sphi 0, %s67
    %s68 = sphi 0, %s65
    %s69 = sphi 0, %s68
    %s85 = sphi 0, %s69
  $region4: #{conv3d_autoencoder_forward.17} parent=0 // loop_header_branch
    %11 = sbr.rel (%p9) target = $region8
  $region5: #{conv3d_autoencoder_forward.17} parent=0 // loop_body
    %s13 = ssub.s32 %s8, 1
    %s14 = ssub.s32 %s8, 2
    %s15 = sadd.s32 %s8, 1
    %s16 = ssub.s32 %s8, %s15
    %p17 = scmp.eq.s32.totalorder %s16, 0
    %s19 = sadd.s32 %s18, 1
    %s20 = scalar_select %p17, %s18, %s19
    %p23 = pneg %p17
    %p24 = scmp.eq.s32.totalorder %s8, 17
    %p25 = por %p23, %p24
    %p26 = scmp.ne.s32.totalorder %s18, %s21
    %p27 = scmp.eq.s32.totalorder %s8, 0
    %p28 = por %p26, %p27
    %p29 = scmp.ne.s32.totalorder %s18, %s21
    %p30 = scmp.eq.s32.totalorder %s13, 17
    %p31 = por %p29, %p30
    %p32 = scmp.ne.s32.totalorder %s21, %s22
    %p33 = scmp.eq.s32.totalorder %s13, 0
    %p34 = por %p32, %p33
    %p35 = scmp.ne.s32.totalorder %s21, %s22
    %p36 = scmp.eq.s32.totalorder %s14, 17
    %p37 = por %p35, %p36
    %p39 = scmp.ne.s32.totalorder %s22, %s38
    %p40 = scmp.eq.s32.totalorder %s14, 0
    %p41 = por %p39, %p40
    %s43 = sadd.s32 %s42, 1
    %p46 = scmp.eq.s32.totalorder %s8, 17
    %p47 = scmp.ne.s32.totalorder %s42, %s44
    %p48 = scmp.eq.s32.totalorder %s8, 0
    %p49 = por %p47, %p48
    %p50 = scmp.ne.s32.totalorder %s42, %s44
    %p51 = scmp.eq.s32.totalorder %s13, 17
    %p52 = por %p50, %p51
    %p53 = scmp.ne.s32.totalorder %s44, %s45
    %p54 = scmp.eq.s32.totalorder %s13, 0
    %p55 = por %p53, %p54
    %p56 = scmp.ne.s32.totalorder %s44, %s45
    %p57 = scmp.eq.s32.totalorder %s14, 17
    %p58 = por %p56, %p57
    %p60 = scmp.ne.s32.totalorder %s45, %s59
    %p61 = scmp.eq.s32.totalorder %s14, 0
    %p62 = por %p60, %p61
    %s63 = ssub.s32 %s8, %s15
    %p64 = scmp.eq.s32.totalorder %s63, 0
    %s66 = sadd.s32 %s65, 1
    %s67 = scalar_select %p64, %s65, %s66
    %p70 = pneg %p64
    %p71 = scmp.eq.s32.totalorder %s8, 17
    %p72 = por %p70, %p71
    %p73 = scmp.ne.s32.totalorder %s65, %s68
    %p74 = scmp.eq.s32.totalorder %s8, 0
    %p75 = por %p73, %p74
    %p76 = scmp.ne.s32.totalorder %s65, %s68
    %p77 = scmp.eq.s32.totalorder %s13, 17
    %p78 = por %p76, %p77
    %p79 = scmp.ne.s32.totalorder %s68, %s69
    %p80 = scmp.eq.s32.totalorder %s13, 0
    %p81 = por %p79, %p80
    %p82 = scmp.ne.s32.totalorder %s68, %s69
    %p83 = scmp.eq.s32.totalorder %s14, 17
    %p84 = por %p82, %p83
    %p86 = scmp.ne.s32.totalorder %s69, %s85
    %p87 = scmp.eq.s32.totalorder %s14, 0
    %p88 = por %p86, %p87
    %p89 = scmp.le.s32.totalorder 1, %s8
    %p90 = scmp.lt.s32.totalorder %s8, 19
    %p91 = pnand %p89, %p90
    %p92 = pneg %p91
    // Predicated region
    $region9: #{conv3d_autoencoder_forward.17} parent=5 // pred_check
      _
    $region10: #{conv3d_autoencoder_forward.17} parent=5 // pred_check_branch
      %94 = sbr.rel (%p91) target = $region12
    $region11: #{conv3d_autoencoder_forward.17} parent=5 // pred_region
      %s95 = ssub.s32 %s8, 1
      // Predicated region
      $region13: #{conv3d_autoencoder_forward.17} parent=11 // pred_check
        %p96 = pneg %p55
      $region14: #{conv3d_autoencoder_forward.17} parent=11 // pred_check_branch
        %98 = sbr.rel (%p96) target = $region16
      $region15: #{conv3d_autoencoder_forward.17} parent=11 // pred_region
        _
      $region16: #{conv3d_autoencoder_forward.17} parent=11 // pred_fallthru
        _
    $region12: #{conv3d_autoencoder_forward.17} parent=5 // pred_fallthru
      _
    %p99 = scmp.lt.s32.totalorder %s8, 18
    // Predicated region
    $region17: #{conv3d_autoencoder_forward.17} parent=5 // pred_check
      %p100 = pneg %p99
    $region18: #{conv3d_autoencoder_forward.17} parent=5 // pred_check_branch
      %102 = sbr.rel (%p100) target = $region20
    $region19: #{conv3d_autoencoder_forward.17} parent=5 // pred_region
      // Predicated region
      $region21: #{conv3d_autoencoder_forward.17} parent=19 // pred_check
        %p103 = pneg %p28
      $region22: #{conv3d_autoencoder_forward.17} parent=19 // pred_check_branch
        %105 = sbr.rel (%p103) target = $region24
      $region23: #{conv3d_autoencoder_forward.17} parent=19 // pred_region
        %s106 = smul.u32 32, %s8
        %p107 = scmp.lt.s32.totalorder %s106, 575
        %s108 = scalar_select %p107, %s106, 575
        %s109 = smul.addr %s108, 8
        %s110 = scalar_lea.vmem %s0, %s109
        %s111 = smul.u32 32, %s8
      $region24: #{conv3d_autoencoder_forward.17} parent=19 // pred_fallthru
        _
    $region20: #{conv3d_autoencoder_forward.17} parent=5 // pred_fallthru
      _
    %p112 = scmp.le.s32.totalorder 1, %s8
    %p113 = scmp.lt.s32.totalorder %s8, 19
    %p114 = pnand %p112, %p113
    %p115 = pneg %p114
    // Predicated region
    $region25: #{conv3d_autoencoder_forward.17} parent=5 // pred_check
      _
    $region26: #{conv3d_autoencoder_forward.17} parent=5 // pred_check_branch
      %117 = sbr.rel (%p114) target = $region28
    $region27: #{conv3d_autoencoder_forward.17} parent=5 // pred_region
      %s118 = ssub.s32 %s8, 1
      %s119 = smul.u32 32, %s13
      %p120 = scmp.lt.s32.totalorder %s119, 575
      %s121 = scalar_select %p120, %s119, 575
      %s122 = smul.addr %s121, 8
      %s123 = scalar_lea.vmem %s0, %s122
      %p124 = pneg %p34
      %p125 = pneg %p31
      %p126 = pneg %p55
      %p127 = pneg %p52
      %p128 = pneg %p81
      %p129 = pneg %p78
      %s130 = smul.u32 32, %s13
      %p131 = scmp.lt.s32.totalorder %s130, 575
      %s132 = scalar_select %p131, %s130, 575
      %s133 = smul.addr %s132, 4
      %s134 = scalar_lea.vmem %s2, %s133
      %s135 = smul.u32 32, %s13
      %p136 = scmp.lt.s32.totalorder %s135, 575
      %s137 = scalar_select %p136, %s135, 575
      %s138 = smul.addr %s137, 8
      %s139 = scalar_lea.vmem %s0, %s138
      %s140 = smul.u32 32, %s13
      %s141 = smul.u32 32, %s13
      %p142 = scmp.lt.s32.totalorder %s141, 575
      %s143 = scalar_select %p142, %s141, 575
      %s144 = smul.addr %s143, 4
      %s145 = scalar_lea.vmem %s2, %s144
      %s146 = smul.u32 32, %s13
      %v147 = vld [vmem:[%s139] sm:$0xff]
      %v148 = vld [vmem:[%s139 + $0x8] sm:$0xff]
      %v149 = vld [vmem:[%s139 + $0x10] sm:$0xff]
      %v150 = vld [vmem:[%s139 + $0x18] sm:$0xff]
      %v151 = vld [vmem:[%s139 + $0x20] sm:$0xff]
      %v152 = vld [vmem:[%s139 + $0x28] sm:$0xff]
      %v153 = vld [vmem:[%s139 + $0x30] sm:$0xff]
      %v154 = vld [vmem:[%s139 + $0x38] sm:$0xff]
      %v155 = vld [vmem:[%s139 + $0x40] sm:$0xff]
      %v156 = vld [vmem:[%s139 + $0x48] sm:$0xff]
      %v157 = vld [vmem:[%s139 + $0x50] sm:$0xff]
      %v158 = vld [vmem:[%s139 + $0x58] sm:$0xff]
      %v159 = vld [vmem:[%s139 + $0x60] sm:$0xff]
      %v160 = vld [vmem:[%s139 + $0x68] sm:$0xff]
      %v161 = vld [vmem:[%s139 + $0x70] sm:$0xff]
      %v162 = vld [vmem:[%s139 + $0x78] sm:$0xff]
      %v163 = vld [vmem:[%s139 + $0x80] sm:$0xff]
      %v164 = vld [vmem:[%s139 + $0x88] sm:$0xff]
      %v165 = vld [vmem:[%s139 + $0x90] sm:$0xff]
      %v166 = vld [vmem:[%s139 + $0x98] sm:$0xff]
      %v167 = vld [vmem:[%s139 + $0xa0] sm:$0xff]
      %v168 = vld [vmem:[%s139 + $0xa8] sm:$0xff]
      %v169 = vld [vmem:[%s139 + $0xb0] sm:$0xff]
      %v170 = vld [vmem:[%s139 + $0xb8] sm:$0xff]
      %v171 = vld [vmem:[%s139 + $0xc0] sm:$0xff]
      %v172 = vld [vmem:[%s139 + $0xc8] sm:$0xff]
      %v173 = vld [vmem:[%s139 + $0xd0] sm:$0xff]
      %v174 = vld [vmem:[%s139 + $0xd8] sm:$0xff]
      %v175 = vld [vmem:[%s139 + $0xe0] sm:$0xff]
      %v176 = vld [vmem:[%s139 + $0xe8] sm:$0xff]
      %v177 = vld [vmem:[%s139 + $0xf0] sm:$0xff]
      %v178 = vld [vmem:[%s139 + $0xf8] sm:$0xff]
      %v179 = vld [vmem:[%s1] sm:$0x1]
      %v181 = vlaneseq
      %v182 = vshrl.u32 %v181, 7
      %v183 = vsub.s32 0, %v182
      %v184 = vrot.slane %v179, %v183
      %v186 = vadd.f32 %v147, %v184
      %v187 = vadd.f32 %v148, %v184
      %v188 = vadd.f32 %v149, %v184
      %v189 = vadd.f32 %v150, %v184
      %v190 = vadd.f32 %v151, %v184
      %v191 = vadd.f32 %v152, %v184
      %v192 = vadd.f32 %v153, %v184
      %v193 = vadd.f32 %v154, %v184
      %v194 = vadd.f32 %v155, %v184
      %v195 = vadd.f32 %v156, %v184
      %v196 = vadd.f32 %v157, %v184
      %v197 = vadd.f32 %v158, %v184
      %v198 = vadd.f32 %v159, %v184
      %v199 = vadd.f32 %v160, %v184
      %v200 = vadd.f32 %v161, %v184
      %v201 = vadd.f32 %v162, %v184
      %v202 = vadd.f32 %v163, %v184
      %v203 = vadd.f32 %v164, %v184
      %v204 = vadd.f32 %v165, %v184
      %v205 = vadd.f32 %v166, %v184
      %v206 = vadd.f32 %v167, %v184
      %v207 = vadd.f32 %v168, %v184
      %v208 = vadd.f32 %v169, %v184
      %v209 = vadd.f32 %v170, %v184
      %v210 = vadd.f32 %v171, %v184
      %v211 = vadd.f32 %v172, %v184
      %v212 = vadd.f32 %v173, %v184
      %v213 = vadd.f32 %v174, %v184
      %v214 = vadd.f32 %v175, %v184
      %v215 = vadd.f32 %v176, %v184
      %v216 = vadd.f32 %v177, %v184
      %v217 = vadd.f32 %v178, %v184
      %v218 = vmax.f32 %v186, 0.0
      %v219 = vmax.f32 %v187, 0.0
      %v220 = vmax.f32 %v188, 0.0
      %v221 = vmax.f32 %v189, 0.0
      %v222 = vmax.f32 %v190, 0.0
      %v223 = vmax.f32 %v191, 0.0
      %v224 = vmax.f32 %v192, 0.0
      %v225 = vmax.f32 %v193, 0.0
      %v226 = vmax.f32 %v194, 0.0
      %v227 = vmax.f32 %v195, 0.0
      %v228 = vmax.f32 %v196, 0.0
      %v229 = vmax.f32 %v197, 0.0
      %v230 = vmax.f32 %v198, 0.0
      %v231 = vmax.f32 %v199, 0.0
      %v232 = vmax.f32 %v200, 0.0
      %v233 = vmax.f32 %v201, 0.0
      %v234 = vmax.f32 %v202, 0.0
      %v235 = vmax.f32 %v203, 0.0
      %v236 = vmax.f32 %v204, 0.0
      %v237 = vmax.f32 %v205, 0.0
      %v238 = vmax.f32 %v206, 0.0
      %v239 = vmax.f32 %v207, 0.0
      %v240 = vmax.f32 %v208, 0.0
      %v241 = vmax.f32 %v209, 0.0
      %v242 = vmax.f32 %v210, 0.0
      %v243 = vmax.f32 %v211, 0.0
      %v244 = vmax.f32 %v212, 0.0
      %v245 = vmax.f32 %v213, 0.0
      %v246 = vmax.f32 %v214, 0.0
      %v247 = vmax.f32 %v215, 0.0
      %v248 = vmax.f32 %v216, 0.0
      %v249 = vmax.f32 %v217, 0.0
      %v250 = vpack.c.bf16 %v219, %v218
      %v251 = vpack.c.bf16 %v221, %v220
      %v252 = vpack.c.bf16 %v223, %v222
      %v253 = vpack.c.bf16 %v225, %v224
      %v254 = vpack.c.bf16 %v227, %v226
      %v255 = vpack.c.bf16 %v229, %v228
      %v256 = vpack.c.bf16 %v231, %v230
      %v257 = vpack.c.bf16 %v233, %v232
      %v258 = vpack.c.bf16 %v235, %v234
      %v259 = vpack.c.bf16 %v237, %v236
      %v260 = vpack.c.bf16 %v239, %v238
      %v261 = vpack.c.bf16 %v241, %v240
      %v262 = vpack.c.bf16 %v243, %v242
      %v263 = vpack.c.bf16 %v245, %v244
      %v264 = vpack.c.bf16 %v247, %v246
      %v265 = vpack.c.bf16 %v249, %v248
      %v282 = vunpack.c.l.b16 %v250
      %v283 = vunpack.c.h.b16 %v250
      %v284 = vunpack.c.l.b16 %v251
      %v285 = vunpack.c.h.b16 %v251
      %v286 = vunpack.c.l.b16 %v252
      %v287 = vunpack.c.h.b16 %v252
      %v288 = vunpack.c.l.b16 %v253
      %v289 = vunpack.c.h.b16 %v253
      %v290 = vunpack.c.l.b16 %v254
      %v291 = vunpack.c.h.b16 %v254
      %v292 = vunpack.c.l.b16 %v255
      %v293 = vunpack.c.h.b16 %v255
      %v294 = vunpack.c.l.b16 %v256
      %v295 = vunpack.c.h.b16 %v256
      %v296 = vunpack.c.l.b16 %v257
      %v297 = vunpack.c.h.b16 %v257
      %v298 = vunpack.c.l.b16 %v258
      %v299 = vunpack.c.h.b16 %v258
      %v300 = vunpack.c.l.b16 %v259
      %v301 = vunpack.c.h.b16 %v259
      %v302 = vunpack.c.l.b16 %v260
      %v303 = vunpack.c.h.b16 %v260
      %v304 = vunpack.c.l.b16 %v261
      %v305 = vunpack.c.h.b16 %v261
      %v306 = vunpack.c.l.b16 %v262
      %v307 = vunpack.c.h.b16 %v262
      %v308 = vunpack.c.l.b16 %v263
      %v309 = vunpack.c.h.b16 %v263
      %v310 = vunpack.c.l.b16 %v264
      %v311 = vunpack.c.h.b16 %v264
      %v312 = vunpack.c.l.b16 %v265
      %v313 = vunpack.c.h.b16 %v265
      %v314 = vpack.c.b16 %v282, %v282
      %v315 = vpack.c.b16 %v283, %v283
      %v316 = vpack.c.b16 %v284, %v284
      %v317 = vpack.c.b16 %v285, %v285
      %v318 = vpack.c.b16 %v286, %v286
      %v319 = vpack.c.b16 %v287, %v287
      %v320 = vpack.c.b16 %v288, %v288
      %v321 = vpack.c.b16 %v289, %v289
      %v322 = vpack.c.b16 %v290, %v290
      %v323 = vpack.c.b16 %v291, %v291
      %v324 = vpack.c.b16 %v292, %v292
      %v325 = vpack.c.b16 %v293, %v293
      %v326 = vpack.c.b16 %v294, %v294
      %v327 = vpack.c.b16 %v295, %v295
      %v328 = vpack.c.b16 %v296, %v296
      %v329 = vpack.c.b16 %v297, %v297
      %v330 = vpack.c.b16 %v298, %v298
      %v331 = vpack.c.b16 %v299, %v299
      %v332 = vpack.c.b16 %v300, %v300
      %v333 = vpack.c.b16 %v301, %v301
      %v334 = vpack.c.b16 %v302, %v302
      %v335 = vpack.c.b16 %v303, %v303
      %v336 = vpack.c.b16 %v304, %v304
      %v337 = vpack.c.b16 %v305, %v305
      %v338 = vpack.c.b16 %v306, %v306
      %v339 = vpack.c.b16 %v307, %v307
      %v340 = vpack.c.b16 %v308, %v308
      %v341 = vpack.c.b16 %v309, %v309
      %v342 = vpack.c.b16 %v310, %v310
      %v343 = vpack.c.b16 %v311, %v311
      %v344 = vpack.c.b16 %v312, %v312
      %v345 = vpack.c.b16 %v313, %v313
      %vm378 = vcmask 257024
      %379 = vst.msk [vmem:[%s145] sm:$0xf] %vm378, %v314
      %380 = vst.msk [vmem:[%s145 + $0x4] sm:$0xf] %vm378, %v315
      %381 = vst.msk [vmem:[%s145 + $0x8] sm:$0xf] %vm378, %v316
      %382 = vst.msk [vmem:[%s145 + $0xc] sm:$0xf] %vm378, %v317
      %383 = vst.msk [vmem:[%s145 + $0x10] sm:$0xf] %vm378, %v318
      %384 = vst.msk [vmem:[%s145 + $0x14] sm:$0xf] %vm378, %v319
      %385 = vst.msk [vmem:[%s145 + $0x18] sm:$0xf] %vm378, %v320
      %386 = vst.msk [vmem:[%s145 + $0x1c] sm:$0xf] %vm378, %v321
      %387 = vst.msk [vmem:[%s145 + $0x20] sm:$0xf] %vm378, %v322
      %388 = vst.msk [vmem:[%s145 + $0x24] sm:$0xf] %vm378, %v323
      %389 = vst.msk [vmem:[%s145 + $0x28] sm:$0xf] %vm378, %v324
      %390 = vst.msk [vmem:[%s145 + $0x2c] sm:$0xf] %vm378, %v325
      %391 = vst.msk [vmem:[%s145 + $0x30] sm:$0xf] %vm378, %v326
      %392 = vst.msk [vmem:[%s145 + $0x34] sm:$0xf] %vm378, %v327
      %393 = vst.msk [vmem:[%s145 + $0x38] sm:$0xf] %vm378, %v328
      %394 = vst.msk [vmem:[%s145 + $0x3c] sm:$0xf] %vm378, %v329
      %395 = vst.msk [vmem:[%s145 + $0x40] sm:$0xf] %vm378, %v330
      %396 = vst.msk [vmem:[%s145 + $0x44] sm:$0xf] %vm378, %v331
      %397 = vst.msk [vmem:[%s145 + $0x48] sm:$0xf] %vm378, %v332
      %398 = vst.msk [vmem:[%s145 + $0x4c] sm:$0xf] %vm378, %v333
      %399 = vst.msk [vmem:[%s145 + $0x50] sm:$0xf] %vm378, %v334
      %400 = vst.msk [vmem:[%s145 + $0x54] sm:$0xf] %vm378, %v335
      %401 = vst.msk [vmem:[%s145 + $0x58] sm:$0xf] %vm378, %v336
      %402 = vst.msk [vmem:[%s145 + $0x5c] sm:$0xf] %vm378, %v337
      %403 = vst.msk [vmem:[%s145 + $0x60] sm:$0xf] %vm378, %v338
      %404 = vst.msk [vmem:[%s145 + $0x64] sm:$0xf] %vm378, %v339
      %405 = vst.msk [vmem:[%s145 + $0x68] sm:$0xf] %vm378, %v340
      %406 = vst.msk [vmem:[%s145 + $0x6c] sm:$0xf] %vm378, %v341
      %407 = vst.msk [vmem:[%s145 + $0x70] sm:$0xf] %vm378, %v342
      %408 = vst.msk [vmem:[%s145 + $0x74] sm:$0xf] %vm378, %v343
      %409 = vst.msk [vmem:[%s145 + $0x78] sm:$0xf] %vm378, %v344
      %410 = vst.msk [vmem:[%s145 + $0x7c] sm:$0xf] %vm378, %v345
      %s411 = smul.u32 32, %s13
      %p412 = scmp.lt.s32.totalorder %s411, 575
      %s413 = scalar_select %p412, %s411, 575
      %s414 = smul.addr %s413, 4
      %s415 = scalar_lea.vmem %s2, %s414
      // Predicated region
      $region29: #{conv3d_autoencoder_forward.17} parent=27 // pred_check
        %p416 = pneg %p78
      $region30: #{conv3d_autoencoder_forward.17} parent=27 // pred_check_branch
        %418 = sbr.rel (%p416) target = $region32
      $region31: #{conv3d_autoencoder_forward.17} parent=27 // pred_region
        %s419 = smul.u32 32, %s13
      $region32: #{conv3d_autoencoder_forward.17} parent=27 // pred_fallthru
        _
    $region28: #{conv3d_autoencoder_forward.17} parent=5 // pred_fallthru
      _
    %p420 = scmp.le.s32.totalorder 2, %s8
    // Predicated region
    $region33: #{conv3d_autoencoder_forward.17} parent=5 // pred_check
      %p421 = pneg %p420
    $region34: #{conv3d_autoencoder_forward.17} parent=5 // pred_check_branch
      %423 = sbr.rel (%p421) target = $region36
    $region35: #{conv3d_autoencoder_forward.17} parent=5 // pred_region
      %s424 = ssub.s32 %s8, 2
      // Predicated region
      $region37: #{conv3d_autoencoder_forward.17} parent=35 // pred_check
        %p425 = pneg %p84
      $region38: #{conv3d_autoencoder_forward.17} parent=35 // pred_check_branch
        %427 = sbr.rel (%p425) target = $region40
      $region39: #{conv3d_autoencoder_forward.17} parent=35 // pred_region
        %s428 = smul.u32 32, %s14
        %p429 = scmp.lt.s32.totalorder %s428, 575
        %s430 = scalar_select %p429, %s428, 575
        %s431 = smul.addr %s430, 4
        %s432 = scalar_lea.vmem %s2, %s431
      $region40: #{conv3d_autoencoder_forward.17} parent=35 // pred_fallthru
        _
    $region36: #{conv3d_autoencoder_forward.17} parent=5 // pred_fallthru
      _
  $region6: #{conv3d_autoencoder_forward.17} parent=0 // loop_footer
    %s12 = sadd.s32 1, %s8
  $region7: #{conv3d_autoencoder_forward.17} parent=0 // loop_footer_branch
    %7 = sbr.rel target = $region3
  $region8: #{conv3d_autoencoder_forward.17} parent=0 // loop_exit
    _

// kernel: conv3d_autoencoder_forward.18
$region0: #{conv3d_autoencoder_forward.18}
  #allocation0 [shape = 'u32[]', space=smem, size = 0x4, offset = 0x4, fixed_abs, tag = 'smem constant byte address 0x4 - core index']
  #allocation1 [shape = 'u32[144,128]{1,0:T(1,128)}', space=vmem, size = 0x12000, scoped, tag = 'internal scratch']
  %s0 = inlined_call_operand.vmem [shape: bf16[4608,32], index: 0, kind: input, shape index: {}]
  %s1 = inlined_call_operand.vmem [shape: bf16[32,12], index: 1, kind: input, shape index: {}]
  %s2 = inlined_call_operand.vmem [shape: f32[1,12], index: 2, kind: input, shape index: {}]
  %s3 = inlined_call_operand.vmem [shape: f32[4608,12], index: 3, kind: output, shape index: {}]
  %s4 = sld [smem:[#allocation0]]
  $region45: #{conv3d_autoencoder_forward.18} parent=0
    _
  %s6 = ssub.s32 1, %s4
  %s7 = scalar_select 0, %s6, %s4
  loop: start=0, step=1, limit=20
  $region2: #{conv3d_autoencoder_forward.18} parent=0 // loop_pre_header
    _
  $region3: #{conv3d_autoencoder_forward.18} parent=0 // loop_header
    %s9 = sphi 0, %s13
    %p10 = scmp.ge.s32.totalorder %s9, 20
    %s19 = sphi 0, %s21
    %s22 = sphi 0, %s19
    %s23 = sphi 0, %s22
    %s39 = sphi 0, %s23
    %s43 = sphi 0, %s43
    %s45 = sphi 0, %s43
    %s46 = sphi 0, %s45
    %s60 = sphi 0, %s46
    %s64 = sphi 0, %s64
    %s66 = sphi 0, %s64
    %s67 = sphi 0, %s66
    %s81 = sphi 0, %s67
    %s87 = sphi 0, %s89
    %s90 = sphi 0, %s87
    %s91 = sphi 0, %s90
    %s107 = sphi 0, %s91
  $region4: #{conv3d_autoencoder_forward.18} parent=0 // loop_header_branch
    %12 = sbr.rel (%p10) target = $region8
  $region5: #{conv3d_autoencoder_forward.18} parent=0 // loop_body
    %s14 = ssub.s32 %s9, 1
    %s15 = ssub.s32 %s9, 2
    %s16 = sadd.s32 %s9, 1
    %s17 = ssub.s32 %s9, %s16
    %p18 = scmp.eq.s32.totalorder %s17, 0
    %s20 = sadd.s32 %s19, 1
    %s21 = scalar_select %p18, %s19, %s20
    %p24 = pneg %p18
    %p25 = scmp.eq.s32.totalorder %s9, 17
    %p26 = por %p24, %p25
    %p27 = scmp.ne.s32.totalorder %s19, %s22
    %p28 = scmp.eq.s32.totalorder %s9, 0
    %p29 = por %p27, %p28
    %p30 = scmp.ne.s32.totalorder %s19, %s22
    %p31 = scmp.eq.s32.totalorder %s14, 17
    %p32 = por %p30, %p31
    %p33 = scmp.ne.s32.totalorder %s22, %s23
    %p34 = scmp.eq.s32.totalorder %s14, 0
    %p35 = por %p33, %p34
    %p36 = scmp.ne.s32.totalorder %s22, %s23
    %p37 = scmp.eq.s32.totalorder %s15, 17
    %p38 = por %p36, %p37
    %p40 = scmp.ne.s32.totalorder %s23, %s39
    %p41 = scmp.eq.s32.totalorder %s15, 0
    %p42 = por %p40, %p41
    %s44 = sadd.s32 %s43, 1
    %p47 = scmp.eq.s32.totalorder %s9, 17
    %p48 = scmp.ne.s32.totalorder %s43, %s45
    %p49 = scmp.eq.s32.totalorder %s9, 0
    %p50 = por %p48, %p49
    %p51 = scmp.ne.s32.totalorder %s43, %s45
    %p52 = scmp.eq.s32.totalorder %s14, 17
    %p53 = por %p51, %p52
    %p54 = scmp.ne.s32.totalorder %s45, %s46
    %p55 = scmp.eq.s32.totalorder %s14, 0
    %p56 = por %p54, %p55
    %p57 = scmp.ne.s32.totalorder %s45, %s46
    %p58 = scmp.eq.s32.totalorder %s15, 17
    %p59 = por %p57, %p58
    %p61 = scmp.ne.s32.totalorder %s46, %s60
    %p62 = scmp.eq.s32.totalorder %s15, 0
    %p63 = por %p61, %p62
    %s65 = sadd.s32 %s64, 1
    %p68 = scmp.eq.s32.totalorder %s9, 17
    %p69 = scmp.ne.s32.totalorder %s64, %s66
    %p70 = scmp.eq.s32.totalorder %s9, 0
    %p71 = por %p69, %p70
    %p72 = scmp.ne.s32.totalorder %s64, %s66
    %p73 = scmp.eq.s32.totalorder %s14, 17
    %p74 = por %p72, %p73
    %p75 = scmp.ne.s32.totalorder %s66, %s67
    %p76 = scmp.eq.s32.totalorder %s14, 0
    %p77 = por %p75, %p76
    %p78 = scmp.ne.s32.totalorder %s66, %s67
    %p79 = scmp.eq.s32.totalorder %s15, 17
    %p80 = por %p78, %p79
    %p82 = scmp.ne.s32.totalorder %s67, %s81
    %p83 = scmp.eq.s32.totalorder %s15, 0
    %p84 = por %p82, %p83
    %s85 = ssub.s32 %s9, %s16
    %p86 = scmp.eq.s32.totalorder %s85, 0
    %s88 = sadd.s32 %s87, 1
    %s89 = scalar_select %p86, %s87, %s88
    %p92 = pneg %p86
    %p93 = scmp.eq.s32.totalorder %s9, 17
    %p94 = por %p92, %p93
    %p95 = scmp.ne.s32.totalorder %s87, %s90
    %p96 = scmp.eq.s32.totalorder %s9, 0
    %p97 = por %p95, %p96
    %p98 = scmp.ne.s32.totalorder %s87, %s90
    %p99 = scmp.eq.s32.totalorder %s14, 17
    %p100 = por %p98, %p99
    %p101 = scmp.ne.s32.totalorder %s90, %s91
    %p102 = scmp.eq.s32.totalorder %s14, 0
    %p103 = por %p101, %p102
    %p104 = scmp.ne.s32.totalorder %s90, %s91
    %p105 = scmp.eq.s32.totalorder %s15, 17
    %p106 = por %p104, %p105
    %p108 = scmp.ne.s32.totalorder %s91, %s107
    %p109 = scmp.eq.s32.totalorder %s15, 0
    %p110 = por %p108, %p109
    %p111 = scmp.le.s32.totalorder 1, %s9
    %p112 = scmp.lt.s32.totalorder %s9, 19
    %p113 = pnand %p111, %p112
    %p114 = pneg %p113
    // Predicated region
    $region9: #{conv3d_autoencoder_forward.18} parent=5 // pred_check
      _
    $region10: #{conv3d_autoencoder_forward.18} parent=5 // pred_check_branch
      %116 = sbr.rel (%p113) target = $region12
    $region11: #{conv3d_autoencoder_forward.18} parent=5 // pred_region
      %s117 = ssub.s32 %s9, 1
      // Predicated region
      $region13: #{conv3d_autoencoder_forward.18} parent=11 // pred_check
        %p118 = pneg %p56
      $region14: #{conv3d_autoencoder_forward.18} parent=11 // pred_check_branch
        %120 = sbr.rel (%p118) target = $region16
      $region15: #{conv3d_autoencoder_forward.18} parent=11 // pred_region
        _
      $region16: #{conv3d_autoencoder_forward.18} parent=11 // pred_fallthru
        _
      // Predicated region
      $region17: #{conv3d_autoencoder_forward.18} parent=11 // pred_check
        %p121 = pneg %p77
      $region18: #{conv3d_autoencoder_forward.18} parent=11 // pred_check_branch
        %123 = sbr.rel (%p121) target = $region20
      $region19: #{conv3d_autoencoder_forward.18} parent=11 // pred_region
        _
      $region20: #{conv3d_autoencoder_forward.18} parent=11 // pred_fallthru
        _
    $region12: #{conv3d_autoencoder_forward.18} parent=5 // pred_fallthru
      _
    %p124 = scmp.lt.s32.totalorder %s9, 18
    // Predicated region
    $region21: #{conv3d_autoencoder_forward.18} parent=5 // pred_check
      %p125 = pneg %p124
    $region22: #{conv3d_autoencoder_forward.18} parent=5 // pred_check_branch
      %127 = sbr.rel (%p125) target = $region24
    $region23: #{conv3d_autoencoder_forward.18} parent=5 // pred_region
      // Predicated region
      $region25: #{conv3d_autoencoder_forward.18} parent=23 // pred_check
        %p128 = pneg %p29
      $region26: #{conv3d_autoencoder_forward.18} parent=23 // pred_check_branch
        %130 = sbr.rel (%p128) target = $region28
      $region27: #{conv3d_autoencoder_forward.18} parent=23 // pred_region
        %s131 = smul.u32 32, %s9
        %p132 = scmp.lt.s32.totalorder %s131, 575
        %s133 = scalar_select %p132, %s131, 575
        %s134 = smul.addr %s133, 4
        %s135 = scalar_lea.vmem %s0, %s134
        %s136 = smul.u32 32, %s9
      $region28: #{conv3d_autoencoder_forward.18} parent=23 // pred_fallthru
        _
    $region24: #{conv3d_autoencoder_forward.18} parent=5 // pred_fallthru
      _
    %p137 = scmp.le.s32.totalorder 1, %s9
    %p138 = scmp.lt.s32.totalorder %s9, 19
    %p139 = pnand %p137, %p138
    %p140 = pneg %p139
    // Predicated region
    $region29: #{conv3d_autoencoder_forward.18} parent=5 // pred_check
      _
    $region30: #{conv3d_autoencoder_forward.18} parent=5 // pred_check_branch
      %142 = sbr.rel (%p139) target = $region32
    $region31: #{conv3d_autoencoder_forward.18} parent=5 // pred_region
      %s143 = ssub.s32 %s9, 1
      %s144 = smul.u32 32, %s14
      %p145 = scmp.lt.s32.totalorder %s144, 575
      %s146 = scalar_select %p145, %s144, 575
      %s147 = smul.addr %s146, 4
      %s148 = scalar_lea.vmem %s0, %s147
      %p149 = pneg %p35
      %p150 = pneg %p32
      %p151 = pneg %p56
      %p152 = pneg %p53
      %p153 = pneg %p77
      %p154 = pneg %p74
      %p155 = pneg %p103
      %p156 = pneg %p100
      %s157 = smul.u32 32, %s14
      %p158 = scmp.lt.s32.totalorder %s157, 575
      %s159 = scalar_select %p158, %s157, 575
      %s160 = smul.addr %s159, 8
      %s161 = scalar_lea.vmem %s3, %s160
      %s162 = smul.u32 32, %s14
      %p163 = scmp.lt.s32.totalorder %s162, 575
      %s164 = scalar_select %p163, %s162, 575
      %s165 = smul.addr %s164, 4
      %s166 = scalar_lea.vmem %s0, %s165
      %s167 = smul.u32 32, %s14
      %s168 = smul.u32 32, %s14
      %p169 = scmp.lt.s32.totalorder %s168, 575
      %s170 = scalar_select %p169, %s168, 575
      %s171 = smul.addr %s170, 8
      %s172 = scalar_lea.vmem %s3, %s171
      %s173 = smul.u32 32, %s14
      %v175 = vld [vmem:[%s166] sm:$0xf]
      %v176 = vld [vmem:[%s166 + $0x4] sm:$0xf]
      %v177 = vld [vmem:[%s166 + $0x8] sm:$0xf]
      %v178 = vld [vmem:[%s166 + $0xc] sm:$0xf]
      %v179 = vld [vmem:[%s166 + $0x10] sm:$0xf]
      %v180 = vld [vmem:[%s166 + $0x14] sm:$0xf]
      %v181 = vld [vmem:[%s166 + $0x18] sm:$0xf]
      %v182 = vld [vmem:[%s166 + $0x1c] sm:$0xf]
      %v183 = vld [vmem:[%s166 + $0x20] sm:$0xf]
      %v184 = vld [vmem:[%s166 + $0x24] sm:$0xf]
      %v185 = vld [vmem:[%s166 + $0x28] sm:$0xf]
      %v186 = vld [vmem:[%s166 + $0x2c] sm:$0xf]
      %v187 = vld [vmem:[%s166 + $0x30] sm:$0xf]
      %v188 = vld [vmem:[%s166 + $0x34] sm:$0xf]
      %v189 = vld [vmem:[%s166 + $0x38] sm:$0xf]
      %v190 = vld [vmem:[%s166 + $0x3c] sm:$0xf]
      %v191 = vld [vmem:[%s166 + $0x40] sm:$0xf]
      %v192 = vld [vmem:[%s166 + $0x44] sm:$0xf]
      %v193 = vld [vmem:[%s166 + $0x48] sm:$0xf]
      %v194 = vld [vmem:[%s166 + $0x4c] sm:$0xf]
      %v195 = vld [vmem:[%s166 + $0x50] sm:$0xf]
      %v196 = vld [vmem:[%s166 + $0x54] sm:$0xf]
      %v197 = vld [vmem:[%s166 + $0x58] sm:$0xf]
      %v198 = vld [vmem:[%s166 + $0x5c] sm:$0xf]
      %v199 = vld [vmem:[%s166 + $0x60] sm:$0xf]
      %v200 = vld [vmem:[%s166 + $0x64] sm:$0xf]
      %v201 = vld [vmem:[%s166 + $0x68] sm:$0xf]
      %v202 = vld [vmem:[%s166 + $0x6c] sm:$0xf]
      %v203 = vld [vmem:[%s166 + $0x70] sm:$0xf]
      %v204 = vld [vmem:[%s166 + $0x74] sm:$0xf]
      %v205 = vld [vmem:[%s166 + $0x78] sm:$0xf]
      %v206 = vld [vmem:[%s166 + $0x7c] sm:$0xf]
      %v207 = vld [vmem:[%s1] sm:$0xf]
      %v208 = vld [vmem:[%s1 + $0x4] sm:$0xf]
      %v209 = vld [vmem:[%s1 + $0x8] sm:$0xf]
      %v210 = vld [vmem:[%s1 + $0xc] sm:$0xf]
      %v211 = vld [vmem:[%s2] sm:$0x1]
      %v213 = vlaneseq
      %v214 = vshrl.u32 %v213, 7
      %v215 = vsub.s32 0, %v214
      %v216 = vrot.slane %v211, %v215
      %v250 = vunpack.c.l.b16 %v175
      %v251 = vunpack.c.l.b16 %v176
      %v252 = vunpack.c.l.b16 %v177
      %v253 = vunpack.c.l.b16 %v178
      %v254 = vunpack.c.l.b16 %v179
      %v255 = vunpack.c.l.b16 %v180
      %v256 = vunpack.c.l.b16 %v181
      %v257 = vunpack.c.l.b16 %v182
      %v258 = vunpack.c.l.b16 %v183
      %v259 = vunpack.c.l.b16 %v184
      %v260 = vunpack.c.l.b16 %v185
      %v261 = vunpack.c.l.b16 %v186
      %v262 = vunpack.c.l.b16 %v187
      %v263 = vunpack.c.l.b16 %v188
      %v264 = vunpack.c.l.b16 %v189
      %v265 = vunpack.c.l.b16 %v190
      %v266 = vunpack.c.l.b16 %v191
      %v267 = vunpack.c.l.b16 %v192
      %v268 = vunpack.c.l.b16 %v193
      %v269 = vunpack.c.l.b16 %v194
      %v270 = vunpack.c.l.b16 %v195
      %v271 = vunpack.c.l.b16 %v196
      %v272 = vunpack.c.l.b16 %v197
      %v273 = vunpack.c.l.b16 %v198
      %v274 = vunpack.c.l.b16 %v199
      %v275 = vunpack.c.l.b16 %v200
      %v276 = vunpack.c.l.b16 %v201
      %v277 = vunpack.c.l.b16 %v202
      %v278 = vunpack.c.l.b16 %v203
      %v279 = vunpack.c.l.b16 %v204
      %v280 = vunpack.c.l.b16 %v205
      %v281 = vunpack.c.l.b16 %v206
      %v282 = vpack.c.b16 %v251, %v250
      %v283 = vpack.c.b16 %v253, %v252
      %v284 = vpack.c.b16 %v255, %v254
      %v285 = vpack.c.b16 %v257, %v256
      %v286 = vpack.c.b16 %v259, %v258
      %v287 = vpack.c.b16 %v261, %v260
      %v288 = vpack.c.b16 %v263, %v262
      %v289 = vpack.c.b16 %v265, %v264
      %v290 = vpack.c.b16 %v267, %v266
      %v291 = vpack.c.b16 %v269, %v268
      %v292 = vpack.c.b16 %v271, %v270
      %v293 = vpack.c.b16 %v273, %v272
      %v294 = vpack.c.b16 %v275, %v274
      %v295 = vpack.c.b16 %v277, %v276
      %v296 = vpack.c.b16 %v279, %v278
      %v297 = vpack.c.b16 %v281, %v280
      %v302 = vunpack.c.l.b16 %v207
      %v303 = vunpack.c.l.b16 %v208
      %v304 = vunpack.c.l.b16 %v209
      %v305 = vunpack.c.l.b16 %v210
      %v306 = vpack.c.b16 %v303, %v302
      %v307 = vpack.c.b16 %v305, %v304
      %vm310 = vcmask 261120
      %v312 = vsel %vm310, %v282, 0
      %v315 = vsel %vm310, %v283, 0
      %v318 = vsel %vm310, %v284, 0
      %v321 = vsel %vm310, %v285, 0
      %v324 = vsel %vm310, %v286, 0
      %v327 = vsel %vm310, %v287, 0
      %v330 = vsel %vm310, %v288, 0
      %v333 = vsel %vm310, %v289, 0
      %v336 = vsel %vm310, %v290, 0
      %v339 = vsel %vm310, %v291, 0
      %v342 = vsel %vm310, %v292, 0
      %v345 = vsel %vm310, %v293, 0
      %v348 = vsel %vm310, %v294, 0
      %v351 = vsel %vm310, %v295, 0
      %v354 = vsel %vm310, %v296, 0
      %v357 = vsel %vm310, %v297, 0
      %359 = vmatprep.subr.bf16.mxu0 0
      %360 = vmatpush1.bf16.msra.mxu0 %v306
      %361 = vmatprep.subr.bf16.mxu0 0
      %362 = vmatpush1.bf16.msra.mxu0 %v307
      %363 = vmatprep.subr.bf16.mxu0 0
      %364 = vmatpush1.bf16.msra.mxu0 0
      %365 = vmatprep.subr.bf16.mxu0 0
      %366 = vmatpush1.bf16.msra.mxu0 0
      %367 = vmatprep.subr.bf16.mxu0 0
      %368 = vmatpush1.bf16.msra.mxu0 0
      %369 = vmatprep.subr.bf16.mxu0 0
      %370 = vmatpush1.bf16.msra.mxu0 0
      %371 = vmatprep.subr.bf16.mxu0 0
      %372 = vmatpush1.bf16.msra.mxu0 0
      %373 = vmatprep.subr.bf16.mxu0 0
      %374 = vmatpush1.bf16.msra.mxu0 0
      %375 = vmatprep.subr.bf16.mxu0 0
      %376 = vmatpush1.bf16.msra.mxu0 0
      %377 = vmatprep.subr.bf16.mxu0 0
      %378 = vmatpush1.bf16.msra.mxu0 0
      %379 = vmatprep.subr.bf16.mxu0 0
      %380 = vmatpush1.bf16.msra.mxu0 0
      %381 = vmatprep.subr.bf16.mxu0 0
      %382 = vmatpush1.bf16.msra.mxu0 0
      %383 = vmatprep.subr.bf16.mxu0 0
      %384 = vmatpush1.bf16.msra.mxu0 0
      %385 = vmatprep.subr.bf16.mxu0 0
      %386 = vmatpush1.bf16.msra.mxu0 0
      %387 = vmatprep.subr.bf16.mxu0 0
      %388 = vmatpush1.bf16.msra.mxu0 0
      %389 = vmatprep.subr.bf16.mxu0 0
      %390 = vmatpush1.bf16.msra.mxu0 0
      %391 = vmatprep.mubr.bf16.mxu0 0
      %392 = vmatmul.mubr.bf16.gmra.mrb[0].mxu0 %v312
      %v393 = vpop.f32.mrb[0].mxu0
      %v394 = vadd.f32 %v216, %v393
      %v395 = vpop.f32.mrb[0].mxu0
      %v396 = vpop.f32.mrb[0].mxu0
      %v397 = vadd.f32 %v216, %v396
      %v398 = vpop.f32.mrb[0].mxu0
      %399 = vmatprep.mubr.bf16.mxu0 0
      %400 = vmatmul.mubr.bf16.gmra.mrb[0].mxu0 %v315
      %v401 = vpop.f32.mrb[0].mxu0
      %v402 = vadd.f32 %v216, %v401
      %v403 = vpop.f32.mrb[0].mxu0
      %v404 = vpop.f32.mrb[0].mxu0
      %v405 = vadd.f32 %v216, %v404
      %v406 = vpop.f32.mrb[0].mxu0
      %407 = vmatprep.mubr.bf16.mxu0 0
      %408 = vmatmul.mubr.bf16.gmra.mrb[0].mxu0 %v318
      %v409 = vpop.f32.mrb[0].mxu0
      %v410 = vadd.f32 %v216, %v409
      %v411 = vpop.f32.mrb[0].mxu0
      %v412 = vpop.f32.mrb[0].mxu0
      %v413 = vadd.f32 %v216, %v412
      %v414 = vpop.f32.mrb[0].mxu0
      %415 = vmatprep.mubr.bf16.mxu0 0
      %416 = vmatmul.mubr.bf16.gmra.mrb[0].mxu0 %v321
      %v417 = vpop.f32.mrb[0].mxu0
      %v418 = vadd.f32 %v216, %v417
      %v419 = vpop.f32.mrb[0].mxu0
      %v420 = vpop.f32.mrb[0].mxu0
      %v421 = vadd.f32 %v216, %v420
      %v422 = vpop.f32.mrb[0].mxu0
      %423 = vmatprep.mubr.bf16.mxu0 0
      %424 = vmatmul.mubr.bf16.gmra.mrb[0].mxu0 %v324
      %v425 = vpop.f32.mrb[0].mxu0
      %v426 = vadd.f32 %v216, %v425
      %v427 = vpop.f32.mrb[0].mxu0
      %v428 = vpop.f32.mrb[0].mxu0
      %v429 = vadd.f32 %v216, %v428
      %v430 = vpop.f32.mrb[0].mxu0
      %431 = vmatprep.mubr.bf16.mxu0 0
      %432 = vmatmul.mubr.bf16.gmra.mrb[0].mxu0 %v327
      %v433 = vpop.f32.mrb[0].mxu0
      %v434 = vadd.f32 %v216, %v433
      %v435 = vpop.f32.mrb[0].mxu0
      %v436 = vpop.f32.mrb[0].mxu0
      %v437 = vadd.f32 %v216, %v436
      %v438 = vpop.f32.mrb[0].mxu0
      %439 = vmatprep.mubr.bf16.mxu0 0
      %440 = vmatmul.mubr.bf16.gmra.mrb[0].mxu0 %v330
      %v441 = vpop.f32.mrb[0].mxu0
      %v442 = vadd.f32 %v216, %v441
      %v443 = vpop.f32.mrb[0].mxu0
      %v444 = vpop.f32.mrb[0].mxu0
      %v445 = vadd.f32 %v216, %v444
      %v446 = vpop.f32.mrb[0].mxu0
      %447 = vmatprep.mubr.bf16.mxu0 0
      %448 = vmatmul.mubr.bf16.gmra.mrb[0].mxu0 %v333
      %v449 = vpop.f32.mrb[0].mxu0
      %v450 = vadd.f32 %v216, %v449
      %v451 = vpop.f32.mrb[0].mxu0
      %v452 = vpop.f32.mrb[0].mxu0
      %v453 = vadd.f32 %v216, %v452
      %v454 = vpop.f32.mrb[0].mxu0
      %455 = vmatprep.mubr.bf16.mxu0 0
      %456 = vmatmul.mubr.bf16.gmra.mrb[0].mxu0 %v336
      %v457 = vpop.f32.mrb[0].mxu0
      %v458 = vadd.f32 %v216, %v457
      %v459 = vpop.f32.mrb[0].mxu0
      %v460 = vpop.f32.mrb[0].mxu0
      %v461 = vadd.f32 %v216, %v460
      %v462 = vpop.f32.mrb[0].mxu0
      %463 = vmatprep.mubr.bf16.mxu0 0
      %464 = vmatmul.mubr.bf16.gmra.mrb[0].mxu0 %v339
      %v465 = vpop.f32.mrb[0].mxu0
      %v466 = vadd.f32 %v216, %v465
      %v467 = vpop.f32.mrb[0].mxu0
      %v468 = vpop.f32.mrb[0].mxu0
      %v469 = vadd.f32 %v216, %v468
      %v470 = vpop.f32.mrb[0].mxu0
      %471 = vmatprep.mubr.bf16.mxu0 0
      %472 = vmatmul.mubr.bf16.gmra.mrb[0].mxu0 %v342
      %v473 = vpop.f32.mrb[0].mxu0
      %v474 = vadd.f32 %v216, %v473
      %v475 = vpop.f32.mrb[0].mxu0
      %v476 = vpop.f32.mrb[0].mxu0
      %v477 = vadd.f32 %v216, %v476
      %v478 = vpop.f32.mrb[0].mxu0
      %479 = vmatprep.mubr.bf16.mxu0 0
      %480 = vmatmul.mubr.bf16.gmra.mrb[0].mxu0 %v345
      %v481 = vpop.f32.mrb[0].mxu0
      %v482 = vadd.f32 %v216, %v481
      %v483 = vpop.f32.mrb[0].mxu0
      %v484 = vpop.f32.mrb[0].mxu0
      %v485 = vadd.f32 %v216, %v484
      %v486 = vpop.f32.mrb[0].mxu0
      %487 = vmatprep.mubr.bf16.mxu0 0
      %488 = vmatmul.mubr.bf16.gmra.mrb[0].mxu0 %v348
      %v489 = vpop.f32.mrb[0].mxu0
      %v490 = vadd.f32 %v216, %v489
      %v491 = vpop.f32.mrb[0].mxu0
      %v492 = vpop.f32.mrb[0].mxu0
      %v493 = vadd.f32 %v216, %v492
      %v494 = vpop.f32.mrb[0].mxu0
      %495 = vmatprep.mubr.bf16.mxu0 0
      %496 = vmatmul.mubr.bf16.gmra.mrb[0].mxu0 %v351
      %v497 = vpop.f32.mrb[0].mxu0
      %v498 = vadd.f32 %v216, %v497
      %v499 = vpop.f32.mrb[0].mxu0
      %v500 = vpop.f32.mrb[0].mxu0
      %v501 = vadd.f32 %v216, %v500
      %v502 = vpop.f32.mrb[0].mxu0
      %503 = vmatprep.mubr.bf16.mxu0 0
      %504 = vmatmul.mubr.bf16.gmra.mrb[0].mxu0 %v354
      %v505 = vpop.f32.mrb[0].mxu0
      %v506 = vadd.f32 %v216, %v505
      %v507 = vpop.f32.mrb[0].mxu0
      %v508 = vpop.f32.mrb[0].mxu0
      %v509 = vadd.f32 %v216, %v508
      %v510 = vpop.f32.mrb[0].mxu0
      %511 = vmatprep.mubr.bf16.mxu0 0
      %512 = vmatmul.mubr.bf16.gmra.mrb[0].mxu0 %v357
      %v513 = vpop.f32.mrb[0].mxu0
      %v514 = vadd.f32 %v216, %v513
      %v515 = vpop.f32.mrb[0].mxu0
      %v516 = vpop.f32.mrb[0].mxu0
      %v517 = vadd.f32 %v216, %v516
      %v518 = vpop.f32.mrb[0].mxu0
      %519 = vdwg.mxu0
      %vm520 = vcmask 97280
      %521 = vst.msk [vmem:[%s172] sm:$0xff] %vm520, %v394
      %522 = vst.msk [vmem:[%s172 + $0x8] sm:$0xff] %vm520, %v397
      %523 = vst.msk [vmem:[%s172 + $0x10] sm:$0xff] %vm520, %v402
      %524 = vst.msk [vmem:[%s172 + $0x18] sm:$0xff] %vm520, %v405
      %525 = vst.msk [vmem:[%s172 + $0x20] sm:$0xff] %vm520, %v410
      %526 = vst.msk [vmem:[%s172 + $0x28] sm:$0xff] %vm520, %v413
      %527 = vst.msk [vmem:[%s172 + $0x30] sm:$0xff] %vm520, %v418
      %528 = vst.msk [vmem:[%s172 + $0x38] sm:$0xff] %vm520, %v421
      %529 = vst.msk [vmem:[%s172 + $0x40] sm:$0xff] %vm520, %v426
      %530 = vst.msk [vmem:[%s172 + $0x48] sm:$0xff] %vm520, %v429
      %531 = vst.msk [vmem:[%s172 + $0x50] sm:$0xff] %vm520, %v434
      %532 = vst.msk [vmem:[%s172 + $0x58] sm:$0xff] %vm520, %v437
      %533 = vst.msk [vmem:[%s172 + $0x60] sm:$0xff] %vm520, %v442
      %534 = vst.msk [vmem:[%s172 + $0x68] sm:$0xff] %vm520, %v445
      %535 = vst.msk [vmem:[%s172 + $0x70] sm:$0xff] %vm520, %v450
      %536 = vst.msk [vmem:[%s172 + $0x78] sm:$0xff] %vm520, %v453
      %537 = vst.msk [vmem:[%s172 + $0x80] sm:$0xff] %vm520, %v458
      %538 = vst.msk [vmem:[%s172 + $0x88] sm:$0xff] %vm520, %v461
      %539 = vst.msk [vmem:[%s172 + $0x90] sm:$0xff] %vm520, %v466
      %540 = vst.msk [vmem:[%s172 + $0x98] sm:$0xff] %vm520, %v469
      %541 = vst.msk [vmem:[%s172 + $0xa0] sm:$0xff] %vm520, %v474
      %542 = vst.msk [vmem:[%s172 + $0xa8] sm:$0xff] %vm520, %v477
      %543 = vst.msk [vmem:[%s172 + $0xb0] sm:$0xff] %vm520, %v482
      %544 = vst.msk [vmem:[%s172 + $0xb8] sm:$0xff] %vm520, %v485
      %545 = vst.msk [vmem:[%s172 + $0xc0] sm:$0xff] %vm520, %v490
      %546 = vst.msk [vmem:[%s172 + $0xc8] sm:$0xff] %vm520, %v493
      %547 = vst.msk [vmem:[%s172 + $0xd0] sm:$0xff] %vm520, %v498
      %548 = vst.msk [vmem:[%s172 + $0xd8] sm:$0xff] %vm520, %v501
      %549 = vst.msk [vmem:[%s172 + $0xe0] sm:$0xff] %vm520, %v506
      %550 = vst.msk [vmem:[%s172 + $0xe8] sm:$0xff] %vm520, %v509
      %551 = vst.msk [vmem:[%s172 + $0xf0] sm:$0xff] %vm520, %v514
      %552 = vst.msk [vmem:[%s172 + $0xf8] sm:$0xff] %vm520, %v517
      %s553 = smul.u32 32, %s14
      %p554 = scmp.lt.s32.totalorder %s553, 575
      %s555 = scalar_select %p554, %s553, 575
      %s556 = smul.addr %s555, 8
      %s557 = scalar_lea.vmem %s3, %s556
      // Predicated region
      $region33: #{conv3d_autoencoder_forward.18} parent=31 // pred_check
        %p558 = pneg %p100
      $region34: #{conv3d_autoencoder_forward.18} parent=31 // pred_check_branch
        %560 = sbr.rel (%p558) target = $region36
      $region35: #{conv3d_autoencoder_forward.18} parent=31 // pred_region
        %s561 = smul.u32 32, %s14
      $region36: #{conv3d_autoencoder_forward.18} parent=31 // pred_fallthru
        _
    $region32: #{conv3d_autoencoder_forward.18} parent=5 // pred_fallthru
      _
    %p562 = scmp.le.s32.totalorder 2, %s9
    // Predicated region
    $region37: #{conv3d_autoencoder_forward.18} parent=5 // pred_check
      %p563 = pneg %p562
    $region38: #{conv3d_autoencoder_forward.18} parent=5 // pred_check_branch
      %565 = sbr.rel (%p563) target = $region40
    $region39: #{conv3d_autoencoder_forward.18} parent=5 // pred_region
      %s566 = ssub.s32 %s9, 2
      // Predicated region
      $region41: #{conv3d_autoencoder_forward.18} parent=39 // pred_check
        %p567 = pneg %p106
      $region42: #{conv3d_autoencoder_forward.18} parent=39 // pred_check_branch
        %569 = sbr.rel (%p567) target = $region44
      $region43: #{conv3d_autoencoder_forward.18} parent=39 // pred_region
        %s570 = smul.u32 32, %s15
        %p571 = scmp.lt.s32.totalorder %s570, 575
        %s572 = scalar_select %p571, %s570, 575
        %s573 = smul.addr %s572, 8
        %s574 = scalar_lea.vmem %s3, %s573
      $region44: #{conv3d_autoencoder_forward.18} parent=39 // pred_fallthru
        _
    $region40: #{conv3d_autoencoder_forward.18} parent=5 // pred_fallthru
      _
  $region6: #{conv3d_autoencoder_forward.18} parent=0 // loop_footer
    %s13 = sadd.s32 1, %s9
  $region7: #{conv3d_autoencoder_forward.18} parent=0 // loop_footer_branch
    %8 = sbr.rel target = $region3
  $region8: #{conv3d_autoencoder_forward.18} parent=0 // loop_exit
    _

// kernel: conv3d_autoencoder_forward.19
$region0: #{conv3d_autoencoder_forward.19}
  #allocation0 [shape = 'u32[]', space=smem, size = 0x4, offset = 0x4, fixed_abs, tag = 'smem constant byte address 0x4 - core index']
  #allocation1 [shape = 'u32[144,128]{1,0:T(1,128)}', space=vmem, size = 0x12000, scoped, tag = 'internal scratch']
  %s0 = inlined_call_operand.vmem [shape: f32[512,16], index: 0, kind: input, shape index: {}]
  %s1 = inlined_call_operand.vmem [shape: f32[1,16], index: 1, kind: input, shape index: {}]
  %s2 = inlined_call_operand.vmem [shape: f32[512,16], index: 2, kind: output, shape index: {}]
  %s3 = sld [smem:[#allocation0]]
  $region41: #{conv3d_autoencoder_forward.19} parent=0
    _
  %s5 = ssub.s32 1, %s3
  %s6 = scalar_select 0, %s5, %s3
  loop: start=0, step=1, limit=4
  $region2: #{conv3d_autoencoder_forward.19} parent=0 // loop_pre_header
    _
  $region3: #{conv3d_autoencoder_forward.19} parent=0 // loop_header
    %s8 = sphi 0, %s12
    %p9 = scmp.ge.s32.totalorder %s8, 4
    %s18 = sphi 0, %s20
    %s21 = sphi 0, %s18
    %s22 = sphi 0, %s21
    %s38 = sphi 0, %s22
    %s42 = sphi 0, %s42
    %s44 = sphi 0, %s42
    %s45 = sphi 0, %s44
    %s59 = sphi 0, %s45
    %s65 = sphi 0, %s67
    %s68 = sphi 0, %s65
    %s69 = sphi 0, %s68
    %s85 = sphi 0, %s69
  $region4: #{conv3d_autoencoder_forward.19} parent=0 // loop_header_branch
    %11 = sbr.rel (%p9) target = $region8
  $region5: #{conv3d_autoencoder_forward.19} parent=0 // loop_body
    %s13 = ssub.s32 %s8, 1
    %s14 = ssub.s32 %s8, 2
    %s15 = sadd.s32 %s8, 1
    %s16 = ssub.s32 %s8, %s15
    %p17 = scmp.eq.s32.totalorder %s16, 0
    %s19 = sadd.s32 %s18, 1
    %s20 = scalar_select %p17, %s18, %s19
    %p23 = pneg %p17
    %p24 = scmp.eq.s32.totalorder %s8, 1
    %p25 = por %p23, %p24
    %p26 = scmp.ne.s32.totalorder %s18, %s21
    %p27 = scmp.eq.s32.totalorder %s8, 0
    %p28 = por %p26, %p27
    %p29 = scmp.ne.s32.totalorder %s18, %s21
    %p30 = scmp.eq.s32.totalorder %s13, 1
    %p31 = por %p29, %p30
    %p32 = scmp.ne.s32.totalorder %s21, %s22
    %p33 = scmp.eq.s32.totalorder %s13, 0
    %p34 = por %p32, %p33
    %p35 = scmp.ne.s32.totalorder %s21, %s22
    %p36 = scmp.eq.s32.totalorder %s14, 1
    %p37 = por %p35, %p36
    %p39 = scmp.ne.s32.totalorder %s22, %s38
    %p40 = scmp.eq.s32.totalorder %s14, 0
    %p41 = por %p39, %p40
    %s43 = sadd.s32 %s42, 1
    %p46 = scmp.eq.s32.totalorder %s8, 1
    %p47 = scmp.ne.s32.totalorder %s42, %s44
    %p48 = scmp.eq.s32.totalorder %s8, 0
    %p49 = por %p47, %p48
    %p50 = scmp.ne.s32.totalorder %s42, %s44
    %p51 = scmp.eq.s32.totalorder %s13, 1
    %p52 = por %p50, %p51
    %p53 = scmp.ne.s32.totalorder %s44, %s45
    %p54 = scmp.eq.s32.totalorder %s13, 0
    %p55 = por %p53, %p54
    %p56 = scmp.ne.s32.totalorder %s44, %s45
    %p57 = scmp.eq.s32.totalorder %s14, 1
    %p58 = por %p56, %p57
    %p60 = scmp.ne.s32.totalorder %s45, %s59
    %p61 = scmp.eq.s32.totalorder %s14, 0
    %p62 = por %p60, %p61
    %s63 = ssub.s32 %s8, %s15
    %p64 = scmp.eq.s32.totalorder %s63, 0
    %s66 = sadd.s32 %s65, 1
    %s67 = scalar_select %p64, %s65, %s66
    %p70 = pneg %p64
    %p71 = scmp.eq.s32.totalorder %s8, 1
    %p72 = por %p70, %p71
    %p73 = scmp.ne.s32.totalorder %s65, %s68
    %p74 = scmp.eq.s32.totalorder %s8, 0
    %p75 = por %p73, %p74
    %p76 = scmp.ne.s32.totalorder %s65, %s68
    %p77 = scmp.eq.s32.totalorder %s13, 1
    %p78 = por %p76, %p77
    %p79 = scmp.ne.s32.totalorder %s68, %s69
    %p80 = scmp.eq.s32.totalorder %s13, 0
    %p81 = por %p79, %p80
    %p82 = scmp.ne.s32.totalorder %s68, %s69
    %p83 = scmp.eq.s32.totalorder %s14, 1
    %p84 = por %p82, %p83
    %p86 = scmp.ne.s32.totalorder %s69, %s85
    %p87 = scmp.eq.s32.totalorder %s14, 0
    %p88 = por %p86, %p87
    %p89 = scmp.le.s32.totalorder 1, %s8
    %p90 = scmp.lt.s32.totalorder %s8, 3
    %p91 = pnand %p89, %p90
    %p92 = pneg %p91
    // Predicated region
    $region9: #{conv3d_autoencoder_forward.19} parent=5 // pred_check
      _
    $region10: #{conv3d_autoencoder_forward.19} parent=5 // pred_check_branch
      %94 = sbr.rel (%p91) target = $region12
    $region11: #{conv3d_autoencoder_forward.19} parent=5 // pred_region
      %s95 = ssub.s32 %s8, 1
      // Predicated region
      $region13: #{conv3d_autoencoder_forward.19} parent=11 // pred_check
        %p96 = pneg %p55
      $region14: #{conv3d_autoencoder_forward.19} parent=11 // pred_check_branch
        %98 = sbr.rel (%p96) target = $region16
      $region15: #{conv3d_autoencoder_forward.19} parent=11 // pred_region
        _
      $region16: #{conv3d_autoencoder_forward.19} parent=11 // pred_fallthru
        _
    $region12: #{conv3d_autoencoder_forward.19} parent=5 // pred_fallthru
      _
    %p99 = scmp.lt.s32.totalorder %s8, 2
    // Predicated region
    $region17: #{conv3d_autoencoder_forward.19} parent=5 // pred_check
      %p100 = pneg %p99
    $region18: #{conv3d_autoencoder_forward.19} parent=5 // pred_check_branch
      %102 = sbr.rel (%p100) target = $region20
    $region19: #{conv3d_autoencoder_forward.19} parent=5 // pred_region
      // Predicated region
      $region21: #{conv3d_autoencoder_forward.19} parent=19 // pred_check
        %p103 = pneg %p28
      $region22: #{conv3d_autoencoder_forward.19} parent=19 // pred_check_branch
        %105 = sbr.rel (%p103) target = $region24
      $region23: #{conv3d_autoencoder_forward.19} parent=19 // pred_region
        %s106 = smul.u32 32, %s8
        %p107 = scmp.lt.s32.totalorder %s106, 63
        %s108 = scalar_select %p107, %s106, 63
        %s109 = smul.addr %s108, 8
        %s110 = scalar_lea.vmem %s0, %s109
        %s111 = smul.u32 32, %s8
      $region24: #{conv3d_autoencoder_forward.19} parent=19 // pred_fallthru
        _
    $region20: #{conv3d_autoencoder_forward.19} parent=5 // pred_fallthru
      _
    %p112 = scmp.le.s32.totalorder 1, %s8
    %p113 = scmp.lt.s32.totalorder %s8, 3
    %p114 = pnand %p112, %p113
    %p115 = pneg %p114
    // Predicated region
    $region25: #{conv3d_autoencoder_forward.19} parent=5 // pred_check
      _
    $region26: #{conv3d_autoencoder_forward.19} parent=5 // pred_check_branch
      %117 = sbr.rel (%p114) target = $region28
    $region27: #{conv3d_autoencoder_forward.19} parent=5 // pred_region
      %s118 = ssub.s32 %s8, 1
      %s119 = smul.u32 32, %s13
      %p120 = scmp.lt.s32.totalorder %s119, 63
      %s121 = scalar_select %p120, %s119, 63
      %s122 = smul.addr %s121, 8
      %s123 = scalar_lea.vmem %s0, %s122
      %p124 = pneg %p34
      %p125 = pneg %p31
      %p126 = pneg %p55
      %p127 = pneg %p52
      %p128 = pneg %p81
      %p129 = pneg %p78
      %s130 = smul.u32 32, %s13
      %p131 = scmp.lt.s32.totalorder %s130, 63
      %s132 = scalar_select %p131, %s130, 63
      %s133 = smul.addr %s132, 8
      %s134 = scalar_lea.vmem %s2, %s133
      %s135 = smul.u32 32, %s13
      %p136 = scmp.lt.s32.totalorder %s135, 63
      %s137 = scalar_select %p136, %s135, 63
      %s138 = smul.addr %s137, 8
      %s139 = scalar_lea.vmem %s0, %s138
      %s140 = smul.u32 32, %s13
      %s141 = smul.u32 32, %s13
      %p142 = scmp.lt.s32.totalorder %s141, 63
      %s143 = scalar_select %p142, %s141, 63
      %s144 = smul.addr %s143, 8
      %s145 = scalar_lea.vmem %s2, %s144
      %s146 = smul.u32 32, %s13
      %v147 = vld [vmem:[%s139] sm:$0xff]
      %v148 = vld [vmem:[%s139 + $0x8] sm:$0xff]
      %v149 = vld [vmem:[%s139 + $0x10] sm:$0xff]
      %v150 = vld [vmem:[%s139 + $0x18] sm:$0xff]
      %v151 = vld [vmem:[%s139 + $0x20] sm:$0xff]
      %v152 = vld [vmem:[%s139 + $0x28] sm:$0xff]
      %v153 = vld [vmem:[%s139 + $0x30] sm:$0xff]
      %v154 = vld [vmem:[%s139 + $0x38] sm:$0xff]
      %v155 = vld [vmem:[%s139 + $0x40] sm:$0xff]
      %v156 = vld [vmem:[%s139 + $0x48] sm:$0xff]
      %v157 = vld [vmem:[%s139 + $0x50] sm:$0xff]
      %v158 = vld [vmem:[%s139 + $0x58] sm:$0xff]
      %v159 = vld [vmem:[%s139 + $0x60] sm:$0xff]
      %v160 = vld [vmem:[%s139 + $0x68] sm:$0xff]
      %v161 = vld [vmem:[%s139 + $0x70] sm:$0xff]
      %v162 = vld [vmem:[%s139 + $0x78] sm:$0xff]
      %v163 = vld [vmem:[%s139 + $0x80] sm:$0xff]
      %v164 = vld [vmem:[%s139 + $0x88] sm:$0xff]
      %v165 = vld [vmem:[%s139 + $0x90] sm:$0xff]
      %v166 = vld [vmem:[%s139 + $0x98] sm:$0xff]
      %v167 = vld [vmem:[%s139 + $0xa0] sm:$0xff]
      %v168 = vld [vmem:[%s139 + $0xa8] sm:$0xff]
      %v169 = vld [vmem:[%s139 + $0xb0] sm:$0xff]
      %v170 = vld [vmem:[%s139 + $0xb8] sm:$0xff]
      %v171 = vld [vmem:[%s139 + $0xc0] sm:$0xff]
      %v172 = vld [vmem:[%s139 + $0xc8] sm:$0xff]
      %v173 = vld [vmem:[%s139 + $0xd0] sm:$0xff]
      %v174 = vld [vmem:[%s139 + $0xd8] sm:$0xff]
      %v175 = vld [vmem:[%s139 + $0xe0] sm:$0xff]
      %v176 = vld [vmem:[%s139 + $0xe8] sm:$0xff]
      %v177 = vld [vmem:[%s139 + $0xf0] sm:$0xff]
      %v178 = vld [vmem:[%s139 + $0xf8] sm:$0xff]
      %v179 = vld [vmem:[%s1] sm:$0x1]
      %v181 = vlaneseq
      %v182 = vshrl.u32 %v181, 7
      %v183 = vsub.s32 0, %v182
      %v184 = vrot.slane %v179, %v183
      %v186 = vadd.f32 %v147, %v184
      %v187 = vadd.f32 %v148, %v184
      %v188 = vadd.f32 %v149, %v184
      %v189 = vadd.f32 %v150, %v184
      %v190 = vadd.f32 %v151, %v184
      %v191 = vadd.f32 %v152, %v184
      %v192 = vadd.f32 %v153, %v184
      %v193 = vadd.f32 %v154, %v184
      %v194 = vadd.f32 %v155, %v184
      %v195 = vadd.f32 %v156, %v184
      %v196 = vadd.f32 %v157, %v184
      %v197 = vadd.f32 %v158, %v184
      %v198 = vadd.f32 %v159, %v184
      %v199 = vadd.f32 %v160, %v184
      %v200 = vadd.f32 %v161, %v184
      %v201 = vadd.f32 %v162, %v184
      %v202 = vadd.f32 %v163, %v184
      %v203 = vadd.f32 %v164, %v184
      %v204 = vadd.f32 %v165, %v184
      %v205 = vadd.f32 %v166, %v184
      %v206 = vadd.f32 %v167, %v184
      %v207 = vadd.f32 %v168, %v184
      %v208 = vadd.f32 %v169, %v184
      %v209 = vadd.f32 %v170, %v184
      %v210 = vadd.f32 %v171, %v184
      %v211 = vadd.f32 %v172, %v184
      %v212 = vadd.f32 %v173, %v184
      %v213 = vadd.f32 %v174, %v184
      %v214 = vadd.f32 %v175, %v184
      %v215 = vadd.f32 %v176, %v184
      %v216 = vadd.f32 %v177, %v184
      %v217 = vadd.f32 %v178, %v184
      %v218 = vsub.f32 0.0, %v186
      %v219 = vsub.f32 0.0, %v187
      %v220 = vsub.f32 0.0, %v188
      %v221 = vsub.f32 0.0, %v189
      %v222 = vsub.f32 0.0, %v190
      %v223 = vsub.f32 0.0, %v191
      %v224 = vsub.f32 0.0, %v192
      %v225 = vsub.f32 0.0, %v193
      %v226 = vsub.f32 0.0, %v194
      %v227 = vsub.f32 0.0, %v195
      %v228 = vsub.f32 0.0, %v196
      %v229 = vsub.f32 0.0, %v197
      %v230 = vsub.f32 0.0, %v198
      %v231 = vsub.f32 0.0, %v199
      %v232 = vsub.f32 0.0, %v200
      %v233 = vsub.f32 0.0, %v201
      %v234 = vsub.f32 0.0, %v202
      %v235 = vsub.f32 0.0, %v203
      %v236 = vsub.f32 0.0, %v204
      %v237 = vsub.f32 0.0, %v205
      %v238 = vsub.f32 0.0, %v206
      %v239 = vsub.f32 0.0, %v207
      %v240 = vsub.f32 0.0, %v208
      %v241 = vsub.f32 0.0, %v209
      %v242 = vsub.f32 0.0, %v210
      %v243 = vsub.f32 0.0, %v211
      %v244 = vsub.f32 0.0, %v212
      %v245 = vsub.f32 0.0, %v213
      %v246 = vsub.f32 0.0, %v214
      %v247 = vsub.f32 0.0, %v215
      %v248 = vsub.f32 0.0, %v216
      %v249 = vsub.f32 0.0, %v217
      %v250 = vmul.f32 %v218, 1.442695
      %v251 = vpow.pop %v250
      %v252 = vmul.f32 %v219, 1.442695
      %v253 = vpow.pop %v252
      %v254 = vmul.f32 %v220, 1.442695
      %v255 = vpow.pop %v254
      %v256 = vmul.f32 %v221, 1.442695
      %v257 = vpow.pop %v256
      %v258 = vmul.f32 %v222, 1.442695
      %v259 = vpow.pop %v258
      %v260 = vmul.f32 %v223, 1.442695
      %v261 = vpow.pop %v260
      %v262 = vmul.f32 %v224, 1.442695
      %v263 = vpow.pop %v262
      %v264 = vmul.f32 %v225, 1.442695
      %v265 = vpow.pop %v264
      %v266 = vmul.f32 %v226, 1.442695
      %v267 = vpow.pop %v266
      %v268 = vmul.f32 %v227, 1.442695
      %v269 = vpow.pop %v268
      %v270 = vmul.f32 %v228, 1.442695
      %v271 = vpow.pop %v270
      %v272 = vmul.f32 %v229, 1.442695
      %v273 = vpow.pop %v272
      %v274 = vmul.f32 %v230, 1.442695
      %v275 = vpow.pop %v274
      %v276 = vmul.f32 %v231, 1.442695
      %v277 = vpow.pop %v276
      %v278 = vmul.f32 %v232, 1.442695
      %v279 = vpow.pop %v278
      %v280 = vmul.f32 %v233, 1.442695
      %v281 = vpow.pop %v280
      %v282 = vmul.f32 %v234, 1.442695
      %v283 = vpow.pop %v282
      %v284 = vmul.f32 %v235, 1.442695
      %v285 = vpow.pop %v284
      %v286 = vmul.f32 %v236, 1.442695
      %v287 = vpow.pop %v286
      %v288 = vmul.f32 %v237, 1.442695
      %v289 = vpow.pop %v288
      %v290 = vmul.f32 %v238, 1.442695
      %v291 = vpow.pop %v290
      %v292 = vmul.f32 %v239, 1.442695
      %v293 = vpow.pop %v292
      %v294 = vmul.f32 %v240, 1.442695
      %v295 = vpow.pop %v294
      %v296 = vmul.f32 %v241, 1.442695
      %v297 = vpow.pop %v296
      %v298 = vmul.f32 %v242, 1.442695
      %v299 = vpow.pop %v298
      %v300 = vmul.f32 %v243, 1.442695
      %v301 = vpow.pop %v300
      %v302 = vmul.f32 %v244, 1.442695
      %v303 = vpow.pop %v302
      %v304 = vmul.f32 %v245, 1.442695
      %v305 = vpow.pop %v304
      %v306 = vmul.f32 %v246, 1.442695
      %v307 = vpow.pop %v306
      %v308 = vmul.f32 %v247, 1.442695
      %v309 = vpow.pop %v308
      %v310 = vmul.f32 %v248, 1.442695
      %v311 = vpow.pop %v310
      %v312 = vmul.f32 %v249, 1.442695
      %v313 = vpow.pop %v312
      %v314 = vadd.f32 %v251, 1.0
      %v315 = vadd.f32 %v253, 1.0
      %v316 = vadd.f32 %v255, 1.0
      %v317 = vadd.f32 %v257, 1.0
      %v318 = vadd.f32 %v259, 1.0
      %v319 = vadd.f32 %v261, 1.0
      %v320 = vadd.f32 %v263, 1.0
      %v321 = vadd.f32 %v265, 1.0
      %v322 = vadd.f32 %v267, 1.0
      %v323 = vadd.f32 %v269, 1.0
      %v324 = vadd.f32 %v271, 1.0
      %v325 = vadd.f32 %v273, 1.0
      %v326 = vadd.f32 %v275, 1.0
      %v327 = vadd.f32 %v277, 1.0
      %v328 = vadd.f32 %v279, 1.0
      %v329 = vadd.f32 %v281, 1.0
      %v330 = vadd.f32 %v283, 1.0
      %v331 = vadd.f32 %v285, 1.0
      %v332 = vadd.f32 %v287, 1.0
      %v333 = vadd.f32 %v289, 1.0
      %v334 = vadd.f32 %v291, 1.0
      %v335 = vadd.f32 %v293, 1.0
      %v336 = vadd.f32 %v295, 1.0
      %v337 = vadd.f32 %v297, 1.0
      %v338 = vadd.f32 %v299, 1.0
      %v339 = vadd.f32 %v301, 1.0
      %v340 = vadd.f32 %v303, 1.0
      %v341 = vadd.f32 %v305, 1.0
      %v342 = vadd.f32 %v307, 1.0
      %v343 = vadd.f32 %v309, 1.0
      %v344 = vadd.f32 %v311, 1.0
      %v345 = vadd.f32 %v313, 1.0
      %v346 = vrcp.pop %v314
      %v347 = vmul.f32 1.0, %v346
      %v348 = vrcp.pop %v315
      %v349 = vmul.f32 1.0, %v348
      %v350 = vrcp.pop %v316
      %v351 = vmul.f32 1.0, %v350
      %v352 = vrcp.pop %v317
      %v353 = vmul.f32 1.0, %v352
      %v354 = vrcp.pop %v318
      %v355 = vmul.f32 1.0, %v354
      %v356 = vrcp.pop %v319
      %v357 = vmul.f32 1.0, %v356
      %v358 = vrcp.pop %v320
      %v359 = vmul.f32 1.0, %v358
      %v360 = vrcp.pop %v321
      %v361 = vmul.f32 1.0, %v360
      %v362 = vrcp.pop %v322
      %v363 = vmul.f32 1.0, %v362
      %v364 = vrcp.pop %v323
      %v365 = vmul.f32 1.0, %v364
      %v366 = vrcp.pop %v324
      %v367 = vmul.f32 1.0, %v366
      %v368 = vrcp.pop %v325
      %v369 = vmul.f32 1.0, %v368
      %v370 = vrcp.pop %v326
      %v371 = vmul.f32 1.0, %v370
      %v372 = vrcp.pop %v327
      %v373 = vmul.f32 1.0, %v372
      %v374 = vrcp.pop %v328
      %v375 = vmul.f32 1.0, %v374
      %v376 = vrcp.pop %v329
      %v377 = vmul.f32 1.0, %v376
      %v378 = vrcp.pop %v330
      %v379 = vmul.f32 1.0, %v378
      %v380 = vrcp.pop %v331
      %v381 = vmul.f32 1.0, %v380
      %v382 = vrcp.pop %v332
      %v383 = vmul.f32 1.0, %v382
      %v384 = vrcp.pop %v333
      %v385 = vmul.f32 1.0, %v384
      %v386 = vrcp.pop %v334
      %v387 = vmul.f32 1.0, %v386
      %v388 = vrcp.pop %v335
      %v389 = vmul.f32 1.0, %v388
      %v390 = vrcp.pop %v336
      %v391 = vmul.f32 1.0, %v390
      %v392 = vrcp.pop %v337
      %v393 = vmul.f32 1.0, %v392
      %v394 = vrcp.pop %v338
      %v395 = vmul.f32 1.0, %v394
      %v396 = vrcp.pop %v339
      %v397 = vmul.f32 1.0, %v396
      %v398 = vrcp.pop %v340
      %v399 = vmul.f32 1.0, %v398
      %v400 = vrcp.pop %v341
      %v401 = vmul.f32 1.0, %v400
      %v402 = vrcp.pop %v342
      %v403 = vmul.f32 1.0, %v402
      %v404 = vrcp.pop %v343
      %v405 = vmul.f32 1.0, %v404
      %v406 = vrcp.pop %v344
      %v407 = vmul.f32 1.0, %v406
      %v408 = vrcp.pop %v345
      %v409 = vmul.f32 1.0, %v408
      %vm410 = vcmask 130048
      %411 = vst.msk [vmem:[%s145] sm:$0xff] %vm410, %v347
      %412 = vst.msk [vmem:[%s145 + $0x8] sm:$0xff] %vm410, %v349
      %413 = vst.msk [vmem:[%s145 + $0x10] sm:$0xff] %vm410, %v351
      %414 = vst.msk [vmem:[%s145 + $0x18] sm:$0xff] %vm410, %v353
      %415 = vst.msk [vmem:[%s145 + $0x20] sm:$0xff] %vm410, %v355
      %416 = vst.msk [vmem:[%s145 + $0x28] sm:$0xff] %vm410, %v357
      %417 = vst.msk [vmem:[%s145 + $0x30] sm:$0xff] %vm410, %v359
      %418 = vst.msk [vmem:[%s145 + $0x38] sm:$0xff] %vm410, %v361
      %419 = vst.msk [vmem:[%s145 + $0x40] sm:$0xff] %vm410, %v363
      %420 = vst.msk [vmem:[%s145 + $0x48] sm:$0xff] %vm410, %v365
      %421 = vst.msk [vmem:[%s145 + $0x50] sm:$0xff] %vm410, %v367
      %422 = vst.msk [vmem:[%s145 + $0x58] sm:$0xff] %vm410, %v369
      %423 = vst.msk [vmem:[%s145 + $0x60] sm:$0xff] %vm410, %v371
      %424 = vst.msk [vmem:[%s145 + $0x68] sm:$0xff] %vm410, %v373
      %425 = vst.msk [vmem:[%s145 + $0x70] sm:$0xff] %vm410, %v375
      %426 = vst.msk [vmem:[%s145 + $0x78] sm:$0xff] %vm410, %v377
      %427 = vst.msk [vmem:[%s145 + $0x80] sm:$0xff] %vm410, %v379
      %428 = vst.msk [vmem:[%s145 + $0x88] sm:$0xff] %vm410, %v381
      %429 = vst.msk [vmem:[%s145 + $0x90] sm:$0xff] %vm410, %v383
      %430 = vst.msk [vmem:[%s145 + $0x98] sm:$0xff] %vm410, %v385
      %431 = vst.msk [vmem:[%s145 + $0xa0] sm:$0xff] %vm410, %v387
      %432 = vst.msk [vmem:[%s145 + $0xa8] sm:$0xff] %vm410, %v389
      %433 = vst.msk [vmem:[%s145 + $0xb0] sm:$0xff] %vm410, %v391
      %434 = vst.msk [vmem:[%s145 + $0xb8] sm:$0xff] %vm410, %v393
      %435 = vst.msk [vmem:[%s145 + $0xc0] sm:$0xff] %vm410, %v395
      %436 = vst.msk [vmem:[%s145 + $0xc8] sm:$0xff] %vm410, %v397
      %437 = vst.msk [vmem:[%s145 + $0xd0] sm:$0xff] %vm410, %v399
      %438 = vst.msk [vmem:[%s145 + $0xd8] sm:$0xff] %vm410, %v401
      %439 = vst.msk [vmem:[%s145 + $0xe0] sm:$0xff] %vm410, %v403
      %440 = vst.msk [vmem:[%s145 + $0xe8] sm:$0xff] %vm410, %v405
      %441 = vst.msk [vmem:[%s145 + $0xf0] sm:$0xff] %vm410, %v407
      %442 = vst.msk [vmem:[%s145 + $0xf8] sm:$0xff] %vm410, %v409
      %s443 = smul.u32 32, %s13
      %p444 = scmp.lt.s32.totalorder %s443, 63
      %s445 = scalar_select %p444, %s443, 63
      %s446 = smul.addr %s445, 8
      %s447 = scalar_lea.vmem %s2, %s446
      // Predicated region
      $region29: #{conv3d_autoencoder_forward.19} parent=27 // pred_check
        %p448 = pneg %p78
      $region30: #{conv3d_autoencoder_forward.19} parent=27 // pred_check_branch
        %450 = sbr.rel (%p448) target = $region32
      $region31: #{conv3d_autoencoder_forward.19} parent=27 // pred_region
        %s451 = smul.u32 32, %s13
      $region32: #{conv3d_autoencoder_forward.19} parent=27 // pred_fallthru
        _
    $region28: #{conv3d_autoencoder_forward.19} parent=5 // pred_fallthru
      _
    %p452 = scmp.le.s32.totalorder 2, %s8
    // Predicated region
    $region33: #{conv3d_autoencoder_forward.19} parent=5 // pred_check
      %p453 = pneg %p452
    $region34: #{conv3d_autoencoder_forward.19} parent=5 // pred_check_branch
      %455 = sbr.rel (%p453) target = $region36
    $region35: #{conv3d_autoencoder_forward.19} parent=5 // pred_region
      %s456 = ssub.s32 %s8, 2
      // Predicated region
      $region37: #{conv3d_autoencoder_forward.19} parent=35 // pred_check
        %p457 = pneg %p84
      $region38: #{conv3d_autoencoder_forward.19} parent=35 // pred_check_branch
        %459 = sbr.rel (%p457) target = $region40
      $region39: #{conv3d_autoencoder_forward.19} parent=35 // pred_region
        %s460 = smul.u32 32, %s14
        %p461 = scmp.lt.s32.totalorder %s460, 63
        %s462 = scalar_select %p461, %s460, 63
        %s463 = smul.addr %s462, 8
        %s464 = scalar_lea.vmem %s2, %s463
      $region40: #{conv3d_autoencoder_forward.19} parent=35 // pred_fallthru
        _
    $region36: #{conv3d_autoencoder_forward.19} parent=5 // pred_fallthru
      _
  $region6: #{conv3d_autoencoder_forward.19} parent=0 // loop_footer
    %s12 = sadd.s32 1, %s8
  $region7: #{conv3d_autoencoder_forward.19} parent=0 // loop_footer_branch
    %7 = sbr.rel target = $region3
  $region8: #{conv3d_autoencoder_forward.19} parent=0 // loop_exit
    _

</llo_original>
